<compile_context>
chip_gen: v7x
topology: tpu7x:2x2x1
jax: 0.10.0
libtpu: 0.0.40
codegen_flags: <defaults>
</compile_context>

<pallas_src>
import functools
import math

import numpy as np

import jax
import jax.numpy as jnp
from jax.experimental import pallas as pl
from jax.experimental.pallas import tpu as pltpu

_LANE = 128                      # lane width (last dim)
_SUBLANE = 8                     # f32 sublane width (second-to-last dim)
_VMEM_BUDGET = 40 * 1024 * 1024  # default working-set target (fits v7x 64 MiB/TC)


def _lem_block_kernel(x_ref, wx_hbm, wy_hbm, wlz_hbm, b_hbm, y0_ref, z0_ref,
                      y_out_ref, z_out_ref,
                      wx_v, wy_v, wlz_v, b_v, gx_sc, y_sc, z_sc,
                      *, dt):
    """One (batch-block, time-block) tile of the LEM recurrence."""
    tb = pl.program_id(1)          # time-block index (sequential / "arbitrary")

    # First time-block of this batch-block: copy the grid-constant fused
    # weights/bias once into single-buffered VMEM scratch and load the initial
    # recurrent state (the scratch carries y/z between time blocks).
    @pl.when(tb == 0)
    def _():
        pltpu.sync_copy(wx_hbm, wx_v)
        pltpu.sync_copy(wy_hbm, wy_v)
        pltpu.sync_copy(wlz_hbm, wlz_v)
        pltpu.sync_copy(b_hbm, b_v)
        y_sc[...] = y0_ref[...].astype(jnp.float32)
        z_sc[...] = z0_ref[...].astype(jnp.float32)

    T, bsz, ninp = x_ref.shape
    nh = y_sc.shape[-1]
    wdt = wy_v.dtype

    wy = wy_v[...]                 # (nh, 3*nh)   recurrent weights for g1|g2|gz
    wlz = wlz_v[...]               # (nh, nh)     recurrent weight for lin-z

    # Hoisted input projection: ONE wide MXU GEMM for all four gates over the
    # whole time block (no serial dependency on x); biases folded in here.
    #   (T*bsz, ninp) @ (ninp, 4*nh) + (1, 4*nh)
    x_blk = x_ref[...].reshape(T * bsz, ninp).astype(wdt)
    gx_sc[...] = (jnp.dot(x_blk, wx_v[...], preferred_element_type=jnp.float32)
                  + b_v[...]).reshape(T, bsz, 4 * nh)

    def step(t, carry):
        y, z = carry
        gx_t = gx_sc[t]                                       # (bsz, 4*nh)
        # One fused recurrent dot for g1|g2|gz: (bsz, nh) @ (nh, 3*nh).
        g = gx_t[:, :3 * nh] + jnp.dot(y.astype(wdt), wy,
                                       preferred_element_type=jnp.float32)
        ms = dt * jax.nn.sigmoid(g[:, :2 * nh])               # fused sigmoid g1|g2
        ms_dt_bar = ms[:, :nh]
        ms_dt = ms[:, nh:]
        z = z + ms_dt * (jnp.tanh(g[:, 2 * nh:]) - z)
        lin = gx_t[:, 3 * nh:] + jnp.dot(z.astype(wdt), wlz,
                                         preferred_element_type=jnp.float32)
        y = y + ms_dt_bar * (jnp.tanh(lin) - y)
        y_out_ref[t] = y.astype(y_out_ref.dtype)
        z_out_ref[t] = z.astype(z_out_ref.dtype)
        return (y, z)

    y, z = jax.lax.fori_loop(0, T, step, (y_sc[...], z_sc[...]), unroll=True)

    # Carry the state to the next time block of this batch-block.
    y_sc[...] = y
    z_sc[...] = z


def _round_up(n, m):
    return ((n + m - 1) // m) * m


def _largest_divisor_leq(n, cap):
    for d in range(min(cap, n), 0, -1):
        if n % d == 0:
            return d
    return 1


def _vmem_bytes(block_t, batch_block, ninp, nh_p, x_bytes, w_bytes, out_bytes):
    x_blk = 2 * block_t * batch_block * ninp * x_bytes               # x (2 bufs)
    out_blk = 2 * 2 * block_t * batch_block * nh_p * out_bytes       # 2 outs, 2 bufs
    state_in = 2 * 2 * batch_block * nh_p * 4                        # y0/z0 blocks
    weights = (ninp * 4 * nh_p + nh_p * 3 * nh_p + nh_p * nh_p) * w_bytes \
        + 4 * nh_p * 4                                               # single buffer
    gx = block_t * batch_block * 4 * nh_p * 4                        # f32 slab
    state_sc = 2 * batch_block * nh_p * 4
    return x_blk + out_blk + state_in + weights + gx + state_sc


def lem_forward(x, weights, weights_lin_z, bias, bias_lin_z, y0, z0, dt, *,
                block_t=None, batch_block=None, weight_dtype=None,
                out_dtype=None):
    """Pallas LEM forward. Returns (all_y_states, all_z_states): (seq, batch, nhid).

    block_t:      timesteps per grid step (must divide seq; auto-sized to VMEM).
    batch_block:  padded-batch rows per grid step along a "parallel" axis.
    weight_dtype: e.g. jnp.bfloat16 for bf16 MXU operands with f32 accumulation
                  and f32 carried state (recommended on v6e/v7x); default f32.
    out_dtype:    dtype of the stored y/z sequences (default: x.dtype).
    """
    seq, batch, ninp = x.shape
    nhid = y0.shape[1]
    dt = float(dt)
    out_dtype = x.dtype if out_dtype is None else out_dtype
    wdt = weights.dtype if weight_dtype is None else weight_dtype

    # ---- pad nhid to a lane multiple (128) and batch to a sublane multiple (8)
    # so every in-kernel slice / store is tile-dense.  Zero padding is inert.
    nh_p = _round_up(nhid, _LANE)
    b_p = _round_up(batch, _SUBLANE)

    # ---- fused, pre-transposed, per-gate-padded weights ----------------------
    # Fused gate order along the output axis: [g1 | g2 | gz | lin_z].
    def pad_g(a):          # pad a gate slab's output dim nhid -> nh_p
        return jnp.pad(a, ((0, 0), (0, nh_p - nhid)))

    wx = jnp.transpose(weights[:, :ninp])          # (ninp, 3*nhid)
    wyr = jnp.transpose(weights[:, ninp:])         # (nhid, 3*nhid)
    wlx = jnp.transpose(weights_lin_z[:, :ninp])   # (ninp, nhid)
    wlzr = jnp.transpose(weights_lin_z[:, ninp:])  # (nhid, nhid)

    wx_cat = jnp.concatenate(
        [pad_g(wx[:, i * nhid:(i + 1) * nhid]) for i in range(3)] + [pad_g(wlx)],
        axis=1).astype(wdt)                                        # (ninp, 4*nh_p)
    wy_cat = jnp.concatenate(
        [pad_g(wyr[:, i * nhid:(i + 1) * nhid]) for i in range(3)], axis=1)
    wy_cat = jnp.pad(wy_cat, ((0, nh_p - nhid), (0, 0))).astype(wdt)  # (nh_p, 3*nh_p)
    wlz = jnp.pad(pad_g(wlzr), ((0, nh_p - nhid), (0, 0))).astype(wdt)  # (nh_p, nh_p)

    def pad_b(v):
        return jnp.pad(v.astype(jnp.float32), (0, nh_p - nhid))
    b_cat = jnp.concatenate(
        [pad_b(bias[i * nhid:(i + 1) * nhid]) for i in range(3)]
        + [pad_b(bias_lin_z)]).reshape(1, 4 * nh_p)                # (1, 4*nh_p) f32

    # ---- pad inputs / initial state ------------------------------------------
    x_p = jnp.pad(x, ((0, 0), (0, b_p - batch), (0, 0))) if b_p != batch else x
    y0_p = jnp.pad(y0.astype(jnp.float32), ((0, b_p - batch), (0, nh_p - nhid)))
    z0_p = jnp.pad(z0.astype(jnp.float32), ((0, b_p - batch), (0, nh_p - nhid)))

    # ---- tiling ---------------------------------------------------------------
    if batch_block is None:
        # >= 2 blocks along the leading "parallel" axis when the padded batch
        # allows it, so the recurrence can shard across v7x's two TensorCores.
        batch_block = b_p // 2 if (b_p >= 16 and b_p % 16 == 0) else b_p
    assert b_p % batch_block == 0, "batch_block must divide the padded batch"

    x_bytes = np.dtype(x_p.dtype).itemsize
    w_bytes = np.dtype(wdt).itemsize
    o_bytes = np.dtype(out_dtype).itemsize
    if block_t is None:
        block_t = _largest_divisor_leq(seq, 16)
        while (block_t > 1
               and _vmem_bytes(block_t, batch_block, ninp, nh_p,
                               x_bytes, w_bytes, o_bytes) > _VMEM_BUDGET):
            block_t = _largest_divisor_leq(seq, block_t - 1)
    assert seq % block_t == 0, "block_t must divide seq"

    est = _vmem_bytes(block_t, batch_block, ninp, nh_p, x_bytes, w_bytes, o_bytes)
    vmem_limit = int(min(64 * 2**20, max(32 * 2**20, 2 * est)))

    num_bb = b_p // batch_block
    num_tb = seq // block_t

    any_spec = pl.BlockSpec(memory_space=pl.ANY)       # grid-constant weights/bias
    x_spec = pl.BlockSpec((block_t, batch_block, ninp), lambda b, t: (t, b, 0))
    state_spec = pl.BlockSpec((batch_block, nh_p), lambda b, t: (b, 0))
    out_spec = pl.BlockSpec((block_t, batch_block, nh_p), lambda b, t: (t, b, 0))

    grid_spec = pltpu.PrefetchScalarGridSpec(
        num_scalar_prefetch=0,
        grid=(num_bb, num_tb),
        in_specs=[
            x_spec,                                    # x time/batch block
            any_spec, any_spec, any_spec, any_spec,    # wx_cat, wy_cat, wlz, bias
            state_spec, state_spec,                    # y0, z0
        ],
        out_specs=(out_spec, out_spec),
        scratch_shapes=[
            pltpu.VMEM((ninp, 4 * nh_p), wdt),               # wx (single buffer)
            pltpu.VMEM((nh_p, 3 * nh_p), wdt),               # wy
            pltpu.VMEM((nh_p, nh_p), wdt),                   # wlz
            pltpu.VMEM((1, 4 * nh_p), jnp.float32),          # fused bias
            pltpu.VMEM((block_t, batch_block, 4 * nh_p), jnp.float32),  # gx slab
            pltpu.VMEM((batch_block, nh_p), jnp.float32),    # carried y
            pltpu.VMEM((batch_block, nh_p), jnp.float32),    # carried z
        ],
    )

    ys_p, zs_p = pl.pallas_call(
        functools.partial(_lem_block_kernel, dt=dt),
        out_shape=(jax.ShapeDtypeStruct((seq, b_p, nh_p), out_dtype),
                   jax.ShapeDtypeStruct((seq, b_p, nh_p), out_dtype)),
        grid_spec=grid_spec,
        compiler_params=pltpu.CompilerParams(
            # batch-block axis is independent (megacore-shardable); the time
            # axis carries the recurrence and must stay sequential.
            dimension_semantics=("parallel", "arbitrary"),
            vmem_limit_bytes=vmem_limit),
    )(x_p, wx_cat, wy_cat, wlz, b_cat, y0_p, z0_p)

    if b_p != batch or nh_p != nhid:
        ys_p = ys_p[:, :batch, :nhid]
        zs_p = zs_p[:, :batch, :nhid]
    return ys_p, zs_p


def lem_forward_ref(x, weights, weights_lin_z, bias, bias_lin_z, y0, z0, dt):
    """Pure-JAX reference (lax.scan) matching the LEM cell equations."""
    def step(carry, xt):
        y, z = carry
        X = jnp.concatenate([xt, y], axis=1)
        g = X @ weights.T + bias
        g1, g2, gz = jnp.split(g, 3, axis=1)
        ms_dt_bar = dt * jax.nn.sigmoid(g1)
        ms_dt = dt * jax.nn.sigmoid(g2)
        z_new = (1.0 - ms_dt) * z + ms_dt * jnp.tanh(gz)
        X2 = jnp.concatenate([xt, z_new], axis=1)
        y_new = (1.0 - ms_dt_bar) * y + ms_dt_bar * jnp.tanh(
            X2 @ weights_lin_z.T + bias_lin_z)
        return (y_new, z_new), (y_new, z_new)

    _, (ys, zs) = jax.lax.scan(step, (y0, z0), x)
    return ys, zs


class LEMcudaPallas:
    """Mirrors LEMcuda.__init__ parameter shapes & uniform(-stdv, stdv) init."""

    def __init__(self, ninp, nhid, dt, key):
        self.ninp = ninp
        self.nhid = nhid
        self.dt = float(dt)
        stdv = 1.0 / math.sqrt(nhid)
        k1, k2, k3, k4 = jax.random.split(key, 4)
        self.weights = jax.random.uniform(
            k1, (3 * nhid, ninp + nhid), jnp.float32, -stdv, stdv)
        self.weights_lin_z = jax.random.uniform(
            k2, (nhid, ninp + nhid), jnp.float32, -stdv, stdv)
        self.bias = jax.random.uniform(k3, (3 * nhid,), jnp.float32, -stdv, stdv)
        self.bias_lin_z = jax.random.uniform(k4, (nhid,), jnp.float32, -stdv, stdv)

    def __call__(self, x, states=None, **kwargs):
        seq, batch, _ = x.shape
        if states is None:
            y = jnp.zeros((batch, self.nhid), x.dtype)
            z = jnp.zeros((batch, self.nhid), x.dtype)
            states = (y, z)
        return lem_forward(x, self.weights, self.weights_lin_z, self.bias,
                           self.bias_lin_z, states[0], states[1], self.dt, **kwargs)

# TODO(synk): only the forward pass (all_y_states, all_z_states) is implemented;
# the CUDA extension's saved-for-backward tensors and lem_cuda.backward are not.


if __name__ == "__main__":
    def run_case(seq, batch, ninp, nhid, dt, key, **kw):
        k_param, k_x = jax.random.split(key)
        model = LEMcudaPallas(ninp, nhid, dt, k_param)
        x = jax.random.normal(k_x, (seq, batch, ninp), jnp.float32)

        ys, zs = model(x, **kw)
        ys = jax.block_until_ready(ys)
        zs = jax.block_until_ready(zs)

        y0 = jnp.zeros((batch, nhid), jnp.float32)
        z0 = jnp.zeros((batch, nhid), jnp.float32)
        ys_ref, zs_ref = lem_forward_ref(x, model.weights, model.weights_lin_z,
                                         model.bias, model.bias_lin_z, y0, z0, dt)

        assert ys.shape == (seq, batch, nhid) and zs.shape == (seq, batch, nhid)
        err_y = float(jnp.max(jnp.abs(ys - ys_ref)))
        err_z = float(jnp.max(jnp.abs(zs - zs_ref)))
        assert jnp.allclose(ys, ys_ref, atol=1e-4, rtol=1e-4), f"y mismatch {err_y}"
        assert jnp.allclose(zs, zs_ref, atol=1e-4, rtol=1e-4), f"z mismatch {err_z}"

    key = jax.random.PRNGKey(0)
    k1, k2 = jax.random.split(key)

    # Lane-aligned hidden size; batch padded 4 -> 8; two time blocks carry state.
    run_case(seq=32, batch=4, ninp=16, nhid=128, dt=0.5, key=k1)
    # Small hidden size exercises the nhid -> 128 / batch -> 8 padding path.
    run_case(seq=8, batch=4, ninp=8, nhid=32, dt=0.25, key=k2, block_t=4)

    print("KERNEL_OK")
</pallas_src>

<mosaic_0001>
module attributes {stable_mosaic.version = 11 : i64} {
  func.func @_lem_block_kernel(%arg0: i32, %arg1: i32, %arg2: memref<16x8x16xf32, #tpu.memory_space<vmem>>, %arg3: memref<16x512xf32, #tpu.memory_space<any>>, %arg4: memref<128x384xf32, #tpu.memory_space<any>>, %arg5: memref<128x128xf32, #tpu.memory_space<any>>, %arg6: memref<1x512xf32, #tpu.memory_space<any>>, %arg7: memref<8x128xf32, #tpu.memory_space<vmem>>, %arg8: memref<8x128xf32, #tpu.memory_space<vmem>>, %arg9: memref<16x8x128xf32, #tpu.memory_space<vmem>>, %arg10: memref<16x8x128xf32, #tpu.memory_space<vmem>>, %arg11: memref<16x512xf32, #tpu.memory_space<vmem>>, %arg12: memref<128x384xf32, #tpu.memory_space<vmem>>, %arg13: memref<128x128xf32, #tpu.memory_space<vmem>>, %arg14: memref<1x512xf32, #tpu.memory_space<vmem>>, %arg15: memref<16x8x512xf32, #tpu.memory_space<vmem>>, %arg16: memref<8x128xf32, #tpu.memory_space<vmem>>, %arg17: memref<8x128xf32, #tpu.memory_space<vmem>>) attributes {dimension_semantics = [#tpu.dimension_semantics<parallel>, #tpu.dimension_semantics<arbitrary>], iteration_bounds = array<i64: 1, 2>, scalar_prefetch = 0 : i64, scratch_operands = 7 : i64, tpu.core_type = #tpu.core_type<tc>, window_params = [{transform_indices = @transform_0, window_bounds = array<i64: 16, 8, 16>}, {}, {}, {}, {}, {transform_indices = @transform_5, window_bounds = array<i64: 8, 128>}, {transform_indices = @transform_6, window_bounds = array<i64: 8, 128>}, {transform_indices = @transform_7, window_bounds = array<i64: 16, 8, 128>}, {transform_indices = @transform_8, window_bounds = array<i64: 16, 8, 128>}]} {
    %c0_i32 = arith.constant 0 : i32
    %0 = arith.cmpi eq, %arg1, %c0_i32 : i32
    %1 = arith.extui %0 : i1 to i32
    %c0_i32_0 = arith.constant 0 : i32
    %2 = arith.cmpi ne, %1, %c0_i32_0 : i32
    scf.if %2 {
      "tpu.region"() ({
        %598 = tpu.sem_alloc : memref<!tpu.dma_semaphore, #tpu.memory_space<semaphore_mem>>
        tpu.enqueue_dma source(%arg3 : memref<16x512xf32, #tpu.memory_space<any>>) target(%arg11 : memref<16x512xf32, #tpu.memory_space<vmem>>) target_semaphore(%598 : memref<!tpu.dma_semaphore, #tpu.memory_space<semaphore_mem>>)
        tpu.wait_dma2 semaphore(%598 : memref<!tpu.dma_semaphore, #tpu.memory_space<semaphore_mem>>) src(%arg3 : memref<16x512xf32, #tpu.memory_space<any>>) dst(%arg11 : memref<16x512xf32, #tpu.memory_space<vmem>>)
        tpu.yield
      }) : () -> ()
      "tpu.region"() ({
        %598 = tpu.sem_alloc : memref<!tpu.dma_semaphore, #tpu.memory_space<semaphore_mem>>
        tpu.enqueue_dma source(%arg4 : memref<128x384xf32, #tpu.memory_space<any>>) target(%arg12 : memref<128x384xf32, #tpu.memory_space<vmem>>) target_semaphore(%598 : memref<!tpu.dma_semaphore, #tpu.memory_space<semaphore_mem>>)
        tpu.wait_dma2 semaphore(%598 : memref<!tpu.dma_semaphore, #tpu.memory_space<semaphore_mem>>) src(%arg4 : memref<128x384xf32, #tpu.memory_space<any>>) dst(%arg12 : memref<128x384xf32, #tpu.memory_space<vmem>>)
        tpu.yield
      }) : () -> ()
      "tpu.region"() ({
        %598 = tpu.sem_alloc : memref<!tpu.dma_semaphore, #tpu.memory_space<semaphore_mem>>
        tpu.enqueue_dma source(%arg5 : memref<128x128xf32, #tpu.memory_space<any>>) target(%arg13 : memref<128x128xf32, #tpu.memory_space<vmem>>) target_semaphore(%598 : memref<!tpu.dma_semaphore, #tpu.memory_space<semaphore_mem>>)
        tpu.wait_dma2 semaphore(%598 : memref<!tpu.dma_semaphore, #tpu.memory_space<semaphore_mem>>) src(%arg5 : memref<128x128xf32, #tpu.memory_space<any>>) dst(%arg13 : memref<128x128xf32, #tpu.memory_space<vmem>>)
        tpu.yield
      }) : () -> ()
      "tpu.region"() ({
        %598 = tpu.sem_alloc : memref<!tpu.dma_semaphore, #tpu.memory_space<semaphore_mem>>
        tpu.enqueue_dma source(%arg6 : memref<1x512xf32, #tpu.memory_space<any>>) target(%arg14 : memref<1x512xf32, #tpu.memory_space<vmem>>) target_semaphore(%598 : memref<!tpu.dma_semaphore, #tpu.memory_space<semaphore_mem>>)
        tpu.wait_dma2 semaphore(%598 : memref<!tpu.dma_semaphore, #tpu.memory_space<semaphore_mem>>) src(%arg6 : memref<1x512xf32, #tpu.memory_space<any>>) dst(%arg14 : memref<1x512xf32, #tpu.memory_space<vmem>>)
        tpu.yield
      }) : () -> ()
      %c0_183 = arith.constant 0 : index
      %c0_184 = arith.constant 0 : index
      %594 = vector.load %arg7[%c0_183, %c0_184] : memref<8x128xf32, #tpu.memory_space<vmem>>, vector<8x128xf32>
      %c0_185 = arith.constant 0 : index
      %c0_186 = arith.constant 0 : index
      %595 = vector.load %arg16[%c0_185, %c0_186] : memref<8x128xf32, #tpu.memory_space<vmem>>, vector<8x128xf32>
      tpu.vector_store %arg16[%c0_185, %c0_186], %594 {strides = array<i32>} : memref<8x128xf32, #tpu.memory_space<vmem>>, vector<8x128xf32>,
      %c0_187 = arith.constant 0 : index
      %c0_188 = arith.constant 0 : index
      %596 = vector.load %arg8[%c0_187, %c0_188] : memref<8x128xf32, #tpu.memory_space<vmem>>, vector<8x128xf32>
      %c0_189 = arith.constant 0 : index
      %c0_190 = arith.constant 0 : index
      %597 = vector.load %arg17[%c0_189, %c0_190] : memref<8x128xf32, #tpu.memory_space<vmem>>, vector<8x128xf32>
      tpu.vector_store %arg17[%c0_189, %c0_190], %596 {strides = array<i32>} : memref<8x128xf32, #tpu.memory_space<vmem>>, vector<8x128xf32>,
    } else {
    }
    %c0 = arith.constant 0 : index
    %c0_1 = arith.constant 0 : index
    %3 = vector.load %arg12[%c0, %c0_1] : memref<128x384xf32, #tpu.memory_space<vmem>>, vector<128x384xf32>
    %c0_2 = arith.constant 0 : index
    %c0_3 = arith.constant 0 : index
    %4 = vector.load %arg13[%c0_2, %c0_3] : memref<128x128xf32, #tpu.memory_space<vmem>>, vector<128x128xf32>
    %c0_4 = arith.constant 0 : index
    %c0_5 = arith.constant 0 : index
    %c0_6 = arith.constant 0 : index
    %5 = vector.load %arg2[%c0_4, %c0_5, %c0_6] : memref<16x8x16xf32, #tpu.memory_space<vmem>>, vector<16x8x16xf32>
    %6 = vector.shape_cast %5 : vector<16x8x16xf32> to vector<128x16xf32>
    %c0_7 = arith.constant 0 : index
    %c0_8 = arith.constant 0 : index
    %7 = vector.load %arg11[%c0_7, %c0_8] : memref<16x512xf32, #tpu.memory_space<vmem>>, vector<16x512xf32>
    %cst = arith.constant dense<0.000000e+00> : vector<128x512xf32>
    %8 = tpu.matmul %6, %7, %cst {dimension_numbers = #tpu.dot_dimension_numbers<[1], [0], [0], [1], [0, 0, 1, 1], [], []>} : vector<128x16xf32>, vector<16x512xf32>, vector<128x512xf32> -> vector<128x512xf32>
    %c0_9 = arith.constant 0 : index
    %c0_10 = arith.constant 0 : index
    %9 = vector.load %arg14[%c0_9, %c0_10] : memref<1x512xf32, #tpu.memory_space<vmem>>, vector<1x512xf32>
    %10 = vector.broadcast %9 : vector<1x512xf32> to vector<128x512xf32>
    %11 = arith.addf %8, %10 : vector<128x512xf32>
    %12 = vector.shape_cast %11 : vector<128x512xf32> to vector<16x8x512xf32>
    %c0_11 = arith.constant 0 : index
    %c0_12 = arith.constant 0 : index
    %c0_13 = arith.constant 0 : index
    %13 = vector.load %arg15[%c0_11, %c0_12, %c0_13] : memref<16x8x512xf32, #tpu.memory_space<vmem>>, vector<16x8x512xf32>
    tpu.vector_store %arg15[%c0_11, %c0_12, %c0_13], %12 {strides = array<i32>} : memref<16x8x512xf32, #tpu.memory_space<vmem>>, vector<16x8x512xf32>,
    %c0_14 = arith.constant 0 : index
    %c0_15 = arith.constant 0 : index
    %14 = vector.load %arg16[%c0_14, %c0_15] : memref<8x128xf32, #tpu.memory_space<vmem>>, vector<8x128xf32>
    %c0_16 = arith.constant 0 : index
    %c0_17 = arith.constant 0 : index
    %15 = vector.load %arg17[%c0_16, %c0_17] : memref<8x128xf32, #tpu.memory_space<vmem>>, vector<8x128xf32>
    %c0_i32_18 = arith.constant 0 : i32
    %16 = arith.index_cast %c0_i32_18 : i32 to index
    %c0_19 = arith.constant 0 : index
    %c0_20 = arith.constant 0 : index
    %17 = vector.load %arg15[%16, %c0_19, %c0_20] : memref<16x8x512xf32, #tpu.memory_space<vmem>>, vector<1x8x512xf32>
    %18 = vector.shape_cast %17 : vector<1x8x512xf32> to vector<8x512xf32>
    %19 = vector.extract_strided_slice %18 {offsets = [0, 0], sizes = [8, 384], strides = [1, 1]} : vector<8x512xf32> to vector<8x384xf32>
    %cst_21 = arith.constant dense<0.000000e+00> : vector<8x384xf32>
    %20 = tpu.matmul %14, %3, %cst_21 {dimension_numbers = #tpu.dot_dimension_numbers<[1], [0], [0], [1], [0, 0, 1, 1], [], []>} : vector<8x128xf32>, vector<128x384xf32>, vector<8x384xf32> -> vector<8x384xf32>
    %21 = arith.addf %19, %20 : vector<8x384xf32>
    %22 = vector.extract_strided_slice %21 {offsets = [0, 0], sizes = [8, 256], strides = [1, 1]} : vector<8x384xf32> to vector<8x256xf32>
    %23 = arith.negf %22 : vector<8x256xf32>
    %24 = math.exp %23 : vector<8x256xf32>
    %cst_22 = arith.constant 1.000000e+00 : f32
    %25 = vector.broadcast %cst_22 : f32 to vector<8x256xf32>
    %26 = arith.addf %25, %24 : vector<8x256xf32>
    %27 = arith.divf %25, %26 : vector<8x256xf32>
    %cst_23 = arith.constant 5.000000e-01 : f32
    %28 = vector.broadcast %cst_23 : f32 to vector<8x256xf32>
    %29 = arith.mulf %28, %27 : vector<8x256xf32>
    %30 = vector.extract_strided_slice %29 {offsets = [0, 0], sizes = [8, 128], strides = [1, 1]} : vector<8x256xf32> to vector<8x128xf32>
    %31 = vector.extract_strided_slice %29 {offsets = [0, 128], sizes = [8, 128], strides = [1, 1]} : vector<8x256xf32> to vector<8x128xf32>
    %32 = vector.extract_strided_slice %21 {offsets = [0, 256], sizes = [8, 128], strides = [1, 1]} : vector<8x384xf32> to vector<8x128xf32>
    %33 = math.tanh %32 : vector<8x128xf32>
    %34 = arith.subf %33, %15 : vector<8x128xf32>
    %35 = arith.mulf %31, %34 : vector<8x128xf32>
    %36 = arith.addf %15, %35 : vector<8x128xf32>
    %37 = vector.extract_strided_slice %18 {offsets = [0, 384], sizes = [8, 128], strides = [1, 1]} : vector<8x512xf32> to vector<8x128xf32>
    %cst_24 = arith.constant dense<0.000000e+00> : vector<8x128xf32>
    %38 = tpu.matmul %36, %4, %cst_24 {dimension_numbers = #tpu.dot_dimension_numbers<[1], [0], [0], [1], [0, 0, 1, 1], [], []>} : vector<8x128xf32>, vector<128x128xf32>, vector<8x128xf32> -> vector<8x128xf32>
    %39 = arith.addf %37, %38 : vector<8x128xf32>
    %40 = math.tanh %39 : vector<8x128xf32>
    %41 = arith.subf %40, %14 : vector<8x128xf32>
    %42 = arith.mulf %30, %41 : vector<8x128xf32>
    %43 = arith.addf %14, %42 : vector<8x128xf32>
    %44 = arith.index_cast %c0_i32_18 : i32 to index
    %c0_25 = arith.constant 0 : index
    %c0_26 = arith.constant 0 : index
    %45 = vector.load %arg9[%44, %c0_25, %c0_26] : memref<16x8x128xf32, #tpu.memory_space<vmem>>, vector<1x8x128xf32>
    %46 = vector.shape_cast %45 : vector<1x8x128xf32> to vector<8x128xf32>
    %47 = vector.shape_cast %43 : vector<8x128xf32> to vector<1x8x128xf32>
    tpu.vector_store %arg9[%44, %c0_25, %c0_26], %47 {strides = array<i32>} : memref<16x8x128xf32, #tpu.memory_space<vmem>>, vector<1x8x128xf32>,
    %48 = arith.index_cast %c0_i32_18 : i32 to index
    %c0_27 = arith.constant 0 : index
    %c0_28 = arith.constant 0 : index
    %49 = vector.load %arg10[%48, %c0_27, %c0_28] : memref<16x8x128xf32, #tpu.memory_space<vmem>>, vector<1x8x128xf32>
    %50 = vector.shape_cast %49 : vector<1x8x128xf32> to vector<8x128xf32>
    %51 = vector.shape_cast %36 : vector<8x128xf32> to vector<1x8x128xf32>
    tpu.vector_store %arg10[%48, %c0_27, %c0_28], %51 {strides = array<i32>} : memref<16x8x128xf32, #tpu.memory_space<vmem>>, vector<1x8x128xf32>,
    %c1_i32 = arith.constant 1 : i32
    %52 = arith.index_cast %c1_i32 : i32 to index
    %c0_29 = arith.constant 0 : index
    %c0_30 = arith.constant 0 : index
    %53 = vector.load %arg15[%52, %c0_29, %c0_30] : memref<16x8x512xf32, #tpu.memory_space<vmem>>, vector<1x8x512xf32>
    %54 = vector.shape_cast %53 : vector<1x8x512xf32> to vector<8x512xf32>
    %55 = vector.extract_strided_slice %54 {offsets = [0, 0], sizes = [8, 384], strides = [1, 1]} : vector<8x512xf32> to vector<8x384xf32>
    %cst_31 = arith.constant dense<0.000000e+00> : vector<8x384xf32>
    %56 = tpu.matmul %43, %3, %cst_31 {dimension_numbers = #tpu.dot_dimension_numbers<[1], [0], [0], [1], [0, 0, 1, 1], [], []>} : vector<8x128xf32>, vector<128x384xf32>, vector<8x384xf32> -> vector<8x384xf32>
    %57 = arith.addf %55, %56 : vector<8x384xf32>
    %58 = vector.extract_strided_slice %57 {offsets = [0, 0], sizes = [8, 256], strides = [1, 1]} : vector<8x384xf32> to vector<8x256xf32>
    %59 = arith.negf %58 : vector<8x256xf32>
    %60 = math.exp %59 : vector<8x256xf32>
    %cst_32 = arith.constant 1.000000e+00 : f32
    %61 = vector.broadcast %cst_32 : f32 to vector<8x256xf32>
    %62 = arith.addf %61, %60 : vector<8x256xf32>
    %63 = arith.divf %61, %62 : vector<8x256xf32>
    %cst_33 = arith.constant 5.000000e-01 : f32
    %64 = vector.broadcast %cst_33 : f32 to vector<8x256xf32>
    %65 = arith.mulf %64, %63 : vector<8x256xf32>
    %66 = vector.extract_strided_slice %65 {offsets = [0, 0], sizes = [8, 128], strides = [1, 1]} : vector<8x256xf32> to vector<8x128xf32>
    %67 = vector.extract_strided_slice %65 {offsets = [0, 128], sizes = [8, 128], strides = [1, 1]} : vector<8x256xf32> to vector<8x128xf32>
    %68 = vector.extract_strided_slice %57 {offsets = [0, 256], sizes = [8, 128], strides = [1, 1]} : vector<8x384xf32> to vector<8x128xf32>
    %69 = math.tanh %68 : vector<8x128xf32>
    %70 = arith.subf %69, %36 : vector<8x128xf32>
    %71 = arith.mulf %67, %70 : vector<8x128xf32>
    %72 = arith.addf %36, %71 : vector<8x128xf32>
    %73 = vector.extract_strided_slice %54 {offsets = [0, 384], sizes = [8, 128], strides = [1, 1]} : vector<8x512xf32> to vector<8x128xf32>
    %cst_34 = arith.constant dense<0.000000e+00> : vector<8x128xf32>
    %74 = tpu.matmul %72, %4, %cst_34 {dimension_numbers = #tpu.dot_dimension_numbers<[1], [0], [0], [1], [0, 0, 1, 1], [], []>} : vector<8x128xf32>, vector<128x128xf32>, vector<8x128xf32> -> vector<8x128xf32>
    %75 = arith.addf %73, %74 : vector<8x128xf32>
    %76 = math.tanh %75 : vector<8x128xf32>
    %77 = arith.subf %76, %43 : vector<8x128xf32>
    %78 = arith.mulf %66, %77 : vector<8x128xf32>
    %79 = arith.addf %43, %78 : vector<8x128xf32>
    %80 = arith.index_cast %c1_i32 : i32 to index
    %c0_35 = arith.constant 0 : index
    %c0_36 = arith.constant 0 : index
    %81 = vector.load %arg9[%80, %c0_35, %c0_36] : memref<16x8x128xf32, #tpu.memory_space<vmem>>, vector<1x8x128xf32>
    %82 = vector.shape_cast %81 : vector<1x8x128xf32> to vector<8x128xf32>
    %83 = vector.shape_cast %79 : vector<8x128xf32> to vector<1x8x128xf32>
    tpu.vector_store %arg9[%80, %c0_35, %c0_36], %83 {strides = array<i32>} : memref<16x8x128xf32, #tpu.memory_space<vmem>>, vector<1x8x128xf32>,
    %84 = arith.index_cast %c1_i32 : i32 to index
    %c0_37 = arith.constant 0 : index
    %c0_38 = arith.constant 0 : index
    %85 = vector.load %arg10[%84, %c0_37, %c0_38] : memref<16x8x128xf32, #tpu.memory_space<vmem>>, vector<1x8x128xf32>
    %86 = vector.shape_cast %85 : vector<1x8x128xf32> to vector<8x128xf32>
    %87 = vector.shape_cast %72 : vector<8x128xf32> to vector<1x8x128xf32>
    tpu.vector_store %arg10[%84, %c0_37, %c0_38], %87 {strides = array<i32>} : memref<16x8x128xf32, #tpu.memory_space<vmem>>, vector<1x8x128xf32>,
    %c2_i32 = arith.constant 2 : i32
    %88 = arith.index_cast %c2_i32 : i32 to index
    %c0_39 = arith.constant 0 : index
    %c0_40 = arith.constant 0 : index
    %89 = vector.load %arg15[%88, %c0_39, %c0_40] : memref<16x8x512xf32, #tpu.memory_space<vmem>>, vector<1x8x512xf32>
    %90 = vector.shape_cast %89 : vector<1x8x512xf32> to vector<8x512xf32>
    %91 = vector.extract_strided_slice %90 {offsets = [0, 0], sizes = [8, 384], strides = [1, 1]} : vector<8x512xf32> to vector<8x384xf32>
    %cst_41 = arith.constant dense<0.000000e+00> : vector<8x384xf32>
    %92 = tpu.matmul %79, %3, %cst_41 {dimension_numbers = #tpu.dot_dimension_numbers<[1], [0], [0], [1], [0, 0, 1, 1], [], []>} : vector<8x128xf32>, vector<128x384xf32>, vector<8x384xf32> -> vector<8x384xf32>
    %93 = arith.addf %91, %92 : vector<8x384xf32>
    %94 = vector.extract_strided_slice %93 {offsets = [0, 0], sizes = [8, 256], strides = [1, 1]} : vector<8x384xf32> to vector<8x256xf32>
    %95 = arith.negf %94 : vector<8x256xf32>
    %96 = math.exp %95 : vector<8x256xf32>
    %cst_42 = arith.constant 1.000000e+00 : f32
    %97 = vector.broadcast %cst_42 : f32 to vector<8x256xf32>
    %98 = arith.addf %97, %96 : vector<8x256xf32>
    %99 = arith.divf %97, %98 : vector<8x256xf32>
    %cst_43 = arith.constant 5.000000e-01 : f32
    %100 = vector.broadcast %cst_43 : f32 to vector<8x256xf32>
    %101 = arith.mulf %100, %99 : vector<8x256xf32>
    %102 = vector.extract_strided_slice %101 {offsets = [0, 0], sizes = [8, 128], strides = [1, 1]} : vector<8x256xf32> to vector<8x128xf32>
    %103 = vector.extract_strided_slice %101 {offsets = [0, 128], sizes = [8, 128], strides = [1, 1]} : vector<8x256xf32> to vector<8x128xf32>
    %104 = vector.extract_strided_slice %93 {offsets = [0, 256], sizes = [8, 128], strides = [1, 1]} : vector<8x384xf32> to vector<8x128xf32>
    %105 = math.tanh %104 : vector<8x128xf32>
    %106 = arith.subf %105, %72 : vector<8x128xf32>
    %107 = arith.mulf %103, %106 : vector<8x128xf32>
    %108 = arith.addf %72, %107 : vector<8x128xf32>
    %109 = vector.extract_strided_slice %90 {offsets = [0, 384], sizes = [8, 128], strides = [1, 1]} : vector<8x512xf32> to vector<8x128xf32>
    %cst_44 = arith.constant dense<0.000000e+00> : vector<8x128xf32>
    %110 = tpu.matmul %108, %4, %cst_44 {dimension_numbers = #tpu.dot_dimension_numbers<[1], [0], [0], [1], [0, 0, 1, 1], [], []>} : vector<8x128xf32>, vector<128x128xf32>, vector<8x128xf32> -> vector<8x128xf32>
    %111 = arith.addf %109, %110 : vector<8x128xf32>
    %112 = math.tanh %111 : vector<8x128xf32>
    %113 = arith.subf %112, %79 : vector<8x128xf32>
    %114 = arith.mulf %102, %113 : vector<8x128xf32>
    %115 = arith.addf %79, %114 : vector<8x128xf32>
    %116 = arith.index_cast %c2_i32 : i32 to index
    %c0_45 = arith.constant 0 : index
    %c0_46 = arith.constant 0 : index
    %117 = vector.load %arg9[%116, %c0_45, %c0_46] : memref<16x8x128xf32, #tpu.memory_space<vmem>>, vector<1x8x128xf32>
    %118 = vector.shape_cast %117 : vector<1x8x128xf32> to vector<8x128xf32>
    %119 = vector.shape_cast %115 : vector<8x128xf32> to vector<1x8x128xf32>
    tpu.vector_store %arg9[%116, %c0_45, %c0_46], %119 {strides = array<i32>} : memref<16x8x128xf32, #tpu.memory_space<vmem>>, vector<1x8x128xf32>,
    %120 = arith.index_cast %c2_i32 : i32 to index
    %c0_47 = arith.constant 0 : index
    %c0_48 = arith.constant 0 : index
    %121 = vector.load %arg10[%120, %c0_47, %c0_48] : memref<16x8x128xf32, #tpu.memory_space<vmem>>, vector<1x8x128xf32>
    %122 = vector.shape_cast %121 : vector<1x8x128xf32> to vector<8x128xf32>
    %123 = vector.shape_cast %108 : vector<8x128xf32> to vector<1x8x128xf32>
    tpu.vector_store %arg10[%120, %c0_47, %c0_48], %123 {strides = array<i32>} : memref<16x8x128xf32, #tpu.memory_space<vmem>>, vector<1x8x128xf32>,
    %c3_i32 = arith.constant 3 : i32
    %124 = arith.index_cast %c3_i32 : i32 to index
    %c0_49 = arith.constant 0 : index
    %c0_50 = arith.constant 0 : index
    %125 = vector.load %arg15[%124, %c0_49, %c0_50] : memref<16x8x512xf32, #tpu.memory_space<vmem>>, vector<1x8x512xf32>
    %126 = vector.shape_cast %125 : vector<1x8x512xf32> to vector<8x512xf32>
    %127 = vector.extract_strided_slice %126 {offsets = [0, 0], sizes = [8, 384], strides = [1, 1]} : vector<8x512xf32> to vector<8x384xf32>
    %cst_51 = arith.constant dense<0.000000e+00> : vector<8x384xf32>
    %128 = tpu.matmul %115, %3, %cst_51 {dimension_numbers = #tpu.dot_dimension_numbers<[1], [0], [0], [1], [0, 0, 1, 1], [], []>} : vector<8x128xf32>, vector<128x384xf32>, vector<8x384xf32> -> vector<8x384xf32>
    %129 = arith.addf %127, %128 : vector<8x384xf32>
    %130 = vector.extract_strided_slice %129 {offsets = [0, 0], sizes = [8, 256], strides = [1, 1]} : vector<8x384xf32> to vector<8x256xf32>
    %131 = arith.negf %130 : vector<8x256xf32>
    %132 = math.exp %131 : vector<8x256xf32>
    %cst_52 = arith.constant 1.000000e+00 : f32
    %133 = vector.broadcast %cst_52 : f32 to vector<8x256xf32>
    %134 = arith.addf %133, %132 : vector<8x256xf32>
    %135 = arith.divf %133, %134 : vector<8x256xf32>
    %cst_53 = arith.constant 5.000000e-01 : f32
    %136 = vector.broadcast %cst_53 : f32 to vector<8x256xf32>
    %137 = arith.mulf %136, %135 : vector<8x256xf32>
    %138 = vector.extract_strided_slice %137 {offsets = [0, 0], sizes = [8, 128], strides = [1, 1]} : vector<8x256xf32> to vector<8x128xf32>
    %139 = vector.extract_strided_slice %137 {offsets = [0, 128], sizes = [8, 128], strides = [1, 1]} : vector<8x256xf32> to vector<8x128xf32>
    %140 = vector.extract_strided_slice %129 {offsets = [0, 256], sizes = [8, 128], strides = [1, 1]} : vector<8x384xf32> to vector<8x128xf32>
    %141 = math.tanh %140 : vector<8x128xf32>
    %142 = arith.subf %141, %108 : vector<8x128xf32>
    %143 = arith.mulf %139, %142 : vector<8x128xf32>
    %144 = arith.addf %108, %143 : vector<8x128xf32>
    %145 = vector.extract_strided_slice %126 {offsets = [0, 384], sizes = [8, 128], strides = [1, 1]} : vector<8x512xf32> to vector<8x128xf32>
    %cst_54 = arith.constant dense<0.000000e+00> : vector<8x128xf32>
    %146 = tpu.matmul %144, %4, %cst_54 {dimension_numbers = #tpu.dot_dimension_numbers<[1], [0], [0], [1], [0, 0, 1, 1], [], []>} : vector<8x128xf32>, vector<128x128xf32>, vector<8x128xf32> -> vector<8x128xf32>
    %147 = arith.addf %145, %146 : vector<8x128xf32>
    %148 = math.tanh %147 : vector<8x128xf32>
    %149 = arith.subf %148, %115 : vector<8x128xf32>
    %150 = arith.mulf %138, %149 : vector<8x128xf32>
    %151 = arith.addf %115, %150 : vector<8x128xf32>
    %152 = arith.index_cast %c3_i32 : i32 to index
    %c0_55 = arith.constant 0 : index
    %c0_56 = arith.constant 0 : index
    %153 = vector.load %arg9[%152, %c0_55, %c0_56] : memref<16x8x128xf32, #tpu.memory_space<vmem>>, vector<1x8x128xf32>
    %154 = vector.shape_cast %153 : vector<1x8x128xf32> to vector<8x128xf32>
    %155 = vector.shape_cast %151 : vector<8x128xf32> to vector<1x8x128xf32>
    tpu.vector_store %arg9[%152, %c0_55, %c0_56], %155 {strides = array<i32>} : memref<16x8x128xf32, #tpu.memory_space<vmem>>, vector<1x8x128xf32>,
    %156 = arith.index_cast %c3_i32 : i32 to index
    %c0_57 = arith.constant 0 : index
    %c0_58 = arith.constant 0 : index
    %157 = vector.load %arg10[%156, %c0_57, %c0_58] : memref<16x8x128xf32, #tpu.memory_space<vmem>>, vector<1x8x128xf32>
    %158 = vector.shape_cast %157 : vector<1x8x128xf32> to vector<8x128xf32>
    %159 = vector.shape_cast %144 : vector<8x128xf32> to vector<1x8x128xf32>
    tpu.vector_store %arg10[%156, %c0_57, %c0_58], %159 {strides = array<i32>} : memref<16x8x128xf32, #tpu.memory_space<vmem>>, vector<1x8x128xf32>,
    %c4_i32 = arith.constant 4 : i32
    %160 = arith.index_cast %c4_i32 : i32 to index
    %c0_59 = arith.constant 0 : index
    %c0_60 = arith.constant 0 : index
    %161 = vector.load %arg15[%160, %c0_59, %c0_60] : memref<16x8x512xf32, #tpu.memory_space<vmem>>, vector<1x8x512xf32>
    %162 = vector.shape_cast %161 : vector<1x8x512xf32> to vector<8x512xf32>
    %163 = vector.extract_strided_slice %162 {offsets = [0, 0], sizes = [8, 384], strides = [1, 1]} : vector<8x512xf32> to vector<8x384xf32>
    %cst_61 = arith.constant dense<0.000000e+00> : vector<8x384xf32>
    %164 = tpu.matmul %151, %3, %cst_61 {dimension_numbers = #tpu.dot_dimension_numbers<[1], [0], [0], [1], [0, 0, 1, 1], [], []>} : vector<8x128xf32>, vector<128x384xf32>, vector<8x384xf32> -> vector<8x384xf32>
    %165 = arith.addf %163, %164 : vector<8x384xf32>
    %166 = vector.extract_strided_slice %165 {offsets = [0, 0], sizes = [8, 256], strides = [1, 1]} : vector<8x384xf32> to vector<8x256xf32>
    %167 = arith.negf %166 : vector<8x256xf32>
    %168 = math.exp %167 : vector<8x256xf32>
    %cst_62 = arith.constant 1.000000e+00 : f32
    %169 = vector.broadcast %cst_62 : f32 to vector<8x256xf32>
    %170 = arith.addf %169, %168 : vector<8x256xf32>
    %171 = arith.divf %169, %170 : vector<8x256xf32>
    %cst_63 = arith.constant 5.000000e-01 : f32
    %172 = vector.broadcast %cst_63 : f32 to vector<8x256xf32>
    %173 = arith.mulf %172, %171 : vector<8x256xf32>
    %174 = vector.extract_strided_slice %173 {offsets = [0, 0], sizes = [8, 128], strides = [1, 1]} : vector<8x256xf32> to vector<8x128xf32>
    %175 = vector.extract_strided_slice %173 {offsets = [0, 128], sizes = [8, 128], strides = [1, 1]} : vector<8x256xf32> to vector<8x128xf32>
    %176 = vector.extract_strided_slice %165 {offsets = [0, 256], sizes = [8, 128], strides = [1, 1]} : vector<8x384xf32> to vector<8x128xf32>
    %177 = math.tanh %176 : vector<8x128xf32>
    %178 = arith.subf %177, %144 : vector<8x128xf32>
    %179 = arith.mulf %175, %178 : vector<8x128xf32>
    %180 = arith.addf %144, %179 : vector<8x128xf32>
    %181 = vector.extract_strided_slice %162 {offsets = [0, 384], sizes = [8, 128], strides = [1, 1]} : vector<8x512xf32> to vector<8x128xf32>
    %cst_64 = arith.constant dense<0.000000e+00> : vector<8x128xf32>
    %182 = tpu.matmul %180, %4, %cst_64 {dimension_numbers = #tpu.dot_dimension_numbers<[1], [0], [0], [1], [0, 0, 1, 1], [], []>} : vector<8x128xf32>, vector<128x128xf32>, vector<8x128xf32> -> vector<8x128xf32>
    %183 = arith.addf %181, %182 : vector<8x128xf32>
    %184 = math.tanh %183 : vector<8x128xf32>
    %185 = arith.subf %184, %151 : vector<8x128xf32>
    %186 = arith.mulf %174, %185 : vector<8x128xf32>
    %187 = arith.addf %151, %186 : vector<8x128xf32>
    %188 = arith.index_cast %c4_i32 : i32 to index
    %c0_65 = arith.constant 0 : index
    %c0_66 = arith.constant 0 : index
    %189 = vector.load %arg9[%188, %c0_65, %c0_66] : memref<16x8x128xf32, #tpu.memory_space<vmem>>, vector<1x8x128xf32>
    %190 = vector.shape_cast %189 : vector<1x8x128xf32> to vector<8x128xf32>
    %191 = vector.shape_cast %187 : vector<8x128xf32> to vector<1x8x128xf32>
    tpu.vector_store %arg9[%188, %c0_65, %c0_66], %191 {strides = array<i32>} : memref<16x8x128xf32, #tpu.memory_space<vmem>>, vector<1x8x128xf32>,
    %192 = arith.index_cast %c4_i32 : i32 to index
    %c0_67 = arith.constant 0 : index
    %c0_68 = arith.constant 0 : index
    %193 = vector.load %arg10[%192, %c0_67, %c0_68] : memref<16x8x128xf32, #tpu.memory_space<vmem>>, vector<1x8x128xf32>
    %194 = vector.shape_cast %193 : vector<1x8x128xf32> to vector<8x128xf32>
    %195 = vector.shape_cast %180 : vector<8x128xf32> to vector<1x8x128xf32>
    tpu.vector_store %arg10[%192, %c0_67, %c0_68], %195 {strides = array<i32>} : memref<16x8x128xf32, #tpu.memory_space<vmem>>, vector<1x8x128xf32>,
    %c5_i32 = arith.constant 5 : i32
    %196 = arith.index_cast %c5_i32 : i32 to index
    %c0_69 = arith.constant 0 : index
    %c0_70 = arith.constant 0 : index
    %197 = vector.load %arg15[%196, %c0_69, %c0_70] : memref<16x8x512xf32, #tpu.memory_space<vmem>>, vector<1x8x512xf32>
    %198 = vector.shape_cast %197 : vector<1x8x512xf32> to vector<8x512xf32>
    %199 = vector.extract_strided_slice %198 {offsets = [0, 0], sizes = [8, 384], strides = [1, 1]} : vector<8x512xf32> to vector<8x384xf32>
    %cst_71 = arith.constant dense<0.000000e+00> : vector<8x384xf32>
    %200 = tpu.matmul %187, %3, %cst_71 {dimension_numbers = #tpu.dot_dimension_numbers<[1], [0], [0], [1], [0, 0, 1, 1], [], []>} : vector<8x128xf32>, vector<128x384xf32>, vector<8x384xf32> -> vector<8x384xf32>
    %201 = arith.addf %199, %200 : vector<8x384xf32>
    %202 = vector.extract_strided_slice %201 {offsets = [0, 0], sizes = [8, 256], strides = [1, 1]} : vector<8x384xf32> to vector<8x256xf32>
    %203 = arith.negf %202 : vector<8x256xf32>
    %204 = math.exp %203 : vector<8x256xf32>
    %cst_72 = arith.constant 1.000000e+00 : f32
    %205 = vector.broadcast %cst_72 : f32 to vector<8x256xf32>
    %206 = arith.addf %205, %204 : vector<8x256xf32>
    %207 = arith.divf %205, %206 : vector<8x256xf32>
    %cst_73 = arith.constant 5.000000e-01 : f32
    %208 = vector.broadcast %cst_73 : f32 to vector<8x256xf32>
    %209 = arith.mulf %208, %207 : vector<8x256xf32>
    %210 = vector.extract_strided_slice %209 {offsets = [0, 0], sizes = [8, 128], strides = [1, 1]} : vector<8x256xf32> to vector<8x128xf32>
    %211 = vector.extract_strided_slice %209 {offsets = [0, 128], sizes = [8, 128], strides = [1, 1]} : vector<8x256xf32> to vector<8x128xf32>
    %212 = vector.extract_strided_slice %201 {offsets = [0, 256], sizes = [8, 128], strides = [1, 1]} : vector<8x384xf32> to vector<8x128xf32>
    %213 = math.tanh %212 : vector<8x128xf32>
    %214 = arith.subf %213, %180 : vector<8x128xf32>
    %215 = arith.mulf %211, %214 : vector<8x128xf32>
    %216 = arith.addf %180, %215 : vector<8x128xf32>
    %217 = vector.extract_strided_slice %198 {offsets = [0, 384], sizes = [8, 128], strides = [1, 1]} : vector<8x512xf32> to vector<8x128xf32>
    %cst_74 = arith.constant dense<0.000000e+00> : vector<8x128xf32>
    %218 = tpu.matmul %216, %4, %cst_74 {dimension_numbers = #tpu.dot_dimension_numbers<[1], [0], [0], [1], [0, 0, 1, 1], [], []>} : vector<8x128xf32>, vector<128x128xf32>, vector<8x128xf32> -> vector<8x128xf32>
    %219 = arith.addf %217, %218 : vector<8x128xf32>
    %220 = math.tanh %219 : vector<8x128xf32>
    %221 = arith.subf %220, %187 : vector<8x128xf32>
    %222 = arith.mulf %210, %221 : vector<8x128xf32>
    %223 = arith.addf %187, %222 : vector<8x128xf32>
    %224 = arith.index_cast %c5_i32 : i32 to index
    %c0_75 = arith.constant 0 : index
    %c0_76 = arith.constant 0 : index
    %225 = vector.load %arg9[%224, %c0_75, %c0_76] : memref<16x8x128xf32, #tpu.memory_space<vmem>>, vector<1x8x128xf32>
    %226 = vector.shape_cast %225 : vector<1x8x128xf32> to vector<8x128xf32>
    %227 = vector.shape_cast %223 : vector<8x128xf32> to vector<1x8x128xf32>
    tpu.vector_store %arg9[%224, %c0_75, %c0_76], %227 {strides = array<i32>} : memref<16x8x128xf32, #tpu.memory_space<vmem>>, vector<1x8x128xf32>,
    %228 = arith.index_cast %c5_i32 : i32 to index
    %c0_77 = arith.constant 0 : index
    %c0_78 = arith.constant 0 : index
    %229 = vector.load %arg10[%228, %c0_77, %c0_78] : memref<16x8x128xf32, #tpu.memory_space<vmem>>, vector<1x8x128xf32>
    %230 = vector.shape_cast %229 : vector<1x8x128xf32> to vector<8x128xf32>
    %231 = vector.shape_cast %216 : vector<8x128xf32> to vector<1x8x128xf32>
    tpu.vector_store %arg10[%228, %c0_77, %c0_78], %231 {strides = array<i32>} : memref<16x8x128xf32, #tpu.memory_space<vmem>>, vector<1x8x128xf32>,
    %c6_i32 = arith.constant 6 : i32
    %232 = arith.index_cast %c6_i32 : i32 to index
    %c0_79 = arith.constant 0 : index
    %c0_80 = arith.constant 0 : index
    %233 = vector.load %arg15[%232, %c0_79, %c0_80] : memref<16x8x512xf32, #tpu.memory_space<vmem>>, vector<1x8x512xf32>
    %234 = vector.shape_cast %233 : vector<1x8x512xf32> to vector<8x512xf32>
    %235 = vector.extract_strided_slice %234 {offsets = [0, 0], sizes = [8, 384], strides = [1, 1]} : vector<8x512xf32> to vector<8x384xf32>
    %cst_81 = arith.constant dense<0.000000e+00> : vector<8x384xf32>
    %236 = tpu.matmul %223, %3, %cst_81 {dimension_numbers = #tpu.dot_dimension_numbers<[1], [0], [0], [1], [0, 0, 1, 1], [], []>} : vector<8x128xf32>, vector<128x384xf32>, vector<8x384xf32> -> vector<8x384xf32>
    %237 = arith.addf %235, %236 : vector<8x384xf32>
    %238 = vector.extract_strided_slice %237 {offsets = [0, 0], sizes = [8, 256], strides = [1, 1]} : vector<8x384xf32> to vector<8x256xf32>
    %239 = arith.negf %238 : vector<8x256xf32>
    %240 = math.exp %239 : vector<8x256xf32>
    %cst_82 = arith.constant 1.000000e+00 : f32
    %241 = vector.broadcast %cst_82 : f32 to vector<8x256xf32>
    %242 = arith.addf %241, %240 : vector<8x256xf32>
    %243 = arith.divf %241, %242 : vector<8x256xf32>
    %cst_83 = arith.constant 5.000000e-01 : f32
    %244 = vector.broadcast %cst_83 : f32 to vector<8x256xf32>
    %245 = arith.mulf %244, %243 : vector<8x256xf32>
    %246 = vector.extract_strided_slice %245 {offsets = [0, 0], sizes = [8, 128], strides = [1, 1]} : vector<8x256xf32> to vector<8x128xf32>
    %247 = vector.extract_strided_slice %245 {offsets = [0, 128], sizes = [8, 128], strides = [1, 1]} : vector<8x256xf32> to vector<8x128xf32>
    %248 = vector.extract_strided_slice %237 {offsets = [0, 256], sizes = [8, 128], strides = [1, 1]} : vector<8x384xf32> to vector<8x128xf32>
    %249 = math.tanh %248 : vector<8x128xf32>
    %250 = arith.subf %249, %216 : vector<8x128xf32>
    %251 = arith.mulf %247, %250 : vector<8x128xf32>
    %252 = arith.addf %216, %251 : vector<8x128xf32>
    %253 = vector.extract_strided_slice %234 {offsets = [0, 384], sizes = [8, 128], strides = [1, 1]} : vector<8x512xf32> to vector<8x128xf32>
    %cst_84 = arith.constant dense<0.000000e+00> : vector<8x128xf32>
    %254 = tpu.matmul %252, %4, %cst_84 {dimension_numbers = #tpu.dot_dimension_numbers<[1], [0], [0], [1], [0, 0, 1, 1], [], []>} : vector<8x128xf32>, vector<128x128xf32>, vector<8x128xf32> -> vector<8x128xf32>
    %255 = arith.addf %253, %254 : vector<8x128xf32>
    %256 = math.tanh %255 : vector<8x128xf32>
    %257 = arith.subf %256, %223 : vector<8x128xf32>
    %258 = arith.mulf %246, %257 : vector<8x128xf32>
    %259 = arith.addf %223, %258 : vector<8x128xf32>
    %260 = arith.index_cast %c6_i32 : i32 to index
    %c0_85 = arith.constant 0 : index
    %c0_86 = arith.constant 0 : index
    %261 = vector.load %arg9[%260, %c0_85, %c0_86] : memref<16x8x128xf32, #tpu.memory_space<vmem>>, vector<1x8x128xf32>
    %262 = vector.shape_cast %261 : vector<1x8x128xf32> to vector<8x128xf32>
    %263 = vector.shape_cast %259 : vector<8x128xf32> to vector<1x8x128xf32>
    tpu.vector_store %arg9[%260, %c0_85, %c0_86], %263 {strides = array<i32>} : memref<16x8x128xf32, #tpu.memory_space<vmem>>, vector<1x8x128xf32>,
    %264 = arith.index_cast %c6_i32 : i32 to index
    %c0_87 = arith.constant 0 : index
    %c0_88 = arith.constant 0 : index
    %265 = vector.load %arg10[%264, %c0_87, %c0_88] : memref<16x8x128xf32, #tpu.memory_space<vmem>>, vector<1x8x128xf32>
    %266 = vector.shape_cast %265 : vector<1x8x128xf32> to vector<8x128xf32>
    %267 = vector.shape_cast %252 : vector<8x128xf32> to vector<1x8x128xf32>
    tpu.vector_store %arg10[%264, %c0_87, %c0_88], %267 {strides = array<i32>} : memref<16x8x128xf32, #tpu.memory_space<vmem>>, vector<1x8x128xf32>,
    %c7_i32 = arith.constant 7 : i32
    %268 = arith.index_cast %c7_i32 : i32 to index
    %c0_89 = arith.constant 0 : index
    %c0_90 = arith.constant 0 : index
    %269 = vector.load %arg15[%268, %c0_89, %c0_90] : memref<16x8x512xf32, #tpu.memory_space<vmem>>, vector<1x8x512xf32>
    %270 = vector.shape_cast %269 : vector<1x8x512xf32> to vector<8x512xf32>
    %271 = vector.extract_strided_slice %270 {offsets = [0, 0], sizes = [8, 384], strides = [1, 1]} : vector<8x512xf32> to vector<8x384xf32>
    %cst_91 = arith.constant dense<0.000000e+00> : vector<8x384xf32>
    %272 = tpu.matmul %259, %3, %cst_91 {dimension_numbers = #tpu.dot_dimension_numbers<[1], [0], [0], [1], [0, 0, 1, 1], [], []>} : vector<8x128xf32>, vector<128x384xf32>, vector<8x384xf32> -> vector<8x384xf32>
    %273 = arith.addf %271, %272 : vector<8x384xf32>
    %274 = vector.extract_strided_slice %273 {offsets = [0, 0], sizes = [8, 256], strides = [1, 1]} : vector<8x384xf32> to vector<8x256xf32>
    %275 = arith.negf %274 : vector<8x256xf32>
    %276 = math.exp %275 : vector<8x256xf32>
    %cst_92 = arith.constant 1.000000e+00 : f32
    %277 = vector.broadcast %cst_92 : f32 to vector<8x256xf32>
    %278 = arith.addf %277, %276 : vector<8x256xf32>
    %279 = arith.divf %277, %278 : vector<8x256xf32>
    %cst_93 = arith.constant 5.000000e-01 : f32
    %280 = vector.broadcast %cst_93 : f32 to vector<8x256xf32>
    %281 = arith.mulf %280, %279 : vector<8x256xf32>
    %282 = vector.extract_strided_slice %281 {offsets = [0, 0], sizes = [8, 128], strides = [1, 1]} : vector<8x256xf32> to vector<8x128xf32>
    %283 = vector.extract_strided_slice %281 {offsets = [0, 128], sizes = [8, 128], strides = [1, 1]} : vector<8x256xf32> to vector<8x128xf32>
    %284 = vector.extract_strided_slice %273 {offsets = [0, 256], sizes = [8, 128], strides = [1, 1]} : vector<8x384xf32> to vector<8x128xf32>
    %285 = math.tanh %284 : vector<8x128xf32>
    %286 = arith.subf %285, %252 : vector<8x128xf32>
    %287 = arith.mulf %283, %286 : vector<8x128xf32>
    %288 = arith.addf %252, %287 : vector<8x128xf32>
    %289 = vector.extract_strided_slice %270 {offsets = [0, 384], sizes = [8, 128], strides = [1, 1]} : vector<8x512xf32> to vector<8x128xf32>
    %cst_94 = arith.constant dense<0.000000e+00> : vector<8x128xf32>
    %290 = tpu.matmul %288, %4, %cst_94 {dimension_numbers = #tpu.dot_dimension_numbers<[1], [0], [0], [1], [0, 0, 1, 1], [], []>} : vector<8x128xf32>, vector<128x128xf32>, vector<8x128xf32> -> vector<8x128xf32>
    %291 = arith.addf %289, %290 : vector<8x128xf32>
    %292 = math.tanh %291 : vector<8x128xf32>
    %293 = arith.subf %292, %259 : vector<8x128xf32>
    %294 = arith.mulf %282, %293 : vector<8x128xf32>
    %295 = arith.addf %259, %294 : vector<8x128xf32>
    %296 = arith.index_cast %c7_i32 : i32 to index
    %c0_95 = arith.constant 0 : index
    %c0_96 = arith.constant 0 : index
    %297 = vector.load %arg9[%296, %c0_95, %c0_96] : memref<16x8x128xf32, #tpu.memory_space<vmem>>, vector<1x8x128xf32>
    %298 = vector.shape_cast %297 : vector<1x8x128xf32> to vector<8x128xf32>
    %299 = vector.shape_cast %295 : vector<8x128xf32> to vector<1x8x128xf32>
    tpu.vector_store %arg9[%296, %c0_95, %c0_96], %299 {strides = array<i32>} : memref<16x8x128xf32, #tpu.memory_space<vmem>>, vector<1x8x128xf32>,
    %300 = arith.index_cast %c7_i32 : i32 to index
    %c0_97 = arith.constant 0 : index
    %c0_98 = arith.constant 0 : index
    %301 = vector.load %arg10[%300, %c0_97, %c0_98] : memref<16x8x128xf32, #tpu.memory_space<vmem>>, vector<1x8x128xf32>
    %302 = vector.shape_cast %301 : vector<1x8x128xf32> to vector<8x128xf32>
    %303 = vector.shape_cast %288 : vector<8x128xf32> to vector<1x8x128xf32>
    tpu.vector_store %arg10[%300, %c0_97, %c0_98], %303 {strides = array<i32>} : memref<16x8x128xf32, #tpu.memory_space<vmem>>, vector<1x8x128xf32>,
    %c8_i32 = arith.constant 8 : i32
    %304 = arith.index_cast %c8_i32 : i32 to index
    %c0_99 = arith.constant 0 : index
    %c0_100 = arith.constant 0 : index
    %305 = vector.load %arg15[%304, %c0_99, %c0_100] : memref<16x8x512xf32, #tpu.memory_space<vmem>>, vector<1x8x512xf32>
    %306 = vector.shape_cast %305 : vector<1x8x512xf32> to vector<8x512xf32>
    %307 = vector.extract_strided_slice %306 {offsets = [0, 0], sizes = [8, 384], strides = [1, 1]} : vector<8x512xf32> to vector<8x384xf32>
    %cst_101 = arith.constant dense<0.000000e+00> : vector<8x384xf32>
    %308 = tpu.matmul %295, %3, %cst_101 {dimension_numbers = #tpu.dot_dimension_numbers<[1], [0], [0], [1], [0, 0, 1, 1], [], []>} : vector<8x128xf32>, vector<128x384xf32>, vector<8x384xf32> -> vector<8x384xf32>
    %309 = arith.addf %307, %308 : vector<8x384xf32>
    %310 = vector.extract_strided_slice %309 {offsets = [0, 0], sizes = [8, 256], strides = [1, 1]} : vector<8x384xf32> to vector<8x256xf32>
    %311 = arith.negf %310 : vector<8x256xf32>
    %312 = math.exp %311 : vector<8x256xf32>
    %cst_102 = arith.constant 1.000000e+00 : f32
    %313 = vector.broadcast %cst_102 : f32 to vector<8x256xf32>
    %314 = arith.addf %313, %312 : vector<8x256xf32>
    %315 = arith.divf %313, %314 : vector<8x256xf32>
    %cst_103 = arith.constant 5.000000e-01 : f32
    %316 = vector.broadcast %cst_103 : f32 to vector<8x256xf32>
    %317 = arith.mulf %316, %315 : vector<8x256xf32>
    %318 = vector.extract_strided_slice %317 {offsets = [0, 0], sizes = [8, 128], strides = [1, 1]} : vector<8x256xf32> to vector<8x128xf32>
    %319 = vector.extract_strided_slice %317 {offsets = [0, 128], sizes = [8, 128], strides = [1, 1]} : vector<8x256xf32> to vector<8x128xf32>
    %320 = vector.extract_strided_slice %309 {offsets = [0, 256], sizes = [8, 128], strides = [1, 1]} : vector<8x384xf32> to vector<8x128xf32>
    %321 = math.tanh %320 : vector<8x128xf32>
    %322 = arith.subf %321, %288 : vector<8x128xf32>
    %323 = arith.mulf %319, %322 : vector<8x128xf32>
    %324 = arith.addf %288, %323 : vector<8x128xf32>
    %325 = vector.extract_strided_slice %306 {offsets = [0, 384], sizes = [8, 128], strides = [1, 1]} : vector<8x512xf32> to vector<8x128xf32>
    %cst_104 = arith.constant dense<0.000000e+00> : vector<8x128xf32>
    %326 = tpu.matmul %324, %4, %cst_104 {dimension_numbers = #tpu.dot_dimension_numbers<[1], [0], [0], [1], [0, 0, 1, 1], [], []>} : vector<8x128xf32>, vector<128x128xf32>, vector<8x128xf32> -> vector<8x128xf32>
    %327 = arith.addf %325, %326 : vector<8x128xf32>
    %328 = math.tanh %327 : vector<8x128xf32>
    %329 = arith.subf %328, %295 : vector<8x128xf32>
    %330 = arith.mulf %318, %329 : vector<8x128xf32>
    %331 = arith.addf %295, %330 : vector<8x128xf32>
    %332 = arith.index_cast %c8_i32 : i32 to index
    %c0_105 = arith.constant 0 : index
    %c0_106 = arith.constant 0 : index
    %333 = vector.load %arg9[%332, %c0_105, %c0_106] : memref<16x8x128xf32, #tpu.memory_space<vmem>>, vector<1x8x128xf32>
    %334 = vector.shape_cast %333 : vector<1x8x128xf32> to vector<8x128xf32>
    %335 = vector.shape_cast %331 : vector<8x128xf32> to vector<1x8x128xf32>
    tpu.vector_store %arg9[%332, %c0_105, %c0_106], %335 {strides = array<i32>} : memref<16x8x128xf32, #tpu.memory_space<vmem>>, vector<1x8x128xf32>,
    %336 = arith.index_cast %c8_i32 : i32 to index
    %c0_107 = arith.constant 0 : index
    %c0_108 = arith.constant 0 : index
    %337 = vector.load %arg10[%336, %c0_107, %c0_108] : memref<16x8x128xf32, #tpu.memory_space<vmem>>, vector<1x8x128xf32>
    %338 = vector.shape_cast %337 : vector<1x8x128xf32> to vector<8x128xf32>
    %339 = vector.shape_cast %324 : vector<8x128xf32> to vector<1x8x128xf32>
    tpu.vector_store %arg10[%336, %c0_107, %c0_108], %339 {strides = array<i32>} : memref<16x8x128xf32, #tpu.memory_space<vmem>>, vector<1x8x128xf32>,
    %c9_i32 = arith.constant 9 : i32
    %340 = arith.index_cast %c9_i32 : i32 to index
    %c0_109 = arith.constant 0 : index
    %c0_110 = arith.constant 0 : index
    %341 = vector.load %arg15[%340, %c0_109, %c0_110] : memref<16x8x512xf32, #tpu.memory_space<vmem>>, vector<1x8x512xf32>
    %342 = vector.shape_cast %341 : vector<1x8x512xf32> to vector<8x512xf32>
    %343 = vector.extract_strided_slice %342 {offsets = [0, 0], sizes = [8, 384], strides = [1, 1]} : vector<8x512xf32> to vector<8x384xf32>
    %cst_111 = arith.constant dense<0.000000e+00> : vector<8x384xf32>
    %344 = tpu.matmul %331, %3, %cst_111 {dimension_numbers = #tpu.dot_dimension_numbers<[1], [0], [0], [1], [0, 0, 1, 1], [], []>} : vector<8x128xf32>, vector<128x384xf32>, vector<8x384xf32> -> vector<8x384xf32>
    %345 = arith.addf %343, %344 : vector<8x384xf32>
    %346 = vector.extract_strided_slice %345 {offsets = [0, 0], sizes = [8, 256], strides = [1, 1]} : vector<8x384xf32> to vector<8x256xf32>
    %347 = arith.negf %346 : vector<8x256xf32>
    %348 = math.exp %347 : vector<8x256xf32>
    %cst_112 = arith.constant 1.000000e+00 : f32
    %349 = vector.broadcast %cst_112 : f32 to vector<8x256xf32>
    %350 = arith.addf %349, %348 : vector<8x256xf32>
    %351 = arith.divf %349, %350 : vector<8x256xf32>
    %cst_113 = arith.constant 5.000000e-01 : f32
    %352 = vector.broadcast %cst_113 : f32 to vector<8x256xf32>
    %353 = arith.mulf %352, %351 : vector<8x256xf32>
    %354 = vector.extract_strided_slice %353 {offsets = [0, 0], sizes = [8, 128], strides = [1, 1]} : vector<8x256xf32> to vector<8x128xf32>
    %355 = vector.extract_strided_slice %353 {offsets = [0, 128], sizes = [8, 128], strides = [1, 1]} : vector<8x256xf32> to vector<8x128xf32>
    %356 = vector.extract_strided_slice %345 {offsets = [0, 256], sizes = [8, 128], strides = [1, 1]} : vector<8x384xf32> to vector<8x128xf32>
    %357 = math.tanh %356 : vector<8x128xf32>
    %358 = arith.subf %357, %324 : vector<8x128xf32>
    %359 = arith.mulf %355, %358 : vector<8x128xf32>
    %360 = arith.addf %324, %359 : vector<8x128xf32>
    %361 = vector.extract_strided_slice %342 {offsets = [0, 384], sizes = [8, 128], strides = [1, 1]} : vector<8x512xf32> to vector<8x128xf32>
    %cst_114 = arith.constant dense<0.000000e+00> : vector<8x128xf32>
    %362 = tpu.matmul %360, %4, %cst_114 {dimension_numbers = #tpu.dot_dimension_numbers<[1], [0], [0], [1], [0, 0, 1, 1], [], []>} : vector<8x128xf32>, vector<128x128xf32>, vector<8x128xf32> -> vector<8x128xf32>
    %363 = arith.addf %361, %362 : vector<8x128xf32>
    %364 = math.tanh %363 : vector<8x128xf32>
    %365 = arith.subf %364, %331 : vector<8x128xf32>
    %366 = arith.mulf %354, %365 : vector<8x128xf32>
    %367 = arith.addf %331, %366 : vector<8x128xf32>
    %368 = arith.index_cast %c9_i32 : i32 to index
    %c0_115 = arith.constant 0 : index
    %c0_116 = arith.constant 0 : index
    %369 = vector.load %arg9[%368, %c0_115, %c0_116] : memref<16x8x128xf32, #tpu.memory_space<vmem>>, vector<1x8x128xf32>
    %370 = vector.shape_cast %369 : vector<1x8x128xf32> to vector<8x128xf32>
    %371 = vector.shape_cast %367 : vector<8x128xf32> to vector<1x8x128xf32>
    tpu.vector_store %arg9[%368, %c0_115, %c0_116], %371 {strides = array<i32>} : memref<16x8x128xf32, #tpu.memory_space<vmem>>, vector<1x8x128xf32>,
    %372 = arith.index_cast %c9_i32 : i32 to index
    %c0_117 = arith.constant 0 : index
    %c0_118 = arith.constant 0 : index
    %373 = vector.load %arg10[%372, %c0_117, %c0_118] : memref<16x8x128xf32, #tpu.memory_space<vmem>>, vector<1x8x128xf32>
    %374 = vector.shape_cast %373 : vector<1x8x128xf32> to vector<8x128xf32>
    %375 = vector.shape_cast %360 : vector<8x128xf32> to vector<1x8x128xf32>
    tpu.vector_store %arg10[%372, %c0_117, %c0_118], %375 {strides = array<i32>} : memref<16x8x128xf32, #tpu.memory_space<vmem>>, vector<1x8x128xf32>,
    %c10_i32 = arith.constant 10 : i32
    %376 = arith.index_cast %c10_i32 : i32 to index
    %c0_119 = arith.constant 0 : index
    %c0_120 = arith.constant 0 : index
    %377 = vector.load %arg15[%376, %c0_119, %c0_120] : memref<16x8x512xf32, #tpu.memory_space<vmem>>, vector<1x8x512xf32>
    %378 = vector.shape_cast %377 : vector<1x8x512xf32> to vector<8x512xf32>
    %379 = vector.extract_strided_slice %378 {offsets = [0, 0], sizes = [8, 384], strides = [1, 1]} : vector<8x512xf32> to vector<8x384xf32>
    %cst_121 = arith.constant dense<0.000000e+00> : vector<8x384xf32>
    %380 = tpu.matmul %367, %3, %cst_121 {dimension_numbers = #tpu.dot_dimension_numbers<[1], [0], [0], [1], [0, 0, 1, 1], [], []>} : vector<8x128xf32>, vector<128x384xf32>, vector<8x384xf32> -> vector<8x384xf32>
    %381 = arith.addf %379, %380 : vector<8x384xf32>
    %382 = vector.extract_strided_slice %381 {offsets = [0, 0], sizes = [8, 256], strides = [1, 1]} : vector<8x384xf32> to vector<8x256xf32>
    %383 = arith.negf %382 : vector<8x256xf32>
    %384 = math.exp %383 : vector<8x256xf32>
    %cst_122 = arith.constant 1.000000e+00 : f32
    %385 = vector.broadcast %cst_122 : f32 to vector<8x256xf32>
    %386 = arith.addf %385, %384 : vector<8x256xf32>
    %387 = arith.divf %385, %386 : vector<8x256xf32>
    %cst_123 = arith.constant 5.000000e-01 : f32
    %388 = vector.broadcast %cst_123 : f32 to vector<8x256xf32>
    %389 = arith.mulf %388, %387 : vector<8x256xf32>
    %390 = vector.extract_strided_slice %389 {offsets = [0, 0], sizes = [8, 128], strides = [1, 1]} : vector<8x256xf32> to vector<8x128xf32>
    %391 = vector.extract_strided_slice %389 {offsets = [0, 128], sizes = [8, 128], strides = [1, 1]} : vector<8x256xf32> to vector<8x128xf32>
    %392 = vector.extract_strided_slice %381 {offsets = [0, 256], sizes = [8, 128], strides = [1, 1]} : vector<8x384xf32> to vector<8x128xf32>
    %393 = math.tanh %392 : vector<8x128xf32>
    %394 = arith.subf %393, %360 : vector<8x128xf32>
    %395 = arith.mulf %391, %394 : vector<8x128xf32>
    %396 = arith.addf %360, %395 : vector<8x128xf32>
    %397 = vector.extract_strided_slice %378 {offsets = [0, 384], sizes = [8, 128], strides = [1, 1]} : vector<8x512xf32> to vector<8x128xf32>
    %cst_124 = arith.constant dense<0.000000e+00> : vector<8x128xf32>
    %398 = tpu.matmul %396, %4, %cst_124 {dimension_numbers = #tpu.dot_dimension_numbers<[1], [0], [0], [1], [0, 0, 1, 1], [], []>} : vector<8x128xf32>, vector<128x128xf32>, vector<8x128xf32> -> vector<8x128xf32>
    %399 = arith.addf %397, %398 : vector<8x128xf32>
    %400 = math.tanh %399 : vector<8x128xf32>
    %401 = arith.subf %400, %367 : vector<8x128xf32>
    %402 = arith.mulf %390, %401 : vector<8x128xf32>
    %403 = arith.addf %367, %402 : vector<8x128xf32>
    %404 = arith.index_cast %c10_i32 : i32 to index
    %c0_125 = arith.constant 0 : index
    %c0_126 = arith.constant 0 : index
    %405 = vector.load %arg9[%404, %c0_125, %c0_126] : memref<16x8x128xf32, #tpu.memory_space<vmem>>, vector<1x8x128xf32>
    %406 = vector.shape_cast %405 : vector<1x8x128xf32> to vector<8x128xf32>
    %407 = vector.shape_cast %403 : vector<8x128xf32> to vector<1x8x128xf32>
    tpu.vector_store %arg9[%404, %c0_125, %c0_126], %407 {strides = array<i32>} : memref<16x8x128xf32, #tpu.memory_space<vmem>>, vector<1x8x128xf32>,
    %408 = arith.index_cast %c10_i32 : i32 to index
    %c0_127 = arith.constant 0 : index
    %c0_128 = arith.constant 0 : index
    %409 = vector.load %arg10[%408, %c0_127, %c0_128] : memref<16x8x128xf32, #tpu.memory_space<vmem>>, vector<1x8x128xf32>
    %410 = vector.shape_cast %409 : vector<1x8x128xf32> to vector<8x128xf32>
    %411 = vector.shape_cast %396 : vector<8x128xf32> to vector<1x8x128xf32>
    tpu.vector_store %arg10[%408, %c0_127, %c0_128], %411 {strides = array<i32>} : memref<16x8x128xf32, #tpu.memory_space<vmem>>, vector<1x8x128xf32>,
    %c11_i32 = arith.constant 11 : i32
    %412 = arith.index_cast %c11_i32 : i32 to index
    %c0_129 = arith.constant 0 : index
    %c0_130 = arith.constant 0 : index
    %413 = vector.load %arg15[%412, %c0_129, %c0_130] : memref<16x8x512xf32, #tpu.memory_space<vmem>>, vector<1x8x512xf32>
    %414 = vector.shape_cast %413 : vector<1x8x512xf32> to vector<8x512xf32>
    %415 = vector.extract_strided_slice %414 {offsets = [0, 0], sizes = [8, 384], strides = [1, 1]} : vector<8x512xf32> to vector<8x384xf32>
    %cst_131 = arith.constant dense<0.000000e+00> : vector<8x384xf32>
    %416 = tpu.matmul %403, %3, %cst_131 {dimension_numbers = #tpu.dot_dimension_numbers<[1], [0], [0], [1], [0, 0, 1, 1], [], []>} : vector<8x128xf32>, vector<128x384xf32>, vector<8x384xf32> -> vector<8x384xf32>
    %417 = arith.addf %415, %416 : vector<8x384xf32>
    %418 = vector.extract_strided_slice %417 {offsets = [0, 0], sizes = [8, 256], strides = [1, 1]} : vector<8x384xf32> to vector<8x256xf32>
    %419 = arith.negf %418 : vector<8x256xf32>
    %420 = math.exp %419 : vector<8x256xf32>
    %cst_132 = arith.constant 1.000000e+00 : f32
    %421 = vector.broadcast %cst_132 : f32 to vector<8x256xf32>
    %422 = arith.addf %421, %420 : vector<8x256xf32>
    %423 = arith.divf %421, %422 : vector<8x256xf32>
    %cst_133 = arith.constant 5.000000e-01 : f32
    %424 = vector.broadcast %cst_133 : f32 to vector<8x256xf32>
    %425 = arith.mulf %424, %423 : vector<8x256xf32>
    %426 = vector.extract_strided_slice %425 {offsets = [0, 0], sizes = [8, 128], strides = [1, 1]} : vector<8x256xf32> to vector<8x128xf32>
    %427 = vector.extract_strided_slice %425 {offsets = [0, 128], sizes = [8, 128], strides = [1, 1]} : vector<8x256xf32> to vector<8x128xf32>
    %428 = vector.extract_strided_slice %417 {offsets = [0, 256], sizes = [8, 128], strides = [1, 1]} : vector<8x384xf32> to vector<8x128xf32>
    %429 = math.tanh %428 : vector<8x128xf32>
    %430 = arith.subf %429, %396 : vector<8x128xf32>
    %431 = arith.mulf %427, %430 : vector<8x128xf32>
    %432 = arith.addf %396, %431 : vector<8x128xf32>
    %433 = vector.extract_strided_slice %414 {offsets = [0, 384], sizes = [8, 128], strides = [1, 1]} : vector<8x512xf32> to vector<8x128xf32>
    %cst_134 = arith.constant dense<0.000000e+00> : vector<8x128xf32>
    %434 = tpu.matmul %432, %4, %cst_134 {dimension_numbers = #tpu.dot_dimension_numbers<[1], [0], [0], [1], [0, 0, 1, 1], [], []>} : vector<8x128xf32>, vector<128x128xf32>, vector<8x128xf32> -> vector<8x128xf32>
    %435 = arith.addf %433, %434 : vector<8x128xf32>
    %436 = math.tanh %435 : vector<8x128xf32>
    %437 = arith.subf %436, %403 : vector<8x128xf32>
    %438 = arith.mulf %426, %437 : vector<8x128xf32>
    %439 = arith.addf %403, %438 : vector<8x128xf32>
    %440 = arith.index_cast %c11_i32 : i32 to index
    %c0_135 = arith.constant 0 : index
    %c0_136 = arith.constant 0 : index
    %441 = vector.load %arg9[%440, %c0_135, %c0_136] : memref<16x8x128xf32, #tpu.memory_space<vmem>>, vector<1x8x128xf32>
    %442 = vector.shape_cast %441 : vector<1x8x128xf32> to vector<8x128xf32>
    %443 = vector.shape_cast %439 : vector<8x128xf32> to vector<1x8x128xf32>
    tpu.vector_store %arg9[%440, %c0_135, %c0_136], %443 {strides = array<i32>} : memref<16x8x128xf32, #tpu.memory_space<vmem>>, vector<1x8x128xf32>,
    %444 = arith.index_cast %c11_i32 : i32 to index
    %c0_137 = arith.constant 0 : index
    %c0_138 = arith.constant 0 : index
    %445 = vector.load %arg10[%444, %c0_137, %c0_138] : memref<16x8x128xf32, #tpu.memory_space<vmem>>, vector<1x8x128xf32>
    %446 = vector.shape_cast %445 : vector<1x8x128xf32> to vector<8x128xf32>
    %447 = vector.shape_cast %432 : vector<8x128xf32> to vector<1x8x128xf32>
    tpu.vector_store %arg10[%444, %c0_137, %c0_138], %447 {strides = array<i32>} : memref<16x8x128xf32, #tpu.memory_space<vmem>>, vector<1x8x128xf32>,
    %c12_i32 = arith.constant 12 : i32
    %448 = arith.index_cast %c12_i32 : i32 to index
    %c0_139 = arith.constant 0 : index
    %c0_140 = arith.constant 0 : index
    %449 = vector.load %arg15[%448, %c0_139, %c0_140] : memref<16x8x512xf32, #tpu.memory_space<vmem>>, vector<1x8x512xf32>
    %450 = vector.shape_cast %449 : vector<1x8x512xf32> to vector<8x512xf32>
    %451 = vector.extract_strided_slice %450 {offsets = [0, 0], sizes = [8, 384], strides = [1, 1]} : vector<8x512xf32> to vector<8x384xf32>
    %cst_141 = arith.constant dense<0.000000e+00> : vector<8x384xf32>
    %452 = tpu.matmul %439, %3, %cst_141 {dimension_numbers = #tpu.dot_dimension_numbers<[1], [0], [0], [1], [0, 0, 1, 1], [], []>} : vector<8x128xf32>, vector<128x384xf32>, vector<8x384xf32> -> vector<8x384xf32>
    %453 = arith.addf %451, %452 : vector<8x384xf32>
    %454 = vector.extract_strided_slice %453 {offsets = [0, 0], sizes = [8, 256], strides = [1, 1]} : vector<8x384xf32> to vector<8x256xf32>
    %455 = arith.negf %454 : vector<8x256xf32>
    %456 = math.exp %455 : vector<8x256xf32>
    %cst_142 = arith.constant 1.000000e+00 : f32
    %457 = vector.broadcast %cst_142 : f32 to vector<8x256xf32>
    %458 = arith.addf %457, %456 : vector<8x256xf32>
    %459 = arith.divf %457, %458 : vector<8x256xf32>
    %cst_143 = arith.constant 5.000000e-01 : f32
    %460 = vector.broadcast %cst_143 : f32 to vector<8x256xf32>
    %461 = arith.mulf %460, %459 : vector<8x256xf32>
    %462 = vector.extract_strided_slice %461 {offsets = [0, 0], sizes = [8, 128], strides = [1, 1]} : vector<8x256xf32> to vector<8x128xf32>
    %463 = vector.extract_strided_slice %461 {offsets = [0, 128], sizes = [8, 128], strides = [1, 1]} : vector<8x256xf32> to vector<8x128xf32>
    %464 = vector.extract_strided_slice %453 {offsets = [0, 256], sizes = [8, 128], strides = [1, 1]} : vector<8x384xf32> to vector<8x128xf32>
    %465 = math.tanh %464 : vector<8x128xf32>
    %466 = arith.subf %465, %432 : vector<8x128xf32>
    %467 = arith.mulf %463, %466 : vector<8x128xf32>
    %468 = arith.addf %432, %467 : vector<8x128xf32>
    %469 = vector.extract_strided_slice %450 {offsets = [0, 384], sizes = [8, 128], strides = [1, 1]} : vector<8x512xf32> to vector<8x128xf32>
    %cst_144 = arith.constant dense<0.000000e+00> : vector<8x128xf32>
    %470 = tpu.matmul %468, %4, %cst_144 {dimension_numbers = #tpu.dot_dimension_numbers<[1], [0], [0], [1], [0, 0, 1, 1], [], []>} : vector<8x128xf32>, vector<128x128xf32>, vector<8x128xf32> -> vector<8x128xf32>
    %471 = arith.addf %469, %470 : vector<8x128xf32>
    %472 = math.tanh %471 : vector<8x128xf32>
    %473 = arith.subf %472, %439 : vector<8x128xf32>
    %474 = arith.mulf %462, %473 : vector<8x128xf32>
    %475 = arith.addf %439, %474 : vector<8x128xf32>
    %476 = arith.index_cast %c12_i32 : i32 to index
    %c0_145 = arith.constant 0 : index
    %c0_146 = arith.constant 0 : index
    %477 = vector.load %arg9[%476, %c0_145, %c0_146] : memref<16x8x128xf32, #tpu.memory_space<vmem>>, vector<1x8x128xf32>
    %478 = vector.shape_cast %477 : vector<1x8x128xf32> to vector<8x128xf32>
    %479 = vector.shape_cast %475 : vector<8x128xf32> to vector<1x8x128xf32>
    tpu.vector_store %arg9[%476, %c0_145, %c0_146], %479 {strides = array<i32>} : memref<16x8x128xf32, #tpu.memory_space<vmem>>, vector<1x8x128xf32>,
    %480 = arith.index_cast %c12_i32 : i32 to index
    %c0_147 = arith.constant 0 : index
    %c0_148 = arith.constant 0 : index
    %481 = vector.load %arg10[%480, %c0_147, %c0_148] : memref<16x8x128xf32, #tpu.memory_space<vmem>>, vector<1x8x128xf32>
    %482 = vector.shape_cast %481 : vector<1x8x128xf32> to vector<8x128xf32>
    %483 = vector.shape_cast %468 : vector<8x128xf32> to vector<1x8x128xf32>
    tpu.vector_store %arg10[%480, %c0_147, %c0_148], %483 {strides = array<i32>} : memref<16x8x128xf32, #tpu.memory_space<vmem>>, vector<1x8x128xf32>,
    %c13_i32 = arith.constant 13 : i32
    %484 = arith.index_cast %c13_i32 : i32 to index
    %c0_149 = arith.constant 0 : index
    %c0_150 = arith.constant 0 : index
    %485 = vector.load %arg15[%484, %c0_149, %c0_150] : memref<16x8x512xf32, #tpu.memory_space<vmem>>, vector<1x8x512xf32>
    %486 = vector.shape_cast %485 : vector<1x8x512xf32> to vector<8x512xf32>
    %487 = vector.extract_strided_slice %486 {offsets = [0, 0], sizes = [8, 384], strides = [1, 1]} : vector<8x512xf32> to vector<8x384xf32>
    %cst_151 = arith.constant dense<0.000000e+00> : vector<8x384xf32>
    %488 = tpu.matmul %475, %3, %cst_151 {dimension_numbers = #tpu.dot_dimension_numbers<[1], [0], [0], [1], [0, 0, 1, 1], [], []>} : vector<8x128xf32>, vector<128x384xf32>, vector<8x384xf32> -> vector<8x384xf32>
    %489 = arith.addf %487, %488 : vector<8x384xf32>
    %490 = vector.extract_strided_slice %489 {offsets = [0, 0], sizes = [8, 256], strides = [1, 1]} : vector<8x384xf32> to vector<8x256xf32>
    %491 = arith.negf %490 : vector<8x256xf32>
    %492 = math.exp %491 : vector<8x256xf32>
    %cst_152 = arith.constant 1.000000e+00 : f32
    %493 = vector.broadcast %cst_152 : f32 to vector<8x256xf32>
    %494 = arith.addf %493, %492 : vector<8x256xf32>
    %495 = arith.divf %493, %494 : vector<8x256xf32>
    %cst_153 = arith.constant 5.000000e-01 : f32
    %496 = vector.broadcast %cst_153 : f32 to vector<8x256xf32>
    %497 = arith.mulf %496, %495 : vector<8x256xf32>
    %498 = vector.extract_strided_slice %497 {offsets = [0, 0], sizes = [8, 128], strides = [1, 1]} : vector<8x256xf32> to vector<8x128xf32>
    %499 = vector.extract_strided_slice %497 {offsets = [0, 128], sizes = [8, 128], strides = [1, 1]} : vector<8x256xf32> to vector<8x128xf32>
    %500 = vector.extract_strided_slice %489 {offsets = [0, 256], sizes = [8, 128], strides = [1, 1]} : vector<8x384xf32> to vector<8x128xf32>
    %501 = math.tanh %500 : vector<8x128xf32>
    %502 = arith.subf %501, %468 : vector<8x128xf32>
    %503 = arith.mulf %499, %502 : vector<8x128xf32>
    %504 = arith.addf %468, %503 : vector<8x128xf32>
    %505 = vector.extract_strided_slice %486 {offsets = [0, 384], sizes = [8, 128], strides = [1, 1]} : vector<8x512xf32> to vector<8x128xf32>
    %cst_154 = arith.constant dense<0.000000e+00> : vector<8x128xf32>
    %506 = tpu.matmul %504, %4, %cst_154 {dimension_numbers = #tpu.dot_dimension_numbers<[1], [0], [0], [1], [0, 0, 1, 1], [], []>} : vector<8x128xf32>, vector<128x128xf32>, vector<8x128xf32> -> vector<8x128xf32>
    %507 = arith.addf %505, %506 : vector<8x128xf32>
    %508 = math.tanh %507 : vector<8x128xf32>
    %509 = arith.subf %508, %475 : vector<8x128xf32>
    %510 = arith.mulf %498, %509 : vector<8x128xf32>
    %511 = arith.addf %475, %510 : vector<8x128xf32>
    %512 = arith.index_cast %c13_i32 : i32 to index
    %c0_155 = arith.constant 0 : index
    %c0_156 = arith.constant 0 : index
    %513 = vector.load %arg9[%512, %c0_155, %c0_156] : memref<16x8x128xf32, #tpu.memory_space<vmem>>, vector<1x8x128xf32>
    %514 = vector.shape_cast %513 : vector<1x8x128xf32> to vector<8x128xf32>
    %515 = vector.shape_cast %511 : vector<8x128xf32> to vector<1x8x128xf32>
    tpu.vector_store %arg9[%512, %c0_155, %c0_156], %515 {strides = array<i32>} : memref<16x8x128xf32, #tpu.memory_space<vmem>>, vector<1x8x128xf32>,
    %516 = arith.index_cast %c13_i32 : i32 to index
    %c0_157 = arith.constant 0 : index
    %c0_158 = arith.constant 0 : index
    %517 = vector.load %arg10[%516, %c0_157, %c0_158] : memref<16x8x128xf32, #tpu.memory_space<vmem>>, vector<1x8x128xf32>
    %518 = vector.shape_cast %517 : vector<1x8x128xf32> to vector<8x128xf32>
    %519 = vector.shape_cast %504 : vector<8x128xf32> to vector<1x8x128xf32>
    tpu.vector_store %arg10[%516, %c0_157, %c0_158], %519 {strides = array<i32>} : memref<16x8x128xf32, #tpu.memory_space<vmem>>, vector<1x8x128xf32>,
    %c14_i32 = arith.constant 14 : i32
    %520 = arith.index_cast %c14_i32 : i32 to index
    %c0_159 = arith.constant 0 : index
    %c0_160 = arith.constant 0 : index
    %521 = vector.load %arg15[%520, %c0_159, %c0_160] : memref<16x8x512xf32, #tpu.memory_space<vmem>>, vector<1x8x512xf32>
    %522 = vector.shape_cast %521 : vector<1x8x512xf32> to vector<8x512xf32>
    %523 = vector.extract_strided_slice %522 {offsets = [0, 0], sizes = [8, 384], strides = [1, 1]} : vector<8x512xf32> to vector<8x384xf32>
    %cst_161 = arith.constant dense<0.000000e+00> : vector<8x384xf32>
    %524 = tpu.matmul %511, %3, %cst_161 {dimension_numbers = #tpu.dot_dimension_numbers<[1], [0], [0], [1], [0, 0, 1, 1], [], []>} : vector<8x128xf32>, vector<128x384xf32>, vector<8x384xf32> -> vector<8x384xf32>
    %525 = arith.addf %523, %524 : vector<8x384xf32>
    %526 = vector.extract_strided_slice %525 {offsets = [0, 0], sizes = [8, 256], strides = [1, 1]} : vector<8x384xf32> to vector<8x256xf32>
    %527 = arith.negf %526 : vector<8x256xf32>
    %528 = math.exp %527 : vector<8x256xf32>
    %cst_162 = arith.constant 1.000000e+00 : f32
    %529 = vector.broadcast %cst_162 : f32 to vector<8x256xf32>
    %530 = arith.addf %529, %528 : vector<8x256xf32>
    %531 = arith.divf %529, %530 : vector<8x256xf32>
    %cst_163 = arith.constant 5.000000e-01 : f32
    %532 = vector.broadcast %cst_163 : f32 to vector<8x256xf32>
    %533 = arith.mulf %532, %531 : vector<8x256xf32>
    %534 = vector.extract_strided_slice %533 {offsets = [0, 0], sizes = [8, 128], strides = [1, 1]} : vector<8x256xf32> to vector<8x128xf32>
    %535 = vector.extract_strided_slice %533 {offsets = [0, 128], sizes = [8, 128], strides = [1, 1]} : vector<8x256xf32> to vector<8x128xf32>
    %536 = vector.extract_strided_slice %525 {offsets = [0, 256], sizes = [8, 128], strides = [1, 1]} : vector<8x384xf32> to vector<8x128xf32>
    %537 = math.tanh %536 : vector<8x128xf32>
    %538 = arith.subf %537, %504 : vector<8x128xf32>
    %539 = arith.mulf %535, %538 : vector<8x128xf32>
    %540 = arith.addf %504, %539 : vector<8x128xf32>
    %541 = vector.extract_strided_slice %522 {offsets = [0, 384], sizes = [8, 128], strides = [1, 1]} : vector<8x512xf32> to vector<8x128xf32>
    %cst_164 = arith.constant dense<0.000000e+00> : vector<8x128xf32>
    %542 = tpu.matmul %540, %4, %cst_164 {dimension_numbers = #tpu.dot_dimension_numbers<[1], [0], [0], [1], [0, 0, 1, 1], [], []>} : vector<8x128xf32>, vector<128x128xf32>, vector<8x128xf32> -> vector<8x128xf32>
    %543 = arith.addf %541, %542 : vector<8x128xf32>
    %544 = math.tanh %543 : vector<8x128xf32>
    %545 = arith.subf %544, %511 : vector<8x128xf32>
    %546 = arith.mulf %534, %545 : vector<8x128xf32>
    %547 = arith.addf %511, %546 : vector<8x128xf32>
    %548 = arith.index_cast %c14_i32 : i32 to index
    %c0_165 = arith.constant 0 : index
    %c0_166 = arith.constant 0 : index
    %549 = vector.load %arg9[%548, %c0_165, %c0_166] : memref<16x8x128xf32, #tpu.memory_space<vmem>>, vector<1x8x128xf32>
    %550 = vector.shape_cast %549 : vector<1x8x128xf32> to vector<8x128xf32>
    %551 = vector.shape_cast %547 : vector<8x128xf32> to vector<1x8x128xf32>
    tpu.vector_store %arg9[%548, %c0_165, %c0_166], %551 {strides = array<i32>} : memref<16x8x128xf32, #tpu.memory_space<vmem>>, vector<1x8x128xf32>,
    %552 = arith.index_cast %c14_i32 : i32 to index
    %c0_167 = arith.constant 0 : index
    %c0_168 = arith.constant 0 : index
    %553 = vector.load %arg10[%552, %c0_167, %c0_168] : memref<16x8x128xf32, #tpu.memory_space<vmem>>, vector<1x8x128xf32>
    %554 = vector.shape_cast %553 : vector<1x8x128xf32> to vector<8x128xf32>
    %555 = vector.shape_cast %540 : vector<8x128xf32> to vector<1x8x128xf32>
    tpu.vector_store %arg10[%552, %c0_167, %c0_168], %555 {strides = array<i32>} : memref<16x8x128xf32, #tpu.memory_space<vmem>>, vector<1x8x128xf32>,
    %c15_i32 = arith.constant 15 : i32
    %556 = arith.index_cast %c15_i32 : i32 to index
    %c0_169 = arith.constant 0 : index
    %c0_170 = arith.constant 0 : index
    %557 = vector.load %arg15[%556, %c0_169, %c0_170] : memref<16x8x512xf32, #tpu.memory_space<vmem>>, vector<1x8x512xf32>
    %558 = vector.shape_cast %557 : vector<1x8x512xf32> to vector<8x512xf32>
    %559 = vector.extract_strided_slice %558 {offsets = [0, 0], sizes = [8, 384], strides = [1, 1]} : vector<8x512xf32> to vector<8x384xf32>
    %cst_171 = arith.constant dense<0.000000e+00> : vector<8x384xf32>
    %560 = tpu.matmul %547, %3, %cst_171 {dimension_numbers = #tpu.dot_dimension_numbers<[1], [0], [0], [1], [0, 0, 1, 1], [], []>} : vector<8x128xf32>, vector<128x384xf32>, vector<8x384xf32> -> vector<8x384xf32>
    %561 = arith.addf %559, %560 : vector<8x384xf32>
    %562 = vector.extract_strided_slice %561 {offsets = [0, 0], sizes = [8, 256], strides = [1, 1]} : vector<8x384xf32> to vector<8x256xf32>
    %563 = arith.negf %562 : vector<8x256xf32>
    %564 = math.exp %563 : vector<8x256xf32>
    %cst_172 = arith.constant 1.000000e+00 : f32
    %565 = vector.broadcast %cst_172 : f32 to vector<8x256xf32>
    %566 = arith.addf %565, %564 : vector<8x256xf32>
    %567 = arith.divf %565, %566 : vector<8x256xf32>
    %cst_173 = arith.constant 5.000000e-01 : f32
    %568 = vector.broadcast %cst_173 : f32 to vector<8x256xf32>
    %569 = arith.mulf %568, %567 : vector<8x256xf32>
    %570 = vector.extract_strided_slice %569 {offsets = [0, 0], sizes = [8, 128], strides = [1, 1]} : vector<8x256xf32> to vector<8x128xf32>
    %571 = vector.extract_strided_slice %569 {offsets = [0, 128], sizes = [8, 128], strides = [1, 1]} : vector<8x256xf32> to vector<8x128xf32>
    %572 = vector.extract_strided_slice %561 {offsets = [0, 256], sizes = [8, 128], strides = [1, 1]} : vector<8x384xf32> to vector<8x128xf32>
    %573 = math.tanh %572 : vector<8x128xf32>
    %574 = arith.subf %573, %540 : vector<8x128xf32>
    %575 = arith.mulf %571, %574 : vector<8x128xf32>
    %576 = arith.addf %540, %575 : vector<8x128xf32>
    %577 = vector.extract_strided_slice %558 {offsets = [0, 384], sizes = [8, 128], strides = [1, 1]} : vector<8x512xf32> to vector<8x128xf32>
    %cst_174 = arith.constant dense<0.000000e+00> : vector<8x128xf32>
    %578 = tpu.matmul %576, %4, %cst_174 {dimension_numbers = #tpu.dot_dimension_numbers<[1], [0], [0], [1], [0, 0, 1, 1], [], []>} : vector<8x128xf32>, vector<128x128xf32>, vector<8x128xf32> -> vector<8x128xf32>
    %579 = arith.addf %577, %578 : vector<8x128xf32>
    %580 = math.tanh %579 : vector<8x128xf32>
    %581 = arith.subf %580, %547 : vector<8x128xf32>
    %582 = arith.mulf %570, %581 : vector<8x128xf32>
    %583 = arith.addf %547, %582 : vector<8x128xf32>
    %584 = arith.index_cast %c15_i32 : i32 to index
    %c0_175 = arith.constant 0 : index
    %c0_176 = arith.constant 0 : index
    %585 = vector.load %arg9[%584, %c0_175, %c0_176] : memref<16x8x128xf32, #tpu.memory_space<vmem>>, vector<1x8x128xf32>
    %586 = vector.shape_cast %585 : vector<1x8x128xf32> to vector<8x128xf32>
    %587 = vector.shape_cast %583 : vector<8x128xf32> to vector<1x8x128xf32>
    tpu.vector_store %arg9[%584, %c0_175, %c0_176], %587 {strides = array<i32>} : memref<16x8x128xf32, #tpu.memory_space<vmem>>, vector<1x8x128xf32>,
    %588 = arith.index_cast %c15_i32 : i32 to index
    %c0_177 = arith.constant 0 : index
    %c0_178 = arith.constant 0 : index
    %589 = vector.load %arg10[%588, %c0_177, %c0_178] : memref<16x8x128xf32, #tpu.memory_space<vmem>>, vector<1x8x128xf32>
    %590 = vector.shape_cast %589 : vector<1x8x128xf32> to vector<8x128xf32>
    %591 = vector.shape_cast %576 : vector<8x128xf32> to vector<1x8x128xf32>
    tpu.vector_store %arg10[%588, %c0_177, %c0_178], %591 {strides = array<i32>} : memref<16x8x128xf32, #tpu.memory_space<vmem>>, vector<1x8x128xf32>,
    %c16_i32 = arith.constant 16 : i32
    %c0_179 = arith.constant 0 : index
    %c0_180 = arith.constant 0 : index
    %592 = vector.load %arg16[%c0_179, %c0_180] : memref<8x128xf32, #tpu.memory_space<vmem>>, vector<8x128xf32>
    tpu.vector_store %arg16[%c0_179, %c0_180], %583 {strides = array<i32>} : memref<8x128xf32, #tpu.memory_space<vmem>>, vector<8x128xf32>,
    %c0_181 = arith.constant 0 : index
    %c0_182 = arith.constant 0 : index
    %593 = vector.load %arg17[%c0_181, %c0_182] : memref<8x128xf32, #tpu.memory_space<vmem>>, vector<8x128xf32>
    tpu.vector_store %arg17[%c0_181, %c0_182], %576 {strides = array<i32>} : memref<8x128xf32, #tpu.memory_space<vmem>>, vector<8x128xf32>,
    return
  }
  func.func @transform_0(%arg0: i32, %arg1: i32) -> (i32, i32, i32) {
    %c0_i32 = arith.constant 0 : i32
    %c0_i32_0 = arith.constant 0 : i32
    return %arg1, %arg0, %c0_i32 : i32, i32, i32
  }
  func.func @transform_5(%arg0: i32, %arg1: i32) -> (i32, i32) {
    %c0_i32 = arith.constant 0 : i32
    %c0_i32_0 = arith.constant 0 : i32
    return %arg0, %c0_i32 : i32, i32
  }
  func.func @transform_6(%arg0: i32, %arg1: i32) -> (i32, i32) {
    %c0_i32 = arith.constant 0 : i32
    %c0_i32_0 = arith.constant 0 : i32
    return %arg0, %c0_i32 : i32, i32
  }
  func.func @transform_7(%arg0: i32, %arg1: i32) -> (i32, i32, i32) {
    %c0_i32 = arith.constant 0 : i32
    %c0_i32_0 = arith.constant 0 : i32
    return %arg1, %arg0, %c0_i32 : i32, i32, i32
  }
  func.func @transform_8(%arg0: i32, %arg1: i32) -> (i32, i32, i32) {
    %c0_i32 = arith.constant 0 : i32
    %c0_i32_0 = arith.constant 0 : i32
    return %arg1, %arg0, %c0_i32 : i32, i32, i32
  }
}

</mosaic_0001>

<llo_original>
// kernel: tpu_custom_call.1
$region0: #{tpu_custom_call.1}
  #allocation0 [shape = 'u32[]', space=smem, size = 0x4, offset = 0x4, fixed_abs, tag = 'smem constant byte address 0x4 - core index']
  #allocation1 [shape = 'u32[144,128]{1,0:T(1,128)}', space=vmem, size = 0x12000, scoped, tag = 'internal scratch']
  #allocation2 [shape = 'f32[16,512]{1,0:T(8,128)}', space=vmem, size = 0x8000, scoped, tag = 'scratch operand']
  #allocation3 [shape = 'f32[128,384]{1,0:T(8,128)}', space=vmem, size = 0x30000, scoped, tag = 'scratch operand']
  #allocation4 [shape = 'f32[128,128]{1,0:T(8,128)}', space=vmem, size = 0x10000, scoped, tag = 'scratch operand']
  #allocation5 [shape = 'f32[1,512]{1,0:T(1,128)}', space=vmem, size = 0x800, scoped, tag = 'scratch operand']
  #allocation6 [shape = 'f32[16,8,512]{2,1,0:T(8,128)}', space=vmem, size = 0x40000, scoped, tag = 'scratch operand']
  #allocation7 [shape = 'f32[8,128]{1,0:T(8,128)}', space=vmem, size = 0x1000, scoped, tag = 'scratch operand']
  #allocation8 [shape = 'f32[8,128]{1,0:T(8,128)}', space=vmem, size = 0x1000, scoped, tag = 'scratch operand']
  #allocation14 [shape = 's32[]', space=sflag, size = 0x4, offset = 0, fixed_abs, tag = 'sflag constant byte address 0x0 - dummy sync flag']
  #allocation15 [shape = 's32[]', space=sflag, size = 0x4, offset = 0, fixed_abs, tag = 'sflag constant byte address 0x0 - dummy sync flag']
  #allocation16 [shape = 'u32[]', space=smem, size = 0x4, offset = 0x44, fixed_abs, tag = 'smem constant byte address 0x44 - assertion arg 0']
  #allocation17 [shape = 'u32[]', space=smem, size = 0x4, offset = 0x48, fixed_abs, tag = 'smem constant byte address 0x48 - assertion arg 1']
  #allocation19 [shape = 's32[]', space=sflag, size = 0x4, offset = 0, fixed_abs, tag = 'sflag constant byte address 0x0 - dummy sync flag']
  #allocation21 [shape = 's32[]', space=sflag, size = 0x4, offset = 0, fixed_abs, tag = 'sflag constant byte address 0x0 - dummy sync flag']
  #allocation22 [shape = 's32[]', space=sflag, size = 0x4, offset = 0, fixed_abs, tag = 'sflag constant byte address 0x0 - dummy sync flag']
  #allocation24 [shape = 's32[]', space=sflag, size = 0x4, offset = 0, fixed_abs, tag = 'sflag constant byte address 0x0 - dummy sync flag']
  %s0 = inlined_call_operand.vmem [shape: f32[32,8,16], index: 0, kind: input, shape index: {}]
  %s1 = inlined_call_operand.hbm [shape: f32[16,512], index: 1, kind: input, shape index: {}]
  %s2 = inlined_call_operand.vmem [shape: f32[128,384], index: 2, kind: input, shape index: {}]
  %s3 = inlined_call_operand.hbm [shape: f32[128,128], index: 3, kind: input, shape index: {}]
  %s4 = inlined_call_operand.vmem [shape: f32[1,512], index: 4, kind: input, shape index: {}]
  %s5 = inlined_call_operand.vmem [shape: f32[8,128], index: 5, kind: input, shape index: {}]
  %s6 = inlined_call_operand.vmem [shape: f32[8,128], index: 6, kind: input, shape index: {}]
  %s7 = inlined_call_operand.hbm [shape: f32[32,8,128], index: 7, kind: output, shape index: {0}]
  %s8 = inlined_call_operand.hbm [shape: f32[32,8,128], index: 8, kind: output, shape index: {1}]
  %9 = xla_tuple %s7, %s8
  %s10 = sld [smem:[#allocation0]]
  $region133: #{tpu_custom_call.1} parent=0
    _
  %s12 = ssub.s32 1, %s10
  %s13 = scalar_select 0, %s12, %s10
  $region1: #{tpu_custom_call.1} parent=0
    #allocation9 [shape = 'u8[131072]{0}', space=vmem, size = 0x20000, scoped, tag = 'output window, operand 0']
    #allocation10 [shape = 's32[2]{0}', space=sflag, size = 0x8, scoped, tag = 'scoped memory for tpu_custom_call.1']
    #allocation11 [shape = 'u8[131072]{0}', space=vmem, size = 0x20000, scoped, tag = 'output window, operand 1']
    #allocation12 [shape = 's32[2]{0}', space=sflag, size = 0x8, scoped, tag = 'scoped memory for tpu_custom_call.1']
    %14 = vsyncpa [#allocation10], 0
    %s15 = scalar_lea.sflag [#allocation10], 1
    %16 = vsyncpa %s15, 0
    %17 = vsyncpa [#allocation12], 0
    %s18 = scalar_lea.sflag [#allocation12], 1
    %19 = vsyncpa %s18, 0
    loop: start=0, step=1, limit=4
    $region2: #{tpu_custom_call.1} parent=1 // loop_pre_header
      _
    $region3: #{tpu_custom_call.1} parent=1 // loop_header
      %s21 = sphi 0, %s25
      %p22 = scmp.ge.s32.totalorder %s21, 4
      %s28 = sphi 0, %s40
      %s29 = sphi 0, %s36
      %s30 = sphi 0, %s28
      %s31 = sphi 0, %s29
      %s32 = sphi 0, %s30
      %s33 = sphi 0, %s31
      %s45 = sphi 0, %s47
      %s48 = sphi 0, %s45
      %s49 = sphi 0, %s48
      %s65 = sphi 0, %s49
      %s71 = sphi 0, %s73
      %s74 = sphi 0, %s71
      %s75 = sphi 0, %s74
      %s91 = sphi 0, %s75
      %s97 = sphi 0, %s99
      %s100 = sphi 0, %s97
      %s101 = sphi 0, %s100
      %s117 = sphi 0, %s101
      %s125 = sphi 0, %s127
      %s128 = sphi 0, %s125
      %s129 = sphi 0, %s128
      %s145 = sphi 0, %s129
      %s153 = sphi 0, %s155
      %s156 = sphi 0, %s153
      %s157 = sphi 0, %s156
      %s173 = sphi 0, %s157
    $region4: #{tpu_custom_call.1} parent=1 // loop_header_branch
      %24 = sbr.rel (%p22) target = $region8
    $region5: #{tpu_custom_call.1} parent=1 // loop_body
      %s26 = ssub.s32 %s21, 1
      %s27 = ssub.s32 %s21, 2
      %s34 = sadd.s32 1, %s29
      %p35 = scmp.ge.s32.totalorder %s34, 2
      %s36 = scalar_select %p35, 0, %s34
      %s37 = sadd.s32 1, %s28
      %s38 = scalar_select %p35, %s37, %s28
      %p39 = scmp.ge.s32.totalorder %s38, 1
      %s40 = scalar_select %p39, 0, %s38
      %s41 = ssub.s32 %s29, %s36
      %s42 = ssub.s32 %s28, %s40
      %s43 = sor.u32 %s41, %s42
      %p44 = scmp.eq.s32.totalorder %s43, 0
      %s46 = sadd.s32 %s45, 1
      %s47 = scalar_select %p44, %s45, %s46
      %p50 = pneg %p44
      %p51 = scmp.eq.s32.totalorder %s21, 1
      %p52 = por %p50, %p51
      %p53 = scmp.ne.s32.totalorder %s45, %s48
      %p54 = scmp.eq.s32.totalorder %s21, 0
      %p55 = por %p53, %p54
      %p56 = scmp.ne.s32.totalorder %s45, %s48
      %p57 = scmp.eq.s32.totalorder %s26, 1
      %p58 = por %p56, %p57
      %p59 = scmp.ne.s32.totalorder %s48, %s49
      %p60 = scmp.eq.s32.totalorder %s26, 0
      %p61 = por %p59, %p60
      %p62 = scmp.ne.s32.totalorder %s48, %s49
      %p63 = scmp.eq.s32.totalorder %s27, 1
      %p64 = por %p62, %p63
      %p66 = scmp.ne.s32.totalorder %s49, %s65
      %p67 = scmp.eq.s32.totalorder %s27, 0
      %p68 = por %p66, %p67
      %s69 = ssub.s32 %s28, %s40
      %p70 = scmp.eq.s32.totalorder %s69, 0
      %s72 = sadd.s32 %s71, 1
      %s73 = scalar_select %p70, %s71, %s72
      %p76 = pneg %p70
      %p77 = scmp.eq.s32.totalorder %s21, 1
      %p78 = por %p76, %p77
      %p79 = scmp.ne.s32.totalorder %s71, %s74
      %p80 = scmp.eq.s32.totalorder %s21, 0
      %p81 = por %p79, %p80
      %p82 = scmp.ne.s32.totalorder %s71, %s74
      %p83 = scmp.eq.s32.totalorder %s26, 1
      %p84 = por %p82, %p83
      %p85 = scmp.ne.s32.totalorder %s74, %s75
      %p86 = scmp.eq.s32.totalorder %s26, 0
      %p87 = por %p85, %p86
      %p88 = scmp.ne.s32.totalorder %s74, %s75
      %p89 = scmp.eq.s32.totalorder %s27, 1
      %p90 = por %p88, %p89
      %p92 = scmp.ne.s32.totalorder %s75, %s91
      %p93 = scmp.eq.s32.totalorder %s27, 0
      %p94 = por %p92, %p93
      %s95 = ssub.s32 %s28, %s40
      %p96 = scmp.eq.s32.totalorder %s95, 0
      %s98 = sadd.s32 %s97, 1
      %s99 = scalar_select %p96, %s97, %s98
      %p102 = pneg %p96
      %p103 = scmp.eq.s32.totalorder %s21, 1
      %p104 = por %p102, %p103
      %p105 = scmp.ne.s32.totalorder %s97, %s100
      %p106 = scmp.eq.s32.totalorder %s21, 0
      %p107 = por %p105, %p106
      %p108 = scmp.ne.s32.totalorder %s97, %s100
      %p109 = scmp.eq.s32.totalorder %s26, 1
      %p110 = por %p108, %p109
      %p111 = scmp.ne.s32.totalorder %s100, %s101
      %p112 = scmp.eq.s32.totalorder %s26, 0
      %p113 = por %p111, %p112
      %p114 = scmp.ne.s32.totalorder %s100, %s101
      %p115 = scmp.eq.s32.totalorder %s27, 1
      %p116 = por %p114, %p115
      %p118 = scmp.ne.s32.totalorder %s101, %s117
      %p119 = scmp.eq.s32.totalorder %s27, 0
      %p120 = por %p118, %p119
      %s121 = ssub.s32 %s29, %s36
      %s122 = ssub.s32 %s28, %s40
      %s123 = sor.u32 %s121, %s122
      %p124 = scmp.eq.s32.totalorder %s123, 0
      %s126 = sadd.s32 %s125, 1
      %s127 = scalar_select %p124, %s125, %s126
      %p130 = pneg %p124
      %p131 = scmp.eq.s32.totalorder %s21, 1
      %p132 = por %p130, %p131
      %p133 = scmp.ne.s32.totalorder %s125, %s128
      %p134 = scmp.eq.s32.totalorder %s21, 0
      %p135 = por %p133, %p134
      %p136 = scmp.ne.s32.totalorder %s125, %s128
      %p137 = scmp.eq.s32.totalorder %s26, 1
      %p138 = por %p136, %p137
      %p139 = scmp.ne.s32.totalorder %s128, %s129
      %p140 = scmp.eq.s32.totalorder %s26, 0
      %p141 = por %p139, %p140
      %p142 = scmp.ne.s32.totalorder %s128, %s129
      %p143 = scmp.eq.s32.totalorder %s27, 1
      %p144 = por %p142, %p143
      %p146 = scmp.ne.s32.totalorder %s129, %s145
      %p147 = scmp.eq.s32.totalorder %s27, 0
      %p148 = por %p146, %p147
      %s149 = ssub.s32 %s29, %s36
      %s150 = ssub.s32 %s28, %s40
      %s151 = sor.u32 %s149, %s150
      %p152 = scmp.eq.s32.totalorder %s151, 0
      %s154 = sadd.s32 %s153, 1
      %s155 = scalar_select %p152, %s153, %s154
      %p158 = pneg %p152
      %p159 = scmp.eq.s32.totalorder %s21, 1
      %p160 = por %p158, %p159
      %p161 = scmp.ne.s32.totalorder %s153, %s156
      %p162 = scmp.eq.s32.totalorder %s21, 0
      %p163 = por %p161, %p162
      %p164 = scmp.ne.s32.totalorder %s153, %s156
      %p165 = scmp.eq.s32.totalorder %s26, 1
      %p166 = por %p164, %p165
      %p167 = scmp.ne.s32.totalorder %s156, %s157
      %p168 = scmp.eq.s32.totalorder %s26, 0
      %p169 = por %p167, %p168
      %p170 = scmp.ne.s32.totalorder %s156, %s157
      %p171 = scmp.eq.s32.totalorder %s27, 1
      %p172 = por %p170, %p171
      %p174 = scmp.ne.s32.totalorder %s157, %s173
      %p175 = scmp.eq.s32.totalorder %s27, 0
      %p176 = por %p174, %p175
      %p177 = scmp.le.s32.totalorder 1, %s21
      %p178 = scmp.lt.s32.totalorder %s21, 3
      %p179 = pnand %p177, %p178
      %p180 = pneg %p179
      // Predicated region
      $region9: #{tpu_custom_call.1} parent=5 // pred_check
        _
      $region10: #{tpu_custom_call.1} parent=5 // pred_check_branch
        %182 = sbr.rel (%p179) target = $region12
      $region11: #{tpu_custom_call.1} parent=5 // pred_region
        %s183 = ssub.s32 %s21, 1
        // Predicated region
        $region13: #{tpu_custom_call.1} parent=11 // pred_check
          %p184 = pneg %p87
        $region14: #{tpu_custom_call.1} parent=11 // pred_check_branch
          %186 = sbr.rel (%p184) target = $region16
        $region15: #{tpu_custom_call.1} parent=11 // pred_region
          %p187 = scmp.lt.s32.totalorder %s30, 0
          %s188 = scalar_select %p187, %s30, 0
          %s189 = smul.addr %s188, 8
          %s190 = scalar_lea.vmem %s5, %s189
        $region16: #{tpu_custom_call.1} parent=11 // pred_fallthru
          _
        // Predicated region
        $region17: #{tpu_custom_call.1} parent=11 // pred_check
          %p191 = pneg %p113
        $region18: #{tpu_custom_call.1} parent=11 // pred_check_branch
          %193 = sbr.rel (%p191) target = $region20
        $region19: #{tpu_custom_call.1} parent=11 // pred_region
          %p194 = scmp.lt.s32.totalorder %s30, 0
          %s195 = scalar_select %p194, %s30, 0
          %s196 = smul.addr %s195, 8
          %s197 = scalar_lea.vmem %s6, %s196
        $region20: #{tpu_custom_call.1} parent=11 // pred_fallthru
          _
      $region12: #{tpu_custom_call.1} parent=5 // pred_fallthru
        _
      %p198 = scmp.lt.s32.totalorder %s21, 2
      // Predicated region
      $region21: #{tpu_custom_call.1} parent=5 // pred_check
        %p199 = pneg %p198
      $region22: #{tpu_custom_call.1} parent=5 // pred_check_branch
        %201 = sbr.rel (%p199) target = $region24
      $region23: #{tpu_custom_call.1} parent=5 // pred_region
        // Predicated region
        $region25: #{tpu_custom_call.1} parent=23 // pred_check
          %p202 = pneg %p55
        $region26: #{tpu_custom_call.1} parent=23 // pred_check_branch
          %204 = sbr.rel (%p202) target = $region28
        $region27: #{tpu_custom_call.1} parent=23 // pred_region
          %s205 = smul.u32 16, %s29
          %p206 = scmp.lt.s32.totalorder %s205, 31
          %s207 = scalar_select %p206, %s205, 31
          %p208 = scmp.lt.s32.totalorder %s28, 0
          %s209 = scalar_select %p208, %s28, 0
          %s210 = sadd.s32 %s209, %s207
          %s211 = smul.addr %s210, 8
          %s212 = scalar_lea.vmem %s0, %s211
          %s213 = smul.u32 16, %s29
        $region28: #{tpu_custom_call.1} parent=23 // pred_fallthru
          _
      $region24: #{tpu_custom_call.1} parent=5 // pred_fallthru
        _
      %p214 = scmp.le.s32.totalorder 1, %s21
      %p215 = scmp.lt.s32.totalorder %s21, 3
      %p216 = pnand %p214, %p215
      %p217 = pneg %p216
      // Predicated region
      $region29: #{tpu_custom_call.1} parent=5 // pred_check
        _
      $region30: #{tpu_custom_call.1} parent=5 // pred_check_branch
        %219 = sbr.rel (%p216) target = $region32
      $region31: #{tpu_custom_call.1} parent=5 // pred_region
        %s220 = ssub.s32 %s21, 1
        %s221 = smul.u32 16, %s31
        %p222 = scmp.lt.s32.totalorder %s221, 31
        %s223 = scalar_select %p222, %s221, 31
        %p224 = scmp.lt.s32.totalorder %s30, 0
        %s225 = scalar_select %p224, %s30, 0
        %s226 = sadd.s32 %s225, %s223
        %s227 = smul.addr %s226, 8
        %s228 = scalar_lea.vmem %s0, %s227
        %p229 = pneg %p61
        %p230 = pneg %p58
        %p231 = scmp.lt.s32.totalorder %s30, 0
        %s232 = scalar_select %p231, %s30, 0
        %s233 = smul.addr %s232, 8
        %s234 = scalar_lea.vmem %s5, %s233
        %p235 = pneg %p87
        %p236 = pneg %p84
        %p237 = scmp.lt.s32.totalorder %s30, 0
        %s238 = scalar_select %p237, %s30, 0
        %s239 = smul.addr %s238, 8
        %s240 = scalar_lea.vmem %s6, %s239
        %p241 = pneg %p113
        %p242 = pneg %p110
        %p243 = pneg %p141
        %p244 = pneg %p138
        %s245 = sand.u32 %s128, 1
        %s246 = scalar_lea.sflag [#allocation10], %s245
        %s247 = sand.u32 %s128, 1
        %s248 = smul.addr %s247, 128
        %s249 = scalar_lea.vmem [#allocation9], %s248
        %p250 = pneg %p169
        %p251 = pneg %p166
        %s252 = sand.u32 %s156, 1
        %s253 = scalar_lea.sflag [#allocation12], %s252
        %s254 = sand.u32 %s156, 1
        %s255 = smul.addr %s254, 128
        %s256 = scalar_lea.vmem [#allocation11], %s255
        %s257 = smul.u32 16, %s31
        %p258 = scmp.lt.s32.totalorder %s257, 31
        %s259 = scalar_select %p258, %s257, 31
        %p260 = scmp.lt.s32.totalorder %s30, 0
        %s261 = scalar_select %p260, %s30, 0
        %s262 = sadd.s32 %s261, %s259
        %s263 = smul.addr %s262, 8
        %s264 = scalar_lea.vmem %s0, %s263
        %s265 = smul.u32 16, %s31
        %p266 = scmp.lt.s32.totalorder %s30, 0
        %s267 = scalar_select %p266, %s30, 0
        %s268 = smul.addr %s267, 8
        %s269 = scalar_lea.vmem %s5, %s268
        %p270 = scmp.lt.s32.totalorder %s30, 0
        %s271 = scalar_select %p270, %s30, 0
        %s272 = smul.addr %s271, 8
        %s273 = scalar_lea.vmem %s6, %s272
        %s274 = smul.u32 16, %s31
        %s275 = smul.u32 16, %s31
        %p276 = scmp.eq.s32.totalorder %s31, 0
        // Predicated region
        $region33: #{tpu_custom_call.1} parent=31 // pred_check
          %p277 = pneg %p276
        $region34: #{tpu_custom_call.1} parent=31 // pred_check_branch
          %279 = sbr.rel (%p277) target = $region36
        $region35: #{tpu_custom_call.1} parent=31 // pred_region
          $region37: #{tpu_custom_call.1} parent=35
            #allocation13 [shape = 's32[1]{0}', space=sflag, size = 0x4, scoped, tag = 'scoped memory for tpu_custom_call.1']
            // Predicated region
            $region38: #{tpu_custom_call.1} parent=37 // pred_check
              _
            $region39: #{tpu_custom_call.1} parent=37 // pred_check_branch
              %281 = sbr.rel target = $region41
            $region40: #{tpu_custom_call.1} parent=37 // pred_region
              %282 = sst [smem:[#allocation16]] [#allocation15]
              %283 = sst [smem:[#allocation17]] [#allocation14]
            $region41: #{tpu_custom_call.1} parent=37 // pred_fallthru
              _
            %285 = shalt.err (0)
            %s287 = sshll.u32 [#allocation2], 4
            %s288 = int_to_ptr.vmem [resolvable:$true] %s287
            %290 = dma.hbm_to_vmem [thread:$0]  %s1, 1024, %s288, [#allocation13]
            %s291 = smul.u32 8, 2
            %s292 = smul.u32 %s291, 4
            %s293 = sshll.u32 %s292, 4
            %294 = dma.done [#allocation13], %s293
          $region42: #{tpu_custom_call.1} parent=35
            #allocation18 [shape = 's32[1]{0}', space=sflag, size = 0x4, scoped, tag = 'scoped memory for tpu_custom_call.1']
            %p296 = scmp.lt.u32.totalorder 384, 8
            %p297 = pneg %p296
            // Predicated region
            $region43: #{tpu_custom_call.1} parent=42 // pred_check
              _
            $region44: #{tpu_custom_call.1} parent=42 // pred_check_branch
              %299 = sbr.rel (%p296) target = $region46
            $region45: #{tpu_custom_call.1} parent=42 // pred_region
              %s314 = sand.u32 384, 7
              %p315 = scmp.eq.s32.totalorder %s314, 0
              // Predicated region
              $region58: #{tpu_custom_call.1} parent=45 // pred_check
                %p316 = pneg %p315
              $region59: #{tpu_custom_call.1} parent=45 // pred_check_branch
                %318 = sbr.rel (%p316) target = $region61
              $region60: #{tpu_custom_call.1} parent=45 // pred_region
                loop: start=0, step=1, limit=1
                $region62: #{tpu_custom_call.1} parent=60 // loop_pre_header
                  _
                $region63: #{tpu_custom_call.1} parent=60 // loop_header
                  %s320 = sphi 0, %s324
                  %p321 = scmp.ge.s32.totalorder %s320, 1
                  %s325 = sphi %s2, %s2
                  %s326 = sphi [#allocation3], [#allocation3]
                $region64: #{tpu_custom_call.1} parent=60 // loop_header_branch
                  %323 = sbr.rel (%p321) target = $region68
                $region65: #{tpu_custom_call.1} parent=60 // loop_body
                  %v327 = vld [vmem:[%s325] sm:$0xff]
                  %328 = vst [vmem:[%s326] sm:$0xff] %v327
                  %v329 = vld [vmem:[%s325 + $0x8] sm:$0xff]
                  %330 = vst [vmem:[%s326 + $0x8] sm:$0xff] %v329
                  %v331 = vld [vmem:[%s325 + $0x10] sm:$0xff]
                  %332 = vst [vmem:[%s326 + $0x10] sm:$0xff] %v331
                  %v333 = vld [vmem:[%s325 + $0x18] sm:$0xff]
                  %334 = vst [vmem:[%s326 + $0x18] sm:$0xff] %v333
                  %v335 = vld [vmem:[%s325 + $0x20] sm:$0xff]
                  %336 = vst [vmem:[%s326 + $0x20] sm:$0xff] %v335
                  %v337 = vld [vmem:[%s325 + $0x28] sm:$0xff]
                  %338 = vst [vmem:[%s326 + $0x28] sm:$0xff] %v337
                  %v339 = vld [vmem:[%s325 + $0x30] sm:$0xff]
                  %340 = vst [vmem:[%s326 + $0x30] sm:$0xff] %v339
                  %v341 = vld [vmem:[%s325 + $0x38] sm:$0xff]
                  %342 = vst [vmem:[%s326 + $0x38] sm:$0xff] %v341
                  %v343 = vld [vmem:[%s325 + $0x40] sm:$0xff]
                  %344 = vst [vmem:[%s326 + $0x40] sm:$0xff] %v343
                  %v345 = vld [vmem:[%s325 + $0x48] sm:$0xff]
                  %346 = vst [vmem:[%s326 + $0x48] sm:$0xff] %v345
                  %v347 = vld [vmem:[%s325 + $0x50] sm:$0xff]
                  %348 = vst [vmem:[%s326 + $0x50] sm:$0xff] %v347
                  %v349 = vld [vmem:[%s325 + $0x58] sm:$0xff]
                  %350 = vst [vmem:[%s326 + $0x58] sm:$0xff] %v349
                  %v351 = vld [vmem:[%s325 + $0x60] sm:$0xff]
                  %352 = vst [vmem:[%s326 + $0x60] sm:$0xff] %v351
                  %v353 = vld [vmem:[%s325 + $0x68] sm:$0xff]
                  %354 = vst [vmem:[%s326 + $0x68] sm:$0xff] %v353
                  %v355 = vld [vmem:[%s325 + $0x70] sm:$0xff]
                  %356 = vst [vmem:[%s326 + $0x70] sm:$0xff] %v355
                  %v357 = vld [vmem:[%s325 + $0x78] sm:$0xff]
                  %358 = vst [vmem:[%s326 + $0x78] sm:$0xff] %v357
                  %v359 = vld [vmem:[%s325 + $0x80] sm:$0xff]
                  %360 = vst [vmem:[%s326 + $0x80] sm:$0xff] %v359
                  %v361 = vld [vmem:[%s325 + $0x88] sm:$0xff]
                  %362 = vst [vmem:[%s326 + $0x88] sm:$0xff] %v361
                  %v363 = vld [vmem:[%s325 + $0x90] sm:$0xff]
                  %364 = vst [vmem:[%s326 + $0x90] sm:$0xff] %v363
                  %v365 = vld [vmem:[%s325 + $0x98] sm:$0xff]
                  %366 = vst [vmem:[%s326 + $0x98] sm:$0xff] %v365
                  %v367 = vld [vmem:[%s325 + $0xa0] sm:$0xff]
                  %368 = vst [vmem:[%s326 + $0xa0] sm:$0xff] %v367
                  %v369 = vld [vmem:[%s325 + $0xa8] sm:$0xff]
                  %370 = vst [vmem:[%s326 + $0xa8] sm:$0xff] %v369
                  %v371 = vld [vmem:[%s325 + $0xb0] sm:$0xff]
                  %372 = vst [vmem:[%s326 + $0xb0] sm:$0xff] %v371
                  %v373 = vld [vmem:[%s325 + $0xb8] sm:$0xff]
                  %374 = vst [vmem:[%s326 + $0xb8] sm:$0xff] %v373
                  %v375 = vld [vmem:[%s325 + $0xc0] sm:$0xff]
                  %376 = vst [vmem:[%s326 + $0xc0] sm:$0xff] %v375
                  %v377 = vld [vmem:[%s325 + $0xc8] sm:$0xff]
                  %378 = vst [vmem:[%s326 + $0xc8] sm:$0xff] %v377
                  %v379 = vld [vmem:[%s325 + $0xd0] sm:$0xff]
                  %380 = vst [vmem:[%s326 + $0xd0] sm:$0xff] %v379
                  %v381 = vld [vmem:[%s325 + $0xd8] sm:$0xff]
                  %382 = vst [vmem:[%s326 + $0xd8] sm:$0xff] %v381
                  %v383 = vld [vmem:[%s325 + $0xe0] sm:$0xff]
                  %384 = vst [vmem:[%s326 + $0xe0] sm:$0xff] %v383
                  %v385 = vld [vmem:[%s325 + $0xe8] sm:$0xff]
                  %386 = vst [vmem:[%s326 + $0xe8] sm:$0xff] %v385
                  %v387 = vld [vmem:[%s325 + $0xf0] sm:$0xff]
                  %388 = vst [vmem:[%s326 + $0xf0] sm:$0xff] %v387
                  %v389 = vld [vmem:[%s325 + $0xf8] sm:$0xff]
                  %390 = vst [vmem:[%s326 + $0xf8] sm:$0xff] %v389
                  %v391 = vld [vmem:[%s325 + $0x100] sm:$0xff]
                  %392 = vst [vmem:[%s326 + $0x100] sm:$0xff] %v391
                  %v393 = vld [vmem:[%s325 + $0x108] sm:$0xff]
                  %394 = vst [vmem:[%s326 + $0x108] sm:$0xff] %v393
                  %v395 = vld [vmem:[%s325 + $0x110] sm:$0xff]
                  %396 = vst [vmem:[%s326 + $0x110] sm:$0xff] %v395
                  %v397 = vld [vmem:[%s325 + $0x118] sm:$0xff]
                  %398 = vst [vmem:[%s326 + $0x118] sm:$0xff] %v397
                  %v399 = vld [vmem:[%s325 + $0x120] sm:$0xff]
                  %400 = vst [vmem:[%s326 + $0x120] sm:$0xff] %v399
                  %v401 = vld [vmem:[%s325 + $0x128] sm:$0xff]
                  %402 = vst [vmem:[%s326 + $0x128] sm:$0xff] %v401
                  %v403 = vld [vmem:[%s325 + $0x130] sm:$0xff]
                  %404 = vst [vmem:[%s326 + $0x130] sm:$0xff] %v403
                  %v405 = vld [vmem:[%s325 + $0x138] sm:$0xff]
                  %406 = vst [vmem:[%s326 + $0x138] sm:$0xff] %v405
                  %v407 = vld [vmem:[%s325 + $0x140] sm:$0xff]
                  %408 = vst [vmem:[%s326 + $0x140] sm:$0xff] %v407
                  %v409 = vld [vmem:[%s325 + $0x148] sm:$0xff]
                  %410 = vst [vmem:[%s326 + $0x148] sm:$0xff] %v409
                  %v411 = vld [vmem:[%s325 + $0x150] sm:$0xff]
                  %412 = vst [vmem:[%s326 + $0x150] sm:$0xff] %v411
                  %v413 = vld [vmem:[%s325 + $0x158] sm:$0xff]
                  %414 = vst [vmem:[%s326 + $0x158] sm:$0xff] %v413
                  %v415 = vld [vmem:[%s325 + $0x160] sm:$0xff]
                  %416 = vst [vmem:[%s326 + $0x160] sm:$0xff] %v415
                  %v417 = vld [vmem:[%s325 + $0x168] sm:$0xff]
                  %418 = vst [vmem:[%s326 + $0x168] sm:$0xff] %v417
                  %v419 = vld [vmem:[%s325 + $0x170] sm:$0xff]
                  %420 = vst [vmem:[%s326 + $0x170] sm:$0xff] %v419
                  %v421 = vld [vmem:[%s325 + $0x178] sm:$0xff]
                  %422 = vst [vmem:[%s326 + $0x178] sm:$0xff] %v421
                $region66: #{tpu_custom_call.1} parent=60 // loop_footer
                  %s324 = sadd.s32 1, %s320
                $region67: #{tpu_custom_call.1} parent=60 // loop_footer_branch
                  %319 = sbr.rel target = $region63
                $region68: #{tpu_custom_call.1} parent=60 // loop_exit
                  _
              $region61: #{tpu_custom_call.1} parent=45 // pred_fallthru
                _
              %p423 = pneg %p315
              // Predicated region
              $region69: #{tpu_custom_call.1} parent=45 // pred_check
                _
              $region70: #{tpu_custom_call.1} parent=45 // pred_check_branch
                %425 = sbr.rel (%p315) target = $region72
              $region71: #{tpu_custom_call.1} parent=45 // pred_region
                %s426 = sand.u32 384, 7
              $region72: #{tpu_custom_call.1} parent=45 // pred_fallthru
                _
            $region46: #{tpu_custom_call.1} parent=42 // pred_fallthru
              _
            // Predicated region
            $region47: #{tpu_custom_call.1} parent=42 // pred_check
              %p300 = pneg %p296
            $region48: #{tpu_custom_call.1} parent=42 // pred_check_branch
              %302 = sbr.rel (%p300) target = $region50
            $region49: #{tpu_custom_call.1} parent=42 // pred_region
              %s303 = sshllo.u32 0, 384
              loop: start=0, step=1, limit=1
              $region51: #{tpu_custom_call.1} parent=49 // loop_pre_header
                _
              $region52: #{tpu_custom_call.1} parent=49 // loop_header
                %s305 = sphi 0, %s309
                %p306 = scmp.ge.s32.totalorder %s305, 1
                %s310 = sphi %s2, %s2
                %s311 = sphi [#allocation3], [#allocation3]
              $region53: #{tpu_custom_call.1} parent=49 // loop_header_branch
                %308 = sbr.rel (%p306) target = $region57
              $region54: #{tpu_custom_call.1} parent=49 // loop_body
                %v312 = vld [vmem:[%s310] sm:%s303]
                %313 = vst [vmem:[%s311] sm:%s303] %v312
              $region55: #{tpu_custom_call.1} parent=49 // loop_footer
                %s309 = sadd.s32 1, %s305
              $region56: #{tpu_custom_call.1} parent=49 // loop_footer_branch
                %304 = sbr.rel target = $region52
              $region57: #{tpu_custom_call.1} parent=49 // loop_exit
                _
            $region50: #{tpu_custom_call.1} parent=42 // pred_fallthru
              _
            // Predicated region
            $region73: #{tpu_custom_call.1} parent=42 // pred_check
              _
            $region74: #{tpu_custom_call.1} parent=42 // pred_check_branch
              %429 = sbr.rel (0) target = $region76
            $region75: #{tpu_custom_call.1} parent=42 // pred_region
              %430 = vsyncadd [#allocation18], 6144
            $region76: #{tpu_custom_call.1} parent=42 // pred_fallthru
              _
            %s431 = smul.u32 8, 16
            %s432 = smul.u32 %s431, 3
            %s433 = sshll.u32 %s432, 4
            %434 = dma.done [#allocation18], %s433
          $region77: #{tpu_custom_call.1} parent=35
            #allocation20 [shape = 's32[1]{0}', space=sflag, size = 0x4, scoped, tag = 'scoped memory for tpu_custom_call.1']
            // Predicated region
            $region78: #{tpu_custom_call.1} parent=77 // pred_check
              _
            $region79: #{tpu_custom_call.1} parent=77 // pred_check_branch
              %436 = sbr.rel target = $region81
            $region80: #{tpu_custom_call.1} parent=77 // pred_region
              %437 = sst [smem:[#allocation16]] [#allocation22]
              %438 = sst [smem:[#allocation17]] [#allocation21]
            $region81: #{tpu_custom_call.1} parent=77 // pred_fallthru
              _
            %440 = shalt.err (0)
            %s442 = sshll.u32 [#allocation4], 4
            %s443 = int_to_ptr.vmem [resolvable:$true] %s442
            %445 = dma.hbm_to_vmem [thread:$0]  %s3, 2048, %s443, [#allocation20]
            %s446 = smul.u32 128, 1
            %s447 = sshll.u32 %s446, 4
            %448 = dma.done [#allocation20], %s447
          $region82: #{tpu_custom_call.1} parent=35
            #allocation23 [shape = 's32[1]{0}', space=sflag, size = 0x4, scoped, tag = 'scoped memory for tpu_custom_call.1']
            %p450 = scmp.lt.u32.totalorder 4, 8
            %p451 = pneg %p450
            // Predicated region
            $region83: #{tpu_custom_call.1} parent=82 // pred_check
              _
            $region84: #{tpu_custom_call.1} parent=82 // pred_check_branch
              %453 = sbr.rel (%p450) target = $region86
            $region85: #{tpu_custom_call.1} parent=82 // pred_region
              %s468 = sand.u32 4, 7
              %p469 = scmp.eq.s32.totalorder %s468, 0
              %p470 = pneg %p469
              // Predicated region
              $region98: #{tpu_custom_call.1} parent=85 // pred_check
                _
              $region99: #{tpu_custom_call.1} parent=85 // pred_check_branch
                %472 = sbr.rel (%p469) target = $region101
              $region100: #{tpu_custom_call.1} parent=85 // pred_region
                %s473 = sand.u32 4, 7
                %s474 = ssub.s32 4, %s473
                %s475 = scalar_lea.vmem %s4, %s474
                %s476 = ssub.s32 4, %s473
                %s477 = scalar_lea.vmem [#allocation5], %s476
                %s478 = sshllo.u32 0, %s473
                loop: start=0, step=1, limit=1
                $region102: #{tpu_custom_call.1} parent=100 // loop_pre_header
                  _
                $region103: #{tpu_custom_call.1} parent=100 // loop_header
                  %s480 = sphi 0, %s484
                  %p481 = scmp.ge.s32.totalorder %s480, 1
                  %s485 = sphi %s475, %s475
                  %s486 = sphi %s477, %s477
                $region104: #{tpu_custom_call.1} parent=100 // loop_header_branch
                  %483 = sbr.rel (%p481) target = $region108
                $region105: #{tpu_custom_call.1} parent=100 // loop_body
                  %v487 = vld [vmem:[%s485] sm:%s478]
                  %488 = vst [vmem:[%s486] sm:%s478] %v487
                $region106: #{tpu_custom_call.1} parent=100 // loop_footer
                  %s484 = sadd.s32 1, %s480
                $region107: #{tpu_custom_call.1} parent=100 // loop_footer_branch
                  %479 = sbr.rel target = $region103
                $region108: #{tpu_custom_call.1} parent=100 // loop_exit
                  _
              $region101: #{tpu_custom_call.1} parent=85 // pred_fallthru
                _
            $region86: #{tpu_custom_call.1} parent=82 // pred_fallthru
              _
            // Predicated region
            $region87: #{tpu_custom_call.1} parent=82 // pred_check
              %p454 = pneg %p450
            $region88: #{tpu_custom_call.1} parent=82 // pred_check_branch
              %456 = sbr.rel (%p454) target = $region90
            $region89: #{tpu_custom_call.1} parent=82 // pred_region
              %s457 = sshllo.u32 0, 4
              loop: start=0, step=1, limit=1
              $region91: #{tpu_custom_call.1} parent=89 // loop_pre_header
                _
              $region92: #{tpu_custom_call.1} parent=89 // loop_header
                %s459 = sphi 0, %s463
                %p460 = scmp.ge.s32.totalorder %s459, 1
                %s464 = sphi %s4, %s4
                %s465 = sphi [#allocation5], [#allocation5]
              $region93: #{tpu_custom_call.1} parent=89 // loop_header_branch
                %462 = sbr.rel (%p460) target = $region97
              $region94: #{tpu_custom_call.1} parent=89 // loop_body
                %v466 = vld [vmem:[%s464] sm:%s457]
                %467 = vst [vmem:[%s465] sm:%s457] %v466
              $region95: #{tpu_custom_call.1} parent=89 // loop_footer
                %s463 = sadd.s32 1, %s459
              $region96: #{tpu_custom_call.1} parent=89 // loop_footer_branch
                %458 = sbr.rel target = $region92
              $region97: #{tpu_custom_call.1} parent=89 // loop_exit
                _
            $region90: #{tpu_custom_call.1} parent=82 // pred_fallthru
              _
            // Predicated region
            $region109: #{tpu_custom_call.1} parent=82 // pred_check
              _
            $region110: #{tpu_custom_call.1} parent=82 // pred_check_branch
              %491 = sbr.rel (0) target = $region112
            $region111: #{tpu_custom_call.1} parent=82 // pred_region
              %492 = vsyncadd [#allocation23], 64
            $region112: #{tpu_custom_call.1} parent=82 // pred_fallthru
              _
            %s493 = smul.u32 1, 4
            %s494 = sshll.u32 %s493, 4
            %495 = dma.done [#allocation23], %s494
          %v496 = vld [vmem:[%s269] sm:$0xff]
          %497 = vst [vmem:[#allocation7] sm:$0xff] %v496
          %v498 = vld [vmem:[%s273] sm:$0xff]
          %499 = vst [vmem:[#allocation8] sm:$0xff] %v498
        $region36: #{tpu_custom_call.1} parent=31 // pred_fallthru
          _
        %v500 = vld [vmem:[#allocation3] sm:$0xff]
        %v501 = vld [vmem:[#allocation3 + $0x8] sm:$0xff]
        %v502 = vld [vmem:[#allocation3 + $0x10] sm:$0xff]
        %v503 = vld [vmem:[#allocation3 + $0x18] sm:$0xff]
        %v504 = vld [vmem:[#allocation3 + $0x20] sm:$0xff]
        %v505 = vld [vmem:[#allocation3 + $0x28] sm:$0xff]
        %v506 = vld [vmem:[#allocation3 + $0x30] sm:$0xff]
        %v507 = vld [vmem:[#allocation3 + $0x38] sm:$0xff]
        %v508 = vld [vmem:[#allocation3 + $0x40] sm:$0xff]
        %v509 = vld [vmem:[#allocation3 + $0x48] sm:$0xff]
        %v510 = vld [vmem:[#allocation3 + $0x50] sm:$0xff]
        %v511 = vld [vmem:[#allocation3 + $0x58] sm:$0xff]
        %v512 = vld [vmem:[#allocation3 + $0x60] sm:$0xff]
        %v513 = vld [vmem:[#allocation3 + $0x68] sm:$0xff]
        %v514 = vld [vmem:[#allocation3 + $0x70] sm:$0xff]
        %v515 = vld [vmem:[#allocation3 + $0x78] sm:$0xff]
        %v516 = vld [vmem:[#allocation3 + $0x80] sm:$0xff]
        %v517 = vld [vmem:[#allocation3 + $0x88] sm:$0xff]
        %v518 = vld [vmem:[#allocation3 + $0x90] sm:$0xff]
        %v519 = vld [vmem:[#allocation3 + $0x98] sm:$0xff]
        %v520 = vld [vmem:[#allocation3 + $0xa0] sm:$0xff]
        %v521 = vld [vmem:[#allocation3 + $0xa8] sm:$0xff]
        %v522 = vld [vmem:[#allocation3 + $0xb0] sm:$0xff]
        %v523 = vld [vmem:[#allocation3 + $0xb8] sm:$0xff]
        %v524 = vld [vmem:[#allocation3 + $0xc0] sm:$0xff]
        %v525 = vld [vmem:[#allocation3 + $0xc8] sm:$0xff]
        %v526 = vld [vmem:[#allocation3 + $0xd0] sm:$0xff]
        %v527 = vld [vmem:[#allocation3 + $0xd8] sm:$0xff]
        %v528 = vld [vmem:[#allocation3 + $0xe0] sm:$0xff]
        %v529 = vld [vmem:[#allocation3 + $0xe8] sm:$0xff]
        %v530 = vld [vmem:[#allocation3 + $0xf0] sm:$0xff]
        %v531 = vld [vmem:[#allocation3 + $0xf8] sm:$0xff]
        %v532 = vld [vmem:[#allocation3 + $0x100] sm:$0xff]
        %v533 = vld [vmem:[#allocation3 + $0x108] sm:$0xff]
        %v534 = vld [vmem:[#allocation3 + $0x110] sm:$0xff]
        %v535 = vld [vmem:[#allocation3 + $0x118] sm:$0xff]
        %v536 = vld [vmem:[#allocation3 + $0x120] sm:$0xff]
        %v537 = vld [vmem:[#allocation3 + $0x128] sm:$0xff]
        %v538 = vld [vmem:[#allocation3 + $0x130] sm:$0xff]
        %v539 = vld [vmem:[#allocation3 + $0x138] sm:$0xff]
        %v540 = vld [vmem:[#allocation3 + $0x140] sm:$0xff]
        %v541 = vld [vmem:[#allocation3 + $0x148] sm:$0xff]
        %v542 = vld [vmem:[#allocation3 + $0x150] sm:$0xff]
        %v543 = vld [vmem:[#allocation3 + $0x158] sm:$0xff]
        %v544 = vld [vmem:[#allocation3 + $0x160] sm:$0xff]
        %v545 = vld [vmem:[#allocation3 + $0x168] sm:$0xff]
        %v546 = vld [vmem:[#allocation3 + $0x170] sm:$0xff]
        %v547 = vld [vmem:[#allocation3 + $0x178] sm:$0xff]
        %v548 = vld [vmem:[#allocation4] sm:$0xff]
        %v549 = vld [vmem:[#allocation4 + $0x8] sm:$0xff]
        %v550 = vld [vmem:[#allocation4 + $0x10] sm:$0xff]
        %v551 = vld [vmem:[#allocation4 + $0x18] sm:$0xff]
        %v552 = vld [vmem:[#allocation4 + $0x20] sm:$0xff]
        %v553 = vld [vmem:[#allocation4 + $0x28] sm:$0xff]
        %v554 = vld [vmem:[#allocation4 + $0x30] sm:$0xff]
        %v555 = vld [vmem:[#allocation4 + $0x38] sm:$0xff]
        %v556 = vld [vmem:[#allocation4 + $0x40] sm:$0xff]
        %v557 = vld [vmem:[#allocation4 + $0x48] sm:$0xff]
        %v558 = vld [vmem:[#allocation4 + $0x50] sm:$0xff]
        %v559 = vld [vmem:[#allocation4 + $0x58] sm:$0xff]
        %v560 = vld [vmem:[#allocation4 + $0x60] sm:$0xff]
        %v561 = vld [vmem:[#allocation4 + $0x68] sm:$0xff]
        %v562 = vld [vmem:[#allocation4 + $0x70] sm:$0xff]
        %v563 = vld [vmem:[#allocation4 + $0x78] sm:$0xff]
        %v564 = vld [vmem:[%s264] sm:$0xff]
        %v565 = vld [vmem:[%s264 + $0x8] sm:$0xff]
        %v566 = vld [vmem:[%s264 + $0x10] sm:$0xff]
        %v567 = vld [vmem:[%s264 + $0x18] sm:$0xff]
        %v568 = vld [vmem:[%s264 + $0x20] sm:$0xff]
        %v569 = vld [vmem:[%s264 + $0x28] sm:$0xff]
        %v570 = vld [vmem:[%s264 + $0x30] sm:$0xff]
        %v571 = vld [vmem:[%s264 + $0x38] sm:$0xff]
        %v572 = vld [vmem:[%s264 + $0x40] sm:$0xff]
        %v573 = vld [vmem:[%s264 + $0x48] sm:$0xff]
        %v574 = vld [vmem:[%s264 + $0x50] sm:$0xff]
        %v575 = vld [vmem:[%s264 + $0x58] sm:$0xff]
        %v576 = vld [vmem:[%s264 + $0x60] sm:$0xff]
        %v577 = vld [vmem:[%s264 + $0x68] sm:$0xff]
        %v578 = vld [vmem:[%s264 + $0x70] sm:$0xff]
        %v579 = vld [vmem:[%s264 + $0x78] sm:$0xff]
        %v580 = vld [vmem:[#allocation2] sm:$0xff]
        %v581 = vld [vmem:[#allocation2 + $0x8] sm:$0xff]
        %v582 = vld [vmem:[#allocation2 + $0x10] sm:$0xff]
        %v583 = vld [vmem:[#allocation2 + $0x18] sm:$0xff]
        %v584 = vld [vmem:[#allocation2 + $0x20] sm:$0xff]
        %v585 = vld [vmem:[#allocation2 + $0x28] sm:$0xff]
        %v586 = vld [vmem:[#allocation2 + $0x30] sm:$0xff]
        %v587 = vld [vmem:[#allocation2 + $0x38] sm:$0xff]
        %v588 = vld [vmem:[#allocation5] sm:$0xf]
        %v590 = vlaneseq
        %v591 = vshrl.u32 %v590, 7
        %v592 = vsub.s32 0, %v591
        %v593 = vrot.slane %v588, %v592
        %v594 = vlaneseq
        %v595 = vshrl.u32 %v594, 7
        %v596 = vsub.s32 1, %v595
        %v597 = vrot.slane %v588, %v596
        %v598 = vlaneseq
        %v599 = vshrl.u32 %v598, 7
        %v600 = vsub.s32 2, %v599
        %v601 = vrot.slane %v588, %v600
        %v602 = vlaneseq
        %v603 = vshrl.u32 %v602, 7
        %v604 = vsub.s32 3, %v603
        %v605 = vrot.slane %v588, %v604
        %vm610 = vcmask 130048
        %v612 = vsel %vm610, %v564, 0
        %v615 = vsel %vm610, %v565, 0
        %v618 = vsel %vm610, %v566, 0
        %v621 = vsel %vm610, %v567, 0
        %v624 = vsel %vm610, %v568, 0
        %v627 = vsel %vm610, %v569, 0
        %v630 = vsel %vm610, %v570, 0
        %v633 = vsel %vm610, %v571, 0
        %v636 = vsel %vm610, %v572, 0
        %v639 = vsel %vm610, %v573, 0
        %v642 = vsel %vm610, %v574, 0
        %v645 = vsel %vm610, %v575, 0
        %v648 = vsel %vm610, %v576, 0
        %v651 = vsel %vm610, %v577, 0
        %v654 = vsel %vm610, %v578, 0
        %v657 = vsel %vm610, %v579, 0
        %659 = vmatprep.subr.mxu0 %v581
        %660 = vmatpush1.msra.mxu0 %v580
        %661 = vmatprep.subr.mxu0 %v585
        %662 = vmatpush1.msra.mxu0 %v584
        %663 = vmatprep.subr.mxu0 0.0
        %664 = vmatpush1.msra.mxu0 0.0
        %665 = vmatprep.subr.mxu0 0.0
        %666 = vmatpush1.msra.mxu0 0.0
        %667 = vmatprep.subr.mxu0 0.0
        %668 = vmatpush1.msra.mxu0 0.0
        %669 = vmatprep.subr.mxu0 0.0
        %670 = vmatpush1.msra.mxu0 0.0
        %671 = vmatprep.subr.mxu0 0.0
        %672 = vmatpush1.msra.mxu0 0.0
        %673 = vmatprep.subr.mxu0 0.0
        %674 = vmatpush1.msra.mxu0 0.0
        %675 = vmatprep.subr.mxu0 0.0
        %676 = vmatpush1.msra.mxu0 0.0
        %677 = vmatprep.subr.mxu0 0.0
        %678 = vmatpush1.msra.mxu0 0.0
        %679 = vmatprep.subr.mxu0 0.0
        %680 = vmatpush1.msra.mxu0 0.0
        %681 = vmatprep.subr.mxu0 0.0
        %682 = vmatpush1.msra.mxu0 0.0
        %683 = vmatprep.subr.mxu0 0.0
        %684 = vmatpush1.msra.mxu0 0.0
        %685 = vmatprep.subr.mxu0 0.0
        %686 = vmatpush1.msra.mxu0 0.0
        %687 = vmatprep.subr.mxu0 0.0
        %688 = vmatpush1.msra.mxu0 0.0
        %689 = vmatprep.subr.mxu0 0.0
        %690 = vmatpush1.msra.mxu0 0.0
        %691 = vmatprep.subr.mxu0 0.0
        %692 = vmatpush1.msra.mxu0 0.0
        %693 = vmatprep.subr.mxu0 0.0
        %694 = vmatpush1.msra.mxu0 0.0
        %695 = vmatprep.subr.mxu0 0.0
        %696 = vmatpush1.msra.mxu0 0.0
        %697 = vmatprep.subr.mxu0 0.0
        %698 = vmatpush1.msra.mxu0 0.0
        %699 = vmatprep.subr.mxu0 0.0
        %700 = vmatpush1.msra.mxu0 0.0
        %701 = vmatprep.subr.mxu0 0.0
        %702 = vmatpush1.msra.mxu0 0.0
        %703 = vmatprep.subr.mxu0 0.0
        %704 = vmatpush1.msra.mxu0 0.0
        %705 = vmatprep.subr.mxu0 0.0
        %706 = vmatpush1.msra.mxu0 0.0
        %707 = vmatprep.subr.mxu0 0.0
        %708 = vmatpush1.msra.mxu0 0.0
        %709 = vmatprep.subr.mxu0 0.0
        %710 = vmatpush1.msra.mxu0 0.0
        %711 = vmatprep.subr.mxu0 0.0
        %712 = vmatpush1.msra.mxu0 0.0
        %713 = vmatprep.subr.mxu0 0.0
        %714 = vmatpush1.msra.mxu0 0.0
        %715 = vmatprep.subr.mxu0 0.0
        %716 = vmatpush1.msra.mxu0 0.0
        %717 = vmatprep.subr.mxu0 0.0
        %718 = vmatpush1.msra.mxu0 0.0
        %719 = vmatprep.subr.mxu0 0.0
        %720 = vmatpush1.msra.mxu0 0.0
        %721 = vmatprep.subr.mxu0 0.0
        %722 = vmatpush1.msra.mxu0 0.0
        %723 = vmatprep.mubr.f32.mxu0 0.0
        %724 = vmatmul.mubr.f32.gmra.mrb[0].mxu0 %v612
        %v725 = vpop.f32.mrb[0].mxu0
        %v726 = vadd.f32 %v593, %v725
        %v727 = vpop.f32.mrb[0].mxu0
        %v728 = vadd.f32 %v597, %v727
        %729 = vmatprep.mubr.f32.mxu0 0.0
        %730 = vmatmul.mubr.f32.gmra.mrb[0].mxu0 %v615
        %v731 = vpop.f32.mrb[0].mxu0
        %v732 = vadd.f32 %v593, %v731
        %v733 = vpop.f32.mrb[0].mxu0
        %v734 = vadd.f32 %v597, %v733
        %735 = vmatprep.mubr.f32.mxu0 0.0
        %736 = vmatmul.mubr.f32.gmra.mrb[0].mxu0 %v618
        %v737 = vpop.f32.mrb[0].mxu0
        %v738 = vadd.f32 %v593, %v737
        %v739 = vpop.f32.mrb[0].mxu0
        %v740 = vadd.f32 %v597, %v739
        %741 = vmatprep.mubr.f32.mxu0 0.0
        %742 = vmatmul.mubr.f32.gmra.mrb[0].mxu0 %v621
        %v743 = vpop.f32.mrb[0].mxu0
        %v744 = vadd.f32 %v593, %v743
        %v745 = vpop.f32.mrb[0].mxu0
        %v746 = vadd.f32 %v597, %v745
        %747 = vmatprep.mubr.f32.mxu0 0.0
        %748 = vmatmul.mubr.f32.gmra.mrb[0].mxu0 %v624
        %v749 = vpop.f32.mrb[0].mxu0
        %v750 = vadd.f32 %v593, %v749
        %v751 = vpop.f32.mrb[0].mxu0
        %v752 = vadd.f32 %v597, %v751
        %753 = vmatprep.mubr.f32.mxu0 0.0
        %754 = vmatmul.mubr.f32.gmra.mrb[0].mxu0 %v627
        %v755 = vpop.f32.mrb[0].mxu0
        %v756 = vadd.f32 %v593, %v755
        %v757 = vpop.f32.mrb[0].mxu0
        %v758 = vadd.f32 %v597, %v757
        %759 = vmatprep.mubr.f32.mxu0 0.0
        %760 = vmatmul.mubr.f32.gmra.mrb[0].mxu0 %v630
        %v761 = vpop.f32.mrb[0].mxu0
        %v762 = vadd.f32 %v593, %v761
        %v763 = vpop.f32.mrb[0].mxu0
        %v764 = vadd.f32 %v597, %v763
        %765 = vmatprep.mubr.f32.mxu0 0.0
        %766 = vmatmul.mubr.f32.gmra.mrb[0].mxu0 %v633
        %v767 = vpop.f32.mrb[0].mxu0
        %v768 = vadd.f32 %v593, %v767
        %v769 = vpop.f32.mrb[0].mxu0
        %v770 = vadd.f32 %v597, %v769
        %771 = vmatprep.mubr.f32.mxu0 0.0
        %772 = vmatmul.mubr.f32.gmra.mrb[0].mxu0 %v636
        %v773 = vpop.f32.mrb[0].mxu0
        %v774 = vadd.f32 %v593, %v773
        %v775 = vpop.f32.mrb[0].mxu0
        %v776 = vadd.f32 %v597, %v775
        %777 = vmatprep.mubr.f32.mxu0 0.0
        %778 = vmatmul.mubr.f32.gmra.mrb[0].mxu0 %v639
        %v779 = vpop.f32.mrb[0].mxu0
        %v780 = vadd.f32 %v593, %v779
        %v781 = vpop.f32.mrb[0].mxu0
        %v782 = vadd.f32 %v597, %v781
        %783 = vmatprep.mubr.f32.mxu0 0.0
        %784 = vmatmul.mubr.f32.gmra.mrb[0].mxu0 %v642
        %v785 = vpop.f32.mrb[0].mxu0
        %v786 = vadd.f32 %v593, %v785
        %v787 = vpop.f32.mrb[0].mxu0
        %v788 = vadd.f32 %v597, %v787
        %789 = vmatprep.mubr.f32.mxu0 0.0
        %790 = vmatmul.mubr.f32.gmra.mrb[0].mxu0 %v645
        %v791 = vpop.f32.mrb[0].mxu0
        %v792 = vadd.f32 %v593, %v791
        %v793 = vpop.f32.mrb[0].mxu0
        %v794 = vadd.f32 %v597, %v793
        %795 = vmatprep.mubr.f32.mxu0 0.0
        %796 = vmatmul.mubr.f32.gmra.mrb[0].mxu0 %v648
        %v797 = vpop.f32.mrb[0].mxu0
        %v798 = vadd.f32 %v593, %v797
        %v799 = vpop.f32.mrb[0].mxu0
        %v800 = vadd.f32 %v597, %v799
        %801 = vmatprep.mubr.f32.mxu0 0.0
        %802 = vmatmul.mubr.f32.gmra.mrb[0].mxu0 %v651
        %v803 = vpop.f32.mrb[0].mxu0
        %v804 = vadd.f32 %v593, %v803
        %v805 = vpop.f32.mrb[0].mxu0
        %v806 = vadd.f32 %v597, %v805
        %807 = vmatprep.mubr.f32.mxu0 0.0
        %808 = vmatmul.mubr.f32.gmra.mrb[0].mxu0 %v654
        %v809 = vpop.f32.mrb[0].mxu0
        %v810 = vadd.f32 %v593, %v809
        %v811 = vpop.f32.mrb[0].mxu0
        %v812 = vadd.f32 %v597, %v811
        %813 = vmatprep.mubr.f32.mxu0 0.0
        %814 = vmatmul.mubr.f32.gmra.mrb[0].mxu0 %v657
        %v815 = vpop.f32.mrb[0].mxu0
        %v816 = vadd.f32 %v593, %v815
        %v817 = vpop.f32.mrb[0].mxu0
        %v818 = vadd.f32 %v597, %v817
        %819 = vdwg.mxu0
        %820 = vmatprep.subr.mxu0 %v583
        %821 = vmatpush1.msra.mxu0 %v582
        %822 = vmatprep.subr.mxu0 %v587
        %823 = vmatpush1.msra.mxu0 %v586
        %824 = vmatprep.subr.mxu0 0.0
        %825 = vmatpush1.msra.mxu0 0.0
        %826 = vmatprep.subr.mxu0 0.0
        %827 = vmatpush1.msra.mxu0 0.0
        %828 = vmatprep.subr.mxu0 0.0
        %829 = vmatpush1.msra.mxu0 0.0
        %830 = vmatprep.subr.mxu0 0.0
        %831 = vmatpush1.msra.mxu0 0.0
        %832 = vmatprep.subr.mxu0 0.0
        %833 = vmatpush1.msra.mxu0 0.0
        %834 = vmatprep.subr.mxu0 0.0
        %835 = vmatpush1.msra.mxu0 0.0
        %836 = vmatprep.subr.mxu0 0.0
        %837 = vmatpush1.msra.mxu0 0.0
        %838 = vmatprep.subr.mxu0 0.0
        %839 = vmatpush1.msra.mxu0 0.0
        %840 = vmatprep.subr.mxu0 0.0
        %841 = vmatpush1.msra.mxu0 0.0
        %842 = vmatprep.subr.mxu0 0.0
        %843 = vmatpush1.msra.mxu0 0.0
        %844 = vmatprep.subr.mxu0 0.0
        %845 = vmatpush1.msra.mxu0 0.0
        %846 = vmatprep.subr.mxu0 0.0
        %847 = vmatpush1.msra.mxu0 0.0
        %848 = vmatprep.subr.mxu0 0.0
        %849 = vmatpush1.msra.mxu0 0.0
        %850 = vmatprep.subr.mxu0 0.0
        %851 = vmatpush1.msra.mxu0 0.0
        %852 = vmatprep.subr.mxu0 0.0
        %853 = vmatpush1.msra.mxu0 0.0
        %854 = vmatprep.subr.mxu0 0.0
        %855 = vmatpush1.msra.mxu0 0.0
        %856 = vmatprep.subr.mxu0 0.0
        %857 = vmatpush1.msra.mxu0 0.0
        %858 = vmatprep.subr.mxu0 0.0
        %859 = vmatpush1.msra.mxu0 0.0
        %860 = vmatprep.subr.mxu0 0.0
        %861 = vmatpush1.msra.mxu0 0.0
        %862 = vmatprep.subr.mxu0 0.0
        %863 = vmatpush1.msra.mxu0 0.0
        %864 = vmatprep.subr.mxu0 0.0
        %865 = vmatpush1.msra.mxu0 0.0
        %866 = vmatprep.subr.mxu0 0.0
        %867 = vmatpush1.msra.mxu0 0.0
        %868 = vmatprep.subr.mxu0 0.0
        %869 = vmatpush1.msra.mxu0 0.0
        %870 = vmatprep.subr.mxu0 0.0
        %871 = vmatpush1.msra.mxu0 0.0
        %872 = vmatprep.subr.mxu0 0.0
        %873 = vmatpush1.msra.mxu0 0.0
        %874 = vmatprep.subr.mxu0 0.0
        %875 = vmatpush1.msra.mxu0 0.0
        %876 = vmatprep.subr.mxu0 0.0
        %877 = vmatpush1.msra.mxu0 0.0
        %878 = vmatprep.subr.mxu0 0.0
        %879 = vmatpush1.msra.mxu0 0.0
        %880 = vmatprep.subr.mxu0 0.0
        %881 = vmatpush1.msra.mxu0 0.0
        %882 = vmatprep.subr.mxu0 0.0
        %883 = vmatpush1.msra.mxu0 0.0
        %884 = vmatprep.mubr.f32.mxu0 0.0
        %885 = vmatmul.mubr.f32.gmra.mrb[0].mxu0 %v612
        %v886 = vpop.f32.mrb[0].mxu0
        %v887 = vadd.f32 %v601, %v886
        %v888 = vpop.f32.mrb[0].mxu0
        %v889 = vadd.f32 %v605, %v888
        %890 = vmatprep.mubr.f32.mxu0 0.0
        %891 = vmatmul.mubr.f32.gmra.mrb[0].mxu0 %v615
        %v892 = vpop.f32.mrb[0].mxu0
        %v893 = vadd.f32 %v601, %v892
        %v894 = vpop.f32.mrb[0].mxu0
        %v895 = vadd.f32 %v605, %v894
        %896 = vmatprep.mubr.f32.mxu0 0.0
        %897 = vmatmul.mubr.f32.gmra.mrb[0].mxu0 %v618
        %v898 = vpop.f32.mrb[0].mxu0
        %v899 = vadd.f32 %v601, %v898
        %v900 = vpop.f32.mrb[0].mxu0
        %v901 = vadd.f32 %v605, %v900
        %902 = vmatprep.mubr.f32.mxu0 0.0
        %903 = vmatmul.mubr.f32.gmra.mrb[0].mxu0 %v621
        %v904 = vpop.f32.mrb[0].mxu0
        %v905 = vadd.f32 %v601, %v904
        %v906 = vpop.f32.mrb[0].mxu0
        %v907 = vadd.f32 %v605, %v906
        %908 = vmatprep.mubr.f32.mxu0 0.0
        %909 = vmatmul.mubr.f32.gmra.mrb[0].mxu0 %v624
        %v910 = vpop.f32.mrb[0].mxu0
        %v911 = vadd.f32 %v601, %v910
        %v912 = vpop.f32.mrb[0].mxu0
        %v913 = vadd.f32 %v605, %v912
        %914 = vmatprep.mubr.f32.mxu0 0.0
        %915 = vmatmul.mubr.f32.gmra.mrb[0].mxu0 %v627
        %v916 = vpop.f32.mrb[0].mxu0
        %v917 = vadd.f32 %v601, %v916
        %v918 = vpop.f32.mrb[0].mxu0
        %v919 = vadd.f32 %v605, %v918
        %920 = vmatprep.mubr.f32.mxu0 0.0
        %921 = vmatmul.mubr.f32.gmra.mrb[0].mxu0 %v630
        %v922 = vpop.f32.mrb[0].mxu0
        %v923 = vadd.f32 %v601, %v922
        %v924 = vpop.f32.mrb[0].mxu0
        %v925 = vadd.f32 %v605, %v924
        %926 = vmatprep.mubr.f32.mxu0 0.0
        %927 = vmatmul.mubr.f32.gmra.mrb[0].mxu0 %v633
        %v928 = vpop.f32.mrb[0].mxu0
        %v929 = vadd.f32 %v601, %v928
        %v930 = vpop.f32.mrb[0].mxu0
        %v931 = vadd.f32 %v605, %v930
        %932 = vmatprep.mubr.f32.mxu0 0.0
        %933 = vmatmul.mubr.f32.gmra.mrb[0].mxu0 %v636
        %v934 = vpop.f32.mrb[0].mxu0
        %v935 = vadd.f32 %v601, %v934
        %v936 = vpop.f32.mrb[0].mxu0
        %v937 = vadd.f32 %v605, %v936
        %938 = vmatprep.mubr.f32.mxu0 0.0
        %939 = vmatmul.mubr.f32.gmra.mrb[0].mxu0 %v639
        %v940 = vpop.f32.mrb[0].mxu0
        %v941 = vadd.f32 %v601, %v940
        %v942 = vpop.f32.mrb[0].mxu0
        %v943 = vadd.f32 %v605, %v942
        %944 = vmatprep.mubr.f32.mxu0 0.0
        %945 = vmatmul.mubr.f32.gmra.mrb[0].mxu0 %v642
        %v946 = vpop.f32.mrb[0].mxu0
        %v947 = vadd.f32 %v601, %v946
        %v948 = vpop.f32.mrb[0].mxu0
        %v949 = vadd.f32 %v605, %v948
        %950 = vmatprep.mubr.f32.mxu0 0.0
        %951 = vmatmul.mubr.f32.gmra.mrb[0].mxu0 %v645
        %v952 = vpop.f32.mrb[0].mxu0
        %v953 = vadd.f32 %v601, %v952
        %v954 = vpop.f32.mrb[0].mxu0
        %v955 = vadd.f32 %v605, %v954
        %956 = vmatprep.mubr.f32.mxu0 0.0
        %957 = vmatmul.mubr.f32.gmra.mrb[0].mxu0 %v648
        %v958 = vpop.f32.mrb[0].mxu0
        %v959 = vadd.f32 %v601, %v958
        %v960 = vpop.f32.mrb[0].mxu0
        %v961 = vadd.f32 %v605, %v960
        %962 = vmatprep.mubr.f32.mxu0 0.0
        %963 = vmatmul.mubr.f32.gmra.mrb[0].mxu0 %v651
        %v964 = vpop.f32.mrb[0].mxu0
        %v965 = vadd.f32 %v601, %v964
        %v966 = vpop.f32.mrb[0].mxu0
        %v967 = vadd.f32 %v605, %v966
        %968 = vmatprep.mubr.f32.mxu0 0.0
        %969 = vmatmul.mubr.f32.gmra.mrb[0].mxu0 %v654
        %v970 = vpop.f32.mrb[0].mxu0
        %v971 = vadd.f32 %v601, %v970
        %v972 = vpop.f32.mrb[0].mxu0
        %v973 = vadd.f32 %v605, %v972
        %974 = vmatprep.mubr.f32.mxu0 0.0
        %975 = vmatmul.mubr.f32.gmra.mrb[0].mxu0 %v657
        %v976 = vpop.f32.mrb[0].mxu0
        %v977 = vadd.f32 %v601, %v976
        %v978 = vpop.f32.mrb[0].mxu0
        %v979 = vadd.f32 %v605, %v978
        %980 = vdwg.mxu0
        %981 = vst [vmem:[#allocation6] sm:$0xff] %v726
        %982 = vst [vmem:[#allocation6 + $0x8] sm:$0xff] %v728
        %983 = vst [vmem:[#allocation6 + $0x10] sm:$0xff] %v887
        %984 = vst [vmem:[#allocation6 + $0x18] sm:$0xff] %v889
        %985 = vst [vmem:[#allocation6 + $0x20] sm:$0xff] %v732
        %986 = vst [vmem:[#allocation6 + $0x28] sm:$0xff] %v734
        %987 = vst [vmem:[#allocation6 + $0x30] sm:$0xff] %v893
        %988 = vst [vmem:[#allocation6 + $0x38] sm:$0xff] %v895
        %989 = vst [vmem:[#allocation6 + $0x40] sm:$0xff] %v738
        %990 = vst [vmem:[#allocation6 + $0x48] sm:$0xff] %v740
        %991 = vst [vmem:[#allocation6 + $0x50] sm:$0xff] %v899
        %992 = vst [vmem:[#allocation6 + $0x58] sm:$0xff] %v901
        %993 = vst [vmem:[#allocation6 + $0x60] sm:$0xff] %v744
        %994 = vst [vmem:[#allocation6 + $0x68] sm:$0xff] %v746
        %995 = vst [vmem:[#allocation6 + $0x70] sm:$0xff] %v905
        %996 = vst [vmem:[#allocation6 + $0x78] sm:$0xff] %v907
        %997 = vst [vmem:[#allocation6 + $0x80] sm:$0xff] %v750
        %998 = vst [vmem:[#allocation6 + $0x88] sm:$0xff] %v752
        %999 = vst [vmem:[#allocation6 + $0x90] sm:$0xff] %v911
        %1000 = vst [vmem:[#allocation6 + $0x98] sm:$0xff] %v913
        %1001 = vst [vmem:[#allocation6 + $0xa0] sm:$0xff] %v756
        %1002 = vst [vmem:[#allocation6 + $0xa8] sm:$0xff] %v758
        %1003 = vst [vmem:[#allocation6 + $0xb0] sm:$0xff] %v917
        %1004 = vst [vmem:[#allocation6 + $0xb8] sm:$0xff] %v919
        %1005 = vst [vmem:[#allocation6 + $0xc0] sm:$0xff] %v762
        %1006 = vst [vmem:[#allocation6 + $0xc8] sm:$0xff] %v764
        %1007 = vst [vmem:[#allocation6 + $0xd0] sm:$0xff] %v923
        %1008 = vst [vmem:[#allocation6 + $0xd8] sm:$0xff] %v925
        %1009 = vst [vmem:[#allocation6 + $0xe0] sm:$0xff] %v768
        %1010 = vst [vmem:[#allocation6 + $0xe8] sm:$0xff] %v770
        %1011 = vst [vmem:[#allocation6 + $0xf0] sm:$0xff] %v929
        %1012 = vst [vmem:[#allocation6 + $0xf8] sm:$0xff] %v931
        %1013 = vst [vmem:[#allocation6 + $0x100] sm:$0xff] %v774
        %1014 = vst [vmem:[#allocation6 + $0x108] sm:$0xff] %v776
        %1015 = vst [vmem:[#allocation6 + $0x110] sm:$0xff] %v935
        %1016 = vst [vmem:[#allocation6 + $0x118] sm:$0xff] %v937
        %1017 = vst [vmem:[#allocation6 + $0x120] sm:$0xff] %v780
        %1018 = vst [vmem:[#allocation6 + $0x128] sm:$0xff] %v782
        %1019 = vst [vmem:[#allocation6 + $0x130] sm:$0xff] %v941
        %1020 = vst [vmem:[#allocation6 + $0x138] sm:$0xff] %v943
        %1021 = vst [vmem:[#allocation6 + $0x140] sm:$0xff] %v786
        %1022 = vst [vmem:[#allocation6 + $0x148] sm:$0xff] %v788
        %1023 = vst [vmem:[#allocation6 + $0x150] sm:$0xff] %v947
        %1024 = vst [vmem:[#allocation6 + $0x158] sm:$0xff] %v949
        %1025 = vst [vmem:[#allocation6 + $0x160] sm:$0xff] %v792
        %1026 = vst [vmem:[#allocation6 + $0x168] sm:$0xff] %v794
        %1027 = vst [vmem:[#allocation6 + $0x170] sm:$0xff] %v953
        %1028 = vst [vmem:[#allocation6 + $0x178] sm:$0xff] %v955
        %1029 = vst [vmem:[#allocation6 + $0x180] sm:$0xff] %v798
        %1030 = vst [vmem:[#allocation6 + $0x188] sm:$0xff] %v800
        %1031 = vst [vmem:[#allocation6 + $0x190] sm:$0xff] %v959
        %1032 = vst [vmem:[#allocation6 + $0x198] sm:$0xff] %v961
        %1033 = vst [vmem:[#allocation6 + $0x1a0] sm:$0xff] %v804
        %1034 = vst [vmem:[#allocation6 + $0x1a8] sm:$0xff] %v806
        %1035 = vst [vmem:[#allocation6 + $0x1b0] sm:$0xff] %v965
        %1036 = vst [vmem:[#allocation6 + $0x1b8] sm:$0xff] %v967
        %1037 = vst [vmem:[#allocation6 + $0x1c0] sm:$0xff] %v810
        %1038 = vst [vmem:[#allocation6 + $0x1c8] sm:$0xff] %v812
        %1039 = vst [vmem:[#allocation6 + $0x1d0] sm:$0xff] %v971
        %1040 = vst [vmem:[#allocation6 + $0x1d8] sm:$0xff] %v973
        %1041 = vst [vmem:[#allocation6 + $0x1e0] sm:$0xff] %v816
        %1042 = vst [vmem:[#allocation6 + $0x1e8] sm:$0xff] %v818
        %1043 = vst [vmem:[#allocation6 + $0x1f0] sm:$0xff] %v977
        %1044 = vst [vmem:[#allocation6 + $0x1f8] sm:$0xff] %v979
        %v1045 = vld [vmem:[#allocation7] sm:$0xff]
        %v1046 = vld [vmem:[#allocation8] sm:$0xff]
        %v1047 = vld [vmem:[#allocation6] sm:$0xff]
        %v1048 = vld [vmem:[#allocation6 + $0x8] sm:$0xff]
        %v1049 = vld [vmem:[#allocation6 + $0x10] sm:$0xff]
        %v1050 = vld [vmem:[#allocation6 + $0x18] sm:$0xff]
        %1051 = vmatprep.subr.mxu0 %v501
        %1052 = vmatpush1.msra.mxu0 %v500
        %1053 = vmatprep.subr.mxu0 %v504
        %1054 = vmatpush1.msra.mxu0 %v503
        %1055 = vmatprep.subr.mxu0 %v507
        %1056 = vmatpush1.msra.mxu0 %v506
        %1057 = vmatprep.subr.mxu0 %v510
        %1058 = vmatpush1.msra.mxu0 %v509
        %1059 = vmatprep.subr.mxu0 %v513
        %1060 = vmatpush1.msra.mxu0 %v512
        %1061 = vmatprep.subr.mxu0 %v516
        %1062 = vmatpush1.msra.mxu0 %v515
        %1063 = vmatprep.subr.mxu0 %v519
        %1064 = vmatpush1.msra.mxu0 %v518
        %1065 = vmatprep.subr.mxu0 %v522
        %1066 = vmatpush1.msra.mxu0 %v521
        %1067 = vmatprep.subr.mxu0 %v525
        %1068 = vmatpush1.msra.mxu0 %v524
        %1069 = vmatprep.subr.mxu0 %v528
        %1070 = vmatpush1.msra.mxu0 %v527
        %1071 = vmatprep.subr.mxu0 %v531
        %1072 = vmatpush1.msra.mxu0 %v530
        %1073 = vmatprep.subr.mxu0 %v534
        %1074 = vmatpush1.msra.mxu0 %v533
        %1075 = vmatprep.subr.mxu0 %v537
        %1076 = vmatpush1.msra.mxu0 %v536
        %1077 = vmatprep.subr.mxu0 %v540
        %1078 = vmatpush1.msra.mxu0 %v539
        %1079 = vmatprep.subr.mxu0 %v543
        %1080 = vmatpush1.msra.mxu0 %v542
        %1081 = vmatprep.subr.mxu0 %v546
        %1082 = vmatpush1.msra.mxu0 %v545
        %1083 = vmatprep.subr.mxu0 0.0
        %1084 = vmatpush1.msra.mxu0 0.0
        %1085 = vmatprep.subr.mxu0 0.0
        %1086 = vmatpush1.msra.mxu0 0.0
        %1087 = vmatprep.subr.mxu0 0.0
        %1088 = vmatpush1.msra.mxu0 0.0
        %1089 = vmatprep.subr.mxu0 0.0
        %1090 = vmatpush1.msra.mxu0 0.0
        %1091 = vmatprep.subr.mxu0 0.0
        %1092 = vmatpush1.msra.mxu0 0.0
        %1093 = vmatprep.subr.mxu0 0.0
        %1094 = vmatpush1.msra.mxu0 0.0
        %1095 = vmatprep.subr.mxu0 0.0
        %1096 = vmatpush1.msra.mxu0 0.0
        %1097 = vmatprep.subr.mxu0 0.0
        %1098 = vmatpush1.msra.mxu0 0.0
        %1099 = vmatprep.subr.mxu0 0.0
        %1100 = vmatpush1.msra.mxu0 0.0
        %1101 = vmatprep.subr.mxu0 0.0
        %1102 = vmatpush1.msra.mxu0 0.0
        %1103 = vmatprep.subr.mxu0 0.0
        %1104 = vmatpush1.msra.mxu0 0.0
        %1105 = vmatprep.subr.mxu0 0.0
        %1106 = vmatpush1.msra.mxu0 0.0
        %1107 = vmatprep.subr.mxu0 0.0
        %1108 = vmatpush1.msra.mxu0 0.0
        %1109 = vmatprep.subr.mxu0 0.0
        %1110 = vmatpush1.msra.mxu0 0.0
        %1111 = vmatprep.subr.mxu0 0.0
        %1112 = vmatpush1.msra.mxu0 0.0
        %1113 = vmatprep.subr.mxu0 0.0
        %1114 = vmatpush1.msra.mxu0 0.0
        %1115 = vmatprep.mubr.f32.mxu0 0.0
        %1116 = vmatmul.mubr.f32.gmra.mrb[0].mxu0 %v1045
        %v1117 = vpop.f32.mrb[0].mxu0
        %v1118 = vadd.f32 0.0, %v1117
        %v1119 = vpop.f32.mrb[0].mxu0
        %v1120 = vadd.f32 0.0, %v1119
        %1121 = vdwg.mxu0
        %1122 = vmatprep.subr.mxu0 0.0
        %1123 = vmatpush1.msra.mxu0 %v502
        %1124 = vmatprep.subr.mxu0 0.0
        %1125 = vmatpush1.msra.mxu0 %v505
        %1126 = vmatprep.subr.mxu0 0.0
        %1127 = vmatpush1.msra.mxu0 %v508
        %1128 = vmatprep.subr.mxu0 0.0
        %1129 = vmatpush1.msra.mxu0 %v511
        %1130 = vmatprep.subr.mxu0 0.0
        %1131 = vmatpush1.msra.mxu0 %v514
        %1132 = vmatprep.subr.mxu0 0.0
        %1133 = vmatpush1.msra.mxu0 %v517
        %1134 = vmatprep.subr.mxu0 0.0
        %1135 = vmatpush1.msra.mxu0 %v520
        %1136 = vmatprep.subr.mxu0 0.0
        %1137 = vmatpush1.msra.mxu0 %v523
        %1138 = vmatprep.subr.mxu0 0.0
        %1139 = vmatpush1.msra.mxu0 %v526
        %1140 = vmatprep.subr.mxu0 0.0
        %1141 = vmatpush1.msra.mxu0 %v529
        %1142 = vmatprep.subr.mxu0 0.0
        %1143 = vmatpush1.msra.mxu0 %v532
        %1144 = vmatprep.subr.mxu0 0.0
        %1145 = vmatpush1.msra.mxu0 %v535
        %1146 = vmatprep.subr.mxu0 0.0
        %1147 = vmatpush1.msra.mxu0 %v538
        %1148 = vmatprep.subr.mxu0 0.0
        %1149 = vmatpush1.msra.mxu0 %v541
        %1150 = vmatprep.subr.mxu0 0.0
        %1151 = vmatpush1.msra.mxu0 %v544
        %1152 = vmatprep.subr.mxu0 0.0
        %1153 = vmatpush1.msra.mxu0 %v547
        %1154 = vmatprep.subr.mxu0 0.0
        %1155 = vmatpush1.msra.mxu0 0.0
        %1156 = vmatprep.subr.mxu0 0.0
        %1157 = vmatpush1.msra.mxu0 0.0
        %1158 = vmatprep.subr.mxu0 0.0
        %1159 = vmatpush1.msra.mxu0 0.0
        %1160 = vmatprep.subr.mxu0 0.0
        %1161 = vmatpush1.msra.mxu0 0.0
        %1162 = vmatprep.subr.mxu0 0.0
        %1163 = vmatpush1.msra.mxu0 0.0
        %1164 = vmatprep.subr.mxu0 0.0
        %1165 = vmatpush1.msra.mxu0 0.0
        %1166 = vmatprep.subr.mxu0 0.0
        %1167 = vmatpush1.msra.mxu0 0.0
        %1168 = vmatprep.subr.mxu0 0.0
        %1169 = vmatpush1.msra.mxu0 0.0
        %1170 = vmatprep.subr.mxu0 0.0
        %1171 = vmatpush1.msra.mxu0 0.0
        %1172 = vmatprep.subr.mxu0 0.0
        %1173 = vmatpush1.msra.mxu0 0.0
        %1174 = vmatprep.subr.mxu0 0.0
        %1175 = vmatpush1.msra.mxu0 0.0
        %1176 = vmatprep.subr.mxu0 0.0
        %1177 = vmatpush1.msra.mxu0 0.0
        %1178 = vmatprep.subr.mxu0 0.0
        %1179 = vmatpush1.msra.mxu0 0.0
        %1180 = vmatprep.subr.mxu0 0.0
        %1181 = vmatpush1.msra.mxu0 0.0
        %1182 = vmatprep.subr.mxu0 0.0
        %1183 = vmatpush1.msra.mxu0 0.0
        %1184 = vmatprep.subr.mxu0 0.0
        %1185 = vmatpush1.msra.mxu0 0.0
        %1186 = vmatprep.mubr.f32.mxu0 0.0
        %1187 = vmatmul.mubr.f32.gmra.mrb[0].mxu0 %v1045
        %v1188 = vpop.f32.mrb[0].mxu0
        %v1189 = vadd.f32 0.0, %v1188
        %v1190 = vpop.f32.mrb[0].mxu0
        %1191 = vdwg.mxu0
        %v1192 = vadd.f32 %v1047, %v1118
        %v1193 = vadd.f32 %v1048, %v1120
        %v1194 = vadd.f32 %v1049, %v1189
        %v1195 = vxor.u32 %v1192, 2147483648
        %v1196 = vxor.u32 %v1193, 2147483648
        %v1197 = vmul.f32 %v1195, 1.442695
        %v1198 = vpow.pop %v1197
        %v1199 = vmul.f32 %v1196, 1.442695
        %v1200 = vpow.pop %v1199
        %v1201 = vadd.f32 %v1198, 1.0
        %v1202 = vadd.f32 %v1200, 1.0
        %v1203 = vrcp.pop %v1201
        %v1204 = vmul.f32 1.0, %v1203
        %v1205 = vrcp.pop %v1202
        %v1206 = vmul.f32 1.0, %v1205
        %v1207 = vmul.f32 %v1204, 0.5
        %v1208 = vmul.f32 %v1206, 0.5
        %v1209 = vtanh.pop %v1194
        %v1210 = vsub.f32 %v1209, %v1046
        %v1211 = vmul.f32 %v1208, %v1210
        %v1212 = vadd.f32 %v1046, %v1211
        %1213 = vmatprep.subr.mxu0 0.0
        %1214 = vmatpush1.msra.mxu0 %v548
        %1215 = vmatprep.subr.mxu0 0.0
        %1216 = vmatpush1.msra.mxu0 %v549
        %1217 = vmatprep.subr.mxu0 0.0
        %1218 = vmatpush1.msra.mxu0 %v550
        %1219 = vmatprep.subr.mxu0 0.0
        %1220 = vmatpush1.msra.mxu0 %v551
        %1221 = vmatprep.subr.mxu0 0.0
        %1222 = vmatpush1.msra.mxu0 %v552
        %1223 = vmatprep.subr.mxu0 0.0
        %1224 = vmatpush1.msra.mxu0 %v553
        %1225 = vmatprep.subr.mxu0 0.0
        %1226 = vmatpush1.msra.mxu0 %v554
        %1227 = vmatprep.subr.mxu0 0.0
        %1228 = vmatpush1.msra.mxu0 %v555
        %1229 = vmatprep.subr.mxu0 0.0
        %1230 = vmatpush1.msra.mxu0 %v556
        %1231 = vmatprep.subr.mxu0 0.0
        %1232 = vmatpush1.msra.mxu0 %v557
        %1233 = vmatprep.subr.mxu0 0.0
        %1234 = vmatpush1.msra.mxu0 %v558
        %1235 = vmatprep.subr.mxu0 0.0
        %1236 = vmatpush1.msra.mxu0 %v559
        %1237 = vmatprep.subr.mxu0 0.0
        %1238 = vmatpush1.msra.mxu0 %v560
        %1239 = vmatprep.subr.mxu0 0.0
        %1240 = vmatpush1.msra.mxu0 %v561
        %1241 = vmatprep.subr.mxu0 0.0
        %1242 = vmatpush1.msra.mxu0 %v562
        %1243 = vmatprep.subr.mxu0 0.0
        %1244 = vmatpush1.msra.mxu0 %v563
        %1245 = vmatprep.subr.mxu0 0.0
        %1246 = vmatpush1.msra.mxu0 0.0
        %1247 = vmatprep.subr.mxu0 0.0
        %1248 = vmatpush1.msra.mxu0 0.0
        %1249 = vmatprep.subr.mxu0 0.0
        %1250 = vmatpush1.msra.mxu0 0.0
        %1251 = vmatprep.subr.mxu0 0.0
        %1252 = vmatpush1.msra.mxu0 0.0
        %1253 = vmatprep.subr.mxu0 0.0
        %1254 = vmatpush1.msra.mxu0 0.0
        %1255 = vmatprep.subr.mxu0 0.0
        %1256 = vmatpush1.msra.mxu0 0.0
        %1257 = vmatprep.subr.mxu0 0.0
        %1258 = vmatpush1.msra.mxu0 0.0
        %1259 = vmatprep.subr.mxu0 0.0
        %1260 = vmatpush1.msra.mxu0 0.0
        %1261 = vmatprep.subr.mxu0 0.0
        %1262 = vmatpush1.msra.mxu0 0.0
        %1263 = vmatprep.subr.mxu0 0.0
        %1264 = vmatpush1.msra.mxu0 0.0
        %1265 = vmatprep.subr.mxu0 0.0
        %1266 = vmatpush1.msra.mxu0 0.0
        %1267 = vmatprep.subr.mxu0 0.0
        %1268 = vmatpush1.msra.mxu0 0.0
        %1269 = vmatprep.subr.mxu0 0.0
        %1270 = vmatpush1.msra.mxu0 0.0
        %1271 = vmatprep.subr.mxu0 0.0
        %1272 = vmatpush1.msra.mxu0 0.0
        %1273 = vmatprep.subr.mxu0 0.0
        %1274 = vmatpush1.msra.mxu0 0.0
        %1275 = vmatprep.subr.mxu0 0.0
        %1276 = vmatpush1.msra.mxu0 0.0
        %1277 = vmatprep.mubr.f32.mxu0 0.0
        %1278 = vmatmul.mubr.f32.gmra.mrb[0].mxu0 %v1212
        %v1279 = vpop.f32.mrb[0].mxu0
        %v1280 = vadd.f32 0.0, %v1279
        %v1281 = vpop.f32.mrb[0].mxu0
        %1282 = vdwg.mxu0
        %v1283 = vadd.f32 %v1050, %v1280
        %v1284 = vtanh.pop %v1283
        %v1285 = vsub.f32 %v1284, %v1045
        %v1286 = vmul.f32 %v1207, %v1285
        %v1287 = vadd.f32 %v1045, %v1286
        %1288 = vst [vmem:[%s249] sm:$0xff] %v1287
        %1289 = vst [vmem:[%s256] sm:$0xff] %v1212
        %s1290 = scalar_lea.vmem [#allocation6], 32
        %v1291 = vld [vmem:[%s1290] sm:$0xff]
        %v1292 = vld [vmem:[%s1290 + $0x8] sm:$0xff]
        %v1293 = vld [vmem:[%s1290 + $0x10] sm:$0xff]
        %v1294 = vld [vmem:[%s1290 + $0x18] sm:$0xff]
        %1295 = vmatprep.subr.mxu0 %v501
        %1296 = vmatpush1.msra.mxu0 %v500
        %1297 = vmatprep.subr.mxu0 %v504
        %1298 = vmatpush1.msra.mxu0 %v503
        %1299 = vmatprep.subr.mxu0 %v507
        %1300 = vmatpush1.msra.mxu0 %v506
        %1301 = vmatprep.subr.mxu0 %v510
        %1302 = vmatpush1.msra.mxu0 %v509
        %1303 = vmatprep.subr.mxu0 %v513
        %1304 = vmatpush1.msra.mxu0 %v512
        %1305 = vmatprep.subr.mxu0 %v516
        %1306 = vmatpush1.msra.mxu0 %v515
        %1307 = vmatprep.subr.mxu0 %v519
        %1308 = vmatpush1.msra.mxu0 %v518
        %1309 = vmatprep.subr.mxu0 %v522
        %1310 = vmatpush1.msra.mxu0 %v521
        %1311 = vmatprep.subr.mxu0 %v525
        %1312 = vmatpush1.msra.mxu0 %v524
        %1313 = vmatprep.subr.mxu0 %v528
        %1314 = vmatpush1.msra.mxu0 %v527
        %1315 = vmatprep.subr.mxu0 %v531
        %1316 = vmatpush1.msra.mxu0 %v530
        %1317 = vmatprep.subr.mxu0 %v534
        %1318 = vmatpush1.msra.mxu0 %v533
        %1319 = vmatprep.subr.mxu0 %v537
        %1320 = vmatpush1.msra.mxu0 %v536
        %1321 = vmatprep.subr.mxu0 %v540
        %1322 = vmatpush1.msra.mxu0 %v539
        %1323 = vmatprep.subr.mxu0 %v543
        %1324 = vmatpush1.msra.mxu0 %v542
        %1325 = vmatprep.subr.mxu0 %v546
        %1326 = vmatpush1.msra.mxu0 %v545
        %1327 = vmatprep.subr.mxu0 0.0
        %1328 = vmatpush1.msra.mxu0 0.0
        %1329 = vmatprep.subr.mxu0 0.0
        %1330 = vmatpush1.msra.mxu0 0.0
        %1331 = vmatprep.subr.mxu0 0.0
        %1332 = vmatpush1.msra.mxu0 0.0
        %1333 = vmatprep.subr.mxu0 0.0
        %1334 = vmatpush1.msra.mxu0 0.0
        %1335 = vmatprep.subr.mxu0 0.0
        %1336 = vmatpush1.msra.mxu0 0.0
        %1337 = vmatprep.subr.mxu0 0.0
        %1338 = vmatpush1.msra.mxu0 0.0
        %1339 = vmatprep.subr.mxu0 0.0
        %1340 = vmatpush1.msra.mxu0 0.0
        %1341 = vmatprep.subr.mxu0 0.0
        %1342 = vmatpush1.msra.mxu0 0.0
        %1343 = vmatprep.subr.mxu0 0.0
        %1344 = vmatpush1.msra.mxu0 0.0
        %1345 = vmatprep.subr.mxu0 0.0
        %1346 = vmatpush1.msra.mxu0 0.0
        %1347 = vmatprep.subr.mxu0 0.0
        %1348 = vmatpush1.msra.mxu0 0.0
        %1349 = vmatprep.subr.mxu0 0.0
        %1350 = vmatpush1.msra.mxu0 0.0
        %1351 = vmatprep.subr.mxu0 0.0
        %1352 = vmatpush1.msra.mxu0 0.0
        %1353 = vmatprep.subr.mxu0 0.0
        %1354 = vmatpush1.msra.mxu0 0.0
        %1355 = vmatprep.subr.mxu0 0.0
        %1356 = vmatpush1.msra.mxu0 0.0
        %1357 = vmatprep.subr.mxu0 0.0
        %1358 = vmatpush1.msra.mxu0 0.0
        %1359 = vmatprep.mubr.f32.mxu0 0.0
        %1360 = vmatmul.mubr.f32.gmra.mrb[0].mxu0 %v1287
        %v1361 = vpop.f32.mrb[0].mxu0
        %v1362 = vadd.f32 0.0, %v1361
        %v1363 = vpop.f32.mrb[0].mxu0
        %v1364 = vadd.f32 0.0, %v1363
        %1365 = vdwg.mxu0
        %1366 = vmatprep.subr.mxu0 0.0
        %1367 = vmatpush1.msra.mxu0 %v502
        %1368 = vmatprep.subr.mxu0 0.0
        %1369 = vmatpush1.msra.mxu0 %v505
        %1370 = vmatprep.subr.mxu0 0.0
        %1371 = vmatpush1.msra.mxu0 %v508
        %1372 = vmatprep.subr.mxu0 0.0
        %1373 = vmatpush1.msra.mxu0 %v511
        %1374 = vmatprep.subr.mxu0 0.0
        %1375 = vmatpush1.msra.mxu0 %v514
        %1376 = vmatprep.subr.mxu0 0.0
        %1377 = vmatpush1.msra.mxu0 %v517
        %1378 = vmatprep.subr.mxu0 0.0
        %1379 = vmatpush1.msra.mxu0 %v520
        %1380 = vmatprep.subr.mxu0 0.0
        %1381 = vmatpush1.msra.mxu0 %v523
        %1382 = vmatprep.subr.mxu0 0.0
        %1383 = vmatpush1.msra.mxu0 %v526
        %1384 = vmatprep.subr.mxu0 0.0
        %1385 = vmatpush1.msra.mxu0 %v529
        %1386 = vmatprep.subr.mxu0 0.0
        %1387 = vmatpush1.msra.mxu0 %v532
        %1388 = vmatprep.subr.mxu0 0.0
        %1389 = vmatpush1.msra.mxu0 %v535
        %1390 = vmatprep.subr.mxu0 0.0
        %1391 = vmatpush1.msra.mxu0 %v538
        %1392 = vmatprep.subr.mxu0 0.0
        %1393 = vmatpush1.msra.mxu0 %v541
        %1394 = vmatprep.subr.mxu0 0.0
        %1395 = vmatpush1.msra.mxu0 %v544
        %1396 = vmatprep.subr.mxu0 0.0
        %1397 = vmatpush1.msra.mxu0 %v547
        %1398 = vmatprep.subr.mxu0 0.0
        %1399 = vmatpush1.msra.mxu0 0.0
        %1400 = vmatprep.subr.mxu0 0.0
        %1401 = vmatpush1.msra.mxu0 0.0
        %1402 = vmatprep.subr.mxu0 0.0
        %1403 = vmatpush1.msra.mxu0 0.0
        %1404 = vmatprep.subr.mxu0 0.0
        %1405 = vmatpush1.msra.mxu0 0.0
        %1406 = vmatprep.subr.mxu0 0.0
        %1407 = vmatpush1.msra.mxu0 0.0
        %1408 = vmatprep.subr.mxu0 0.0
        %1409 = vmatpush1.msra.mxu0 0.0
        %1410 = vmatprep.subr.mxu0 0.0
        %1411 = vmatpush1.msra.mxu0 0.0
        %1412 = vmatprep.subr.mxu0 0.0
        %1413 = vmatpush1.msra.mxu0 0.0
        %1414 = vmatprep.subr.mxu0 0.0
        %1415 = vmatpush1.msra.mxu0 0.0
        %1416 = vmatprep.subr.mxu0 0.0
        %1417 = vmatpush1.msra.mxu0 0.0
        %1418 = vmatprep.subr.mxu0 0.0
        %1419 = vmatpush1.msra.mxu0 0.0
        %1420 = vmatprep.subr.mxu0 0.0
        %1421 = vmatpush1.msra.mxu0 0.0
        %1422 = vmatprep.subr.mxu0 0.0
        %1423 = vmatpush1.msra.mxu0 0.0
        %1424 = vmatprep.subr.mxu0 0.0
        %1425 = vmatpush1.msra.mxu0 0.0
        %1426 = vmatprep.subr.mxu0 0.0
        %1427 = vmatpush1.msra.mxu0 0.0
        %1428 = vmatprep.subr.mxu0 0.0
        %1429 = vmatpush1.msra.mxu0 0.0
        %1430 = vmatprep.mubr.f32.mxu0 0.0
        %1431 = vmatmul.mubr.f32.gmra.mrb[0].mxu0 %v1287
        %v1432 = vpop.f32.mrb[0].mxu0
        %v1433 = vadd.f32 0.0, %v1432
        %v1434 = vpop.f32.mrb[0].mxu0
        %1435 = vdwg.mxu0
        %v1436 = vadd.f32 %v1291, %v1362
        %v1437 = vadd.f32 %v1292, %v1364
        %v1438 = vadd.f32 %v1293, %v1433
        %v1439 = vxor.u32 %v1436, 2147483648
        %v1440 = vxor.u32 %v1437, 2147483648
        %v1441 = vmul.f32 %v1439, 1.442695
        %v1442 = vpow.pop %v1441
        %v1443 = vmul.f32 %v1440, 1.442695
        %v1444 = vpow.pop %v1443
        %v1445 = vadd.f32 %v1442, 1.0
        %v1446 = vadd.f32 %v1444, 1.0
        %v1447 = vrcp.pop %v1445
        %v1448 = vmul.f32 1.0, %v1447
        %v1449 = vrcp.pop %v1446
        %v1450 = vmul.f32 1.0, %v1449
        %v1451 = vmul.f32 %v1448, 0.5
        %v1452 = vmul.f32 %v1450, 0.5
        %v1453 = vtanh.pop %v1438
        %v1454 = vsub.f32 %v1453, %v1212
        %v1455 = vmul.f32 %v1452, %v1454
        %v1456 = vadd.f32 %v1212, %v1455
        %1457 = vmatprep.subr.mxu0 0.0
        %1458 = vmatpush1.msra.mxu0 %v548
        %1459 = vmatprep.subr.mxu0 0.0
        %1460 = vmatpush1.msra.mxu0 %v549
        %1461 = vmatprep.subr.mxu0 0.0
        %1462 = vmatpush1.msra.mxu0 %v550
        %1463 = vmatprep.subr.mxu0 0.0
        %1464 = vmatpush1.msra.mxu0 %v551
        %1465 = vmatprep.subr.mxu0 0.0
        %1466 = vmatpush1.msra.mxu0 %v552
        %1467 = vmatprep.subr.mxu0 0.0
        %1468 = vmatpush1.msra.mxu0 %v553
        %1469 = vmatprep.subr.mxu0 0.0
        %1470 = vmatpush1.msra.mxu0 %v554
        %1471 = vmatprep.subr.mxu0 0.0
        %1472 = vmatpush1.msra.mxu0 %v555
        %1473 = vmatprep.subr.mxu0 0.0
        %1474 = vmatpush1.msra.mxu0 %v556
        %1475 = vmatprep.subr.mxu0 0.0
        %1476 = vmatpush1.msra.mxu0 %v557
        %1477 = vmatprep.subr.mxu0 0.0
        %1478 = vmatpush1.msra.mxu0 %v558
        %1479 = vmatprep.subr.mxu0 0.0
        %1480 = vmatpush1.msra.mxu0 %v559
        %1481 = vmatprep.subr.mxu0 0.0
        %1482 = vmatpush1.msra.mxu0 %v560
        %1483 = vmatprep.subr.mxu0 0.0
        %1484 = vmatpush1.msra.mxu0 %v561
        %1485 = vmatprep.subr.mxu0 0.0
        %1486 = vmatpush1.msra.mxu0 %v562
        %1487 = vmatprep.subr.mxu0 0.0
        %1488 = vmatpush1.msra.mxu0 %v563
        %1489 = vmatprep.subr.mxu0 0.0
        %1490 = vmatpush1.msra.mxu0 0.0
        %1491 = vmatprep.subr.mxu0 0.0
        %1492 = vmatpush1.msra.mxu0 0.0
        %1493 = vmatprep.subr.mxu0 0.0
        %1494 = vmatpush1.msra.mxu0 0.0
        %1495 = vmatprep.subr.mxu0 0.0
        %1496 = vmatpush1.msra.mxu0 0.0
        %1497 = vmatprep.subr.mxu0 0.0
        %1498 = vmatpush1.msra.mxu0 0.0
        %1499 = vmatprep.subr.mxu0 0.0
        %1500 = vmatpush1.msra.mxu0 0.0
        %1501 = vmatprep.subr.mxu0 0.0
        %1502 = vmatpush1.msra.mxu0 0.0
        %1503 = vmatprep.subr.mxu0 0.0
        %1504 = vmatpush1.msra.mxu0 0.0
        %1505 = vmatprep.subr.mxu0 0.0
        %1506 = vmatpush1.msra.mxu0 0.0
        %1507 = vmatprep.subr.mxu0 0.0
        %1508 = vmatpush1.msra.mxu0 0.0
        %1509 = vmatprep.subr.mxu0 0.0
        %1510 = vmatpush1.msra.mxu0 0.0
        %1511 = vmatprep.subr.mxu0 0.0
        %1512 = vmatpush1.msra.mxu0 0.0
        %1513 = vmatprep.subr.mxu0 0.0
        %1514 = vmatpush1.msra.mxu0 0.0
        %1515 = vmatprep.subr.mxu0 0.0
        %1516 = vmatpush1.msra.mxu0 0.0
        %1517 = vmatprep.subr.mxu0 0.0
        %1518 = vmatpush1.msra.mxu0 0.0
        %1519 = vmatprep.subr.mxu0 0.0
        %1520 = vmatpush1.msra.mxu0 0.0
        %1521 = vmatprep.mubr.f32.mxu0 0.0
        %1522 = vmatmul.mubr.f32.gmra.mrb[0].mxu0 %v1456
        %v1523 = vpop.f32.mrb[0].mxu0
        %v1524 = vadd.f32 0.0, %v1523
        %v1525 = vpop.f32.mrb[0].mxu0
        %1526 = vdwg.mxu0
        %v1527 = vadd.f32 %v1294, %v1524
        %v1528 = vtanh.pop %v1527
        %v1529 = vsub.f32 %v1528, %v1287
        %v1530 = vmul.f32 %v1451, %v1529
        %v1531 = vadd.f32 %v1287, %v1530
        %s1532 = scalar_lea.vmem %s249, 8 [#allocation9]
        %1533 = vst [vmem:[%s1532] sm:$0xff] %v1531
        %s1534 = scalar_lea.vmem %s256, 8 [#allocation11]
        %1535 = vst [vmem:[%s1534] sm:$0xff] %v1456
        %s1536 = scalar_lea.vmem [#allocation6], 64
        %v1537 = vld [vmem:[%s1536] sm:$0xff]
        %v1538 = vld [vmem:[%s1536 + $0x8] sm:$0xff]
        %v1539 = vld [vmem:[%s1536 + $0x10] sm:$0xff]
        %v1540 = vld [vmem:[%s1536 + $0x18] sm:$0xff]
        %1541 = vmatprep.subr.mxu0 %v501
        %1542 = vmatpush1.msra.mxu0 %v500
        %1543 = vmatprep.subr.mxu0 %v504
        %1544 = vmatpush1.msra.mxu0 %v503
        %1545 = vmatprep.subr.mxu0 %v507
        %1546 = vmatpush1.msra.mxu0 %v506
        %1547 = vmatprep.subr.mxu0 %v510
        %1548 = vmatpush1.msra.mxu0 %v509
        %1549 = vmatprep.subr.mxu0 %v513
        %1550 = vmatpush1.msra.mxu0 %v512
        %1551 = vmatprep.subr.mxu0 %v516
        %1552 = vmatpush1.msra.mxu0 %v515
        %1553 = vmatprep.subr.mxu0 %v519
        %1554 = vmatpush1.msra.mxu0 %v518
        %1555 = vmatprep.subr.mxu0 %v522
        %1556 = vmatpush1.msra.mxu0 %v521
        %1557 = vmatprep.subr.mxu0 %v525
        %1558 = vmatpush1.msra.mxu0 %v524
        %1559 = vmatprep.subr.mxu0 %v528
        %1560 = vmatpush1.msra.mxu0 %v527
        %1561 = vmatprep.subr.mxu0 %v531
        %1562 = vmatpush1.msra.mxu0 %v530
        %1563 = vmatprep.subr.mxu0 %v534
        %1564 = vmatpush1.msra.mxu0 %v533
        %1565 = vmatprep.subr.mxu0 %v537
        %1566 = vmatpush1.msra.mxu0 %v536
        %1567 = vmatprep.subr.mxu0 %v540
        %1568 = vmatpush1.msra.mxu0 %v539
        %1569 = vmatprep.subr.mxu0 %v543
        %1570 = vmatpush1.msra.mxu0 %v542
        %1571 = vmatprep.subr.mxu0 %v546
        %1572 = vmatpush1.msra.mxu0 %v545
        %1573 = vmatprep.subr.mxu0 0.0
        %1574 = vmatpush1.msra.mxu0 0.0
        %1575 = vmatprep.subr.mxu0 0.0
        %1576 = vmatpush1.msra.mxu0 0.0
        %1577 = vmatprep.subr.mxu0 0.0
        %1578 = vmatpush1.msra.mxu0 0.0
        %1579 = vmatprep.subr.mxu0 0.0
        %1580 = vmatpush1.msra.mxu0 0.0
        %1581 = vmatprep.subr.mxu0 0.0
        %1582 = vmatpush1.msra.mxu0 0.0
        %1583 = vmatprep.subr.mxu0 0.0
        %1584 = vmatpush1.msra.mxu0 0.0
        %1585 = vmatprep.subr.mxu0 0.0
        %1586 = vmatpush1.msra.mxu0 0.0
        %1587 = vmatprep.subr.mxu0 0.0
        %1588 = vmatpush1.msra.mxu0 0.0
        %1589 = vmatprep.subr.mxu0 0.0
        %1590 = vmatpush1.msra.mxu0 0.0
        %1591 = vmatprep.subr.mxu0 0.0
        %1592 = vmatpush1.msra.mxu0 0.0
        %1593 = vmatprep.subr.mxu0 0.0
        %1594 = vmatpush1.msra.mxu0 0.0
        %1595 = vmatprep.subr.mxu0 0.0
        %1596 = vmatpush1.msra.mxu0 0.0
        %1597 = vmatprep.subr.mxu0 0.0
        %1598 = vmatpush1.msra.mxu0 0.0
        %1599 = vmatprep.subr.mxu0 0.0
        %1600 = vmatpush1.msra.mxu0 0.0
        %1601 = vmatprep.subr.mxu0 0.0
        %1602 = vmatpush1.msra.mxu0 0.0
        %1603 = vmatprep.subr.mxu0 0.0
        %1604 = vmatpush1.msra.mxu0 0.0
        %1605 = vmatprep.mubr.f32.mxu0 0.0
        %1606 = vmatmul.mubr.f32.gmra.mrb[0].mxu0 %v1531
        %v1607 = vpop.f32.mrb[0].mxu0
        %v1608 = vadd.f32 0.0, %v1607
        %v1609 = vpop.f32.mrb[0].mxu0
        %v1610 = vadd.f32 0.0, %v1609
        %1611 = vdwg.mxu0
        %1612 = vmatprep.subr.mxu0 0.0
        %1613 = vmatpush1.msra.mxu0 %v502
        %1614 = vmatprep.subr.mxu0 0.0
        %1615 = vmatpush1.msra.mxu0 %v505
        %1616 = vmatprep.subr.mxu0 0.0
        %1617 = vmatpush1.msra.mxu0 %v508
        %1618 = vmatprep.subr.mxu0 0.0
        %1619 = vmatpush1.msra.mxu0 %v511
        %1620 = vmatprep.subr.mxu0 0.0
        %1621 = vmatpush1.msra.mxu0 %v514
        %1622 = vmatprep.subr.mxu0 0.0
        %1623 = vmatpush1.msra.mxu0 %v517
        %1624 = vmatprep.subr.mxu0 0.0
        %1625 = vmatpush1.msra.mxu0 %v520
        %1626 = vmatprep.subr.mxu0 0.0
        %1627 = vmatpush1.msra.mxu0 %v523
        %1628 = vmatprep.subr.mxu0 0.0
        %1629 = vmatpush1.msra.mxu0 %v526
        %1630 = vmatprep.subr.mxu0 0.0
        %1631 = vmatpush1.msra.mxu0 %v529
        %1632 = vmatprep.subr.mxu0 0.0
        %1633 = vmatpush1.msra.mxu0 %v532
        %1634 = vmatprep.subr.mxu0 0.0
        %1635 = vmatpush1.msra.mxu0 %v535
        %1636 = vmatprep.subr.mxu0 0.0
        %1637 = vmatpush1.msra.mxu0 %v538
        %1638 = vmatprep.subr.mxu0 0.0
        %1639 = vmatpush1.msra.mxu0 %v541
        %1640 = vmatprep.subr.mxu0 0.0
        %1641 = vmatpush1.msra.mxu0 %v544
        %1642 = vmatprep.subr.mxu0 0.0
        %1643 = vmatpush1.msra.mxu0 %v547
        %1644 = vmatprep.subr.mxu0 0.0
        %1645 = vmatpush1.msra.mxu0 0.0
        %1646 = vmatprep.subr.mxu0 0.0
        %1647 = vmatpush1.msra.mxu0 0.0
        %1648 = vmatprep.subr.mxu0 0.0
        %1649 = vmatpush1.msra.mxu0 0.0
        %1650 = vmatprep.subr.mxu0 0.0
        %1651 = vmatpush1.msra.mxu0 0.0
        %1652 = vmatprep.subr.mxu0 0.0
        %1653 = vmatpush1.msra.mxu0 0.0
        %1654 = vmatprep.subr.mxu0 0.0
        %1655 = vmatpush1.msra.mxu0 0.0
        %1656 = vmatprep.subr.mxu0 0.0
        %1657 = vmatpush1.msra.mxu0 0.0
        %1658 = vmatprep.subr.mxu0 0.0
        %1659 = vmatpush1.msra.mxu0 0.0
        %1660 = vmatprep.subr.mxu0 0.0
        %1661 = vmatpush1.msra.mxu0 0.0
        %1662 = vmatprep.subr.mxu0 0.0
        %1663 = vmatpush1.msra.mxu0 0.0
        %1664 = vmatprep.subr.mxu0 0.0
        %1665 = vmatpush1.msra.mxu0 0.0
        %1666 = vmatprep.subr.mxu0 0.0
        %1667 = vmatpush1.msra.mxu0 0.0
        %1668 = vmatprep.subr.mxu0 0.0
        %1669 = vmatpush1.msra.mxu0 0.0
        %1670 = vmatprep.subr.mxu0 0.0
        %1671 = vmatpush1.msra.mxu0 0.0
        %1672 = vmatprep.subr.mxu0 0.0
        %1673 = vmatpush1.msra.mxu0 0.0
        %1674 = vmatprep.subr.mxu0 0.0
        %1675 = vmatpush1.msra.mxu0 0.0
        %1676 = vmatprep.mubr.f32.mxu0 0.0
        %1677 = vmatmul.mubr.f32.gmra.mrb[0].mxu0 %v1531
        %v1678 = vpop.f32.mrb[0].mxu0
        %v1679 = vadd.f32 0.0, %v1678
        %v1680 = vpop.f32.mrb[0].mxu0
        %1681 = vdwg.mxu0
        %v1682 = vadd.f32 %v1537, %v1608
        %v1683 = vadd.f32 %v1538, %v1610
        %v1684 = vadd.f32 %v1539, %v1679
        %v1685 = vxor.u32 %v1682, 2147483648
        %v1686 = vxor.u32 %v1683, 2147483648
        %v1687 = vmul.f32 %v1685, 1.442695
        %v1688 = vpow.pop %v1687
        %v1689 = vmul.f32 %v1686, 1.442695
        %v1690 = vpow.pop %v1689
        %v1691 = vadd.f32 %v1688, 1.0
        %v1692 = vadd.f32 %v1690, 1.0
        %v1693 = vrcp.pop %v1691
        %v1694 = vmul.f32 1.0, %v1693
        %v1695 = vrcp.pop %v1692
        %v1696 = vmul.f32 1.0, %v1695
        %v1697 = vmul.f32 %v1694, 0.5
        %v1698 = vmul.f32 %v1696, 0.5
        %v1699 = vtanh.pop %v1684
        %v1700 = vsub.f32 %v1699, %v1456
        %v1701 = vmul.f32 %v1698, %v1700
        %v1702 = vadd.f32 %v1456, %v1701
        %1703 = vmatprep.subr.mxu0 0.0
        %1704 = vmatpush1.msra.mxu0 %v548
        %1705 = vmatprep.subr.mxu0 0.0
        %1706 = vmatpush1.msra.mxu0 %v549
        %1707 = vmatprep.subr.mxu0 0.0
        %1708 = vmatpush1.msra.mxu0 %v550
        %1709 = vmatprep.subr.mxu0 0.0
        %1710 = vmatpush1.msra.mxu0 %v551
        %1711 = vmatprep.subr.mxu0 0.0
        %1712 = vmatpush1.msra.mxu0 %v552
        %1713 = vmatprep.subr.mxu0 0.0
        %1714 = vmatpush1.msra.mxu0 %v553
        %1715 = vmatprep.subr.mxu0 0.0
        %1716 = vmatpush1.msra.mxu0 %v554
        %1717 = vmatprep.subr.mxu0 0.0
        %1718 = vmatpush1.msra.mxu0 %v555
        %1719 = vmatprep.subr.mxu0 0.0
        %1720 = vmatpush1.msra.mxu0 %v556
        %1721 = vmatprep.subr.mxu0 0.0
        %1722 = vmatpush1.msra.mxu0 %v557
        %1723 = vmatprep.subr.mxu0 0.0
        %1724 = vmatpush1.msra.mxu0 %v558
        %1725 = vmatprep.subr.mxu0 0.0
        %1726 = vmatpush1.msra.mxu0 %v559
        %1727 = vmatprep.subr.mxu0 0.0
        %1728 = vmatpush1.msra.mxu0 %v560
        %1729 = vmatprep.subr.mxu0 0.0
        %1730 = vmatpush1.msra.mxu0 %v561
        %1731 = vmatprep.subr.mxu0 0.0
        %1732 = vmatpush1.msra.mxu0 %v562
        %1733 = vmatprep.subr.mxu0 0.0
        %1734 = vmatpush1.msra.mxu0 %v563
        %1735 = vmatprep.subr.mxu0 0.0
        %1736 = vmatpush1.msra.mxu0 0.0
        %1737 = vmatprep.subr.mxu0 0.0
        %1738 = vmatpush1.msra.mxu0 0.0
        %1739 = vmatprep.subr.mxu0 0.0
        %1740 = vmatpush1.msra.mxu0 0.0
        %1741 = vmatprep.subr.mxu0 0.0
        %1742 = vmatpush1.msra.mxu0 0.0
        %1743 = vmatprep.subr.mxu0 0.0
        %1744 = vmatpush1.msra.mxu0 0.0
        %1745 = vmatprep.subr.mxu0 0.0
        %1746 = vmatpush1.msra.mxu0 0.0
        %1747 = vmatprep.subr.mxu0 0.0
        %1748 = vmatpush1.msra.mxu0 0.0
        %1749 = vmatprep.subr.mxu0 0.0
        %1750 = vmatpush1.msra.mxu0 0.0
        %1751 = vmatprep.subr.mxu0 0.0
        %1752 = vmatpush1.msra.mxu0 0.0
        %1753 = vmatprep.subr.mxu0 0.0
        %1754 = vmatpush1.msra.mxu0 0.0
        %1755 = vmatprep.subr.mxu0 0.0
        %1756 = vmatpush1.msra.mxu0 0.0
        %1757 = vmatprep.subr.mxu0 0.0
        %1758 = vmatpush1.msra.mxu0 0.0
        %1759 = vmatprep.subr.mxu0 0.0
        %1760 = vmatpush1.msra.mxu0 0.0
        %1761 = vmatprep.subr.mxu0 0.0
        %1762 = vmatpush1.msra.mxu0 0.0
        %1763 = vmatprep.subr.mxu0 0.0
        %1764 = vmatpush1.msra.mxu0 0.0
        %1765 = vmatprep.subr.mxu0 0.0
        %1766 = vmatpush1.msra.mxu0 0.0
        %1767 = vmatprep.mubr.f32.mxu0 0.0
        %1768 = vmatmul.mubr.f32.gmra.mrb[0].mxu0 %v1702
        %v1769 = vpop.f32.mrb[0].mxu0
        %v1770 = vadd.f32 0.0, %v1769
        %v1771 = vpop.f32.mrb[0].mxu0
        %1772 = vdwg.mxu0
        %v1773 = vadd.f32 %v1540, %v1770
        %v1774 = vtanh.pop %v1773
        %v1775 = vsub.f32 %v1774, %v1531
        %v1776 = vmul.f32 %v1697, %v1775
        %v1777 = vadd.f32 %v1531, %v1776
        %s1778 = scalar_lea.vmem %s249, 16 [#allocation9]
        %1779 = vst [vmem:[%s1778] sm:$0xff] %v1777
        %s1780 = scalar_lea.vmem %s256, 16 [#allocation11]
        %1781 = vst [vmem:[%s1780] sm:$0xff] %v1702
        %s1782 = scalar_lea.vmem [#allocation6], 96
        %v1783 = vld [vmem:[%s1782] sm:$0xff]
        %v1784 = vld [vmem:[%s1782 + $0x8] sm:$0xff]
        %v1785 = vld [vmem:[%s1782 + $0x10] sm:$0xff]
        %v1786 = vld [vmem:[%s1782 + $0x18] sm:$0xff]
        %1787 = vmatprep.subr.mxu0 %v501
        %1788 = vmatpush1.msra.mxu0 %v500
        %1789 = vmatprep.subr.mxu0 %v504
        %1790 = vmatpush1.msra.mxu0 %v503
        %1791 = vmatprep.subr.mxu0 %v507
        %1792 = vmatpush1.msra.mxu0 %v506
        %1793 = vmatprep.subr.mxu0 %v510
        %1794 = vmatpush1.msra.mxu0 %v509
        %1795 = vmatprep.subr.mxu0 %v513
        %1796 = vmatpush1.msra.mxu0 %v512
        %1797 = vmatprep.subr.mxu0 %v516
        %1798 = vmatpush1.msra.mxu0 %v515
        %1799 = vmatprep.subr.mxu0 %v519
        %1800 = vmatpush1.msra.mxu0 %v518
        %1801 = vmatprep.subr.mxu0 %v522
        %1802 = vmatpush1.msra.mxu0 %v521
        %1803 = vmatprep.subr.mxu0 %v525
        %1804 = vmatpush1.msra.mxu0 %v524
        %1805 = vmatprep.subr.mxu0 %v528
        %1806 = vmatpush1.msra.mxu0 %v527
        %1807 = vmatprep.subr.mxu0 %v531
        %1808 = vmatpush1.msra.mxu0 %v530
        %1809 = vmatprep.subr.mxu0 %v534
        %1810 = vmatpush1.msra.mxu0 %v533
        %1811 = vmatprep.subr.mxu0 %v537
        %1812 = vmatpush1.msra.mxu0 %v536
        %1813 = vmatprep.subr.mxu0 %v540
        %1814 = vmatpush1.msra.mxu0 %v539
        %1815 = vmatprep.subr.mxu0 %v543
        %1816 = vmatpush1.msra.mxu0 %v542
        %1817 = vmatprep.subr.mxu0 %v546
        %1818 = vmatpush1.msra.mxu0 %v545
        %1819 = vmatprep.subr.mxu0 0.0
        %1820 = vmatpush1.msra.mxu0 0.0
        %1821 = vmatprep.subr.mxu0 0.0
        %1822 = vmatpush1.msra.mxu0 0.0
        %1823 = vmatprep.subr.mxu0 0.0
        %1824 = vmatpush1.msra.mxu0 0.0
        %1825 = vmatprep.subr.mxu0 0.0
        %1826 = vmatpush1.msra.mxu0 0.0
        %1827 = vmatprep.subr.mxu0 0.0
        %1828 = vmatpush1.msra.mxu0 0.0
        %1829 = vmatprep.subr.mxu0 0.0
        %1830 = vmatpush1.msra.mxu0 0.0
        %1831 = vmatprep.subr.mxu0 0.0
        %1832 = vmatpush1.msra.mxu0 0.0
        %1833 = vmatprep.subr.mxu0 0.0
        %1834 = vmatpush1.msra.mxu0 0.0
        %1835 = vmatprep.subr.mxu0 0.0
        %1836 = vmatpush1.msra.mxu0 0.0
        %1837 = vmatprep.subr.mxu0 0.0
        %1838 = vmatpush1.msra.mxu0 0.0
        %1839 = vmatprep.subr.mxu0 0.0
        %1840 = vmatpush1.msra.mxu0 0.0
        %1841 = vmatprep.subr.mxu0 0.0
        %1842 = vmatpush1.msra.mxu0 0.0
        %1843 = vmatprep.subr.mxu0 0.0
        %1844 = vmatpush1.msra.mxu0 0.0
        %1845 = vmatprep.subr.mxu0 0.0
        %1846 = vmatpush1.msra.mxu0 0.0
        %1847 = vmatprep.subr.mxu0 0.0
        %1848 = vmatpush1.msra.mxu0 0.0
        %1849 = vmatprep.subr.mxu0 0.0
        %1850 = vmatpush1.msra.mxu0 0.0
        %1851 = vmatprep.mubr.f32.mxu0 0.0
        %1852 = vmatmul.mubr.f32.gmra.mrb[0].mxu0 %v1777
        %v1853 = vpop.f32.mrb[0].mxu0
        %v1854 = vadd.f32 0.0, %v1853
        %v1855 = vpop.f32.mrb[0].mxu0
        %v1856 = vadd.f32 0.0, %v1855
        %1857 = vdwg.mxu0
        %1858 = vmatprep.subr.mxu0 0.0
        %1859 = vmatpush1.msra.mxu0 %v502
        %1860 = vmatprep.subr.mxu0 0.0
        %1861 = vmatpush1.msra.mxu0 %v505
        %1862 = vmatprep.subr.mxu0 0.0
        %1863 = vmatpush1.msra.mxu0 %v508
        %1864 = vmatprep.subr.mxu0 0.0
        %1865 = vmatpush1.msra.mxu0 %v511
        %1866 = vmatprep.subr.mxu0 0.0
        %1867 = vmatpush1.msra.mxu0 %v514
        %1868 = vmatprep.subr.mxu0 0.0
        %1869 = vmatpush1.msra.mxu0 %v517
        %1870 = vmatprep.subr.mxu0 0.0
        %1871 = vmatpush1.msra.mxu0 %v520
        %1872 = vmatprep.subr.mxu0 0.0
        %1873 = vmatpush1.msra.mxu0 %v523
        %1874 = vmatprep.subr.mxu0 0.0
        %1875 = vmatpush1.msra.mxu0 %v526
        %1876 = vmatprep.subr.mxu0 0.0
        %1877 = vmatpush1.msra.mxu0 %v529
        %1878 = vmatprep.subr.mxu0 0.0
        %1879 = vmatpush1.msra.mxu0 %v532
        %1880 = vmatprep.subr.mxu0 0.0
        %1881 = vmatpush1.msra.mxu0 %v535
        %1882 = vmatprep.subr.mxu0 0.0
        %1883 = vmatpush1.msra.mxu0 %v538
        %1884 = vmatprep.subr.mxu0 0.0
        %1885 = vmatpush1.msra.mxu0 %v541
        %1886 = vmatprep.subr.mxu0 0.0
        %1887 = vmatpush1.msra.mxu0 %v544
        %1888 = vmatprep.subr.mxu0 0.0
        %1889 = vmatpush1.msra.mxu0 %v547
        %1890 = vmatprep.subr.mxu0 0.0
        %1891 = vmatpush1.msra.mxu0 0.0
        %1892 = vmatprep.subr.mxu0 0.0
        %1893 = vmatpush1.msra.mxu0 0.0
        %1894 = vmatprep.subr.mxu0 0.0
        %1895 = vmatpush1.msra.mxu0 0.0
        %1896 = vmatprep.subr.mxu0 0.0
        %1897 = vmatpush1.msra.mxu0 0.0
        %1898 = vmatprep.subr.mxu0 0.0
        %1899 = vmatpush1.msra.mxu0 0.0
        %1900 = vmatprep.subr.mxu0 0.0
        %1901 = vmatpush1.msra.mxu0 0.0
        %1902 = vmatprep.subr.mxu0 0.0
        %1903 = vmatpush1.msra.mxu0 0.0
        %1904 = vmatprep.subr.mxu0 0.0
        %1905 = vmatpush1.msra.mxu0 0.0
        %1906 = vmatprep.subr.mxu0 0.0
        %1907 = vmatpush1.msra.mxu0 0.0
        %1908 = vmatprep.subr.mxu0 0.0
        %1909 = vmatpush1.msra.mxu0 0.0
        %1910 = vmatprep.subr.mxu0 0.0
        %1911 = vmatpush1.msra.mxu0 0.0
        %1912 = vmatprep.subr.mxu0 0.0
        %1913 = vmatpush1.msra.mxu0 0.0
        %1914 = vmatprep.subr.mxu0 0.0
        %1915 = vmatpush1.msra.mxu0 0.0
        %1916 = vmatprep.subr.mxu0 0.0
        %1917 = vmatpush1.msra.mxu0 0.0
        %1918 = vmatprep.subr.mxu0 0.0
        %1919 = vmatpush1.msra.mxu0 0.0
        %1920 = vmatprep.subr.mxu0 0.0
        %1921 = vmatpush1.msra.mxu0 0.0
        %1922 = vmatprep.mubr.f32.mxu0 0.0
        %1923 = vmatmul.mubr.f32.gmra.mrb[0].mxu0 %v1777
        %v1924 = vpop.f32.mrb[0].mxu0
        %v1925 = vadd.f32 0.0, %v1924
        %v1926 = vpop.f32.mrb[0].mxu0
        %1927 = vdwg.mxu0
        %v1928 = vadd.f32 %v1783, %v1854
        %v1929 = vadd.f32 %v1784, %v1856
        %v1930 = vadd.f32 %v1785, %v1925
        %v1931 = vxor.u32 %v1928, 2147483648
        %v1932 = vxor.u32 %v1929, 2147483648
        %v1933 = vmul.f32 %v1931, 1.442695
        %v1934 = vpow.pop %v1933
        %v1935 = vmul.f32 %v1932, 1.442695
        %v1936 = vpow.pop %v1935
        %v1937 = vadd.f32 %v1934, 1.0
        %v1938 = vadd.f32 %v1936, 1.0
        %v1939 = vrcp.pop %v1937
        %v1940 = vmul.f32 1.0, %v1939
        %v1941 = vrcp.pop %v1938
        %v1942 = vmul.f32 1.0, %v1941
        %v1943 = vmul.f32 %v1940, 0.5
        %v1944 = vmul.f32 %v1942, 0.5
        %v1945 = vtanh.pop %v1930
        %v1946 = vsub.f32 %v1945, %v1702
        %v1947 = vmul.f32 %v1944, %v1946
        %v1948 = vadd.f32 %v1702, %v1947
        %1949 = vmatprep.subr.mxu0 0.0
        %1950 = vmatpush1.msra.mxu0 %v548
        %1951 = vmatprep.subr.mxu0 0.0
        %1952 = vmatpush1.msra.mxu0 %v549
        %1953 = vmatprep.subr.mxu0 0.0
        %1954 = vmatpush1.msra.mxu0 %v550
        %1955 = vmatprep.subr.mxu0 0.0
        %1956 = vmatpush1.msra.mxu0 %v551
        %1957 = vmatprep.subr.mxu0 0.0
        %1958 = vmatpush1.msra.mxu0 %v552
        %1959 = vmatprep.subr.mxu0 0.0
        %1960 = vmatpush1.msra.mxu0 %v553
        %1961 = vmatprep.subr.mxu0 0.0
        %1962 = vmatpush1.msra.mxu0 %v554
        %1963 = vmatprep.subr.mxu0 0.0
        %1964 = vmatpush1.msra.mxu0 %v555
        %1965 = vmatprep.subr.mxu0 0.0
        %1966 = vmatpush1.msra.mxu0 %v556
        %1967 = vmatprep.subr.mxu0 0.0
        %1968 = vmatpush1.msra.mxu0 %v557
        %1969 = vmatprep.subr.mxu0 0.0
        %1970 = vmatpush1.msra.mxu0 %v558
        %1971 = vmatprep.subr.mxu0 0.0
        %1972 = vmatpush1.msra.mxu0 %v559
        %1973 = vmatprep.subr.mxu0 0.0
        %1974 = vmatpush1.msra.mxu0 %v560
        %1975 = vmatprep.subr.mxu0 0.0
        %1976 = vmatpush1.msra.mxu0 %v561
        %1977 = vmatprep.subr.mxu0 0.0
        %1978 = vmatpush1.msra.mxu0 %v562
        %1979 = vmatprep.subr.mxu0 0.0
        %1980 = vmatpush1.msra.mxu0 %v563
        %1981 = vmatprep.subr.mxu0 0.0
        %1982 = vmatpush1.msra.mxu0 0.0
        %1983 = vmatprep.subr.mxu0 0.0
        %1984 = vmatpush1.msra.mxu0 0.0
        %1985 = vmatprep.subr.mxu0 0.0
        %1986 = vmatpush1.msra.mxu0 0.0
        %1987 = vmatprep.subr.mxu0 0.0
        %1988 = vmatpush1.msra.mxu0 0.0
        %1989 = vmatprep.subr.mxu0 0.0
        %1990 = vmatpush1.msra.mxu0 0.0
        %1991 = vmatprep.subr.mxu0 0.0
        %1992 = vmatpush1.msra.mxu0 0.0
        %1993 = vmatprep.subr.mxu0 0.0
        %1994 = vmatpush1.msra.mxu0 0.0
        %1995 = vmatprep.subr.mxu0 0.0
        %1996 = vmatpush1.msra.mxu0 0.0
        %1997 = vmatprep.subr.mxu0 0.0
        %1998 = vmatpush1.msra.mxu0 0.0
        %1999 = vmatprep.subr.mxu0 0.0
        %2000 = vmatpush1.msra.mxu0 0.0
        %2001 = vmatprep.subr.mxu0 0.0
        %2002 = vmatpush1.msra.mxu0 0.0
        %2003 = vmatprep.subr.mxu0 0.0
        %2004 = vmatpush1.msra.mxu0 0.0
        %2005 = vmatprep.subr.mxu0 0.0
        %2006 = vmatpush1.msra.mxu0 0.0
        %2007 = vmatprep.subr.mxu0 0.0
        %2008 = vmatpush1.msra.mxu0 0.0
        %2009 = vmatprep.subr.mxu0 0.0
        %2010 = vmatpush1.msra.mxu0 0.0
        %2011 = vmatprep.subr.mxu0 0.0
        %2012 = vmatpush1.msra.mxu0 0.0
        %2013 = vmatprep.mubr.f32.mxu0 0.0
        %2014 = vmatmul.mubr.f32.gmra.mrb[0].mxu0 %v1948
        %v2015 = vpop.f32.mrb[0].mxu0
        %v2016 = vadd.f32 0.0, %v2015
        %v2017 = vpop.f32.mrb[0].mxu0
        %2018 = vdwg.mxu0
        %v2019 = vadd.f32 %v1786, %v2016
        %v2020 = vtanh.pop %v2019
        %v2021 = vsub.f32 %v2020, %v1777
        %v2022 = vmul.f32 %v1943, %v2021
        %v2023 = vadd.f32 %v1777, %v2022
        %s2024 = scalar_lea.vmem %s249, 24 [#allocation9]
        %2025 = vst [vmem:[%s2024] sm:$0xff] %v2023
        %s2026 = scalar_lea.vmem %s256, 24 [#allocation11]
        %2027 = vst [vmem:[%s2026] sm:$0xff] %v1948
        %s2028 = scalar_lea.vmem [#allocation6], 128
        %v2029 = vld [vmem:[%s2028] sm:$0xff]
        %v2030 = vld [vmem:[%s2028 + $0x8] sm:$0xff]
        %v2031 = vld [vmem:[%s2028 + $0x10] sm:$0xff]
        %v2032 = vld [vmem:[%s2028 + $0x18] sm:$0xff]
        %2033 = vmatprep.subr.mxu0 %v501
        %2034 = vmatpush1.msra.mxu0 %v500
        %2035 = vmatprep.subr.mxu0 %v504
        %2036 = vmatpush1.msra.mxu0 %v503
        %2037 = vmatprep.subr.mxu0 %v507
        %2038 = vmatpush1.msra.mxu0 %v506
        %2039 = vmatprep.subr.mxu0 %v510
        %2040 = vmatpush1.msra.mxu0 %v509
        %2041 = vmatprep.subr.mxu0 %v513
        %2042 = vmatpush1.msra.mxu0 %v512
        %2043 = vmatprep.subr.mxu0 %v516
        %2044 = vmatpush1.msra.mxu0 %v515
        %2045 = vmatprep.subr.mxu0 %v519
        %2046 = vmatpush1.msra.mxu0 %v518
        %2047 = vmatprep.subr.mxu0 %v522
        %2048 = vmatpush1.msra.mxu0 %v521
        %2049 = vmatprep.subr.mxu0 %v525
        %2050 = vmatpush1.msra.mxu0 %v524
        %2051 = vmatprep.subr.mxu0 %v528
        %2052 = vmatpush1.msra.mxu0 %v527
        %2053 = vmatprep.subr.mxu0 %v531
        %2054 = vmatpush1.msra.mxu0 %v530
        %2055 = vmatprep.subr.mxu0 %v534
        %2056 = vmatpush1.msra.mxu0 %v533
        %2057 = vmatprep.subr.mxu0 %v537
        %2058 = vmatpush1.msra.mxu0 %v536
        %2059 = vmatprep.subr.mxu0 %v540
        %2060 = vmatpush1.msra.mxu0 %v539
        %2061 = vmatprep.subr.mxu0 %v543
        %2062 = vmatpush1.msra.mxu0 %v542
        %2063 = vmatprep.subr.mxu0 %v546
        %2064 = vmatpush1.msra.mxu0 %v545
        %2065 = vmatprep.subr.mxu0 0.0
        %2066 = vmatpush1.msra.mxu0 0.0
        %2067 = vmatprep.subr.mxu0 0.0
        %2068 = vmatpush1.msra.mxu0 0.0
        %2069 = vmatprep.subr.mxu0 0.0
        %2070 = vmatpush1.msra.mxu0 0.0
        %2071 = vmatprep.subr.mxu0 0.0
        %2072 = vmatpush1.msra.mxu0 0.0
        %2073 = vmatprep.subr.mxu0 0.0
        %2074 = vmatpush1.msra.mxu0 0.0
        %2075 = vmatprep.subr.mxu0 0.0
        %2076 = vmatpush1.msra.mxu0 0.0
        %2077 = vmatprep.subr.mxu0 0.0
        %2078 = vmatpush1.msra.mxu0 0.0
        %2079 = vmatprep.subr.mxu0 0.0
        %2080 = vmatpush1.msra.mxu0 0.0
        %2081 = vmatprep.subr.mxu0 0.0
        %2082 = vmatpush1.msra.mxu0 0.0
        %2083 = vmatprep.subr.mxu0 0.0
        %2084 = vmatpush1.msra.mxu0 0.0
        %2085 = vmatprep.subr.mxu0 0.0
        %2086 = vmatpush1.msra.mxu0 0.0
        %2087 = vmatprep.subr.mxu0 0.0
        %2088 = vmatpush1.msra.mxu0 0.0
        %2089 = vmatprep.subr.mxu0 0.0
        %2090 = vmatpush1.msra.mxu0 0.0
        %2091 = vmatprep.subr.mxu0 0.0
        %2092 = vmatpush1.msra.mxu0 0.0
        %2093 = vmatprep.subr.mxu0 0.0
        %2094 = vmatpush1.msra.mxu0 0.0
        %2095 = vmatprep.subr.mxu0 0.0
        %2096 = vmatpush1.msra.mxu0 0.0
        %2097 = vmatprep.mubr.f32.mxu0 0.0
        %2098 = vmatmul.mubr.f32.gmra.mrb[0].mxu0 %v2023
        %v2099 = vpop.f32.mrb[0].mxu0
        %v2100 = vadd.f32 0.0, %v2099
        %v2101 = vpop.f32.mrb[0].mxu0
        %v2102 = vadd.f32 0.0, %v2101
        %2103 = vdwg.mxu0
        %2104 = vmatprep.subr.mxu0 0.0
        %2105 = vmatpush1.msra.mxu0 %v502
        %2106 = vmatprep.subr.mxu0 0.0
        %2107 = vmatpush1.msra.mxu0 %v505
        %2108 = vmatprep.subr.mxu0 0.0
        %2109 = vmatpush1.msra.mxu0 %v508
        %2110 = vmatprep.subr.mxu0 0.0
        %2111 = vmatpush1.msra.mxu0 %v511
        %2112 = vmatprep.subr.mxu0 0.0
        %2113 = vmatpush1.msra.mxu0 %v514
        %2114 = vmatprep.subr.mxu0 0.0
        %2115 = vmatpush1.msra.mxu0 %v517
        %2116 = vmatprep.subr.mxu0 0.0
        %2117 = vmatpush1.msra.mxu0 %v520
        %2118 = vmatprep.subr.mxu0 0.0
        %2119 = vmatpush1.msra.mxu0 %v523
        %2120 = vmatprep.subr.mxu0 0.0
        %2121 = vmatpush1.msra.mxu0 %v526
        %2122 = vmatprep.subr.mxu0 0.0
        %2123 = vmatpush1.msra.mxu0 %v529
        %2124 = vmatprep.subr.mxu0 0.0
        %2125 = vmatpush1.msra.mxu0 %v532
        %2126 = vmatprep.subr.mxu0 0.0
        %2127 = vmatpush1.msra.mxu0 %v535
        %2128 = vmatprep.subr.mxu0 0.0
        %2129 = vmatpush1.msra.mxu0 %v538
        %2130 = vmatprep.subr.mxu0 0.0
        %2131 = vmatpush1.msra.mxu0 %v541
        %2132 = vmatprep.subr.mxu0 0.0
        %2133 = vmatpush1.msra.mxu0 %v544
        %2134 = vmatprep.subr.mxu0 0.0
        %2135 = vmatpush1.msra.mxu0 %v547
        %2136 = vmatprep.subr.mxu0 0.0
        %2137 = vmatpush1.msra.mxu0 0.0
        %2138 = vmatprep.subr.mxu0 0.0
        %2139 = vmatpush1.msra.mxu0 0.0
        %2140 = vmatprep.subr.mxu0 0.0
        %2141 = vmatpush1.msra.mxu0 0.0
        %2142 = vmatprep.subr.mxu0 0.0
        %2143 = vmatpush1.msra.mxu0 0.0
        %2144 = vmatprep.subr.mxu0 0.0
        %2145 = vmatpush1.msra.mxu0 0.0
        %2146 = vmatprep.subr.mxu0 0.0
        %2147 = vmatpush1.msra.mxu0 0.0
        %2148 = vmatprep.subr.mxu0 0.0
        %2149 = vmatpush1.msra.mxu0 0.0
        %2150 = vmatprep.subr.mxu0 0.0
        %2151 = vmatpush1.msra.mxu0 0.0
        %2152 = vmatprep.subr.mxu0 0.0
        %2153 = vmatpush1.msra.mxu0 0.0
        %2154 = vmatprep.subr.mxu0 0.0
        %2155 = vmatpush1.msra.mxu0 0.0
        %2156 = vmatprep.subr.mxu0 0.0
        %2157 = vmatpush1.msra.mxu0 0.0
        %2158 = vmatprep.subr.mxu0 0.0
        %2159 = vmatpush1.msra.mxu0 0.0
        %2160 = vmatprep.subr.mxu0 0.0
        %2161 = vmatpush1.msra.mxu0 0.0
        %2162 = vmatprep.subr.mxu0 0.0
        %2163 = vmatpush1.msra.mxu0 0.0
        %2164 = vmatprep.subr.mxu0 0.0
        %2165 = vmatpush1.msra.mxu0 0.0
        %2166 = vmatprep.subr.mxu0 0.0
        %2167 = vmatpush1.msra.mxu0 0.0
        %2168 = vmatprep.mubr.f32.mxu0 0.0
        %2169 = vmatmul.mubr.f32.gmra.mrb[0].mxu0 %v2023
        %v2170 = vpop.f32.mrb[0].mxu0
        %v2171 = vadd.f32 0.0, %v2170
        %v2172 = vpop.f32.mrb[0].mxu0
        %2173 = vdwg.mxu0
        %v2174 = vadd.f32 %v2029, %v2100
        %v2175 = vadd.f32 %v2030, %v2102
        %v2176 = vadd.f32 %v2031, %v2171
        %v2177 = vxor.u32 %v2174, 2147483648
        %v2178 = vxor.u32 %v2175, 2147483648
        %v2179 = vmul.f32 %v2177, 1.442695
        %v2180 = vpow.pop %v2179
        %v2181 = vmul.f32 %v2178, 1.442695
        %v2182 = vpow.pop %v2181
        %v2183 = vadd.f32 %v2180, 1.0
        %v2184 = vadd.f32 %v2182, 1.0
        %v2185 = vrcp.pop %v2183
        %v2186 = vmul.f32 1.0, %v2185
        %v2187 = vrcp.pop %v2184
        %v2188 = vmul.f32 1.0, %v2187
        %v2189 = vmul.f32 %v2186, 0.5
        %v2190 = vmul.f32 %v2188, 0.5
        %v2191 = vtanh.pop %v2176
        %v2192 = vsub.f32 %v2191, %v1948
        %v2193 = vmul.f32 %v2190, %v2192
        %v2194 = vadd.f32 %v1948, %v2193
        %2195 = vmatprep.subr.mxu0 0.0
        %2196 = vmatpush1.msra.mxu0 %v548
        %2197 = vmatprep.subr.mxu0 0.0
        %2198 = vmatpush1.msra.mxu0 %v549
        %2199 = vmatprep.subr.mxu0 0.0
        %2200 = vmatpush1.msra.mxu0 %v550
        %2201 = vmatprep.subr.mxu0 0.0
        %2202 = vmatpush1.msra.mxu0 %v551
        %2203 = vmatprep.subr.mxu0 0.0
        %2204 = vmatpush1.msra.mxu0 %v552
        %2205 = vmatprep.subr.mxu0 0.0
        %2206 = vmatpush1.msra.mxu0 %v553
        %2207 = vmatprep.subr.mxu0 0.0
        %2208 = vmatpush1.msra.mxu0 %v554
        %2209 = vmatprep.subr.mxu0 0.0
        %2210 = vmatpush1.msra.mxu0 %v555
        %2211 = vmatprep.subr.mxu0 0.0
        %2212 = vmatpush1.msra.mxu0 %v556
        %2213 = vmatprep.subr.mxu0 0.0
        %2214 = vmatpush1.msra.mxu0 %v557
        %2215 = vmatprep.subr.mxu0 0.0
        %2216 = vmatpush1.msra.mxu0 %v558
        %2217 = vmatprep.subr.mxu0 0.0
        %2218 = vmatpush1.msra.mxu0 %v559
        %2219 = vmatprep.subr.mxu0 0.0
        %2220 = vmatpush1.msra.mxu0 %v560
        %2221 = vmatprep.subr.mxu0 0.0
        %2222 = vmatpush1.msra.mxu0 %v561
        %2223 = vmatprep.subr.mxu0 0.0
        %2224 = vmatpush1.msra.mxu0 %v562
        %2225 = vmatprep.subr.mxu0 0.0
        %2226 = vmatpush1.msra.mxu0 %v563
        %2227 = vmatprep.subr.mxu0 0.0
        %2228 = vmatpush1.msra.mxu0 0.0
        %2229 = vmatprep.subr.mxu0 0.0
        %2230 = vmatpush1.msra.mxu0 0.0
        %2231 = vmatprep.subr.mxu0 0.0
        %2232 = vmatpush1.msra.mxu0 0.0
        %2233 = vmatprep.subr.mxu0 0.0
        %2234 = vmatpush1.msra.mxu0 0.0
        %2235 = vmatprep.subr.mxu0 0.0
        %2236 = vmatpush1.msra.mxu0 0.0
        %2237 = vmatprep.subr.mxu0 0.0
        %2238 = vmatpush1.msra.mxu0 0.0
        %2239 = vmatprep.subr.mxu0 0.0
        %2240 = vmatpush1.msra.mxu0 0.0
        %2241 = vmatprep.subr.mxu0 0.0
        %2242 = vmatpush1.msra.mxu0 0.0
        %2243 = vmatprep.subr.mxu0 0.0
        %2244 = vmatpush1.msra.mxu0 0.0
        %2245 = vmatprep.subr.mxu0 0.0
        %2246 = vmatpush1.msra.mxu0 0.0
        %2247 = vmatprep.subr.mxu0 0.0
        %2248 = vmatpush1.msra.mxu0 0.0
        %2249 = vmatprep.subr.mxu0 0.0
        %2250 = vmatpush1.msra.mxu0 0.0
        %2251 = vmatprep.subr.mxu0 0.0
        %2252 = vmatpush1.msra.mxu0 0.0
        %2253 = vmatprep.subr.mxu0 0.0
        %2254 = vmatpush1.msra.mxu0 0.0
        %2255 = vmatprep.subr.mxu0 0.0
        %2256 = vmatpush1.msra.mxu0 0.0
        %2257 = vmatprep.subr.mxu0 0.0
        %2258 = vmatpush1.msra.mxu0 0.0
        %2259 = vmatprep.mubr.f32.mxu0 0.0
        %2260 = vmatmul.mubr.f32.gmra.mrb[0].mxu0 %v2194
        %v2261 = vpop.f32.mrb[0].mxu0
        %v2262 = vadd.f32 0.0, %v2261
        %v2263 = vpop.f32.mrb[0].mxu0
        %2264 = vdwg.mxu0
        %v2265 = vadd.f32 %v2032, %v2262
        %v2266 = vtanh.pop %v2265
        %v2267 = vsub.f32 %v2266, %v2023
        %v2268 = vmul.f32 %v2189, %v2267
        %v2269 = vadd.f32 %v2023, %v2268
        %s2270 = scalar_lea.vmem %s249, 32 [#allocation9]
        %2271 = vst [vmem:[%s2270] sm:$0xff] %v2269
        %s2272 = scalar_lea.vmem %s256, 32 [#allocation11]
        %2273 = vst [vmem:[%s2272] sm:$0xff] %v2194
        %s2274 = scalar_lea.vmem [#allocation6], 160
        %v2275 = vld [vmem:[%s2274] sm:$0xff]
        %v2276 = vld [vmem:[%s2274 + $0x8] sm:$0xff]
        %v2277 = vld [vmem:[%s2274 + $0x10] sm:$0xff]
        %v2278 = vld [vmem:[%s2274 + $0x18] sm:$0xff]
        %2279 = vmatprep.subr.mxu0 %v501
        %2280 = vmatpush1.msra.mxu0 %v500
        %2281 = vmatprep.subr.mxu0 %v504
        %2282 = vmatpush1.msra.mxu0 %v503
        %2283 = vmatprep.subr.mxu0 %v507
        %2284 = vmatpush1.msra.mxu0 %v506
        %2285 = vmatprep.subr.mxu0 %v510
        %2286 = vmatpush1.msra.mxu0 %v509
        %2287 = vmatprep.subr.mxu0 %v513
        %2288 = vmatpush1.msra.mxu0 %v512
        %2289 = vmatprep.subr.mxu0 %v516
        %2290 = vmatpush1.msra.mxu0 %v515
        %2291 = vmatprep.subr.mxu0 %v519
        %2292 = vmatpush1.msra.mxu0 %v518
        %2293 = vmatprep.subr.mxu0 %v522
        %2294 = vmatpush1.msra.mxu0 %v521
        %2295 = vmatprep.subr.mxu0 %v525
        %2296 = vmatpush1.msra.mxu0 %v524
        %2297 = vmatprep.subr.mxu0 %v528
        %2298 = vmatpush1.msra.mxu0 %v527
        %2299 = vmatprep.subr.mxu0 %v531
        %2300 = vmatpush1.msra.mxu0 %v530
        %2301 = vmatprep.subr.mxu0 %v534
        %2302 = vmatpush1.msra.mxu0 %v533
        %2303 = vmatprep.subr.mxu0 %v537
        %2304 = vmatpush1.msra.mxu0 %v536
        %2305 = vmatprep.subr.mxu0 %v540
        %2306 = vmatpush1.msra.mxu0 %v539
        %2307 = vmatprep.subr.mxu0 %v543
        %2308 = vmatpush1.msra.mxu0 %v542
        %2309 = vmatprep.subr.mxu0 %v546
        %2310 = vmatpush1.msra.mxu0 %v545
        %2311 = vmatprep.subr.mxu0 0.0
        %2312 = vmatpush1.msra.mxu0 0.0
        %2313 = vmatprep.subr.mxu0 0.0
        %2314 = vmatpush1.msra.mxu0 0.0
        %2315 = vmatprep.subr.mxu0 0.0
        %2316 = vmatpush1.msra.mxu0 0.0
        %2317 = vmatprep.subr.mxu0 0.0
        %2318 = vmatpush1.msra.mxu0 0.0
        %2319 = vmatprep.subr.mxu0 0.0
        %2320 = vmatpush1.msra.mxu0 0.0
        %2321 = vmatprep.subr.mxu0 0.0
        %2322 = vmatpush1.msra.mxu0 0.0
        %2323 = vmatprep.subr.mxu0 0.0
        %2324 = vmatpush1.msra.mxu0 0.0
        %2325 = vmatprep.subr.mxu0 0.0
        %2326 = vmatpush1.msra.mxu0 0.0
        %2327 = vmatprep.subr.mxu0 0.0
        %2328 = vmatpush1.msra.mxu0 0.0
        %2329 = vmatprep.subr.mxu0 0.0
        %2330 = vmatpush1.msra.mxu0 0.0
        %2331 = vmatprep.subr.mxu0 0.0
        %2332 = vmatpush1.msra.mxu0 0.0
        %2333 = vmatprep.subr.mxu0 0.0
        %2334 = vmatpush1.msra.mxu0 0.0
        %2335 = vmatprep.subr.mxu0 0.0
        %2336 = vmatpush1.msra.mxu0 0.0
        %2337 = vmatprep.subr.mxu0 0.0
        %2338 = vmatpush1.msra.mxu0 0.0
        %2339 = vmatprep.subr.mxu0 0.0
        %2340 = vmatpush1.msra.mxu0 0.0
        %2341 = vmatprep.subr.mxu0 0.0
        %2342 = vmatpush1.msra.mxu0 0.0
        %2343 = vmatprep.mubr.f32.mxu0 0.0
        %2344 = vmatmul.mubr.f32.gmra.mrb[0].mxu0 %v2269
        %v2345 = vpop.f32.mrb[0].mxu0
        %v2346 = vadd.f32 0.0, %v2345
        %v2347 = vpop.f32.mrb[0].mxu0
        %v2348 = vadd.f32 0.0, %v2347
        %2349 = vdwg.mxu0
        %2350 = vmatprep.subr.mxu0 0.0
        %2351 = vmatpush1.msra.mxu0 %v502
        %2352 = vmatprep.subr.mxu0 0.0
        %2353 = vmatpush1.msra.mxu0 %v505
        %2354 = vmatprep.subr.mxu0 0.0
        %2355 = vmatpush1.msra.mxu0 %v508
        %2356 = vmatprep.subr.mxu0 0.0
        %2357 = vmatpush1.msra.mxu0 %v511
        %2358 = vmatprep.subr.mxu0 0.0
        %2359 = vmatpush1.msra.mxu0 %v514
        %2360 = vmatprep.subr.mxu0 0.0
        %2361 = vmatpush1.msra.mxu0 %v517
        %2362 = vmatprep.subr.mxu0 0.0
        %2363 = vmatpush1.msra.mxu0 %v520
        %2364 = vmatprep.subr.mxu0 0.0
        %2365 = vmatpush1.msra.mxu0 %v523
        %2366 = vmatprep.subr.mxu0 0.0
        %2367 = vmatpush1.msra.mxu0 %v526
        %2368 = vmatprep.subr.mxu0 0.0
        %2369 = vmatpush1.msra.mxu0 %v529
        %2370 = vmatprep.subr.mxu0 0.0
        %2371 = vmatpush1.msra.mxu0 %v532
        %2372 = vmatprep.subr.mxu0 0.0
        %2373 = vmatpush1.msra.mxu0 %v535
        %2374 = vmatprep.subr.mxu0 0.0
        %2375 = vmatpush1.msra.mxu0 %v538
        %2376 = vmatprep.subr.mxu0 0.0
        %2377 = vmatpush1.msra.mxu0 %v541
        %2378 = vmatprep.subr.mxu0 0.0
        %2379 = vmatpush1.msra.mxu0 %v544
        %2380 = vmatprep.subr.mxu0 0.0
        %2381 = vmatpush1.msra.mxu0 %v547
        %2382 = vmatprep.subr.mxu0 0.0
        %2383 = vmatpush1.msra.mxu0 0.0
        %2384 = vmatprep.subr.mxu0 0.0
        %2385 = vmatpush1.msra.mxu0 0.0
        %2386 = vmatprep.subr.mxu0 0.0
        %2387 = vmatpush1.msra.mxu0 0.0
        %2388 = vmatprep.subr.mxu0 0.0
        %2389 = vmatpush1.msra.mxu0 0.0
        %2390 = vmatprep.subr.mxu0 0.0
        %2391 = vmatpush1.msra.mxu0 0.0
        %2392 = vmatprep.subr.mxu0 0.0
        %2393 = vmatpush1.msra.mxu0 0.0
        %2394 = vmatprep.subr.mxu0 0.0
        %2395 = vmatpush1.msra.mxu0 0.0
        %2396 = vmatprep.subr.mxu0 0.0
        %2397 = vmatpush1.msra.mxu0 0.0
        %2398 = vmatprep.subr.mxu0 0.0
        %2399 = vmatpush1.msra.mxu0 0.0
        %2400 = vmatprep.subr.mxu0 0.0
        %2401 = vmatpush1.msra.mxu0 0.0
        %2402 = vmatprep.subr.mxu0 0.0
        %2403 = vmatpush1.msra.mxu0 0.0
        %2404 = vmatprep.subr.mxu0 0.0
        %2405 = vmatpush1.msra.mxu0 0.0
        %2406 = vmatprep.subr.mxu0 0.0
        %2407 = vmatpush1.msra.mxu0 0.0
        %2408 = vmatprep.subr.mxu0 0.0
        %2409 = vmatpush1.msra.mxu0 0.0
        %2410 = vmatprep.subr.mxu0 0.0
        %2411 = vmatpush1.msra.mxu0 0.0
        %2412 = vmatprep.subr.mxu0 0.0
        %2413 = vmatpush1.msra.mxu0 0.0
        %2414 = vmatprep.mubr.f32.mxu0 0.0
        %2415 = vmatmul.mubr.f32.gmra.mrb[0].mxu0 %v2269
        %v2416 = vpop.f32.mrb[0].mxu0
        %v2417 = vadd.f32 0.0, %v2416
        %v2418 = vpop.f32.mrb[0].mxu0
        %2419 = vdwg.mxu0
        %v2420 = vadd.f32 %v2275, %v2346
        %v2421 = vadd.f32 %v2276, %v2348
        %v2422 = vadd.f32 %v2277, %v2417
        %v2423 = vxor.u32 %v2420, 2147483648
        %v2424 = vxor.u32 %v2421, 2147483648
        %v2425 = vmul.f32 %v2423, 1.442695
        %v2426 = vpow.pop %v2425
        %v2427 = vmul.f32 %v2424, 1.442695
        %v2428 = vpow.pop %v2427
        %v2429 = vadd.f32 %v2426, 1.0
        %v2430 = vadd.f32 %v2428, 1.0
        %v2431 = vrcp.pop %v2429
        %v2432 = vmul.f32 1.0, %v2431
        %v2433 = vrcp.pop %v2430
        %v2434 = vmul.f32 1.0, %v2433
        %v2435 = vmul.f32 %v2432, 0.5
        %v2436 = vmul.f32 %v2434, 0.5
        %v2437 = vtanh.pop %v2422
        %v2438 = vsub.f32 %v2437, %v2194
        %v2439 = vmul.f32 %v2436, %v2438
        %v2440 = vadd.f32 %v2194, %v2439
        %2441 = vmatprep.subr.mxu0 0.0
        %2442 = vmatpush1.msra.mxu0 %v548
        %2443 = vmatprep.subr.mxu0 0.0
        %2444 = vmatpush1.msra.mxu0 %v549
        %2445 = vmatprep.subr.mxu0 0.0
        %2446 = vmatpush1.msra.mxu0 %v550
        %2447 = vmatprep.subr.mxu0 0.0
        %2448 = vmatpush1.msra.mxu0 %v551
        %2449 = vmatprep.subr.mxu0 0.0
        %2450 = vmatpush1.msra.mxu0 %v552
        %2451 = vmatprep.subr.mxu0 0.0
        %2452 = vmatpush1.msra.mxu0 %v553
        %2453 = vmatprep.subr.mxu0 0.0
        %2454 = vmatpush1.msra.mxu0 %v554
        %2455 = vmatprep.subr.mxu0 0.0
        %2456 = vmatpush1.msra.mxu0 %v555
        %2457 = vmatprep.subr.mxu0 0.0
        %2458 = vmatpush1.msra.mxu0 %v556
        %2459 = vmatprep.subr.mxu0 0.0
        %2460 = vmatpush1.msra.mxu0 %v557
        %2461 = vmatprep.subr.mxu0 0.0
        %2462 = vmatpush1.msra.mxu0 %v558
        %2463 = vmatprep.subr.mxu0 0.0
        %2464 = vmatpush1.msra.mxu0 %v559
        %2465 = vmatprep.subr.mxu0 0.0
        %2466 = vmatpush1.msra.mxu0 %v560
        %2467 = vmatprep.subr.mxu0 0.0
        %2468 = vmatpush1.msra.mxu0 %v561
        %2469 = vmatprep.subr.mxu0 0.0
        %2470 = vmatpush1.msra.mxu0 %v562
        %2471 = vmatprep.subr.mxu0 0.0
        %2472 = vmatpush1.msra.mxu0 %v563
        %2473 = vmatprep.subr.mxu0 0.0
        %2474 = vmatpush1.msra.mxu0 0.0
        %2475 = vmatprep.subr.mxu0 0.0
        %2476 = vmatpush1.msra.mxu0 0.0
        %2477 = vmatprep.subr.mxu0 0.0
        %2478 = vmatpush1.msra.mxu0 0.0
        %2479 = vmatprep.subr.mxu0 0.0
        %2480 = vmatpush1.msra.mxu0 0.0
        %2481 = vmatprep.subr.mxu0 0.0
        %2482 = vmatpush1.msra.mxu0 0.0
        %2483 = vmatprep.subr.mxu0 0.0
        %2484 = vmatpush1.msra.mxu0 0.0
        %2485 = vmatprep.subr.mxu0 0.0
        %2486 = vmatpush1.msra.mxu0 0.0
        %2487 = vmatprep.subr.mxu0 0.0
        %2488 = vmatpush1.msra.mxu0 0.0
        %2489 = vmatprep.subr.mxu0 0.0
        %2490 = vmatpush1.msra.mxu0 0.0
        %2491 = vmatprep.subr.mxu0 0.0
        %2492 = vmatpush1.msra.mxu0 0.0
        %2493 = vmatprep.subr.mxu0 0.0
        %2494 = vmatpush1.msra.mxu0 0.0
        %2495 = vmatprep.subr.mxu0 0.0
        %2496 = vmatpush1.msra.mxu0 0.0
        %2497 = vmatprep.subr.mxu0 0.0
        %2498 = vmatpush1.msra.mxu0 0.0
        %2499 = vmatprep.subr.mxu0 0.0
        %2500 = vmatpush1.msra.mxu0 0.0
        %2501 = vmatprep.subr.mxu0 0.0
        %2502 = vmatpush1.msra.mxu0 0.0
        %2503 = vmatprep.subr.mxu0 0.0
        %2504 = vmatpush1.msra.mxu0 0.0
        %2505 = vmatprep.mubr.f32.mxu0 0.0
        %2506 = vmatmul.mubr.f32.gmra.mrb[0].mxu0 %v2440
        %v2507 = vpop.f32.mrb[0].mxu0
        %v2508 = vadd.f32 0.0, %v2507
        %v2509 = vpop.f32.mrb[0].mxu0
        %2510 = vdwg.mxu0
        %v2511 = vadd.f32 %v2278, %v2508
        %v2512 = vtanh.pop %v2511
        %v2513 = vsub.f32 %v2512, %v2269
        %v2514 = vmul.f32 %v2435, %v2513
        %v2515 = vadd.f32 %v2269, %v2514
        %s2516 = scalar_lea.vmem %s249, 40 [#allocation9]
        %2517 = vst [vmem:[%s2516] sm:$0xff] %v2515
        %s2518 = scalar_lea.vmem %s256, 40 [#allocation11]
        %2519 = vst [vmem:[%s2518] sm:$0xff] %v2440
        %s2520 = scalar_lea.vmem [#allocation6], 192
        %v2521 = vld [vmem:[%s2520] sm:$0xff]
        %v2522 = vld [vmem:[%s2520 + $0x8] sm:$0xff]
        %v2523 = vld [vmem:[%s2520 + $0x10] sm:$0xff]
        %v2524 = vld [vmem:[%s2520 + $0x18] sm:$0xff]
        %2525 = vmatprep.subr.mxu0 %v501
        %2526 = vmatpush1.msra.mxu0 %v500
        %2527 = vmatprep.subr.mxu0 %v504
        %2528 = vmatpush1.msra.mxu0 %v503
        %2529 = vmatprep.subr.mxu0 %v507
        %2530 = vmatpush1.msra.mxu0 %v506
        %2531 = vmatprep.subr.mxu0 %v510
        %2532 = vmatpush1.msra.mxu0 %v509
        %2533 = vmatprep.subr.mxu0 %v513
        %2534 = vmatpush1.msra.mxu0 %v512
        %2535 = vmatprep.subr.mxu0 %v516
        %2536 = vmatpush1.msra.mxu0 %v515
        %2537 = vmatprep.subr.mxu0 %v519
        %2538 = vmatpush1.msra.mxu0 %v518
        %2539 = vmatprep.subr.mxu0 %v522
        %2540 = vmatpush1.msra.mxu0 %v521
        %2541 = vmatprep.subr.mxu0 %v525
        %2542 = vmatpush1.msra.mxu0 %v524
        %2543 = vmatprep.subr.mxu0 %v528
        %2544 = vmatpush1.msra.mxu0 %v527
        %2545 = vmatprep.subr.mxu0 %v531
        %2546 = vmatpush1.msra.mxu0 %v530
        %2547 = vmatprep.subr.mxu0 %v534
        %2548 = vmatpush1.msra.mxu0 %v533
        %2549 = vmatprep.subr.mxu0 %v537
        %2550 = vmatpush1.msra.mxu0 %v536
        %2551 = vmatprep.subr.mxu0 %v540
        %2552 = vmatpush1.msra.mxu0 %v539
        %2553 = vmatprep.subr.mxu0 %v543
        %2554 = vmatpush1.msra.mxu0 %v542
        %2555 = vmatprep.subr.mxu0 %v546
        %2556 = vmatpush1.msra.mxu0 %v545
        %2557 = vmatprep.subr.mxu0 0.0
        %2558 = vmatpush1.msra.mxu0 0.0
        %2559 = vmatprep.subr.mxu0 0.0
        %2560 = vmatpush1.msra.mxu0 0.0
        %2561 = vmatprep.subr.mxu0 0.0
        %2562 = vmatpush1.msra.mxu0 0.0
        %2563 = vmatprep.subr.mxu0 0.0
        %2564 = vmatpush1.msra.mxu0 0.0
        %2565 = vmatprep.subr.mxu0 0.0
        %2566 = vmatpush1.msra.mxu0 0.0
        %2567 = vmatprep.subr.mxu0 0.0
        %2568 = vmatpush1.msra.mxu0 0.0
        %2569 = vmatprep.subr.mxu0 0.0
        %2570 = vmatpush1.msra.mxu0 0.0
        %2571 = vmatprep.subr.mxu0 0.0
        %2572 = vmatpush1.msra.mxu0 0.0
        %2573 = vmatprep.subr.mxu0 0.0
        %2574 = vmatpush1.msra.mxu0 0.0
        %2575 = vmatprep.subr.mxu0 0.0
        %2576 = vmatpush1.msra.mxu0 0.0
        %2577 = vmatprep.subr.mxu0 0.0
        %2578 = vmatpush1.msra.mxu0 0.0
        %2579 = vmatprep.subr.mxu0 0.0
        %2580 = vmatpush1.msra.mxu0 0.0
        %2581 = vmatprep.subr.mxu0 0.0
        %2582 = vmatpush1.msra.mxu0 0.0
        %2583 = vmatprep.subr.mxu0 0.0
        %2584 = vmatpush1.msra.mxu0 0.0
        %2585 = vmatprep.subr.mxu0 0.0
        %2586 = vmatpush1.msra.mxu0 0.0
        %2587 = vmatprep.subr.mxu0 0.0
        %2588 = vmatpush1.msra.mxu0 0.0
        %2589 = vmatprep.mubr.f32.mxu0 0.0
        %2590 = vmatmul.mubr.f32.gmra.mrb[0].mxu0 %v2515
        %v2591 = vpop.f32.mrb[0].mxu0
        %v2592 = vadd.f32 0.0, %v2591
        %v2593 = vpop.f32.mrb[0].mxu0
        %v2594 = vadd.f32 0.0, %v2593
        %2595 = vdwg.mxu0
        %2596 = vmatprep.subr.mxu0 0.0
        %2597 = vmatpush1.msra.mxu0 %v502
        %2598 = vmatprep.subr.mxu0 0.0
        %2599 = vmatpush1.msra.mxu0 %v505
        %2600 = vmatprep.subr.mxu0 0.0
        %2601 = vmatpush1.msra.mxu0 %v508
        %2602 = vmatprep.subr.mxu0 0.0
        %2603 = vmatpush1.msra.mxu0 %v511
        %2604 = vmatprep.subr.mxu0 0.0
        %2605 = vmatpush1.msra.mxu0 %v514
        %2606 = vmatprep.subr.mxu0 0.0
        %2607 = vmatpush1.msra.mxu0 %v517
        %2608 = vmatprep.subr.mxu0 0.0
        %2609 = vmatpush1.msra.mxu0 %v520
        %2610 = vmatprep.subr.mxu0 0.0
        %2611 = vmatpush1.msra.mxu0 %v523
        %2612 = vmatprep.subr.mxu0 0.0
        %2613 = vmatpush1.msra.mxu0 %v526
        %2614 = vmatprep.subr.mxu0 0.0
        %2615 = vmatpush1.msra.mxu0 %v529
        %2616 = vmatprep.subr.mxu0 0.0
        %2617 = vmatpush1.msra.mxu0 %v532
        %2618 = vmatprep.subr.mxu0 0.0
        %2619 = vmatpush1.msra.mxu0 %v535
        %2620 = vmatprep.subr.mxu0 0.0
        %2621 = vmatpush1.msra.mxu0 %v538
        %2622 = vmatprep.subr.mxu0 0.0
        %2623 = vmatpush1.msra.mxu0 %v541
        %2624 = vmatprep.subr.mxu0 0.0
        %2625 = vmatpush1.msra.mxu0 %v544
        %2626 = vmatprep.subr.mxu0 0.0
        %2627 = vmatpush1.msra.mxu0 %v547
        %2628 = vmatprep.subr.mxu0 0.0
        %2629 = vmatpush1.msra.mxu0 0.0
        %2630 = vmatprep.subr.mxu0 0.0
        %2631 = vmatpush1.msra.mxu0 0.0
        %2632 = vmatprep.subr.mxu0 0.0
        %2633 = vmatpush1.msra.mxu0 0.0
        %2634 = vmatprep.subr.mxu0 0.0
        %2635 = vmatpush1.msra.mxu0 0.0
        %2636 = vmatprep.subr.mxu0 0.0
        %2637 = vmatpush1.msra.mxu0 0.0
        %2638 = vmatprep.subr.mxu0 0.0
        %2639 = vmatpush1.msra.mxu0 0.0
        %2640 = vmatprep.subr.mxu0 0.0
        %2641 = vmatpush1.msra.mxu0 0.0
        %2642 = vmatprep.subr.mxu0 0.0
        %2643 = vmatpush1.msra.mxu0 0.0
        %2644 = vmatprep.subr.mxu0 0.0
        %2645 = vmatpush1.msra.mxu0 0.0
        %2646 = vmatprep.subr.mxu0 0.0
        %2647 = vmatpush1.msra.mxu0 0.0
        %2648 = vmatprep.subr.mxu0 0.0
        %2649 = vmatpush1.msra.mxu0 0.0
        %2650 = vmatprep.subr.mxu0 0.0
        %2651 = vmatpush1.msra.mxu0 0.0
        %2652 = vmatprep.subr.mxu0 0.0
        %2653 = vmatpush1.msra.mxu0 0.0
        %2654 = vmatprep.subr.mxu0 0.0
        %2655 = vmatpush1.msra.mxu0 0.0
        %2656 = vmatprep.subr.mxu0 0.0
        %2657 = vmatpush1.msra.mxu0 0.0
        %2658 = vmatprep.subr.mxu0 0.0
        %2659 = vmatpush1.msra.mxu0 0.0
        %2660 = vmatprep.mubr.f32.mxu0 0.0
        %2661 = vmatmul.mubr.f32.gmra.mrb[0].mxu0 %v2515
        %v2662 = vpop.f32.mrb[0].mxu0
        %v2663 = vadd.f32 0.0, %v2662
        %v2664 = vpop.f32.mrb[0].mxu0
        %2665 = vdwg.mxu0
        %v2666 = vadd.f32 %v2521, %v2592
        %v2667 = vadd.f32 %v2522, %v2594
        %v2668 = vadd.f32 %v2523, %v2663
        %v2669 = vxor.u32 %v2666, 2147483648
        %v2670 = vxor.u32 %v2667, 2147483648
        %v2671 = vmul.f32 %v2669, 1.442695
        %v2672 = vpow.pop %v2671
        %v2673 = vmul.f32 %v2670, 1.442695
        %v2674 = vpow.pop %v2673
        %v2675 = vadd.f32 %v2672, 1.0
        %v2676 = vadd.f32 %v2674, 1.0
        %v2677 = vrcp.pop %v2675
        %v2678 = vmul.f32 1.0, %v2677
        %v2679 = vrcp.pop %v2676
        %v2680 = vmul.f32 1.0, %v2679
        %v2681 = vmul.f32 %v2678, 0.5
        %v2682 = vmul.f32 %v2680, 0.5
        %v2683 = vtanh.pop %v2668
        %v2684 = vsub.f32 %v2683, %v2440
        %v2685 = vmul.f32 %v2682, %v2684
        %v2686 = vadd.f32 %v2440, %v2685
        %2687 = vmatprep.subr.mxu0 0.0
        %2688 = vmatpush1.msra.mxu0 %v548
        %2689 = vmatprep.subr.mxu0 0.0
        %2690 = vmatpush1.msra.mxu0 %v549
        %2691 = vmatprep.subr.mxu0 0.0
        %2692 = vmatpush1.msra.mxu0 %v550
        %2693 = vmatprep.subr.mxu0 0.0
        %2694 = vmatpush1.msra.mxu0 %v551
        %2695 = vmatprep.subr.mxu0 0.0
        %2696 = vmatpush1.msra.mxu0 %v552
        %2697 = vmatprep.subr.mxu0 0.0
        %2698 = vmatpush1.msra.mxu0 %v553
        %2699 = vmatprep.subr.mxu0 0.0
        %2700 = vmatpush1.msra.mxu0 %v554
        %2701 = vmatprep.subr.mxu0 0.0
        %2702 = vmatpush1.msra.mxu0 %v555
        %2703 = vmatprep.subr.mxu0 0.0
        %2704 = vmatpush1.msra.mxu0 %v556
        %2705 = vmatprep.subr.mxu0 0.0
        %2706 = vmatpush1.msra.mxu0 %v557
        %2707 = vmatprep.subr.mxu0 0.0
        %2708 = vmatpush1.msra.mxu0 %v558
        %2709 = vmatprep.subr.mxu0 0.0
        %2710 = vmatpush1.msra.mxu0 %v559
        %2711 = vmatprep.subr.mxu0 0.0
        %2712 = vmatpush1.msra.mxu0 %v560
        %2713 = vmatprep.subr.mxu0 0.0
        %2714 = vmatpush1.msra.mxu0 %v561
        %2715 = vmatprep.subr.mxu0 0.0
        %2716 = vmatpush1.msra.mxu0 %v562
        %2717 = vmatprep.subr.mxu0 0.0
        %2718 = vmatpush1.msra.mxu0 %v563
        %2719 = vmatprep.subr.mxu0 0.0
        %2720 = vmatpush1.msra.mxu0 0.0
        %2721 = vmatprep.subr.mxu0 0.0
        %2722 = vmatpush1.msra.mxu0 0.0
        %2723 = vmatprep.subr.mxu0 0.0
        %2724 = vmatpush1.msra.mxu0 0.0
        %2725 = vmatprep.subr.mxu0 0.0
        %2726 = vmatpush1.msra.mxu0 0.0
        %2727 = vmatprep.subr.mxu0 0.0
        %2728 = vmatpush1.msra.mxu0 0.0
        %2729 = vmatprep.subr.mxu0 0.0
        %2730 = vmatpush1.msra.mxu0 0.0
        %2731 = vmatprep.subr.mxu0 0.0
        %2732 = vmatpush1.msra.mxu0 0.0
        %2733 = vmatprep.subr.mxu0 0.0
        %2734 = vmatpush1.msra.mxu0 0.0
        %2735 = vmatprep.subr.mxu0 0.0
        %2736 = vmatpush1.msra.mxu0 0.0
        %2737 = vmatprep.subr.mxu0 0.0
        %2738 = vmatpush1.msra.mxu0 0.0
        %2739 = vmatprep.subr.mxu0 0.0
        %2740 = vmatpush1.msra.mxu0 0.0
        %2741 = vmatprep.subr.mxu0 0.0
        %2742 = vmatpush1.msra.mxu0 0.0
        %2743 = vmatprep.subr.mxu0 0.0
        %2744 = vmatpush1.msra.mxu0 0.0
        %2745 = vmatprep.subr.mxu0 0.0
        %2746 = vmatpush1.msra.mxu0 0.0
        %2747 = vmatprep.subr.mxu0 0.0
        %2748 = vmatpush1.msra.mxu0 0.0
        %2749 = vmatprep.subr.mxu0 0.0
        %2750 = vmatpush1.msra.mxu0 0.0
        %2751 = vmatprep.mubr.f32.mxu0 0.0
        %2752 = vmatmul.mubr.f32.gmra.mrb[0].mxu0 %v2686
        %v2753 = vpop.f32.mrb[0].mxu0
        %v2754 = vadd.f32 0.0, %v2753
        %v2755 = vpop.f32.mrb[0].mxu0
        %2756 = vdwg.mxu0
        %v2757 = vadd.f32 %v2524, %v2754
        %v2758 = vtanh.pop %v2757
        %v2759 = vsub.f32 %v2758, %v2515
        %v2760 = vmul.f32 %v2681, %v2759
        %v2761 = vadd.f32 %v2515, %v2760
        %s2762 = scalar_lea.vmem %s249, 48 [#allocation9]
        %2763 = vst [vmem:[%s2762] sm:$0xff] %v2761
        %s2764 = scalar_lea.vmem %s256, 48 [#allocation11]
        %2765 = vst [vmem:[%s2764] sm:$0xff] %v2686
        %s2766 = scalar_lea.vmem [#allocation6], 224
        %v2767 = vld [vmem:[%s2766] sm:$0xff]
        %v2768 = vld [vmem:[%s2766 + $0x8] sm:$0xff]
        %v2769 = vld [vmem:[%s2766 + $0x10] sm:$0xff]
        %v2770 = vld [vmem:[%s2766 + $0x18] sm:$0xff]
        %2771 = vmatprep.subr.mxu0 %v501
        %2772 = vmatpush1.msra.mxu0 %v500
        %2773 = vmatprep.subr.mxu0 %v504
        %2774 = vmatpush1.msra.mxu0 %v503
        %2775 = vmatprep.subr.mxu0 %v507
        %2776 = vmatpush1.msra.mxu0 %v506
        %2777 = vmatprep.subr.mxu0 %v510
        %2778 = vmatpush1.msra.mxu0 %v509
        %2779 = vmatprep.subr.mxu0 %v513
        %2780 = vmatpush1.msra.mxu0 %v512
        %2781 = vmatprep.subr.mxu0 %v516
        %2782 = vmatpush1.msra.mxu0 %v515
        %2783 = vmatprep.subr.mxu0 %v519
        %2784 = vmatpush1.msra.mxu0 %v518
        %2785 = vmatprep.subr.mxu0 %v522
        %2786 = vmatpush1.msra.mxu0 %v521
        %2787 = vmatprep.subr.mxu0 %v525
        %2788 = vmatpush1.msra.mxu0 %v524
        %2789 = vmatprep.subr.mxu0 %v528
        %2790 = vmatpush1.msra.mxu0 %v527
        %2791 = vmatprep.subr.mxu0 %v531
        %2792 = vmatpush1.msra.mxu0 %v530
        %2793 = vmatprep.subr.mxu0 %v534
        %2794 = vmatpush1.msra.mxu0 %v533
        %2795 = vmatprep.subr.mxu0 %v537
        %2796 = vmatpush1.msra.mxu0 %v536
        %2797 = vmatprep.subr.mxu0 %v540
        %2798 = vmatpush1.msra.mxu0 %v539
        %2799 = vmatprep.subr.mxu0 %v543
        %2800 = vmatpush1.msra.mxu0 %v542
        %2801 = vmatprep.subr.mxu0 %v546
        %2802 = vmatpush1.msra.mxu0 %v545
        %2803 = vmatprep.subr.mxu0 0.0
        %2804 = vmatpush1.msra.mxu0 0.0
        %2805 = vmatprep.subr.mxu0 0.0
        %2806 = vmatpush1.msra.mxu0 0.0
        %2807 = vmatprep.subr.mxu0 0.0
        %2808 = vmatpush1.msra.mxu0 0.0
        %2809 = vmatprep.subr.mxu0 0.0
        %2810 = vmatpush1.msra.mxu0 0.0
        %2811 = vmatprep.subr.mxu0 0.0
        %2812 = vmatpush1.msra.mxu0 0.0
        %2813 = vmatprep.subr.mxu0 0.0
        %2814 = vmatpush1.msra.mxu0 0.0
        %2815 = vmatprep.subr.mxu0 0.0
        %2816 = vmatpush1.msra.mxu0 0.0
        %2817 = vmatprep.subr.mxu0 0.0
        %2818 = vmatpush1.msra.mxu0 0.0
        %2819 = vmatprep.subr.mxu0 0.0
        %2820 = vmatpush1.msra.mxu0 0.0
        %2821 = vmatprep.subr.mxu0 0.0
        %2822 = vmatpush1.msra.mxu0 0.0
        %2823 = vmatprep.subr.mxu0 0.0
        %2824 = vmatpush1.msra.mxu0 0.0
        %2825 = vmatprep.subr.mxu0 0.0
        %2826 = vmatpush1.msra.mxu0 0.0
        %2827 = vmatprep.subr.mxu0 0.0
        %2828 = vmatpush1.msra.mxu0 0.0
        %2829 = vmatprep.subr.mxu0 0.0
        %2830 = vmatpush1.msra.mxu0 0.0
        %2831 = vmatprep.subr.mxu0 0.0
        %2832 = vmatpush1.msra.mxu0 0.0
        %2833 = vmatprep.subr.mxu0 0.0
        %2834 = vmatpush1.msra.mxu0 0.0
        %2835 = vmatprep.mubr.f32.mxu0 0.0
        %2836 = vmatmul.mubr.f32.gmra.mrb[0].mxu0 %v2761
        %v2837 = vpop.f32.mrb[0].mxu0
        %v2838 = vadd.f32 0.0, %v2837
        %v2839 = vpop.f32.mrb[0].mxu0
        %v2840 = vadd.f32 0.0, %v2839
        %2841 = vdwg.mxu0
        %2842 = vmatprep.subr.mxu0 0.0
        %2843 = vmatpush1.msra.mxu0 %v502
        %2844 = vmatprep.subr.mxu0 0.0
        %2845 = vmatpush1.msra.mxu0 %v505
        %2846 = vmatprep.subr.mxu0 0.0
        %2847 = vmatpush1.msra.mxu0 %v508
        %2848 = vmatprep.subr.mxu0 0.0
        %2849 = vmatpush1.msra.mxu0 %v511
        %2850 = vmatprep.subr.mxu0 0.0
        %2851 = vmatpush1.msra.mxu0 %v514
        %2852 = vmatprep.subr.mxu0 0.0
        %2853 = vmatpush1.msra.mxu0 %v517
        %2854 = vmatprep.subr.mxu0 0.0
        %2855 = vmatpush1.msra.mxu0 %v520
        %2856 = vmatprep.subr.mxu0 0.0
        %2857 = vmatpush1.msra.mxu0 %v523
        %2858 = vmatprep.subr.mxu0 0.0
        %2859 = vmatpush1.msra.mxu0 %v526
        %2860 = vmatprep.subr.mxu0 0.0
        %2861 = vmatpush1.msra.mxu0 %v529
        %2862 = vmatprep.subr.mxu0 0.0
        %2863 = vmatpush1.msra.mxu0 %v532
        %2864 = vmatprep.subr.mxu0 0.0
        %2865 = vmatpush1.msra.mxu0 %v535
        %2866 = vmatprep.subr.mxu0 0.0
        %2867 = vmatpush1.msra.mxu0 %v538
        %2868 = vmatprep.subr.mxu0 0.0
        %2869 = vmatpush1.msra.mxu0 %v541
        %2870 = vmatprep.subr.mxu0 0.0
        %2871 = vmatpush1.msra.mxu0 %v544
        %2872 = vmatprep.subr.mxu0 0.0
        %2873 = vmatpush1.msra.mxu0 %v547
        %2874 = vmatprep.subr.mxu0 0.0
        %2875 = vmatpush1.msra.mxu0 0.0
        %2876 = vmatprep.subr.mxu0 0.0
        %2877 = vmatpush1.msra.mxu0 0.0
        %2878 = vmatprep.subr.mxu0 0.0
        %2879 = vmatpush1.msra.mxu0 0.0
        %2880 = vmatprep.subr.mxu0 0.0
        %2881 = vmatpush1.msra.mxu0 0.0
        %2882 = vmatprep.subr.mxu0 0.0
        %2883 = vmatpush1.msra.mxu0 0.0
        %2884 = vmatprep.subr.mxu0 0.0
        %2885 = vmatpush1.msra.mxu0 0.0
        %2886 = vmatprep.subr.mxu0 0.0
        %2887 = vmatpush1.msra.mxu0 0.0
        %2888 = vmatprep.subr.mxu0 0.0
        %2889 = vmatpush1.msra.mxu0 0.0
        %2890 = vmatprep.subr.mxu0 0.0
        %2891 = vmatpush1.msra.mxu0 0.0
        %2892 = vmatprep.subr.mxu0 0.0
        %2893 = vmatpush1.msra.mxu0 0.0
        %2894 = vmatprep.subr.mxu0 0.0
        %2895 = vmatpush1.msra.mxu0 0.0
        %2896 = vmatprep.subr.mxu0 0.0
        %2897 = vmatpush1.msra.mxu0 0.0
        %2898 = vmatprep.subr.mxu0 0.0
        %2899 = vmatpush1.msra.mxu0 0.0
        %2900 = vmatprep.subr.mxu0 0.0
        %2901 = vmatpush1.msra.mxu0 0.0
        %2902 = vmatprep.subr.mxu0 0.0
        %2903 = vmatpush1.msra.mxu0 0.0
        %2904 = vmatprep.subr.mxu0 0.0
        %2905 = vmatpush1.msra.mxu0 0.0
        %2906 = vmatprep.mubr.f32.mxu0 0.0
        %2907 = vmatmul.mubr.f32.gmra.mrb[0].mxu0 %v2761
        %v2908 = vpop.f32.mrb[0].mxu0
        %v2909 = vadd.f32 0.0, %v2908
        %v2910 = vpop.f32.mrb[0].mxu0
        %2911 = vdwg.mxu0
        %v2912 = vadd.f32 %v2767, %v2838
        %v2913 = vadd.f32 %v2768, %v2840
        %v2914 = vadd.f32 %v2769, %v2909
        %v2915 = vxor.u32 %v2912, 2147483648
        %v2916 = vxor.u32 %v2913, 2147483648
        %v2917 = vmul.f32 %v2915, 1.442695
        %v2918 = vpow.pop %v2917
        %v2919 = vmul.f32 %v2916, 1.442695
        %v2920 = vpow.pop %v2919
        %v2921 = vadd.f32 %v2918, 1.0
        %v2922 = vadd.f32 %v2920, 1.0
        %v2923 = vrcp.pop %v2921
        %v2924 = vmul.f32 1.0, %v2923
        %v2925 = vrcp.pop %v2922
        %v2926 = vmul.f32 1.0, %v2925
        %v2927 = vmul.f32 %v2924, 0.5
        %v2928 = vmul.f32 %v2926, 0.5
        %v2929 = vtanh.pop %v2914
        %v2930 = vsub.f32 %v2929, %v2686
        %v2931 = vmul.f32 %v2928, %v2930
        %v2932 = vadd.f32 %v2686, %v2931
        %2933 = vmatprep.subr.mxu0 0.0
        %2934 = vmatpush1.msra.mxu0 %v548
        %2935 = vmatprep.subr.mxu0 0.0
        %2936 = vmatpush1.msra.mxu0 %v549
        %2937 = vmatprep.subr.mxu0 0.0
        %2938 = vmatpush1.msra.mxu0 %v550
        %2939 = vmatprep.subr.mxu0 0.0
        %2940 = vmatpush1.msra.mxu0 %v551
        %2941 = vmatprep.subr.mxu0 0.0
        %2942 = vmatpush1.msra.mxu0 %v552
        %2943 = vmatprep.subr.mxu0 0.0
        %2944 = vmatpush1.msra.mxu0 %v553
        %2945 = vmatprep.subr.mxu0 0.0
        %2946 = vmatpush1.msra.mxu0 %v554
        %2947 = vmatprep.subr.mxu0 0.0
        %2948 = vmatpush1.msra.mxu0 %v555
        %2949 = vmatprep.subr.mxu0 0.0
        %2950 = vmatpush1.msra.mxu0 %v556
        %2951 = vmatprep.subr.mxu0 0.0
        %2952 = vmatpush1.msra.mxu0 %v557
        %2953 = vmatprep.subr.mxu0 0.0
        %2954 = vmatpush1.msra.mxu0 %v558
        %2955 = vmatprep.subr.mxu0 0.0
        %2956 = vmatpush1.msra.mxu0 %v559
        %2957 = vmatprep.subr.mxu0 0.0
        %2958 = vmatpush1.msra.mxu0 %v560
        %2959 = vmatprep.subr.mxu0 0.0
        %2960 = vmatpush1.msra.mxu0 %v561
        %2961 = vmatprep.subr.mxu0 0.0
        %2962 = vmatpush1.msra.mxu0 %v562
        %2963 = vmatprep.subr.mxu0 0.0
        %2964 = vmatpush1.msra.mxu0 %v563
        %2965 = vmatprep.subr.mxu0 0.0
        %2966 = vmatpush1.msra.mxu0 0.0
        %2967 = vmatprep.subr.mxu0 0.0
        %2968 = vmatpush1.msra.mxu0 0.0
        %2969 = vmatprep.subr.mxu0 0.0
        %2970 = vmatpush1.msra.mxu0 0.0
        %2971 = vmatprep.subr.mxu0 0.0
        %2972 = vmatpush1.msra.mxu0 0.0
        %2973 = vmatprep.subr.mxu0 0.0
        %2974 = vmatpush1.msra.mxu0 0.0
        %2975 = vmatprep.subr.mxu0 0.0
        %2976 = vmatpush1.msra.mxu0 0.0
        %2977 = vmatprep.subr.mxu0 0.0
        %2978 = vmatpush1.msra.mxu0 0.0
        %2979 = vmatprep.subr.mxu0 0.0
        %2980 = vmatpush1.msra.mxu0 0.0
        %2981 = vmatprep.subr.mxu0 0.0
        %2982 = vmatpush1.msra.mxu0 0.0
        %2983 = vmatprep.subr.mxu0 0.0
        %2984 = vmatpush1.msra.mxu0 0.0
        %2985 = vmatprep.subr.mxu0 0.0
        %2986 = vmatpush1.msra.mxu0 0.0
        %2987 = vmatprep.subr.mxu0 0.0
        %2988 = vmatpush1.msra.mxu0 0.0
        %2989 = vmatprep.subr.mxu0 0.0
        %2990 = vmatpush1.msra.mxu0 0.0
        %2991 = vmatprep.subr.mxu0 0.0
        %2992 = vmatpush1.msra.mxu0 0.0
        %2993 = vmatprep.subr.mxu0 0.0
        %2994 = vmatpush1.msra.mxu0 0.0
        %2995 = vmatprep.subr.mxu0 0.0
        %2996 = vmatpush1.msra.mxu0 0.0
        %2997 = vmatprep.mubr.f32.mxu0 0.0
        %2998 = vmatmul.mubr.f32.gmra.mrb[0].mxu0 %v2932
        %v2999 = vpop.f32.mrb[0].mxu0
        %v3000 = vadd.f32 0.0, %v2999
        %v3001 = vpop.f32.mrb[0].mxu0
        %3002 = vdwg.mxu0
        %v3003 = vadd.f32 %v2770, %v3000
        %v3004 = vtanh.pop %v3003
        %v3005 = vsub.f32 %v3004, %v2761
        %v3006 = vmul.f32 %v2927, %v3005
        %v3007 = vadd.f32 %v2761, %v3006
        %s3008 = scalar_lea.vmem %s249, 56 [#allocation9]
        %3009 = vst [vmem:[%s3008] sm:$0xff] %v3007
        %s3010 = scalar_lea.vmem %s256, 56 [#allocation11]
        %3011 = vst [vmem:[%s3010] sm:$0xff] %v2932
        %s3012 = scalar_lea.vmem [#allocation6], 256
        %v3013 = vld [vmem:[%s3012] sm:$0xff]
        %v3014 = vld [vmem:[%s3012 + $0x8] sm:$0xff]
        %v3015 = vld [vmem:[%s3012 + $0x10] sm:$0xff]
        %v3016 = vld [vmem:[%s3012 + $0x18] sm:$0xff]
        %3017 = vmatprep.subr.mxu0 %v501
        %3018 = vmatpush1.msra.mxu0 %v500
        %3019 = vmatprep.subr.mxu0 %v504
        %3020 = vmatpush1.msra.mxu0 %v503
        %3021 = vmatprep.subr.mxu0 %v507
        %3022 = vmatpush1.msra.mxu0 %v506
        %3023 = vmatprep.subr.mxu0 %v510
        %3024 = vmatpush1.msra.mxu0 %v509
        %3025 = vmatprep.subr.mxu0 %v513
        %3026 = vmatpush1.msra.mxu0 %v512
        %3027 = vmatprep.subr.mxu0 %v516
        %3028 = vmatpush1.msra.mxu0 %v515
        %3029 = vmatprep.subr.mxu0 %v519
        %3030 = vmatpush1.msra.mxu0 %v518
        %3031 = vmatprep.subr.mxu0 %v522
        %3032 = vmatpush1.msra.mxu0 %v521
        %3033 = vmatprep.subr.mxu0 %v525
        %3034 = vmatpush1.msra.mxu0 %v524
        %3035 = vmatprep.subr.mxu0 %v528
        %3036 = vmatpush1.msra.mxu0 %v527
        %3037 = vmatprep.subr.mxu0 %v531
        %3038 = vmatpush1.msra.mxu0 %v530
        %3039 = vmatprep.subr.mxu0 %v534
        %3040 = vmatpush1.msra.mxu0 %v533
        %3041 = vmatprep.subr.mxu0 %v537
        %3042 = vmatpush1.msra.mxu0 %v536
        %3043 = vmatprep.subr.mxu0 %v540
        %3044 = vmatpush1.msra.mxu0 %v539
        %3045 = vmatprep.subr.mxu0 %v543
        %3046 = vmatpush1.msra.mxu0 %v542
        %3047 = vmatprep.subr.mxu0 %v546
        %3048 = vmatpush1.msra.mxu0 %v545
        %3049 = vmatprep.subr.mxu0 0.0
        %3050 = vmatpush1.msra.mxu0 0.0
        %3051 = vmatprep.subr.mxu0 0.0
        %3052 = vmatpush1.msra.mxu0 0.0
        %3053 = vmatprep.subr.mxu0 0.0
        %3054 = vmatpush1.msra.mxu0 0.0
        %3055 = vmatprep.subr.mxu0 0.0
        %3056 = vmatpush1.msra.mxu0 0.0
        %3057 = vmatprep.subr.mxu0 0.0
        %3058 = vmatpush1.msra.mxu0 0.0
        %3059 = vmatprep.subr.mxu0 0.0
        %3060 = vmatpush1.msra.mxu0 0.0
        %3061 = vmatprep.subr.mxu0 0.0
        %3062 = vmatpush1.msra.mxu0 0.0
        %3063 = vmatprep.subr.mxu0 0.0
        %3064 = vmatpush1.msra.mxu0 0.0
        %3065 = vmatprep.subr.mxu0 0.0
        %3066 = vmatpush1.msra.mxu0 0.0
        %3067 = vmatprep.subr.mxu0 0.0
        %3068 = vmatpush1.msra.mxu0 0.0
        %3069 = vmatprep.subr.mxu0 0.0
        %3070 = vmatpush1.msra.mxu0 0.0
        %3071 = vmatprep.subr.mxu0 0.0
        %3072 = vmatpush1.msra.mxu0 0.0
        %3073 = vmatprep.subr.mxu0 0.0
        %3074 = vmatpush1.msra.mxu0 0.0
        %3075 = vmatprep.subr.mxu0 0.0
        %3076 = vmatpush1.msra.mxu0 0.0
        %3077 = vmatprep.subr.mxu0 0.0
        %3078 = vmatpush1.msra.mxu0 0.0
        %3079 = vmatprep.subr.mxu0 0.0
        %3080 = vmatpush1.msra.mxu0 0.0
        %3081 = vmatprep.mubr.f32.mxu0 0.0
        %3082 = vmatmul.mubr.f32.gmra.mrb[0].mxu0 %v3007
        %v3083 = vpop.f32.mrb[0].mxu0
        %v3084 = vadd.f32 0.0, %v3083
        %v3085 = vpop.f32.mrb[0].mxu0
        %v3086 = vadd.f32 0.0, %v3085
        %3087 = vdwg.mxu0
        %3088 = vmatprep.subr.mxu0 0.0
        %3089 = vmatpush1.msra.mxu0 %v502
        %3090 = vmatprep.subr.mxu0 0.0
        %3091 = vmatpush1.msra.mxu0 %v505
        %3092 = vmatprep.subr.mxu0 0.0
        %3093 = vmatpush1.msra.mxu0 %v508
        %3094 = vmatprep.subr.mxu0 0.0
        %3095 = vmatpush1.msra.mxu0 %v511
        %3096 = vmatprep.subr.mxu0 0.0
        %3097 = vmatpush1.msra.mxu0 %v514
        %3098 = vmatprep.subr.mxu0 0.0
        %3099 = vmatpush1.msra.mxu0 %v517
        %3100 = vmatprep.subr.mxu0 0.0
        %3101 = vmatpush1.msra.mxu0 %v520
        %3102 = vmatprep.subr.mxu0 0.0
        %3103 = vmatpush1.msra.mxu0 %v523
        %3104 = vmatprep.subr.mxu0 0.0
        %3105 = vmatpush1.msra.mxu0 %v526
        %3106 = vmatprep.subr.mxu0 0.0
        %3107 = vmatpush1.msra.mxu0 %v529
        %3108 = vmatprep.subr.mxu0 0.0
        %3109 = vmatpush1.msra.mxu0 %v532
        %3110 = vmatprep.subr.mxu0 0.0
        %3111 = vmatpush1.msra.mxu0 %v535
        %3112 = vmatprep.subr.mxu0 0.0
        %3113 = vmatpush1.msra.mxu0 %v538
        %3114 = vmatprep.subr.mxu0 0.0
        %3115 = vmatpush1.msra.mxu0 %v541
        %3116 = vmatprep.subr.mxu0 0.0
        %3117 = vmatpush1.msra.mxu0 %v544
        %3118 = vmatprep.subr.mxu0 0.0
        %3119 = vmatpush1.msra.mxu0 %v547
        %3120 = vmatprep.subr.mxu0 0.0
        %3121 = vmatpush1.msra.mxu0 0.0
        %3122 = vmatprep.subr.mxu0 0.0
        %3123 = vmatpush1.msra.mxu0 0.0
        %3124 = vmatprep.subr.mxu0 0.0
        %3125 = vmatpush1.msra.mxu0 0.0
        %3126 = vmatprep.subr.mxu0 0.0
        %3127 = vmatpush1.msra.mxu0 0.0
        %3128 = vmatprep.subr.mxu0 0.0
        %3129 = vmatpush1.msra.mxu0 0.0
        %3130 = vmatprep.subr.mxu0 0.0
        %3131 = vmatpush1.msra.mxu0 0.0
        %3132 = vmatprep.subr.mxu0 0.0
        %3133 = vmatpush1.msra.mxu0 0.0
        %3134 = vmatprep.subr.mxu0 0.0
        %3135 = vmatpush1.msra.mxu0 0.0
        %3136 = vmatprep.subr.mxu0 0.0
        %3137 = vmatpush1.msra.mxu0 0.0
        %3138 = vmatprep.subr.mxu0 0.0
        %3139 = vmatpush1.msra.mxu0 0.0
        %3140 = vmatprep.subr.mxu0 0.0
        %3141 = vmatpush1.msra.mxu0 0.0
        %3142 = vmatprep.subr.mxu0 0.0
        %3143 = vmatpush1.msra.mxu0 0.0
        %3144 = vmatprep.subr.mxu0 0.0
        %3145 = vmatpush1.msra.mxu0 0.0
        %3146 = vmatprep.subr.mxu0 0.0
        %3147 = vmatpush1.msra.mxu0 0.0
        %3148 = vmatprep.subr.mxu0 0.0
        %3149 = vmatpush1.msra.mxu0 0.0
        %3150 = vmatprep.subr.mxu0 0.0
        %3151 = vmatpush1.msra.mxu0 0.0
        %3152 = vmatprep.mubr.f32.mxu0 0.0
        %3153 = vmatmul.mubr.f32.gmra.mrb[0].mxu0 %v3007
        %v3154 = vpop.f32.mrb[0].mxu0
        %v3155 = vadd.f32 0.0, %v3154
        %v3156 = vpop.f32.mrb[0].mxu0
        %3157 = vdwg.mxu0
        %v3158 = vadd.f32 %v3013, %v3084
        %v3159 = vadd.f32 %v3014, %v3086
        %v3160 = vadd.f32 %v3015, %v3155
        %v3161 = vxor.u32 %v3158, 2147483648
        %v3162 = vxor.u32 %v3159, 2147483648
        %v3163 = vmul.f32 %v3161, 1.442695
        %v3164 = vpow.pop %v3163
        %v3165 = vmul.f32 %v3162, 1.442695
        %v3166 = vpow.pop %v3165
        %v3167 = vadd.f32 %v3164, 1.0
        %v3168 = vadd.f32 %v3166, 1.0
        %v3169 = vrcp.pop %v3167
        %v3170 = vmul.f32 1.0, %v3169
        %v3171 = vrcp.pop %v3168
        %v3172 = vmul.f32 1.0, %v3171
        %v3173 = vmul.f32 %v3170, 0.5
        %v3174 = vmul.f32 %v3172, 0.5
        %v3175 = vtanh.pop %v3160
        %v3176 = vsub.f32 %v3175, %v2932
        %v3177 = vmul.f32 %v3174, %v3176
        %v3178 = vadd.f32 %v2932, %v3177
        %3179 = vmatprep.subr.mxu0 0.0
        %3180 = vmatpush1.msra.mxu0 %v548
        %3181 = vmatprep.subr.mxu0 0.0
        %3182 = vmatpush1.msra.mxu0 %v549
        %3183 = vmatprep.subr.mxu0 0.0
        %3184 = vmatpush1.msra.mxu0 %v550
        %3185 = vmatprep.subr.mxu0 0.0
        %3186 = vmatpush1.msra.mxu0 %v551
        %3187 = vmatprep.subr.mxu0 0.0
        %3188 = vmatpush1.msra.mxu0 %v552
        %3189 = vmatprep.subr.mxu0 0.0
        %3190 = vmatpush1.msra.mxu0 %v553
        %3191 = vmatprep.subr.mxu0 0.0
        %3192 = vmatpush1.msra.mxu0 %v554
        %3193 = vmatprep.subr.mxu0 0.0
        %3194 = vmatpush1.msra.mxu0 %v555
        %3195 = vmatprep.subr.mxu0 0.0
        %3196 = vmatpush1.msra.mxu0 %v556
        %3197 = vmatprep.subr.mxu0 0.0
        %3198 = vmatpush1.msra.mxu0 %v557
        %3199 = vmatprep.subr.mxu0 0.0
        %3200 = vmatpush1.msra.mxu0 %v558
        %3201 = vmatprep.subr.mxu0 0.0
        %3202 = vmatpush1.msra.mxu0 %v559
        %3203 = vmatprep.subr.mxu0 0.0
        %3204 = vmatpush1.msra.mxu0 %v560
        %3205 = vmatprep.subr.mxu0 0.0
        %3206 = vmatpush1.msra.mxu0 %v561
        %3207 = vmatprep.subr.mxu0 0.0
        %3208 = vmatpush1.msra.mxu0 %v562
        %3209 = vmatprep.subr.mxu0 0.0
        %3210 = vmatpush1.msra.mxu0 %v563
        %3211 = vmatprep.subr.mxu0 0.0
        %3212 = vmatpush1.msra.mxu0 0.0
        %3213 = vmatprep.subr.mxu0 0.0
        %3214 = vmatpush1.msra.mxu0 0.0
        %3215 = vmatprep.subr.mxu0 0.0
        %3216 = vmatpush1.msra.mxu0 0.0
        %3217 = vmatprep.subr.mxu0 0.0
        %3218 = vmatpush1.msra.mxu0 0.0
        %3219 = vmatprep.subr.mxu0 0.0
        %3220 = vmatpush1.msra.mxu0 0.0
        %3221 = vmatprep.subr.mxu0 0.0
        %3222 = vmatpush1.msra.mxu0 0.0
        %3223 = vmatprep.subr.mxu0 0.0
        %3224 = vmatpush1.msra.mxu0 0.0
        %3225 = vmatprep.subr.mxu0 0.0
        %3226 = vmatpush1.msra.mxu0 0.0
        %3227 = vmatprep.subr.mxu0 0.0
        %3228 = vmatpush1.msra.mxu0 0.0
        %3229 = vmatprep.subr.mxu0 0.0
        %3230 = vmatpush1.msra.mxu0 0.0
        %3231 = vmatprep.subr.mxu0 0.0
        %3232 = vmatpush1.msra.mxu0 0.0
        %3233 = vmatprep.subr.mxu0 0.0
        %3234 = vmatpush1.msra.mxu0 0.0
        %3235 = vmatprep.subr.mxu0 0.0
        %3236 = vmatpush1.msra.mxu0 0.0
        %3237 = vmatprep.subr.mxu0 0.0
        %3238 = vmatpush1.msra.mxu0 0.0
        %3239 = vmatprep.subr.mxu0 0.0
        %3240 = vmatpush1.msra.mxu0 0.0
        %3241 = vmatprep.subr.mxu0 0.0
        %3242 = vmatpush1.msra.mxu0 0.0
        %3243 = vmatprep.mubr.f32.mxu0 0.0
        %3244 = vmatmul.mubr.f32.gmra.mrb[0].mxu0 %v3178
        %v3245 = vpop.f32.mrb[0].mxu0
        %v3246 = vadd.f32 0.0, %v3245
        %v3247 = vpop.f32.mrb[0].mxu0
        %3248 = vdwg.mxu0
        %v3249 = vadd.f32 %v3016, %v3246
        %v3250 = vtanh.pop %v3249
        %v3251 = vsub.f32 %v3250, %v3007
        %v3252 = vmul.f32 %v3173, %v3251
        %v3253 = vadd.f32 %v3007, %v3252
        %s3254 = scalar_lea.vmem %s249, 64 [#allocation9]
        %3255 = vst [vmem:[%s3254] sm:$0xff] %v3253
        %s3256 = scalar_lea.vmem %s256, 64 [#allocation11]
        %3257 = vst [vmem:[%s3256] sm:$0xff] %v3178
        %s3258 = scalar_lea.vmem [#allocation6], 288
        %v3259 = vld [vmem:[%s3258] sm:$0xff]
        %v3260 = vld [vmem:[%s3258 + $0x8] sm:$0xff]
        %v3261 = vld [vmem:[%s3258 + $0x10] sm:$0xff]
        %v3262 = vld [vmem:[%s3258 + $0x18] sm:$0xff]
        %3263 = vmatprep.subr.mxu0 %v501
        %3264 = vmatpush1.msra.mxu0 %v500
        %3265 = vmatprep.subr.mxu0 %v504
        %3266 = vmatpush1.msra.mxu0 %v503
        %3267 = vmatprep.subr.mxu0 %v507
        %3268 = vmatpush1.msra.mxu0 %v506
        %3269 = vmatprep.subr.mxu0 %v510
        %3270 = vmatpush1.msra.mxu0 %v509
        %3271 = vmatprep.subr.mxu0 %v513
        %3272 = vmatpush1.msra.mxu0 %v512
        %3273 = vmatprep.subr.mxu0 %v516
        %3274 = vmatpush1.msra.mxu0 %v515
        %3275 = vmatprep.subr.mxu0 %v519
        %3276 = vmatpush1.msra.mxu0 %v518
        %3277 = vmatprep.subr.mxu0 %v522
        %3278 = vmatpush1.msra.mxu0 %v521
        %3279 = vmatprep.subr.mxu0 %v525
        %3280 = vmatpush1.msra.mxu0 %v524
        %3281 = vmatprep.subr.mxu0 %v528
        %3282 = vmatpush1.msra.mxu0 %v527
        %3283 = vmatprep.subr.mxu0 %v531
        %3284 = vmatpush1.msra.mxu0 %v530
        %3285 = vmatprep.subr.mxu0 %v534
        %3286 = vmatpush1.msra.mxu0 %v533
        %3287 = vmatprep.subr.mxu0 %v537
        %3288 = vmatpush1.msra.mxu0 %v536
        %3289 = vmatprep.subr.mxu0 %v540
        %3290 = vmatpush1.msra.mxu0 %v539
        %3291 = vmatprep.subr.mxu0 %v543
        %3292 = vmatpush1.msra.mxu0 %v542
        %3293 = vmatprep.subr.mxu0 %v546
        %3294 = vmatpush1.msra.mxu0 %v545
        %3295 = vmatprep.subr.mxu0 0.0
        %3296 = vmatpush1.msra.mxu0 0.0
        %3297 = vmatprep.subr.mxu0 0.0
        %3298 = vmatpush1.msra.mxu0 0.0
        %3299 = vmatprep.subr.mxu0 0.0
        %3300 = vmatpush1.msra.mxu0 0.0
        %3301 = vmatprep.subr.mxu0 0.0
        %3302 = vmatpush1.msra.mxu0 0.0
        %3303 = vmatprep.subr.mxu0 0.0
        %3304 = vmatpush1.msra.mxu0 0.0
        %3305 = vmatprep.subr.mxu0 0.0
        %3306 = vmatpush1.msra.mxu0 0.0
        %3307 = vmatprep.subr.mxu0 0.0
        %3308 = vmatpush1.msra.mxu0 0.0
        %3309 = vmatprep.subr.mxu0 0.0
        %3310 = vmatpush1.msra.mxu0 0.0
        %3311 = vmatprep.subr.mxu0 0.0
        %3312 = vmatpush1.msra.mxu0 0.0
        %3313 = vmatprep.subr.mxu0 0.0
        %3314 = vmatpush1.msra.mxu0 0.0
        %3315 = vmatprep.subr.mxu0 0.0
        %3316 = vmatpush1.msra.mxu0 0.0
        %3317 = vmatprep.subr.mxu0 0.0
        %3318 = vmatpush1.msra.mxu0 0.0
        %3319 = vmatprep.subr.mxu0 0.0
        %3320 = vmatpush1.msra.mxu0 0.0
        %3321 = vmatprep.subr.mxu0 0.0
        %3322 = vmatpush1.msra.mxu0 0.0
        %3323 = vmatprep.subr.mxu0 0.0
        %3324 = vmatpush1.msra.mxu0 0.0
        %3325 = vmatprep.subr.mxu0 0.0
        %3326 = vmatpush1.msra.mxu0 0.0
        %3327 = vmatprep.mubr.f32.mxu0 0.0
        %3328 = vmatmul.mubr.f32.gmra.mrb[0].mxu0 %v3253
        %v3329 = vpop.f32.mrb[0].mxu0
        %v3330 = vadd.f32 0.0, %v3329
        %v3331 = vpop.f32.mrb[0].mxu0
        %v3332 = vadd.f32 0.0, %v3331
        %3333 = vdwg.mxu0
        %3334 = vmatprep.subr.mxu0 0.0
        %3335 = vmatpush1.msra.mxu0 %v502
        %3336 = vmatprep.subr.mxu0 0.0
        %3337 = vmatpush1.msra.mxu0 %v505
        %3338 = vmatprep.subr.mxu0 0.0
        %3339 = vmatpush1.msra.mxu0 %v508
        %3340 = vmatprep.subr.mxu0 0.0
        %3341 = vmatpush1.msra.mxu0 %v511
        %3342 = vmatprep.subr.mxu0 0.0
        %3343 = vmatpush1.msra.mxu0 %v514
        %3344 = vmatprep.subr.mxu0 0.0
        %3345 = vmatpush1.msra.mxu0 %v517
        %3346 = vmatprep.subr.mxu0 0.0
        %3347 = vmatpush1.msra.mxu0 %v520
        %3348 = vmatprep.subr.mxu0 0.0
        %3349 = vmatpush1.msra.mxu0 %v523
        %3350 = vmatprep.subr.mxu0 0.0
        %3351 = vmatpush1.msra.mxu0 %v526
        %3352 = vmatprep.subr.mxu0 0.0
        %3353 = vmatpush1.msra.mxu0 %v529
        %3354 = vmatprep.subr.mxu0 0.0
        %3355 = vmatpush1.msra.mxu0 %v532
        %3356 = vmatprep.subr.mxu0 0.0
        %3357 = vmatpush1.msra.mxu0 %v535
        %3358 = vmatprep.subr.mxu0 0.0
        %3359 = vmatpush1.msra.mxu0 %v538
        %3360 = vmatprep.subr.mxu0 0.0
        %3361 = vmatpush1.msra.mxu0 %v541
        %3362 = vmatprep.subr.mxu0 0.0
        %3363 = vmatpush1.msra.mxu0 %v544
        %3364 = vmatprep.subr.mxu0 0.0
        %3365 = vmatpush1.msra.mxu0 %v547
        %3366 = vmatprep.subr.mxu0 0.0
        %3367 = vmatpush1.msra.mxu0 0.0
        %3368 = vmatprep.subr.mxu0 0.0
        %3369 = vmatpush1.msra.mxu0 0.0
        %3370 = vmatprep.subr.mxu0 0.0
        %3371 = vmatpush1.msra.mxu0 0.0
        %3372 = vmatprep.subr.mxu0 0.0
        %3373 = vmatpush1.msra.mxu0 0.0
        %3374 = vmatprep.subr.mxu0 0.0
        %3375 = vmatpush1.msra.mxu0 0.0
        %3376 = vmatprep.subr.mxu0 0.0
        %3377 = vmatpush1.msra.mxu0 0.0
        %3378 = vmatprep.subr.mxu0 0.0
        %3379 = vmatpush1.msra.mxu0 0.0
        %3380 = vmatprep.subr.mxu0 0.0
        %3381 = vmatpush1.msra.mxu0 0.0
        %3382 = vmatprep.subr.mxu0 0.0
        %3383 = vmatpush1.msra.mxu0 0.0
        %3384 = vmatprep.subr.mxu0 0.0
        %3385 = vmatpush1.msra.mxu0 0.0
        %3386 = vmatprep.subr.mxu0 0.0
        %3387 = vmatpush1.msra.mxu0 0.0
        %3388 = vmatprep.subr.mxu0 0.0
        %3389 = vmatpush1.msra.mxu0 0.0
        %3390 = vmatprep.subr.mxu0 0.0
        %3391 = vmatpush1.msra.mxu0 0.0
        %3392 = vmatprep.subr.mxu0 0.0
        %3393 = vmatpush1.msra.mxu0 0.0
        %3394 = vmatprep.subr.mxu0 0.0
        %3395 = vmatpush1.msra.mxu0 0.0
        %3396 = vmatprep.subr.mxu0 0.0
        %3397 = vmatpush1.msra.mxu0 0.0
        %3398 = vmatprep.mubr.f32.mxu0 0.0
        %3399 = vmatmul.mubr.f32.gmra.mrb[0].mxu0 %v3253
        %v3400 = vpop.f32.mrb[0].mxu0
        %v3401 = vadd.f32 0.0, %v3400
        %v3402 = vpop.f32.mrb[0].mxu0
        %3403 = vdwg.mxu0
        %v3404 = vadd.f32 %v3259, %v3330
        %v3405 = vadd.f32 %v3260, %v3332
        %v3406 = vadd.f32 %v3261, %v3401
        %v3407 = vxor.u32 %v3404, 2147483648
        %v3408 = vxor.u32 %v3405, 2147483648
        %v3409 = vmul.f32 %v3407, 1.442695
        %v3410 = vpow.pop %v3409
        %v3411 = vmul.f32 %v3408, 1.442695
        %v3412 = vpow.pop %v3411
        %v3413 = vadd.f32 %v3410, 1.0
        %v3414 = vadd.f32 %v3412, 1.0
        %v3415 = vrcp.pop %v3413
        %v3416 = vmul.f32 1.0, %v3415
        %v3417 = vrcp.pop %v3414
        %v3418 = vmul.f32 1.0, %v3417
        %v3419 = vmul.f32 %v3416, 0.5
        %v3420 = vmul.f32 %v3418, 0.5
        %v3421 = vtanh.pop %v3406
        %v3422 = vsub.f32 %v3421, %v3178
        %v3423 = vmul.f32 %v3420, %v3422
        %v3424 = vadd.f32 %v3178, %v3423
        %3425 = vmatprep.subr.mxu0 0.0
        %3426 = vmatpush1.msra.mxu0 %v548
        %3427 = vmatprep.subr.mxu0 0.0
        %3428 = vmatpush1.msra.mxu0 %v549
        %3429 = vmatprep.subr.mxu0 0.0
        %3430 = vmatpush1.msra.mxu0 %v550
        %3431 = vmatprep.subr.mxu0 0.0
        %3432 = vmatpush1.msra.mxu0 %v551
        %3433 = vmatprep.subr.mxu0 0.0
        %3434 = vmatpush1.msra.mxu0 %v552
        %3435 = vmatprep.subr.mxu0 0.0
        %3436 = vmatpush1.msra.mxu0 %v553
        %3437 = vmatprep.subr.mxu0 0.0
        %3438 = vmatpush1.msra.mxu0 %v554
        %3439 = vmatprep.subr.mxu0 0.0
        %3440 = vmatpush1.msra.mxu0 %v555
        %3441 = vmatprep.subr.mxu0 0.0
        %3442 = vmatpush1.msra.mxu0 %v556
        %3443 = vmatprep.subr.mxu0 0.0
        %3444 = vmatpush1.msra.mxu0 %v557
        %3445 = vmatprep.subr.mxu0 0.0
        %3446 = vmatpush1.msra.mxu0 %v558
        %3447 = vmatprep.subr.mxu0 0.0
        %3448 = vmatpush1.msra.mxu0 %v559
        %3449 = vmatprep.subr.mxu0 0.0
        %3450 = vmatpush1.msra.mxu0 %v560
        %3451 = vmatprep.subr.mxu0 0.0
        %3452 = vmatpush1.msra.mxu0 %v561
        %3453 = vmatprep.subr.mxu0 0.0
        %3454 = vmatpush1.msra.mxu0 %v562
        %3455 = vmatprep.subr.mxu0 0.0
        %3456 = vmatpush1.msra.mxu0 %v563
        %3457 = vmatprep.subr.mxu0 0.0
        %3458 = vmatpush1.msra.mxu0 0.0
        %3459 = vmatprep.subr.mxu0 0.0
        %3460 = vmatpush1.msra.mxu0 0.0
        %3461 = vmatprep.subr.mxu0 0.0
        %3462 = vmatpush1.msra.mxu0 0.0
        %3463 = vmatprep.subr.mxu0 0.0
        %3464 = vmatpush1.msra.mxu0 0.0
        %3465 = vmatprep.subr.mxu0 0.0
        %3466 = vmatpush1.msra.mxu0 0.0
        %3467 = vmatprep.subr.mxu0 0.0
        %3468 = vmatpush1.msra.mxu0 0.0
        %3469 = vmatprep.subr.mxu0 0.0
        %3470 = vmatpush1.msra.mxu0 0.0
        %3471 = vmatprep.subr.mxu0 0.0
        %3472 = vmatpush1.msra.mxu0 0.0
        %3473 = vmatprep.subr.mxu0 0.0
        %3474 = vmatpush1.msra.mxu0 0.0
        %3475 = vmatprep.subr.mxu0 0.0
        %3476 = vmatpush1.msra.mxu0 0.0
        %3477 = vmatprep.subr.mxu0 0.0
        %3478 = vmatpush1.msra.mxu0 0.0
        %3479 = vmatprep.subr.mxu0 0.0
        %3480 = vmatpush1.msra.mxu0 0.0
        %3481 = vmatprep.subr.mxu0 0.0
        %3482 = vmatpush1.msra.mxu0 0.0
        %3483 = vmatprep.subr.mxu0 0.0
        %3484 = vmatpush1.msra.mxu0 0.0
        %3485 = vmatprep.subr.mxu0 0.0
        %3486 = vmatpush1.msra.mxu0 0.0
        %3487 = vmatprep.subr.mxu0 0.0
        %3488 = vmatpush1.msra.mxu0 0.0
        %3489 = vmatprep.mubr.f32.mxu0 0.0
        %3490 = vmatmul.mubr.f32.gmra.mrb[0].mxu0 %v3424
        %v3491 = vpop.f32.mrb[0].mxu0
        %v3492 = vadd.f32 0.0, %v3491
        %v3493 = vpop.f32.mrb[0].mxu0
        %3494 = vdwg.mxu0
        %v3495 = vadd.f32 %v3262, %v3492
        %v3496 = vtanh.pop %v3495
        %v3497 = vsub.f32 %v3496, %v3253
        %v3498 = vmul.f32 %v3419, %v3497
        %v3499 = vadd.f32 %v3253, %v3498
        %s3500 = scalar_lea.vmem %s249, 72 [#allocation9]
        %3501 = vst [vmem:[%s3500] sm:$0xff] %v3499
        %s3502 = scalar_lea.vmem %s256, 72 [#allocation11]
        %3503 = vst [vmem:[%s3502] sm:$0xff] %v3424
        %s3504 = scalar_lea.vmem [#allocation6], 320
        %v3505 = vld [vmem:[%s3504] sm:$0xff]
        %v3506 = vld [vmem:[%s3504 + $0x8] sm:$0xff]
        %v3507 = vld [vmem:[%s3504 + $0x10] sm:$0xff]
        %v3508 = vld [vmem:[%s3504 + $0x18] sm:$0xff]
        %3509 = vmatprep.subr.mxu0 %v501
        %3510 = vmatpush1.msra.mxu0 %v500
        %3511 = vmatprep.subr.mxu0 %v504
        %3512 = vmatpush1.msra.mxu0 %v503
        %3513 = vmatprep.subr.mxu0 %v507
        %3514 = vmatpush1.msra.mxu0 %v506
        %3515 = vmatprep.subr.mxu0 %v510
        %3516 = vmatpush1.msra.mxu0 %v509
        %3517 = vmatprep.subr.mxu0 %v513
        %3518 = vmatpush1.msra.mxu0 %v512
        %3519 = vmatprep.subr.mxu0 %v516
        %3520 = vmatpush1.msra.mxu0 %v515
        %3521 = vmatprep.subr.mxu0 %v519
        %3522 = vmatpush1.msra.mxu0 %v518
        %3523 = vmatprep.subr.mxu0 %v522
        %3524 = vmatpush1.msra.mxu0 %v521
        %3525 = vmatprep.subr.mxu0 %v525
        %3526 = vmatpush1.msra.mxu0 %v524
        %3527 = vmatprep.subr.mxu0 %v528
        %3528 = vmatpush1.msra.mxu0 %v527
        %3529 = vmatprep.subr.mxu0 %v531
        %3530 = vmatpush1.msra.mxu0 %v530
        %3531 = vmatprep.subr.mxu0 %v534
        %3532 = vmatpush1.msra.mxu0 %v533
        %3533 = vmatprep.subr.mxu0 %v537
        %3534 = vmatpush1.msra.mxu0 %v536
        %3535 = vmatprep.subr.mxu0 %v540
        %3536 = vmatpush1.msra.mxu0 %v539
        %3537 = vmatprep.subr.mxu0 %v543
        %3538 = vmatpush1.msra.mxu0 %v542
        %3539 = vmatprep.subr.mxu0 %v546
        %3540 = vmatpush1.msra.mxu0 %v545
        %3541 = vmatprep.subr.mxu0 0.0
        %3542 = vmatpush1.msra.mxu0 0.0
        %3543 = vmatprep.subr.mxu0 0.0
        %3544 = vmatpush1.msra.mxu0 0.0
        %3545 = vmatprep.subr.mxu0 0.0
        %3546 = vmatpush1.msra.mxu0 0.0
        %3547 = vmatprep.subr.mxu0 0.0
        %3548 = vmatpush1.msra.mxu0 0.0
        %3549 = vmatprep.subr.mxu0 0.0
        %3550 = vmatpush1.msra.mxu0 0.0
        %3551 = vmatprep.subr.mxu0 0.0
        %3552 = vmatpush1.msra.mxu0 0.0
        %3553 = vmatprep.subr.mxu0 0.0
        %3554 = vmatpush1.msra.mxu0 0.0
        %3555 = vmatprep.subr.mxu0 0.0
        %3556 = vmatpush1.msra.mxu0 0.0
        %3557 = vmatprep.subr.mxu0 0.0
        %3558 = vmatpush1.msra.mxu0 0.0
        %3559 = vmatprep.subr.mxu0 0.0
        %3560 = vmatpush1.msra.mxu0 0.0
        %3561 = vmatprep.subr.mxu0 0.0
        %3562 = vmatpush1.msra.mxu0 0.0
        %3563 = vmatprep.subr.mxu0 0.0
        %3564 = vmatpush1.msra.mxu0 0.0
        %3565 = vmatprep.subr.mxu0 0.0
        %3566 = vmatpush1.msra.mxu0 0.0
        %3567 = vmatprep.subr.mxu0 0.0
        %3568 = vmatpush1.msra.mxu0 0.0
        %3569 = vmatprep.subr.mxu0 0.0
        %3570 = vmatpush1.msra.mxu0 0.0
        %3571 = vmatprep.subr.mxu0 0.0
        %3572 = vmatpush1.msra.mxu0 0.0
        %3573 = vmatprep.mubr.f32.mxu0 0.0
        %3574 = vmatmul.mubr.f32.gmra.mrb[0].mxu0 %v3499
        %v3575 = vpop.f32.mrb[0].mxu0
        %v3576 = vadd.f32 0.0, %v3575
        %v3577 = vpop.f32.mrb[0].mxu0
        %v3578 = vadd.f32 0.0, %v3577
        %3579 = vdwg.mxu0
        %3580 = vmatprep.subr.mxu0 0.0
        %3581 = vmatpush1.msra.mxu0 %v502
        %3582 = vmatprep.subr.mxu0 0.0
        %3583 = vmatpush1.msra.mxu0 %v505
        %3584 = vmatprep.subr.mxu0 0.0
        %3585 = vmatpush1.msra.mxu0 %v508
        %3586 = vmatprep.subr.mxu0 0.0
        %3587 = vmatpush1.msra.mxu0 %v511
        %3588 = vmatprep.subr.mxu0 0.0
        %3589 = vmatpush1.msra.mxu0 %v514
        %3590 = vmatprep.subr.mxu0 0.0
        %3591 = vmatpush1.msra.mxu0 %v517
        %3592 = vmatprep.subr.mxu0 0.0
        %3593 = vmatpush1.msra.mxu0 %v520
        %3594 = vmatprep.subr.mxu0 0.0
        %3595 = vmatpush1.msra.mxu0 %v523
        %3596 = vmatprep.subr.mxu0 0.0
        %3597 = vmatpush1.msra.mxu0 %v526
        %3598 = vmatprep.subr.mxu0 0.0
        %3599 = vmatpush1.msra.mxu0 %v529
        %3600 = vmatprep.subr.mxu0 0.0
        %3601 = vmatpush1.msra.mxu0 %v532
        %3602 = vmatprep.subr.mxu0 0.0
        %3603 = vmatpush1.msra.mxu0 %v535
        %3604 = vmatprep.subr.mxu0 0.0
        %3605 = vmatpush1.msra.mxu0 %v538
        %3606 = vmatprep.subr.mxu0 0.0
        %3607 = vmatpush1.msra.mxu0 %v541
        %3608 = vmatprep.subr.mxu0 0.0
        %3609 = vmatpush1.msra.mxu0 %v544
        %3610 = vmatprep.subr.mxu0 0.0
        %3611 = vmatpush1.msra.mxu0 %v547
        %3612 = vmatprep.subr.mxu0 0.0
        %3613 = vmatpush1.msra.mxu0 0.0
        %3614 = vmatprep.subr.mxu0 0.0
        %3615 = vmatpush1.msra.mxu0 0.0
        %3616 = vmatprep.subr.mxu0 0.0
        %3617 = vmatpush1.msra.mxu0 0.0
        %3618 = vmatprep.subr.mxu0 0.0
        %3619 = vmatpush1.msra.mxu0 0.0
        %3620 = vmatprep.subr.mxu0 0.0
        %3621 = vmatpush1.msra.mxu0 0.0
        %3622 = vmatprep.subr.mxu0 0.0
        %3623 = vmatpush1.msra.mxu0 0.0
        %3624 = vmatprep.subr.mxu0 0.0
        %3625 = vmatpush1.msra.mxu0 0.0
        %3626 = vmatprep.subr.mxu0 0.0
        %3627 = vmatpush1.msra.mxu0 0.0
        %3628 = vmatprep.subr.mxu0 0.0
        %3629 = vmatpush1.msra.mxu0 0.0
        %3630 = vmatprep.subr.mxu0 0.0
        %3631 = vmatpush1.msra.mxu0 0.0
        %3632 = vmatprep.subr.mxu0 0.0
        %3633 = vmatpush1.msra.mxu0 0.0
        %3634 = vmatprep.subr.mxu0 0.0
        %3635 = vmatpush1.msra.mxu0 0.0
        %3636 = vmatprep.subr.mxu0 0.0
        %3637 = vmatpush1.msra.mxu0 0.0
        %3638 = vmatprep.subr.mxu0 0.0
        %3639 = vmatpush1.msra.mxu0 0.0
        %3640 = vmatprep.subr.mxu0 0.0
        %3641 = vmatpush1.msra.mxu0 0.0
        %3642 = vmatprep.subr.mxu0 0.0
        %3643 = vmatpush1.msra.mxu0 0.0
        %3644 = vmatprep.mubr.f32.mxu0 0.0
        %3645 = vmatmul.mubr.f32.gmra.mrb[0].mxu0 %v3499
        %v3646 = vpop.f32.mrb[0].mxu0
        %v3647 = vadd.f32 0.0, %v3646
        %v3648 = vpop.f32.mrb[0].mxu0
        %3649 = vdwg.mxu0
        %v3650 = vadd.f32 %v3505, %v3576
        %v3651 = vadd.f32 %v3506, %v3578
        %v3652 = vadd.f32 %v3507, %v3647
        %v3653 = vxor.u32 %v3650, 2147483648
        %v3654 = vxor.u32 %v3651, 2147483648
        %v3655 = vmul.f32 %v3653, 1.442695
        %v3656 = vpow.pop %v3655
        %v3657 = vmul.f32 %v3654, 1.442695
        %v3658 = vpow.pop %v3657
        %v3659 = vadd.f32 %v3656, 1.0
        %v3660 = vadd.f32 %v3658, 1.0
        %v3661 = vrcp.pop %v3659
        %v3662 = vmul.f32 1.0, %v3661
        %v3663 = vrcp.pop %v3660
        %v3664 = vmul.f32 1.0, %v3663
        %v3665 = vmul.f32 %v3662, 0.5
        %v3666 = vmul.f32 %v3664, 0.5
        %v3667 = vtanh.pop %v3652
        %v3668 = vsub.f32 %v3667, %v3424
        %v3669 = vmul.f32 %v3666, %v3668
        %v3670 = vadd.f32 %v3424, %v3669
        %3671 = vmatprep.subr.mxu0 0.0
        %3672 = vmatpush1.msra.mxu0 %v548
        %3673 = vmatprep.subr.mxu0 0.0
        %3674 = vmatpush1.msra.mxu0 %v549
        %3675 = vmatprep.subr.mxu0 0.0
        %3676 = vmatpush1.msra.mxu0 %v550
        %3677 = vmatprep.subr.mxu0 0.0
        %3678 = vmatpush1.msra.mxu0 %v551
        %3679 = vmatprep.subr.mxu0 0.0
        %3680 = vmatpush1.msra.mxu0 %v552
        %3681 = vmatprep.subr.mxu0 0.0
        %3682 = vmatpush1.msra.mxu0 %v553
        %3683 = vmatprep.subr.mxu0 0.0
        %3684 = vmatpush1.msra.mxu0 %v554
        %3685 = vmatprep.subr.mxu0 0.0
        %3686 = vmatpush1.msra.mxu0 %v555
        %3687 = vmatprep.subr.mxu0 0.0
        %3688 = vmatpush1.msra.mxu0 %v556
        %3689 = vmatprep.subr.mxu0 0.0
        %3690 = vmatpush1.msra.mxu0 %v557
        %3691 = vmatprep.subr.mxu0 0.0
        %3692 = vmatpush1.msra.mxu0 %v558
        %3693 = vmatprep.subr.mxu0 0.0
        %3694 = vmatpush1.msra.mxu0 %v559
        %3695 = vmatprep.subr.mxu0 0.0
        %3696 = vmatpush1.msra.mxu0 %v560
        %3697 = vmatprep.subr.mxu0 0.0
        %3698 = vmatpush1.msra.mxu0 %v561
        %3699 = vmatprep.subr.mxu0 0.0
        %3700 = vmatpush1.msra.mxu0 %v562
        %3701 = vmatprep.subr.mxu0 0.0
        %3702 = vmatpush1.msra.mxu0 %v563
        %3703 = vmatprep.subr.mxu0 0.0
        %3704 = vmatpush1.msra.mxu0 0.0
        %3705 = vmatprep.subr.mxu0 0.0
        %3706 = vmatpush1.msra.mxu0 0.0
        %3707 = vmatprep.subr.mxu0 0.0
        %3708 = vmatpush1.msra.mxu0 0.0
        %3709 = vmatprep.subr.mxu0 0.0
        %3710 = vmatpush1.msra.mxu0 0.0
        %3711 = vmatprep.subr.mxu0 0.0
        %3712 = vmatpush1.msra.mxu0 0.0
        %3713 = vmatprep.subr.mxu0 0.0
        %3714 = vmatpush1.msra.mxu0 0.0
        %3715 = vmatprep.subr.mxu0 0.0
        %3716 = vmatpush1.msra.mxu0 0.0
        %3717 = vmatprep.subr.mxu0 0.0
        %3718 = vmatpush1.msra.mxu0 0.0
        %3719 = vmatprep.subr.mxu0 0.0
        %3720 = vmatpush1.msra.mxu0 0.0
        %3721 = vmatprep.subr.mxu0 0.0
        %3722 = vmatpush1.msra.mxu0 0.0
        %3723 = vmatprep.subr.mxu0 0.0
        %3724 = vmatpush1.msra.mxu0 0.0
        %3725 = vmatprep.subr.mxu0 0.0
        %3726 = vmatpush1.msra.mxu0 0.0
        %3727 = vmatprep.subr.mxu0 0.0
        %3728 = vmatpush1.msra.mxu0 0.0
        %3729 = vmatprep.subr.mxu0 0.0
        %3730 = vmatpush1.msra.mxu0 0.0
        %3731 = vmatprep.subr.mxu0 0.0
        %3732 = vmatpush1.msra.mxu0 0.0
        %3733 = vmatprep.subr.mxu0 0.0
        %3734 = vmatpush1.msra.mxu0 0.0
        %3735 = vmatprep.mubr.f32.mxu0 0.0
        %3736 = vmatmul.mubr.f32.gmra.mrb[0].mxu0 %v3670
        %v3737 = vpop.f32.mrb[0].mxu0
        %v3738 = vadd.f32 0.0, %v3737
        %v3739 = vpop.f32.mrb[0].mxu0
        %3740 = vdwg.mxu0
        %v3741 = vadd.f32 %v3508, %v3738
        %v3742 = vtanh.pop %v3741
        %v3743 = vsub.f32 %v3742, %v3499
        %v3744 = vmul.f32 %v3665, %v3743
        %v3745 = vadd.f32 %v3499, %v3744
        %s3746 = scalar_lea.vmem %s249, 80 [#allocation9]
        %3747 = vst [vmem:[%s3746] sm:$0xff] %v3745
        %s3748 = scalar_lea.vmem %s256, 80 [#allocation11]
        %3749 = vst [vmem:[%s3748] sm:$0xff] %v3670
        %s3750 = scalar_lea.vmem [#allocation6], 352
        %v3751 = vld [vmem:[%s3750] sm:$0xff]
        %v3752 = vld [vmem:[%s3750 + $0x8] sm:$0xff]
        %v3753 = vld [vmem:[%s3750 + $0x10] sm:$0xff]
        %v3754 = vld [vmem:[%s3750 + $0x18] sm:$0xff]
        %3755 = vmatprep.subr.mxu0 %v501
        %3756 = vmatpush1.msra.mxu0 %v500
        %3757 = vmatprep.subr.mxu0 %v504
        %3758 = vmatpush1.msra.mxu0 %v503
        %3759 = vmatprep.subr.mxu0 %v507
        %3760 = vmatpush1.msra.mxu0 %v506
        %3761 = vmatprep.subr.mxu0 %v510
        %3762 = vmatpush1.msra.mxu0 %v509
        %3763 = vmatprep.subr.mxu0 %v513
        %3764 = vmatpush1.msra.mxu0 %v512
        %3765 = vmatprep.subr.mxu0 %v516
        %3766 = vmatpush1.msra.mxu0 %v515
        %3767 = vmatprep.subr.mxu0 %v519
        %3768 = vmatpush1.msra.mxu0 %v518
        %3769 = vmatprep.subr.mxu0 %v522
        %3770 = vmatpush1.msra.mxu0 %v521
        %3771 = vmatprep.subr.mxu0 %v525
        %3772 = vmatpush1.msra.mxu0 %v524
        %3773 = vmatprep.subr.mxu0 %v528
        %3774 = vmatpush1.msra.mxu0 %v527
        %3775 = vmatprep.subr.mxu0 %v531
        %3776 = vmatpush1.msra.mxu0 %v530
        %3777 = vmatprep.subr.mxu0 %v534
        %3778 = vmatpush1.msra.mxu0 %v533
        %3779 = vmatprep.subr.mxu0 %v537
        %3780 = vmatpush1.msra.mxu0 %v536
        %3781 = vmatprep.subr.mxu0 %v540
        %3782 = vmatpush1.msra.mxu0 %v539
        %3783 = vmatprep.subr.mxu0 %v543
        %3784 = vmatpush1.msra.mxu0 %v542
        %3785 = vmatprep.subr.mxu0 %v546
        %3786 = vmatpush1.msra.mxu0 %v545
        %3787 = vmatprep.subr.mxu0 0.0
        %3788 = vmatpush1.msra.mxu0 0.0
        %3789 = vmatprep.subr.mxu0 0.0
        %3790 = vmatpush1.msra.mxu0 0.0
        %3791 = vmatprep.subr.mxu0 0.0
        %3792 = vmatpush1.msra.mxu0 0.0
        %3793 = vmatprep.subr.mxu0 0.0
        %3794 = vmatpush1.msra.mxu0 0.0
        %3795 = vmatprep.subr.mxu0 0.0
        %3796 = vmatpush1.msra.mxu0 0.0
        %3797 = vmatprep.subr.mxu0 0.0
        %3798 = vmatpush1.msra.mxu0 0.0
        %3799 = vmatprep.subr.mxu0 0.0
        %3800 = vmatpush1.msra.mxu0 0.0
        %3801 = vmatprep.subr.mxu0 0.0
        %3802 = vmatpush1.msra.mxu0 0.0
        %3803 = vmatprep.subr.mxu0 0.0
        %3804 = vmatpush1.msra.mxu0 0.0
        %3805 = vmatprep.subr.mxu0 0.0
        %3806 = vmatpush1.msra.mxu0 0.0
        %3807 = vmatprep.subr.mxu0 0.0
        %3808 = vmatpush1.msra.mxu0 0.0
        %3809 = vmatprep.subr.mxu0 0.0
        %3810 = vmatpush1.msra.mxu0 0.0
        %3811 = vmatprep.subr.mxu0 0.0
        %3812 = vmatpush1.msra.mxu0 0.0
        %3813 = vmatprep.subr.mxu0 0.0
        %3814 = vmatpush1.msra.mxu0 0.0
        %3815 = vmatprep.subr.mxu0 0.0
        %3816 = vmatpush1.msra.mxu0 0.0
        %3817 = vmatprep.subr.mxu0 0.0
        %3818 = vmatpush1.msra.mxu0 0.0
        %3819 = vmatprep.mubr.f32.mxu0 0.0
        %3820 = vmatmul.mubr.f32.gmra.mrb[0].mxu0 %v3745
        %v3821 = vpop.f32.mrb[0].mxu0
        %v3822 = vadd.f32 0.0, %v3821
        %v3823 = vpop.f32.mrb[0].mxu0
        %v3824 = vadd.f32 0.0, %v3823
        %3825 = vdwg.mxu0
        %3826 = vmatprep.subr.mxu0 0.0
        %3827 = vmatpush1.msra.mxu0 %v502
        %3828 = vmatprep.subr.mxu0 0.0
        %3829 = vmatpush1.msra.mxu0 %v505
        %3830 = vmatprep.subr.mxu0 0.0
        %3831 = vmatpush1.msra.mxu0 %v508
        %3832 = vmatprep.subr.mxu0 0.0
        %3833 = vmatpush1.msra.mxu0 %v511
        %3834 = vmatprep.subr.mxu0 0.0
        %3835 = vmatpush1.msra.mxu0 %v514
        %3836 = vmatprep.subr.mxu0 0.0
        %3837 = vmatpush1.msra.mxu0 %v517
        %3838 = vmatprep.subr.mxu0 0.0
        %3839 = vmatpush1.msra.mxu0 %v520
        %3840 = vmatprep.subr.mxu0 0.0
        %3841 = vmatpush1.msra.mxu0 %v523
        %3842 = vmatprep.subr.mxu0 0.0
        %3843 = vmatpush1.msra.mxu0 %v526
        %3844 = vmatprep.subr.mxu0 0.0
        %3845 = vmatpush1.msra.mxu0 %v529
        %3846 = vmatprep.subr.mxu0 0.0
        %3847 = vmatpush1.msra.mxu0 %v532
        %3848 = vmatprep.subr.mxu0 0.0
        %3849 = vmatpush1.msra.mxu0 %v535
        %3850 = vmatprep.subr.mxu0 0.0
        %3851 = vmatpush1.msra.mxu0 %v538
        %3852 = vmatprep.subr.mxu0 0.0
        %3853 = vmatpush1.msra.mxu0 %v541
        %3854 = vmatprep.subr.mxu0 0.0
        %3855 = vmatpush1.msra.mxu0 %v544
        %3856 = vmatprep.subr.mxu0 0.0
        %3857 = vmatpush1.msra.mxu0 %v547
        %3858 = vmatprep.subr.mxu0 0.0
        %3859 = vmatpush1.msra.mxu0 0.0
        %3860 = vmatprep.subr.mxu0 0.0
        %3861 = vmatpush1.msra.mxu0 0.0
        %3862 = vmatprep.subr.mxu0 0.0
        %3863 = vmatpush1.msra.mxu0 0.0
        %3864 = vmatprep.subr.mxu0 0.0
        %3865 = vmatpush1.msra.mxu0 0.0
        %3866 = vmatprep.subr.mxu0 0.0
        %3867 = vmatpush1.msra.mxu0 0.0
        %3868 = vmatprep.subr.mxu0 0.0
        %3869 = vmatpush1.msra.mxu0 0.0
        %3870 = vmatprep.subr.mxu0 0.0
        %3871 = vmatpush1.msra.mxu0 0.0
        %3872 = vmatprep.subr.mxu0 0.0
        %3873 = vmatpush1.msra.mxu0 0.0
        %3874 = vmatprep.subr.mxu0 0.0
        %3875 = vmatpush1.msra.mxu0 0.0
        %3876 = vmatprep.subr.mxu0 0.0
        %3877 = vmatpush1.msra.mxu0 0.0
        %3878 = vmatprep.subr.mxu0 0.0
        %3879 = vmatpush1.msra.mxu0 0.0
        %3880 = vmatprep.subr.mxu0 0.0
        %3881 = vmatpush1.msra.mxu0 0.0
        %3882 = vmatprep.subr.mxu0 0.0
        %3883 = vmatpush1.msra.mxu0 0.0
        %3884 = vmatprep.subr.mxu0 0.0
        %3885 = vmatpush1.msra.mxu0 0.0
        %3886 = vmatprep.subr.mxu0 0.0
        %3887 = vmatpush1.msra.mxu0 0.0
        %3888 = vmatprep.subr.mxu0 0.0
        %3889 = vmatpush1.msra.mxu0 0.0
        %3890 = vmatprep.mubr.f32.mxu0 0.0
        %3891 = vmatmul.mubr.f32.gmra.mrb[0].mxu0 %v3745
        %v3892 = vpop.f32.mrb[0].mxu0
        %v3893 = vadd.f32 0.0, %v3892
        %v3894 = vpop.f32.mrb[0].mxu0
        %3895 = vdwg.mxu0
        %v3896 = vadd.f32 %v3751, %v3822
        %v3897 = vadd.f32 %v3752, %v3824
        %v3898 = vadd.f32 %v3753, %v3893
        %v3899 = vxor.u32 %v3896, 2147483648
        %v3900 = vxor.u32 %v3897, 2147483648
        %v3901 = vmul.f32 %v3899, 1.442695
        %v3902 = vpow.pop %v3901
        %v3903 = vmul.f32 %v3900, 1.442695
        %v3904 = vpow.pop %v3903
        %v3905 = vadd.f32 %v3902, 1.0
        %v3906 = vadd.f32 %v3904, 1.0
        %v3907 = vrcp.pop %v3905
        %v3908 = vmul.f32 1.0, %v3907
        %v3909 = vrcp.pop %v3906
        %v3910 = vmul.f32 1.0, %v3909
        %v3911 = vmul.f32 %v3908, 0.5
        %v3912 = vmul.f32 %v3910, 0.5
        %v3913 = vtanh.pop %v3898
        %v3914 = vsub.f32 %v3913, %v3670
        %v3915 = vmul.f32 %v3912, %v3914
        %v3916 = vadd.f32 %v3670, %v3915
        %3917 = vmatprep.subr.mxu0 0.0
        %3918 = vmatpush1.msra.mxu0 %v548
        %3919 = vmatprep.subr.mxu0 0.0
        %3920 = vmatpush1.msra.mxu0 %v549
        %3921 = vmatprep.subr.mxu0 0.0
        %3922 = vmatpush1.msra.mxu0 %v550
        %3923 = vmatprep.subr.mxu0 0.0
        %3924 = vmatpush1.msra.mxu0 %v551
        %3925 = vmatprep.subr.mxu0 0.0
        %3926 = vmatpush1.msra.mxu0 %v552
        %3927 = vmatprep.subr.mxu0 0.0
        %3928 = vmatpush1.msra.mxu0 %v553
        %3929 = vmatprep.subr.mxu0 0.0
        %3930 = vmatpush1.msra.mxu0 %v554
        %3931 = vmatprep.subr.mxu0 0.0
        %3932 = vmatpush1.msra.mxu0 %v555
        %3933 = vmatprep.subr.mxu0 0.0
        %3934 = vmatpush1.msra.mxu0 %v556
        %3935 = vmatprep.subr.mxu0 0.0
        %3936 = vmatpush1.msra.mxu0 %v557
        %3937 = vmatprep.subr.mxu0 0.0
        %3938 = vmatpush1.msra.mxu0 %v558
        %3939 = vmatprep.subr.mxu0 0.0
        %3940 = vmatpush1.msra.mxu0 %v559
        %3941 = vmatprep.subr.mxu0 0.0
        %3942 = vmatpush1.msra.mxu0 %v560
        %3943 = vmatprep.subr.mxu0 0.0
        %3944 = vmatpush1.msra.mxu0 %v561
        %3945 = vmatprep.subr.mxu0 0.0
        %3946 = vmatpush1.msra.mxu0 %v562
        %3947 = vmatprep.subr.mxu0 0.0
        %3948 = vmatpush1.msra.mxu0 %v563
        %3949 = vmatprep.subr.mxu0 0.0
        %3950 = vmatpush1.msra.mxu0 0.0
        %3951 = vmatprep.subr.mxu0 0.0
        %3952 = vmatpush1.msra.mxu0 0.0
        %3953 = vmatprep.subr.mxu0 0.0
        %3954 = vmatpush1.msra.mxu0 0.0
        %3955 = vmatprep.subr.mxu0 0.0
        %3956 = vmatpush1.msra.mxu0 0.0
        %3957 = vmatprep.subr.mxu0 0.0
        %3958 = vmatpush1.msra.mxu0 0.0
        %3959 = vmatprep.subr.mxu0 0.0
        %3960 = vmatpush1.msra.mxu0 0.0
        %3961 = vmatprep.subr.mxu0 0.0
        %3962 = vmatpush1.msra.mxu0 0.0
        %3963 = vmatprep.subr.mxu0 0.0
        %3964 = vmatpush1.msra.mxu0 0.0
        %3965 = vmatprep.subr.mxu0 0.0
        %3966 = vmatpush1.msra.mxu0 0.0
        %3967 = vmatprep.subr.mxu0 0.0
        %3968 = vmatpush1.msra.mxu0 0.0
        %3969 = vmatprep.subr.mxu0 0.0
        %3970 = vmatpush1.msra.mxu0 0.0
        %3971 = vmatprep.subr.mxu0 0.0
        %3972 = vmatpush1.msra.mxu0 0.0
        %3973 = vmatprep.subr.mxu0 0.0
        %3974 = vmatpush1.msra.mxu0 0.0
        %3975 = vmatprep.subr.mxu0 0.0
        %3976 = vmatpush1.msra.mxu0 0.0
        %3977 = vmatprep.subr.mxu0 0.0
        %3978 = vmatpush1.msra.mxu0 0.0
        %3979 = vmatprep.subr.mxu0 0.0
        %3980 = vmatpush1.msra.mxu0 0.0
        %3981 = vmatprep.mubr.f32.mxu0 0.0
        %3982 = vmatmul.mubr.f32.gmra.mrb[0].mxu0 %v3916
        %v3983 = vpop.f32.mrb[0].mxu0
        %v3984 = vadd.f32 0.0, %v3983
        %v3985 = vpop.f32.mrb[0].mxu0
        %3986 = vdwg.mxu0
        %v3987 = vadd.f32 %v3754, %v3984
        %v3988 = vtanh.pop %v3987
        %v3989 = vsub.f32 %v3988, %v3745
        %v3990 = vmul.f32 %v3911, %v3989
        %v3991 = vadd.f32 %v3745, %v3990
        %s3992 = scalar_lea.vmem %s249, 88 [#allocation9]
        %3993 = vst [vmem:[%s3992] sm:$0xff] %v3991
        %s3994 = scalar_lea.vmem %s256, 88 [#allocation11]
        %3995 = vst [vmem:[%s3994] sm:$0xff] %v3916
        %s3996 = scalar_lea.vmem [#allocation6], 384
        %v3997 = vld [vmem:[%s3996] sm:$0xff]
        %v3998 = vld [vmem:[%s3996 + $0x8] sm:$0xff]
        %v3999 = vld [vmem:[%s3996 + $0x10] sm:$0xff]
        %v4000 = vld [vmem:[%s3996 + $0x18] sm:$0xff]
        %4001 = vmatprep.subr.mxu0 %v501
        %4002 = vmatpush1.msra.mxu0 %v500
        %4003 = vmatprep.subr.mxu0 %v504
        %4004 = vmatpush1.msra.mxu0 %v503
        %4005 = vmatprep.subr.mxu0 %v507
        %4006 = vmatpush1.msra.mxu0 %v506
        %4007 = vmatprep.subr.mxu0 %v510
        %4008 = vmatpush1.msra.mxu0 %v509
        %4009 = vmatprep.subr.mxu0 %v513
        %4010 = vmatpush1.msra.mxu0 %v512
        %4011 = vmatprep.subr.mxu0 %v516
        %4012 = vmatpush1.msra.mxu0 %v515
        %4013 = vmatprep.subr.mxu0 %v519
        %4014 = vmatpush1.msra.mxu0 %v518
        %4015 = vmatprep.subr.mxu0 %v522
        %4016 = vmatpush1.msra.mxu0 %v521
        %4017 = vmatprep.subr.mxu0 %v525
        %4018 = vmatpush1.msra.mxu0 %v524
        %4019 = vmatprep.subr.mxu0 %v528
        %4020 = vmatpush1.msra.mxu0 %v527
        %4021 = vmatprep.subr.mxu0 %v531
        %4022 = vmatpush1.msra.mxu0 %v530
        %4023 = vmatprep.subr.mxu0 %v534
        %4024 = vmatpush1.msra.mxu0 %v533
        %4025 = vmatprep.subr.mxu0 %v537
        %4026 = vmatpush1.msra.mxu0 %v536
        %4027 = vmatprep.subr.mxu0 %v540
        %4028 = vmatpush1.msra.mxu0 %v539
        %4029 = vmatprep.subr.mxu0 %v543
        %4030 = vmatpush1.msra.mxu0 %v542
        %4031 = vmatprep.subr.mxu0 %v546
        %4032 = vmatpush1.msra.mxu0 %v545
        %4033 = vmatprep.subr.mxu0 0.0
        %4034 = vmatpush1.msra.mxu0 0.0
        %4035 = vmatprep.subr.mxu0 0.0
        %4036 = vmatpush1.msra.mxu0 0.0
        %4037 = vmatprep.subr.mxu0 0.0
        %4038 = vmatpush1.msra.mxu0 0.0
        %4039 = vmatprep.subr.mxu0 0.0
        %4040 = vmatpush1.msra.mxu0 0.0
        %4041 = vmatprep.subr.mxu0 0.0
        %4042 = vmatpush1.msra.mxu0 0.0
        %4043 = vmatprep.subr.mxu0 0.0
        %4044 = vmatpush1.msra.mxu0 0.0
        %4045 = vmatprep.subr.mxu0 0.0
        %4046 = vmatpush1.msra.mxu0 0.0
        %4047 = vmatprep.subr.mxu0 0.0
        %4048 = vmatpush1.msra.mxu0 0.0
        %4049 = vmatprep.subr.mxu0 0.0
        %4050 = vmatpush1.msra.mxu0 0.0
        %4051 = vmatprep.subr.mxu0 0.0
        %4052 = vmatpush1.msra.mxu0 0.0
        %4053 = vmatprep.subr.mxu0 0.0
        %4054 = vmatpush1.msra.mxu0 0.0
        %4055 = vmatprep.subr.mxu0 0.0
        %4056 = vmatpush1.msra.mxu0 0.0
        %4057 = vmatprep.subr.mxu0 0.0
        %4058 = vmatpush1.msra.mxu0 0.0
        %4059 = vmatprep.subr.mxu0 0.0
        %4060 = vmatpush1.msra.mxu0 0.0
        %4061 = vmatprep.subr.mxu0 0.0
        %4062 = vmatpush1.msra.mxu0 0.0
        %4063 = vmatprep.subr.mxu0 0.0
        %4064 = vmatpush1.msra.mxu0 0.0
        %4065 = vmatprep.mubr.f32.mxu0 0.0
        %4066 = vmatmul.mubr.f32.gmra.mrb[0].mxu0 %v3991
        %v4067 = vpop.f32.mrb[0].mxu0
        %v4068 = vadd.f32 0.0, %v4067
        %v4069 = vpop.f32.mrb[0].mxu0
        %v4070 = vadd.f32 0.0, %v4069
        %4071 = vdwg.mxu0
        %4072 = vmatprep.subr.mxu0 0.0
        %4073 = vmatpush1.msra.mxu0 %v502
        %4074 = vmatprep.subr.mxu0 0.0
        %4075 = vmatpush1.msra.mxu0 %v505
        %4076 = vmatprep.subr.mxu0 0.0
        %4077 = vmatpush1.msra.mxu0 %v508
        %4078 = vmatprep.subr.mxu0 0.0
        %4079 = vmatpush1.msra.mxu0 %v511
        %4080 = vmatprep.subr.mxu0 0.0
        %4081 = vmatpush1.msra.mxu0 %v514
        %4082 = vmatprep.subr.mxu0 0.0
        %4083 = vmatpush1.msra.mxu0 %v517
        %4084 = vmatprep.subr.mxu0 0.0
        %4085 = vmatpush1.msra.mxu0 %v520
        %4086 = vmatprep.subr.mxu0 0.0
        %4087 = vmatpush1.msra.mxu0 %v523
        %4088 = vmatprep.subr.mxu0 0.0
        %4089 = vmatpush1.msra.mxu0 %v526
        %4090 = vmatprep.subr.mxu0 0.0
        %4091 = vmatpush1.msra.mxu0 %v529
        %4092 = vmatprep.subr.mxu0 0.0
        %4093 = vmatpush1.msra.mxu0 %v532
        %4094 = vmatprep.subr.mxu0 0.0
        %4095 = vmatpush1.msra.mxu0 %v535
        %4096 = vmatprep.subr.mxu0 0.0
        %4097 = vmatpush1.msra.mxu0 %v538
        %4098 = vmatprep.subr.mxu0 0.0
        %4099 = vmatpush1.msra.mxu0 %v541
        %4100 = vmatprep.subr.mxu0 0.0
        %4101 = vmatpush1.msra.mxu0 %v544
        %4102 = vmatprep.subr.mxu0 0.0
        %4103 = vmatpush1.msra.mxu0 %v547
        %4104 = vmatprep.subr.mxu0 0.0
        %4105 = vmatpush1.msra.mxu0 0.0
        %4106 = vmatprep.subr.mxu0 0.0
        %4107 = vmatpush1.msra.mxu0 0.0
        %4108 = vmatprep.subr.mxu0 0.0
        %4109 = vmatpush1.msra.mxu0 0.0
        %4110 = vmatprep.subr.mxu0 0.0
        %4111 = vmatpush1.msra.mxu0 0.0
        %4112 = vmatprep.subr.mxu0 0.0
        %4113 = vmatpush1.msra.mxu0 0.0
        %4114 = vmatprep.subr.mxu0 0.0
        %4115 = vmatpush1.msra.mxu0 0.0
        %4116 = vmatprep.subr.mxu0 0.0
        %4117 = vmatpush1.msra.mxu0 0.0
        %4118 = vmatprep.subr.mxu0 0.0
        %4119 = vmatpush1.msra.mxu0 0.0
        %4120 = vmatprep.subr.mxu0 0.0
        %4121 = vmatpush1.msra.mxu0 0.0
        %4122 = vmatprep.subr.mxu0 0.0
        %4123 = vmatpush1.msra.mxu0 0.0
        %4124 = vmatprep.subr.mxu0 0.0
        %4125 = vmatpush1.msra.mxu0 0.0
        %4126 = vmatprep.subr.mxu0 0.0
        %4127 = vmatpush1.msra.mxu0 0.0
        %4128 = vmatprep.subr.mxu0 0.0
        %4129 = vmatpush1.msra.mxu0 0.0
        %4130 = vmatprep.subr.mxu0 0.0
        %4131 = vmatpush1.msra.mxu0 0.0
        %4132 = vmatprep.subr.mxu0 0.0
        %4133 = vmatpush1.msra.mxu0 0.0
        %4134 = vmatprep.subr.mxu0 0.0
        %4135 = vmatpush1.msra.mxu0 0.0
        %4136 = vmatprep.mubr.f32.mxu0 0.0
        %4137 = vmatmul.mubr.f32.gmra.mrb[0].mxu0 %v3991
        %v4138 = vpop.f32.mrb[0].mxu0
        %v4139 = vadd.f32 0.0, %v4138
        %v4140 = vpop.f32.mrb[0].mxu0
        %4141 = vdwg.mxu0
        %v4142 = vadd.f32 %v3997, %v4068
        %v4143 = vadd.f32 %v3998, %v4070
        %v4144 = vadd.f32 %v3999, %v4139
        %v4145 = vxor.u32 %v4142, 2147483648
        %v4146 = vxor.u32 %v4143, 2147483648
        %v4147 = vmul.f32 %v4145, 1.442695
        %v4148 = vpow.pop %v4147
        %v4149 = vmul.f32 %v4146, 1.442695
        %v4150 = vpow.pop %v4149
        %v4151 = vadd.f32 %v4148, 1.0
        %v4152 = vadd.f32 %v4150, 1.0
        %v4153 = vrcp.pop %v4151
        %v4154 = vmul.f32 1.0, %v4153
        %v4155 = vrcp.pop %v4152
        %v4156 = vmul.f32 1.0, %v4155
        %v4157 = vmul.f32 %v4154, 0.5
        %v4158 = vmul.f32 %v4156, 0.5
        %v4159 = vtanh.pop %v4144
        %v4160 = vsub.f32 %v4159, %v3916
        %v4161 = vmul.f32 %v4158, %v4160
        %v4162 = vadd.f32 %v3916, %v4161
        %4163 = vmatprep.subr.mxu0 0.0
        %4164 = vmatpush1.msra.mxu0 %v548
        %4165 = vmatprep.subr.mxu0 0.0
        %4166 = vmatpush1.msra.mxu0 %v549
        %4167 = vmatprep.subr.mxu0 0.0
        %4168 = vmatpush1.msra.mxu0 %v550
        %4169 = vmatprep.subr.mxu0 0.0
        %4170 = vmatpush1.msra.mxu0 %v551
        %4171 = vmatprep.subr.mxu0 0.0
        %4172 = vmatpush1.msra.mxu0 %v552
        %4173 = vmatprep.subr.mxu0 0.0
        %4174 = vmatpush1.msra.mxu0 %v553
        %4175 = vmatprep.subr.mxu0 0.0
        %4176 = vmatpush1.msra.mxu0 %v554
        %4177 = vmatprep.subr.mxu0 0.0
        %4178 = vmatpush1.msra.mxu0 %v555
        %4179 = vmatprep.subr.mxu0 0.0
        %4180 = vmatpush1.msra.mxu0 %v556
        %4181 = vmatprep.subr.mxu0 0.0
        %4182 = vmatpush1.msra.mxu0 %v557
        %4183 = vmatprep.subr.mxu0 0.0
        %4184 = vmatpush1.msra.mxu0 %v558
        %4185 = vmatprep.subr.mxu0 0.0
        %4186 = vmatpush1.msra.mxu0 %v559
        %4187 = vmatprep.subr.mxu0 0.0
        %4188 = vmatpush1.msra.mxu0 %v560
        %4189 = vmatprep.subr.mxu0 0.0
        %4190 = vmatpush1.msra.mxu0 %v561
        %4191 = vmatprep.subr.mxu0 0.0
        %4192 = vmatpush1.msra.mxu0 %v562
        %4193 = vmatprep.subr.mxu0 0.0
        %4194 = vmatpush1.msra.mxu0 %v563
        %4195 = vmatprep.subr.mxu0 0.0
        %4196 = vmatpush1.msra.mxu0 0.0
        %4197 = vmatprep.subr.mxu0 0.0
        %4198 = vmatpush1.msra.mxu0 0.0
        %4199 = vmatprep.subr.mxu0 0.0
        %4200 = vmatpush1.msra.mxu0 0.0
        %4201 = vmatprep.subr.mxu0 0.0
        %4202 = vmatpush1.msra.mxu0 0.0
        %4203 = vmatprep.subr.mxu0 0.0
        %4204 = vmatpush1.msra.mxu0 0.0
        %4205 = vmatprep.subr.mxu0 0.0
        %4206 = vmatpush1.msra.mxu0 0.0
        %4207 = vmatprep.subr.mxu0 0.0
        %4208 = vmatpush1.msra.mxu0 0.0
        %4209 = vmatprep.subr.mxu0 0.0
        %4210 = vmatpush1.msra.mxu0 0.0
        %4211 = vmatprep.subr.mxu0 0.0
        %4212 = vmatpush1.msra.mxu0 0.0
        %4213 = vmatprep.subr.mxu0 0.0
        %4214 = vmatpush1.msra.mxu0 0.0
        %4215 = vmatprep.subr.mxu0 0.0
        %4216 = vmatpush1.msra.mxu0 0.0
        %4217 = vmatprep.subr.mxu0 0.0
        %4218 = vmatpush1.msra.mxu0 0.0
        %4219 = vmatprep.subr.mxu0 0.0
        %4220 = vmatpush1.msra.mxu0 0.0
        %4221 = vmatprep.subr.mxu0 0.0
        %4222 = vmatpush1.msra.mxu0 0.0
        %4223 = vmatprep.subr.mxu0 0.0
        %4224 = vmatpush1.msra.mxu0 0.0
        %4225 = vmatprep.subr.mxu0 0.0
        %4226 = vmatpush1.msra.mxu0 0.0
        %4227 = vmatprep.mubr.f32.mxu0 0.0
        %4228 = vmatmul.mubr.f32.gmra.mrb[0].mxu0 %v4162
        %v4229 = vpop.f32.mrb[0].mxu0
        %v4230 = vadd.f32 0.0, %v4229
        %v4231 = vpop.f32.mrb[0].mxu0
        %4232 = vdwg.mxu0
        %v4233 = vadd.f32 %v4000, %v4230
        %v4234 = vtanh.pop %v4233
        %v4235 = vsub.f32 %v4234, %v3991
        %v4236 = vmul.f32 %v4157, %v4235
        %v4237 = vadd.f32 %v3991, %v4236
        %s4238 = scalar_lea.vmem %s249, 96 [#allocation9]
        %4239 = vst [vmem:[%s4238] sm:$0xff] %v4237
        %s4240 = scalar_lea.vmem %s256, 96 [#allocation11]
        %4241 = vst [vmem:[%s4240] sm:$0xff] %v4162
        %s4242 = scalar_lea.vmem [#allocation6], 416
        %v4243 = vld [vmem:[%s4242] sm:$0xff]
        %v4244 = vld [vmem:[%s4242 + $0x8] sm:$0xff]
        %v4245 = vld [vmem:[%s4242 + $0x10] sm:$0xff]
        %v4246 = vld [vmem:[%s4242 + $0x18] sm:$0xff]
        %4247 = vmatprep.subr.mxu0 %v501
        %4248 = vmatpush1.msra.mxu0 %v500
        %4249 = vmatprep.subr.mxu0 %v504
        %4250 = vmatpush1.msra.mxu0 %v503
        %4251 = vmatprep.subr.mxu0 %v507
        %4252 = vmatpush1.msra.mxu0 %v506
        %4253 = vmatprep.subr.mxu0 %v510
        %4254 = vmatpush1.msra.mxu0 %v509
        %4255 = vmatprep.subr.mxu0 %v513
        %4256 = vmatpush1.msra.mxu0 %v512
        %4257 = vmatprep.subr.mxu0 %v516
        %4258 = vmatpush1.msra.mxu0 %v515
        %4259 = vmatprep.subr.mxu0 %v519
        %4260 = vmatpush1.msra.mxu0 %v518
        %4261 = vmatprep.subr.mxu0 %v522
        %4262 = vmatpush1.msra.mxu0 %v521
        %4263 = vmatprep.subr.mxu0 %v525
        %4264 = vmatpush1.msra.mxu0 %v524
        %4265 = vmatprep.subr.mxu0 %v528
        %4266 = vmatpush1.msra.mxu0 %v527
        %4267 = vmatprep.subr.mxu0 %v531
        %4268 = vmatpush1.msra.mxu0 %v530
        %4269 = vmatprep.subr.mxu0 %v534
        %4270 = vmatpush1.msra.mxu0 %v533
        %4271 = vmatprep.subr.mxu0 %v537
        %4272 = vmatpush1.msra.mxu0 %v536
        %4273 = vmatprep.subr.mxu0 %v540
        %4274 = vmatpush1.msra.mxu0 %v539
        %4275 = vmatprep.subr.mxu0 %v543
        %4276 = vmatpush1.msra.mxu0 %v542
        %4277 = vmatprep.subr.mxu0 %v546
        %4278 = vmatpush1.msra.mxu0 %v545
        %4279 = vmatprep.subr.mxu0 0.0
        %4280 = vmatpush1.msra.mxu0 0.0
        %4281 = vmatprep.subr.mxu0 0.0
        %4282 = vmatpush1.msra.mxu0 0.0
        %4283 = vmatprep.subr.mxu0 0.0
        %4284 = vmatpush1.msra.mxu0 0.0
        %4285 = vmatprep.subr.mxu0 0.0
        %4286 = vmatpush1.msra.mxu0 0.0
        %4287 = vmatprep.subr.mxu0 0.0
        %4288 = vmatpush1.msra.mxu0 0.0
        %4289 = vmatprep.subr.mxu0 0.0
        %4290 = vmatpush1.msra.mxu0 0.0
        %4291 = vmatprep.subr.mxu0 0.0
        %4292 = vmatpush1.msra.mxu0 0.0
        %4293 = vmatprep.subr.mxu0 0.0
        %4294 = vmatpush1.msra.mxu0 0.0
        %4295 = vmatprep.subr.mxu0 0.0
        %4296 = vmatpush1.msra.mxu0 0.0
        %4297 = vmatprep.subr.mxu0 0.0
        %4298 = vmatpush1.msra.mxu0 0.0
        %4299 = vmatprep.subr.mxu0 0.0
        %4300 = vmatpush1.msra.mxu0 0.0
        %4301 = vmatprep.subr.mxu0 0.0
        %4302 = vmatpush1.msra.mxu0 0.0
        %4303 = vmatprep.subr.mxu0 0.0
        %4304 = vmatpush1.msra.mxu0 0.0
        %4305 = vmatprep.subr.mxu0 0.0
        %4306 = vmatpush1.msra.mxu0 0.0
        %4307 = vmatprep.subr.mxu0 0.0
        %4308 = vmatpush1.msra.mxu0 0.0
        %4309 = vmatprep.subr.mxu0 0.0
        %4310 = vmatpush1.msra.mxu0 0.0
        %4311 = vmatprep.mubr.f32.mxu0 0.0
        %4312 = vmatmul.mubr.f32.gmra.mrb[0].mxu0 %v4237
        %v4313 = vpop.f32.mrb[0].mxu0
        %v4314 = vadd.f32 0.0, %v4313
        %v4315 = vpop.f32.mrb[0].mxu0
        %v4316 = vadd.f32 0.0, %v4315
        %4317 = vdwg.mxu0
        %4318 = vmatprep.subr.mxu0 0.0
        %4319 = vmatpush1.msra.mxu0 %v502
        %4320 = vmatprep.subr.mxu0 0.0
        %4321 = vmatpush1.msra.mxu0 %v505
        %4322 = vmatprep.subr.mxu0 0.0
        %4323 = vmatpush1.msra.mxu0 %v508
        %4324 = vmatprep.subr.mxu0 0.0
        %4325 = vmatpush1.msra.mxu0 %v511
        %4326 = vmatprep.subr.mxu0 0.0
        %4327 = vmatpush1.msra.mxu0 %v514
        %4328 = vmatprep.subr.mxu0 0.0
        %4329 = vmatpush1.msra.mxu0 %v517
        %4330 = vmatprep.subr.mxu0 0.0
        %4331 = vmatpush1.msra.mxu0 %v520
        %4332 = vmatprep.subr.mxu0 0.0
        %4333 = vmatpush1.msra.mxu0 %v523
        %4334 = vmatprep.subr.mxu0 0.0
        %4335 = vmatpush1.msra.mxu0 %v526
        %4336 = vmatprep.subr.mxu0 0.0
        %4337 = vmatpush1.msra.mxu0 %v529
        %4338 = vmatprep.subr.mxu0 0.0
        %4339 = vmatpush1.msra.mxu0 %v532
        %4340 = vmatprep.subr.mxu0 0.0
        %4341 = vmatpush1.msra.mxu0 %v535
        %4342 = vmatprep.subr.mxu0 0.0
        %4343 = vmatpush1.msra.mxu0 %v538
        %4344 = vmatprep.subr.mxu0 0.0
        %4345 = vmatpush1.msra.mxu0 %v541
        %4346 = vmatprep.subr.mxu0 0.0
        %4347 = vmatpush1.msra.mxu0 %v544
        %4348 = vmatprep.subr.mxu0 0.0
        %4349 = vmatpush1.msra.mxu0 %v547
        %4350 = vmatprep.subr.mxu0 0.0
        %4351 = vmatpush1.msra.mxu0 0.0
        %4352 = vmatprep.subr.mxu0 0.0
        %4353 = vmatpush1.msra.mxu0 0.0
        %4354 = vmatprep.subr.mxu0 0.0
        %4355 = vmatpush1.msra.mxu0 0.0
        %4356 = vmatprep.subr.mxu0 0.0
        %4357 = vmatpush1.msra.mxu0 0.0
        %4358 = vmatprep.subr.mxu0 0.0
        %4359 = vmatpush1.msra.mxu0 0.0
        %4360 = vmatprep.subr.mxu0 0.0
        %4361 = vmatpush1.msra.mxu0 0.0
        %4362 = vmatprep.subr.mxu0 0.0
        %4363 = vmatpush1.msra.mxu0 0.0
        %4364 = vmatprep.subr.mxu0 0.0
        %4365 = vmatpush1.msra.mxu0 0.0
        %4366 = vmatprep.subr.mxu0 0.0
        %4367 = vmatpush1.msra.mxu0 0.0
        %4368 = vmatprep.subr.mxu0 0.0
        %4369 = vmatpush1.msra.mxu0 0.0
        %4370 = vmatprep.subr.mxu0 0.0
        %4371 = vmatpush1.msra.mxu0 0.0
        %4372 = vmatprep.subr.mxu0 0.0
        %4373 = vmatpush1.msra.mxu0 0.0
        %4374 = vmatprep.subr.mxu0 0.0
        %4375 = vmatpush1.msra.mxu0 0.0
        %4376 = vmatprep.subr.mxu0 0.0
        %4377 = vmatpush1.msra.mxu0 0.0
        %4378 = vmatprep.subr.mxu0 0.0
        %4379 = vmatpush1.msra.mxu0 0.0
        %4380 = vmatprep.subr.mxu0 0.0
        %4381 = vmatpush1.msra.mxu0 0.0
        %4382 = vmatprep.mubr.f32.mxu0 0.0
        %4383 = vmatmul.mubr.f32.gmra.mrb[0].mxu0 %v4237
        %v4384 = vpop.f32.mrb[0].mxu0
        %v4385 = vadd.f32 0.0, %v4384
        %v4386 = vpop.f32.mrb[0].mxu0
        %4387 = vdwg.mxu0
        %v4388 = vadd.f32 %v4243, %v4314
        %v4389 = vadd.f32 %v4244, %v4316
        %v4390 = vadd.f32 %v4245, %v4385
        %v4391 = vxor.u32 %v4388, 2147483648
        %v4392 = vxor.u32 %v4389, 2147483648
        %v4393 = vmul.f32 %v4391, 1.442695
        %v4394 = vpow.pop %v4393
        %v4395 = vmul.f32 %v4392, 1.442695
        %v4396 = vpow.pop %v4395
        %v4397 = vadd.f32 %v4394, 1.0
        %v4398 = vadd.f32 %v4396, 1.0
        %v4399 = vrcp.pop %v4397
        %v4400 = vmul.f32 1.0, %v4399
        %v4401 = vrcp.pop %v4398
        %v4402 = vmul.f32 1.0, %v4401
        %v4403 = vmul.f32 %v4400, 0.5
        %v4404 = vmul.f32 %v4402, 0.5
        %v4405 = vtanh.pop %v4390
        %v4406 = vsub.f32 %v4405, %v4162
        %v4407 = vmul.f32 %v4404, %v4406
        %v4408 = vadd.f32 %v4162, %v4407
        %4409 = vmatprep.subr.mxu0 0.0
        %4410 = vmatpush1.msra.mxu0 %v548
        %4411 = vmatprep.subr.mxu0 0.0
        %4412 = vmatpush1.msra.mxu0 %v549
        %4413 = vmatprep.subr.mxu0 0.0
        %4414 = vmatpush1.msra.mxu0 %v550
        %4415 = vmatprep.subr.mxu0 0.0
        %4416 = vmatpush1.msra.mxu0 %v551
        %4417 = vmatprep.subr.mxu0 0.0
        %4418 = vmatpush1.msra.mxu0 %v552
        %4419 = vmatprep.subr.mxu0 0.0
        %4420 = vmatpush1.msra.mxu0 %v553
        %4421 = vmatprep.subr.mxu0 0.0
        %4422 = vmatpush1.msra.mxu0 %v554
        %4423 = vmatprep.subr.mxu0 0.0
        %4424 = vmatpush1.msra.mxu0 %v555
        %4425 = vmatprep.subr.mxu0 0.0
        %4426 = vmatpush1.msra.mxu0 %v556
        %4427 = vmatprep.subr.mxu0 0.0
        %4428 = vmatpush1.msra.mxu0 %v557
        %4429 = vmatprep.subr.mxu0 0.0
        %4430 = vmatpush1.msra.mxu0 %v558
        %4431 = vmatprep.subr.mxu0 0.0
        %4432 = vmatpush1.msra.mxu0 %v559
        %4433 = vmatprep.subr.mxu0 0.0
        %4434 = vmatpush1.msra.mxu0 %v560
        %4435 = vmatprep.subr.mxu0 0.0
        %4436 = vmatpush1.msra.mxu0 %v561
        %4437 = vmatprep.subr.mxu0 0.0
        %4438 = vmatpush1.msra.mxu0 %v562
        %4439 = vmatprep.subr.mxu0 0.0
        %4440 = vmatpush1.msra.mxu0 %v563
        %4441 = vmatprep.subr.mxu0 0.0
        %4442 = vmatpush1.msra.mxu0 0.0
        %4443 = vmatprep.subr.mxu0 0.0
        %4444 = vmatpush1.msra.mxu0 0.0
        %4445 = vmatprep.subr.mxu0 0.0
        %4446 = vmatpush1.msra.mxu0 0.0
        %4447 = vmatprep.subr.mxu0 0.0
        %4448 = vmatpush1.msra.mxu0 0.0
        %4449 = vmatprep.subr.mxu0 0.0
        %4450 = vmatpush1.msra.mxu0 0.0
        %4451 = vmatprep.subr.mxu0 0.0
        %4452 = vmatpush1.msra.mxu0 0.0
        %4453 = vmatprep.subr.mxu0 0.0
        %4454 = vmatpush1.msra.mxu0 0.0
        %4455 = vmatprep.subr.mxu0 0.0
        %4456 = vmatpush1.msra.mxu0 0.0
        %4457 = vmatprep.subr.mxu0 0.0
        %4458 = vmatpush1.msra.mxu0 0.0
        %4459 = vmatprep.subr.mxu0 0.0
        %4460 = vmatpush1.msra.mxu0 0.0
        %4461 = vmatprep.subr.mxu0 0.0
        %4462 = vmatpush1.msra.mxu0 0.0
        %4463 = vmatprep.subr.mxu0 0.0
        %4464 = vmatpush1.msra.mxu0 0.0
        %4465 = vmatprep.subr.mxu0 0.0
        %4466 = vmatpush1.msra.mxu0 0.0
        %4467 = vmatprep.subr.mxu0 0.0
        %4468 = vmatpush1.msra.mxu0 0.0
        %4469 = vmatprep.subr.mxu0 0.0
        %4470 = vmatpush1.msra.mxu0 0.0
        %4471 = vmatprep.subr.mxu0 0.0
        %4472 = vmatpush1.msra.mxu0 0.0
        %4473 = vmatprep.mubr.f32.mxu0 0.0
        %4474 = vmatmul.mubr.f32.gmra.mrb[0].mxu0 %v4408
        %v4475 = vpop.f32.mrb[0].mxu0
        %v4476 = vadd.f32 0.0, %v4475
        %v4477 = vpop.f32.mrb[0].mxu0
        %4478 = vdwg.mxu0
        %v4479 = vadd.f32 %v4246, %v4476
        %v4480 = vtanh.pop %v4479
        %v4481 = vsub.f32 %v4480, %v4237
        %v4482 = vmul.f32 %v4403, %v4481
        %v4483 = vadd.f32 %v4237, %v4482
        %s4484 = scalar_lea.vmem %s249, 104 [#allocation9]
        %4485 = vst [vmem:[%s4484] sm:$0xff] %v4483
        %s4486 = scalar_lea.vmem %s256, 104 [#allocation11]
        %4487 = vst [vmem:[%s4486] sm:$0xff] %v4408
        %s4488 = scalar_lea.vmem [#allocation6], 448
        %v4489 = vld [vmem:[%s4488] sm:$0xff]
        %v4490 = vld [vmem:[%s4488 + $0x8] sm:$0xff]
        %v4491 = vld [vmem:[%s4488 + $0x10] sm:$0xff]
        %v4492 = vld [vmem:[%s4488 + $0x18] sm:$0xff]
        %4493 = vmatprep.subr.mxu0 %v501
        %4494 = vmatpush1.msra.mxu0 %v500
        %4495 = vmatprep.subr.mxu0 %v504
        %4496 = vmatpush1.msra.mxu0 %v503
        %4497 = vmatprep.subr.mxu0 %v507
        %4498 = vmatpush1.msra.mxu0 %v506
        %4499 = vmatprep.subr.mxu0 %v510
        %4500 = vmatpush1.msra.mxu0 %v509
        %4501 = vmatprep.subr.mxu0 %v513
        %4502 = vmatpush1.msra.mxu0 %v512
        %4503 = vmatprep.subr.mxu0 %v516
        %4504 = vmatpush1.msra.mxu0 %v515
        %4505 = vmatprep.subr.mxu0 %v519
        %4506 = vmatpush1.msra.mxu0 %v518
        %4507 = vmatprep.subr.mxu0 %v522
        %4508 = vmatpush1.msra.mxu0 %v521
        %4509 = vmatprep.subr.mxu0 %v525
        %4510 = vmatpush1.msra.mxu0 %v524
        %4511 = vmatprep.subr.mxu0 %v528
        %4512 = vmatpush1.msra.mxu0 %v527
        %4513 = vmatprep.subr.mxu0 %v531
        %4514 = vmatpush1.msra.mxu0 %v530
        %4515 = vmatprep.subr.mxu0 %v534
        %4516 = vmatpush1.msra.mxu0 %v533
        %4517 = vmatprep.subr.mxu0 %v537
        %4518 = vmatpush1.msra.mxu0 %v536
        %4519 = vmatprep.subr.mxu0 %v540
        %4520 = vmatpush1.msra.mxu0 %v539
        %4521 = vmatprep.subr.mxu0 %v543
        %4522 = vmatpush1.msra.mxu0 %v542
        %4523 = vmatprep.subr.mxu0 %v546
        %4524 = vmatpush1.msra.mxu0 %v545
        %4525 = vmatprep.subr.mxu0 0.0
        %4526 = vmatpush1.msra.mxu0 0.0
        %4527 = vmatprep.subr.mxu0 0.0
        %4528 = vmatpush1.msra.mxu0 0.0
        %4529 = vmatprep.subr.mxu0 0.0
        %4530 = vmatpush1.msra.mxu0 0.0
        %4531 = vmatprep.subr.mxu0 0.0
        %4532 = vmatpush1.msra.mxu0 0.0
        %4533 = vmatprep.subr.mxu0 0.0
        %4534 = vmatpush1.msra.mxu0 0.0
        %4535 = vmatprep.subr.mxu0 0.0
        %4536 = vmatpush1.msra.mxu0 0.0
        %4537 = vmatprep.subr.mxu0 0.0
        %4538 = vmatpush1.msra.mxu0 0.0
        %4539 = vmatprep.subr.mxu0 0.0
        %4540 = vmatpush1.msra.mxu0 0.0
        %4541 = vmatprep.subr.mxu0 0.0
        %4542 = vmatpush1.msra.mxu0 0.0
        %4543 = vmatprep.subr.mxu0 0.0
        %4544 = vmatpush1.msra.mxu0 0.0
        %4545 = vmatprep.subr.mxu0 0.0
        %4546 = vmatpush1.msra.mxu0 0.0
        %4547 = vmatprep.subr.mxu0 0.0
        %4548 = vmatpush1.msra.mxu0 0.0
        %4549 = vmatprep.subr.mxu0 0.0
        %4550 = vmatpush1.msra.mxu0 0.0
        %4551 = vmatprep.subr.mxu0 0.0
        %4552 = vmatpush1.msra.mxu0 0.0
        %4553 = vmatprep.subr.mxu0 0.0
        %4554 = vmatpush1.msra.mxu0 0.0
        %4555 = vmatprep.subr.mxu0 0.0
        %4556 = vmatpush1.msra.mxu0 0.0
        %4557 = vmatprep.mubr.f32.mxu0 0.0
        %4558 = vmatmul.mubr.f32.gmra.mrb[0].mxu0 %v4483
        %v4559 = vpop.f32.mrb[0].mxu0
        %v4560 = vadd.f32 0.0, %v4559
        %v4561 = vpop.f32.mrb[0].mxu0
        %v4562 = vadd.f32 0.0, %v4561
        %4563 = vdwg.mxu0
        %4564 = vmatprep.subr.mxu0 0.0
        %4565 = vmatpush1.msra.mxu0 %v502
        %4566 = vmatprep.subr.mxu0 0.0
        %4567 = vmatpush1.msra.mxu0 %v505
        %4568 = vmatprep.subr.mxu0 0.0
        %4569 = vmatpush1.msra.mxu0 %v508
        %4570 = vmatprep.subr.mxu0 0.0
        %4571 = vmatpush1.msra.mxu0 %v511
        %4572 = vmatprep.subr.mxu0 0.0
        %4573 = vmatpush1.msra.mxu0 %v514
        %4574 = vmatprep.subr.mxu0 0.0
        %4575 = vmatpush1.msra.mxu0 %v517
        %4576 = vmatprep.subr.mxu0 0.0
        %4577 = vmatpush1.msra.mxu0 %v520
        %4578 = vmatprep.subr.mxu0 0.0
        %4579 = vmatpush1.msra.mxu0 %v523
        %4580 = vmatprep.subr.mxu0 0.0
        %4581 = vmatpush1.msra.mxu0 %v526
        %4582 = vmatprep.subr.mxu0 0.0
        %4583 = vmatpush1.msra.mxu0 %v529
        %4584 = vmatprep.subr.mxu0 0.0
        %4585 = vmatpush1.msra.mxu0 %v532
        %4586 = vmatprep.subr.mxu0 0.0
        %4587 = vmatpush1.msra.mxu0 %v535
        %4588 = vmatprep.subr.mxu0 0.0
        %4589 = vmatpush1.msra.mxu0 %v538
        %4590 = vmatprep.subr.mxu0 0.0
        %4591 = vmatpush1.msra.mxu0 %v541
        %4592 = vmatprep.subr.mxu0 0.0
        %4593 = vmatpush1.msra.mxu0 %v544
        %4594 = vmatprep.subr.mxu0 0.0
        %4595 = vmatpush1.msra.mxu0 %v547
        %4596 = vmatprep.subr.mxu0 0.0
        %4597 = vmatpush1.msra.mxu0 0.0
        %4598 = vmatprep.subr.mxu0 0.0
        %4599 = vmatpush1.msra.mxu0 0.0
        %4600 = vmatprep.subr.mxu0 0.0
        %4601 = vmatpush1.msra.mxu0 0.0
        %4602 = vmatprep.subr.mxu0 0.0
        %4603 = vmatpush1.msra.mxu0 0.0
        %4604 = vmatprep.subr.mxu0 0.0
        %4605 = vmatpush1.msra.mxu0 0.0
        %4606 = vmatprep.subr.mxu0 0.0
        %4607 = vmatpush1.msra.mxu0 0.0
        %4608 = vmatprep.subr.mxu0 0.0
        %4609 = vmatpush1.msra.mxu0 0.0
        %4610 = vmatprep.subr.mxu0 0.0
        %4611 = vmatpush1.msra.mxu0 0.0
        %4612 = vmatprep.subr.mxu0 0.0
        %4613 = vmatpush1.msra.mxu0 0.0
        %4614 = vmatprep.subr.mxu0 0.0
        %4615 = vmatpush1.msra.mxu0 0.0
        %4616 = vmatprep.subr.mxu0 0.0
        %4617 = vmatpush1.msra.mxu0 0.0
        %4618 = vmatprep.subr.mxu0 0.0
        %4619 = vmatpush1.msra.mxu0 0.0
        %4620 = vmatprep.subr.mxu0 0.0
        %4621 = vmatpush1.msra.mxu0 0.0
        %4622 = vmatprep.subr.mxu0 0.0
        %4623 = vmatpush1.msra.mxu0 0.0
        %4624 = vmatprep.subr.mxu0 0.0
        %4625 = vmatpush1.msra.mxu0 0.0
        %4626 = vmatprep.subr.mxu0 0.0
        %4627 = vmatpush1.msra.mxu0 0.0
        %4628 = vmatprep.mubr.f32.mxu0 0.0
        %4629 = vmatmul.mubr.f32.gmra.mrb[0].mxu0 %v4483
        %v4630 = vpop.f32.mrb[0].mxu0
        %v4631 = vadd.f32 0.0, %v4630
        %v4632 = vpop.f32.mrb[0].mxu0
        %4633 = vdwg.mxu0
        %v4634 = vadd.f32 %v4489, %v4560
        %v4635 = vadd.f32 %v4490, %v4562
        %v4636 = vadd.f32 %v4491, %v4631
        %v4637 = vxor.u32 %v4634, 2147483648
        %v4638 = vxor.u32 %v4635, 2147483648
        %v4639 = vmul.f32 %v4637, 1.442695
        %v4640 = vpow.pop %v4639
        %v4641 = vmul.f32 %v4638, 1.442695
        %v4642 = vpow.pop %v4641
        %v4643 = vadd.f32 %v4640, 1.0
        %v4644 = vadd.f32 %v4642, 1.0
        %v4645 = vrcp.pop %v4643
        %v4646 = vmul.f32 1.0, %v4645
        %v4647 = vrcp.pop %v4644
        %v4648 = vmul.f32 1.0, %v4647
        %v4649 = vmul.f32 %v4646, 0.5
        %v4650 = vmul.f32 %v4648, 0.5
        %v4651 = vtanh.pop %v4636
        %v4652 = vsub.f32 %v4651, %v4408
        %v4653 = vmul.f32 %v4650, %v4652
        %v4654 = vadd.f32 %v4408, %v4653
        %4655 = vmatprep.subr.mxu0 0.0
        %4656 = vmatpush1.msra.mxu0 %v548
        %4657 = vmatprep.subr.mxu0 0.0
        %4658 = vmatpush1.msra.mxu0 %v549
        %4659 = vmatprep.subr.mxu0 0.0
        %4660 = vmatpush1.msra.mxu0 %v550
        %4661 = vmatprep.subr.mxu0 0.0
        %4662 = vmatpush1.msra.mxu0 %v551
        %4663 = vmatprep.subr.mxu0 0.0
        %4664 = vmatpush1.msra.mxu0 %v552
        %4665 = vmatprep.subr.mxu0 0.0
        %4666 = vmatpush1.msra.mxu0 %v553
        %4667 = vmatprep.subr.mxu0 0.0
        %4668 = vmatpush1.msra.mxu0 %v554
        %4669 = vmatprep.subr.mxu0 0.0
        %4670 = vmatpush1.msra.mxu0 %v555
        %4671 = vmatprep.subr.mxu0 0.0
        %4672 = vmatpush1.msra.mxu0 %v556
        %4673 = vmatprep.subr.mxu0 0.0
        %4674 = vmatpush1.msra.mxu0 %v557
        %4675 = vmatprep.subr.mxu0 0.0
        %4676 = vmatpush1.msra.mxu0 %v558
        %4677 = vmatprep.subr.mxu0 0.0
        %4678 = vmatpush1.msra.mxu0 %v559
        %4679 = vmatprep.subr.mxu0 0.0
        %4680 = vmatpush1.msra.mxu0 %v560
        %4681 = vmatprep.subr.mxu0 0.0
        %4682 = vmatpush1.msra.mxu0 %v561
        %4683 = vmatprep.subr.mxu0 0.0
        %4684 = vmatpush1.msra.mxu0 %v562
        %4685 = vmatprep.subr.mxu0 0.0
        %4686 = vmatpush1.msra.mxu0 %v563
        %4687 = vmatprep.subr.mxu0 0.0
        %4688 = vmatpush1.msra.mxu0 0.0
        %4689 = vmatprep.subr.mxu0 0.0
        %4690 = vmatpush1.msra.mxu0 0.0
        %4691 = vmatprep.subr.mxu0 0.0
        %4692 = vmatpush1.msra.mxu0 0.0
        %4693 = vmatprep.subr.mxu0 0.0
        %4694 = vmatpush1.msra.mxu0 0.0
        %4695 = vmatprep.subr.mxu0 0.0
        %4696 = vmatpush1.msra.mxu0 0.0
        %4697 = vmatprep.subr.mxu0 0.0
        %4698 = vmatpush1.msra.mxu0 0.0
        %4699 = vmatprep.subr.mxu0 0.0
        %4700 = vmatpush1.msra.mxu0 0.0
        %4701 = vmatprep.subr.mxu0 0.0
        %4702 = vmatpush1.msra.mxu0 0.0
        %4703 = vmatprep.subr.mxu0 0.0
        %4704 = vmatpush1.msra.mxu0 0.0
        %4705 = vmatprep.subr.mxu0 0.0
        %4706 = vmatpush1.msra.mxu0 0.0
        %4707 = vmatprep.subr.mxu0 0.0
        %4708 = vmatpush1.msra.mxu0 0.0
        %4709 = vmatprep.subr.mxu0 0.0
        %4710 = vmatpush1.msra.mxu0 0.0
        %4711 = vmatprep.subr.mxu0 0.0
        %4712 = vmatpush1.msra.mxu0 0.0
        %4713 = vmatprep.subr.mxu0 0.0
        %4714 = vmatpush1.msra.mxu0 0.0
        %4715 = vmatprep.subr.mxu0 0.0
        %4716 = vmatpush1.msra.mxu0 0.0
        %4717 = vmatprep.subr.mxu0 0.0
        %4718 = vmatpush1.msra.mxu0 0.0
        %4719 = vmatprep.mubr.f32.mxu0 0.0
        %4720 = vmatmul.mubr.f32.gmra.mrb[0].mxu0 %v4654
        %v4721 = vpop.f32.mrb[0].mxu0
        %v4722 = vadd.f32 0.0, %v4721
        %v4723 = vpop.f32.mrb[0].mxu0
        %4724 = vdwg.mxu0
        %v4725 = vadd.f32 %v4492, %v4722
        %v4726 = vtanh.pop %v4725
        %v4727 = vsub.f32 %v4726, %v4483
        %v4728 = vmul.f32 %v4649, %v4727
        %v4729 = vadd.f32 %v4483, %v4728
        %s4730 = scalar_lea.vmem %s249, 112 [#allocation9]
        %4731 = vst [vmem:[%s4730] sm:$0xff] %v4729
        %s4732 = scalar_lea.vmem %s256, 112 [#allocation11]
        %4733 = vst [vmem:[%s4732] sm:$0xff] %v4654
        %s4734 = scalar_lea.vmem [#allocation6], 480
        %v4735 = vld [vmem:[%s4734] sm:$0xff]
        %v4736 = vld [vmem:[%s4734 + $0x8] sm:$0xff]
        %v4737 = vld [vmem:[%s4734 + $0x10] sm:$0xff]
        %v4738 = vld [vmem:[%s4734 + $0x18] sm:$0xff]
        %4739 = vmatprep.subr.mxu0 %v501
        %4740 = vmatpush1.msra.mxu0 %v500
        %4741 = vmatprep.subr.mxu0 %v504
        %4742 = vmatpush1.msra.mxu0 %v503
        %4743 = vmatprep.subr.mxu0 %v507
        %4744 = vmatpush1.msra.mxu0 %v506
        %4745 = vmatprep.subr.mxu0 %v510
        %4746 = vmatpush1.msra.mxu0 %v509
        %4747 = vmatprep.subr.mxu0 %v513
        %4748 = vmatpush1.msra.mxu0 %v512
        %4749 = vmatprep.subr.mxu0 %v516
        %4750 = vmatpush1.msra.mxu0 %v515
        %4751 = vmatprep.subr.mxu0 %v519
        %4752 = vmatpush1.msra.mxu0 %v518
        %4753 = vmatprep.subr.mxu0 %v522
        %4754 = vmatpush1.msra.mxu0 %v521
        %4755 = vmatprep.subr.mxu0 %v525
        %4756 = vmatpush1.msra.mxu0 %v524
        %4757 = vmatprep.subr.mxu0 %v528
        %4758 = vmatpush1.msra.mxu0 %v527
        %4759 = vmatprep.subr.mxu0 %v531
        %4760 = vmatpush1.msra.mxu0 %v530
        %4761 = vmatprep.subr.mxu0 %v534
        %4762 = vmatpush1.msra.mxu0 %v533
        %4763 = vmatprep.subr.mxu0 %v537
        %4764 = vmatpush1.msra.mxu0 %v536
        %4765 = vmatprep.subr.mxu0 %v540
        %4766 = vmatpush1.msra.mxu0 %v539
        %4767 = vmatprep.subr.mxu0 %v543
        %4768 = vmatpush1.msra.mxu0 %v542
        %4769 = vmatprep.subr.mxu0 %v546
        %4770 = vmatpush1.msra.mxu0 %v545
        %4771 = vmatprep.subr.mxu0 0.0
        %4772 = vmatpush1.msra.mxu0 0.0
        %4773 = vmatprep.subr.mxu0 0.0
        %4774 = vmatpush1.msra.mxu0 0.0
        %4775 = vmatprep.subr.mxu0 0.0
        %4776 = vmatpush1.msra.mxu0 0.0
        %4777 = vmatprep.subr.mxu0 0.0
        %4778 = vmatpush1.msra.mxu0 0.0
        %4779 = vmatprep.subr.mxu0 0.0
        %4780 = vmatpush1.msra.mxu0 0.0
        %4781 = vmatprep.subr.mxu0 0.0
        %4782 = vmatpush1.msra.mxu0 0.0
        %4783 = vmatprep.subr.mxu0 0.0
        %4784 = vmatpush1.msra.mxu0 0.0
        %4785 = vmatprep.subr.mxu0 0.0
        %4786 = vmatpush1.msra.mxu0 0.0
        %4787 = vmatprep.subr.mxu0 0.0
        %4788 = vmatpush1.msra.mxu0 0.0
        %4789 = vmatprep.subr.mxu0 0.0
        %4790 = vmatpush1.msra.mxu0 0.0
        %4791 = vmatprep.subr.mxu0 0.0
        %4792 = vmatpush1.msra.mxu0 0.0
        %4793 = vmatprep.subr.mxu0 0.0
        %4794 = vmatpush1.msra.mxu0 0.0
        %4795 = vmatprep.subr.mxu0 0.0
        %4796 = vmatpush1.msra.mxu0 0.0
        %4797 = vmatprep.subr.mxu0 0.0
        %4798 = vmatpush1.msra.mxu0 0.0
        %4799 = vmatprep.subr.mxu0 0.0
        %4800 = vmatpush1.msra.mxu0 0.0
        %4801 = vmatprep.subr.mxu0 0.0
        %4802 = vmatpush1.msra.mxu0 0.0
        %4803 = vmatprep.mubr.f32.mxu0 0.0
        %4804 = vmatmul.mubr.f32.gmra.mrb[0].mxu0 %v4729
        %v4805 = vpop.f32.mrb[0].mxu0
        %v4806 = vadd.f32 0.0, %v4805
        %v4807 = vpop.f32.mrb[0].mxu0
        %v4808 = vadd.f32 0.0, %v4807
        %4809 = vdwg.mxu0
        %4810 = vmatprep.subr.mxu0 0.0
        %4811 = vmatpush1.msra.mxu0 %v502
        %4812 = vmatprep.subr.mxu0 0.0
        %4813 = vmatpush1.msra.mxu0 %v505
        %4814 = vmatprep.subr.mxu0 0.0
        %4815 = vmatpush1.msra.mxu0 %v508
        %4816 = vmatprep.subr.mxu0 0.0
        %4817 = vmatpush1.msra.mxu0 %v511
        %4818 = vmatprep.subr.mxu0 0.0
        %4819 = vmatpush1.msra.mxu0 %v514
        %4820 = vmatprep.subr.mxu0 0.0
        %4821 = vmatpush1.msra.mxu0 %v517
        %4822 = vmatprep.subr.mxu0 0.0
        %4823 = vmatpush1.msra.mxu0 %v520
        %4824 = vmatprep.subr.mxu0 0.0
        %4825 = vmatpush1.msra.mxu0 %v523
        %4826 = vmatprep.subr.mxu0 0.0
        %4827 = vmatpush1.msra.mxu0 %v526
        %4828 = vmatprep.subr.mxu0 0.0
        %4829 = vmatpush1.msra.mxu0 %v529
        %4830 = vmatprep.subr.mxu0 0.0
        %4831 = vmatpush1.msra.mxu0 %v532
        %4832 = vmatprep.subr.mxu0 0.0
        %4833 = vmatpush1.msra.mxu0 %v535
        %4834 = vmatprep.subr.mxu0 0.0
        %4835 = vmatpush1.msra.mxu0 %v538
        %4836 = vmatprep.subr.mxu0 0.0
        %4837 = vmatpush1.msra.mxu0 %v541
        %4838 = vmatprep.subr.mxu0 0.0
        %4839 = vmatpush1.msra.mxu0 %v544
        %4840 = vmatprep.subr.mxu0 0.0
        %4841 = vmatpush1.msra.mxu0 %v547
        %4842 = vmatprep.subr.mxu0 0.0
        %4843 = vmatpush1.msra.mxu0 0.0
        %4844 = vmatprep.subr.mxu0 0.0
        %4845 = vmatpush1.msra.mxu0 0.0
        %4846 = vmatprep.subr.mxu0 0.0
        %4847 = vmatpush1.msra.mxu0 0.0
        %4848 = vmatprep.subr.mxu0 0.0
        %4849 = vmatpush1.msra.mxu0 0.0
        %4850 = vmatprep.subr.mxu0 0.0
        %4851 = vmatpush1.msra.mxu0 0.0
        %4852 = vmatprep.subr.mxu0 0.0
        %4853 = vmatpush1.msra.mxu0 0.0
        %4854 = vmatprep.subr.mxu0 0.0
        %4855 = vmatpush1.msra.mxu0 0.0
        %4856 = vmatprep.subr.mxu0 0.0
        %4857 = vmatpush1.msra.mxu0 0.0
        %4858 = vmatprep.subr.mxu0 0.0
        %4859 = vmatpush1.msra.mxu0 0.0
        %4860 = vmatprep.subr.mxu0 0.0
        %4861 = vmatpush1.msra.mxu0 0.0
        %4862 = vmatprep.subr.mxu0 0.0
        %4863 = vmatpush1.msra.mxu0 0.0
        %4864 = vmatprep.subr.mxu0 0.0
        %4865 = vmatpush1.msra.mxu0 0.0
        %4866 = vmatprep.subr.mxu0 0.0
        %4867 = vmatpush1.msra.mxu0 0.0
        %4868 = vmatprep.subr.mxu0 0.0
        %4869 = vmatpush1.msra.mxu0 0.0
        %4870 = vmatprep.subr.mxu0 0.0
        %4871 = vmatpush1.msra.mxu0 0.0
        %4872 = vmatprep.subr.mxu0 0.0
        %4873 = vmatpush1.msra.mxu0 0.0
        %4874 = vmatprep.mubr.f32.mxu0 0.0
        %4875 = vmatmul.mubr.f32.gmra.mrb[0].mxu0 %v4729
        %v4876 = vpop.f32.mrb[0].mxu0
        %v4877 = vadd.f32 0.0, %v4876
        %v4878 = vpop.f32.mrb[0].mxu0
        %4879 = vdwg.mxu0
        %v4880 = vadd.f32 %v4735, %v4806
        %v4881 = vadd.f32 %v4736, %v4808
        %v4882 = vadd.f32 %v4737, %v4877
        %v4883 = vxor.u32 %v4880, 2147483648
        %v4884 = vxor.u32 %v4881, 2147483648
        %v4885 = vmul.f32 %v4883, 1.442695
        %v4886 = vpow.pop %v4885
        %v4887 = vmul.f32 %v4884, 1.442695
        %v4888 = vpow.pop %v4887
        %v4889 = vadd.f32 %v4886, 1.0
        %v4890 = vadd.f32 %v4888, 1.0
        %v4891 = vrcp.pop %v4889
        %v4892 = vmul.f32 1.0, %v4891
        %v4893 = vrcp.pop %v4890
        %v4894 = vmul.f32 1.0, %v4893
        %v4895 = vmul.f32 %v4892, 0.5
        %v4896 = vmul.f32 %v4894, 0.5
        %v4897 = vtanh.pop %v4882
        %v4898 = vsub.f32 %v4897, %v4654
        %v4899 = vmul.f32 %v4896, %v4898
        %v4900 = vadd.f32 %v4654, %v4899
        %4901 = vmatprep.subr.mxu0 0.0
        %4902 = vmatpush1.msra.mxu0 %v548
        %4903 = vmatprep.subr.mxu0 0.0
        %4904 = vmatpush1.msra.mxu0 %v549
        %4905 = vmatprep.subr.mxu0 0.0
        %4906 = vmatpush1.msra.mxu0 %v550
        %4907 = vmatprep.subr.mxu0 0.0
        %4908 = vmatpush1.msra.mxu0 %v551
        %4909 = vmatprep.subr.mxu0 0.0
        %4910 = vmatpush1.msra.mxu0 %v552
        %4911 = vmatprep.subr.mxu0 0.0
        %4912 = vmatpush1.msra.mxu0 %v553
        %4913 = vmatprep.subr.mxu0 0.0
        %4914 = vmatpush1.msra.mxu0 %v554
        %4915 = vmatprep.subr.mxu0 0.0
        %4916 = vmatpush1.msra.mxu0 %v555
        %4917 = vmatprep.subr.mxu0 0.0
        %4918 = vmatpush1.msra.mxu0 %v556
        %4919 = vmatprep.subr.mxu0 0.0
        %4920 = vmatpush1.msra.mxu0 %v557
        %4921 = vmatprep.subr.mxu0 0.0
        %4922 = vmatpush1.msra.mxu0 %v558
        %4923 = vmatprep.subr.mxu0 0.0
        %4924 = vmatpush1.msra.mxu0 %v559
        %4925 = vmatprep.subr.mxu0 0.0
        %4926 = vmatpush1.msra.mxu0 %v560
        %4927 = vmatprep.subr.mxu0 0.0
        %4928 = vmatpush1.msra.mxu0 %v561
        %4929 = vmatprep.subr.mxu0 0.0
        %4930 = vmatpush1.msra.mxu0 %v562
        %4931 = vmatprep.subr.mxu0 0.0
        %4932 = vmatpush1.msra.mxu0 %v563
        %4933 = vmatprep.subr.mxu0 0.0
        %4934 = vmatpush1.msra.mxu0 0.0
        %4935 = vmatprep.subr.mxu0 0.0
        %4936 = vmatpush1.msra.mxu0 0.0
        %4937 = vmatprep.subr.mxu0 0.0
        %4938 = vmatpush1.msra.mxu0 0.0
        %4939 = vmatprep.subr.mxu0 0.0
        %4940 = vmatpush1.msra.mxu0 0.0
        %4941 = vmatprep.subr.mxu0 0.0
        %4942 = vmatpush1.msra.mxu0 0.0
        %4943 = vmatprep.subr.mxu0 0.0
        %4944 = vmatpush1.msra.mxu0 0.0
        %4945 = vmatprep.subr.mxu0 0.0
        %4946 = vmatpush1.msra.mxu0 0.0
        %4947 = vmatprep.subr.mxu0 0.0
        %4948 = vmatpush1.msra.mxu0 0.0
        %4949 = vmatprep.subr.mxu0 0.0
        %4950 = vmatpush1.msra.mxu0 0.0
        %4951 = vmatprep.subr.mxu0 0.0
        %4952 = vmatpush1.msra.mxu0 0.0
        %4953 = vmatprep.subr.mxu0 0.0
        %4954 = vmatpush1.msra.mxu0 0.0
        %4955 = vmatprep.subr.mxu0 0.0
        %4956 = vmatpush1.msra.mxu0 0.0
        %4957 = vmatprep.subr.mxu0 0.0
        %4958 = vmatpush1.msra.mxu0 0.0
        %4959 = vmatprep.subr.mxu0 0.0
        %4960 = vmatpush1.msra.mxu0 0.0
        %4961 = vmatprep.subr.mxu0 0.0
        %4962 = vmatpush1.msra.mxu0 0.0
        %4963 = vmatprep.subr.mxu0 0.0
        %4964 = vmatpush1.msra.mxu0 0.0
        %4965 = vmatprep.mubr.f32.mxu0 0.0
        %4966 = vmatmul.mubr.f32.gmra.mrb[0].mxu0 %v4900
        %v4967 = vpop.f32.mrb[0].mxu0
        %v4968 = vadd.f32 0.0, %v4967
        %v4969 = vpop.f32.mrb[0].mxu0
        %4970 = vdwg.mxu0
        %v4971 = vadd.f32 %v4738, %v4968
        %v4972 = vtanh.pop %v4971
        %v4973 = vsub.f32 %v4972, %v4729
        %v4974 = vmul.f32 %v4895, %v4973
        %v4975 = vadd.f32 %v4729, %v4974
        %s4976 = scalar_lea.vmem %s249, 120 [#allocation9]
        %4977 = vst [vmem:[%s4976] sm:$0xff] %v4975
        %s4978 = scalar_lea.vmem %s256, 120 [#allocation11]
        %4979 = vst [vmem:[%s4978] sm:$0xff] %v4900
        %4980 = vst [vmem:[#allocation7] sm:$0xff] %v4975
        %4981 = vst [vmem:[#allocation8] sm:$0xff] %v4900
        %s4982 = sand.u32 %s128, 1
        %s4983 = scalar_lea.sflag [#allocation10], %s4982
        %s4984 = sand.u32 %s128, 1
        %s4985 = smul.addr %s4984, 128
        %s4986 = scalar_lea.vmem [#allocation9], %s4985
        %s4987 = sand.u32 %s156, 1
        %s4988 = scalar_lea.sflag [#allocation12], %s4987
        %s4989 = sand.u32 %s156, 1
        %s4990 = smul.addr %s4989, 128
        %s4991 = scalar_lea.vmem [#allocation11], %s4990
        // Predicated region
        $region113: #{tpu_custom_call.1} parent=31 // pred_check
          %p4992 = pneg %p138
        $region114: #{tpu_custom_call.1} parent=31 // pred_check_branch
          %4994 = sbr.rel (%p4992) target = $region116
        $region115: #{tpu_custom_call.1} parent=31 // pred_region
          %s4995 = smul.u32 16, %s31
          %s4997 = ssub.s32 2048, 2048
          %4998 = vsyncadd %s4983, %s4997
          %s4999 = sadd.s32 %s30, %s4995
          %s5000 = smul.addr %s4999, 128
          %s5001 = scalar_lea.hbm %s7, %s5000
          %s5002 = sshll.u32 %s4986, 4
          %s5003 = int_to_ptr.vmem [resolvable:$true] %s5002
          %5008 = dma.vmem_to_hbm [thread:$0]  %s5003, 2048, %s5001, %s4983, 128, 128, 8
        $region116: #{tpu_custom_call.1} parent=31 // pred_fallthru
          _
        // Predicated region
        $region117: #{tpu_custom_call.1} parent=31 // pred_check
          %p5009 = pneg %p166
        $region118: #{tpu_custom_call.1} parent=31 // pred_check_branch
          %5011 = sbr.rel (%p5009) target = $region120
        $region119: #{tpu_custom_call.1} parent=31 // pred_region
          %s5012 = smul.u32 16, %s31
          %s5014 = ssub.s32 2048, 2048
          %5015 = vsyncadd %s4988, %s5014
          %s5016 = sadd.s32 %s30, %s5012
          %s5017 = smul.addr %s5016, 128
          %s5018 = scalar_lea.hbm %s8, %s5017
          %s5019 = sshll.u32 %s4991, 4
          %s5020 = int_to_ptr.vmem [resolvable:$true] %s5019
          %5025 = dma.vmem_to_hbm [thread:$0]  %s5020, 2048, %s5018, %s4988, 128, 128, 8
        $region120: #{tpu_custom_call.1} parent=31 // pred_fallthru
          _
      $region32: #{tpu_custom_call.1} parent=5 // pred_fallthru
        _
      %p5026 = scmp.le.s32.totalorder 2, %s21
      // Predicated region
      $region121: #{tpu_custom_call.1} parent=5 // pred_check
        %p5027 = pneg %p5026
      $region122: #{tpu_custom_call.1} parent=5 // pred_check_branch
        %5029 = sbr.rel (%p5027) target = $region124
      $region123: #{tpu_custom_call.1} parent=5 // pred_region
        %s5030 = ssub.s32 %s21, 2
        // Predicated region
        $region125: #{tpu_custom_call.1} parent=123 // pred_check
          %p5031 = pneg %p144
        $region126: #{tpu_custom_call.1} parent=123 // pred_check_branch
          %5033 = sbr.rel (%p5031) target = $region128
        $region127: #{tpu_custom_call.1} parent=123 // pred_region
          %s5034 = sand.u32 %s129, 1
          %s5035 = scalar_lea.sflag [#allocation10], %s5034
          %s5036 = sand.u32 %s129, 1
          %s5037 = smul.addr %s5036, 128
          %s5038 = scalar_lea.vmem [#allocation9], %s5037
          %5039 = dma.done %s5035, 2048
        $region128: #{tpu_custom_call.1} parent=123 // pred_fallthru
          _
        // Predicated region
        $region129: #{tpu_custom_call.1} parent=123 // pred_check
          %p5040 = pneg %p172
        $region130: #{tpu_custom_call.1} parent=123 // pred_check_branch
          %5042 = sbr.rel (%p5040) target = $region132
        $region131: #{tpu_custom_call.1} parent=123 // pred_region
          %s5043 = sand.u32 %s157, 1
          %s5044 = scalar_lea.sflag [#allocation12], %s5043
          %s5045 = sand.u32 %s157, 1
          %s5046 = smul.addr %s5045, 128
          %s5047 = scalar_lea.vmem [#allocation11], %s5046
          %5048 = dma.done %s5044, 2048
        $region132: #{tpu_custom_call.1} parent=123 // pred_fallthru
          _
      $region124: #{tpu_custom_call.1} parent=5 // pred_fallthru
        _
    $region6: #{tpu_custom_call.1} parent=1 // loop_footer
      %s25 = sadd.s32 1, %s21
    $region7: #{tpu_custom_call.1} parent=1 // loop_footer_branch
      %20 = sbr.rel target = $region3
    $region8: #{tpu_custom_call.1} parent=1 // loop_exit
      _
    %5049 = vsyncpa [#allocation10], 1
    %s5050 = scalar_lea.sflag [#allocation10], 1
    %5051 = vsyncpa %s5050, 1
    %5052 = vsyncpa [#allocation12], 1
    %s5053 = scalar_lea.sflag [#allocation12], 1
    %5054 = vsyncpa %s5053, 1

</llo_original>
